<compile_context>
chip_gen: v7x
topology: tpu7x:2x2x1
jax: 0.10.0
libtpu: 0.0.40
codegen_flags: <defaults>
</compile_context>

<pallas_src>
import numpy as np
import jax
import jax.numpy as jnp
from jax.experimental import pallas as pl
from jax.experimental.pallas import tpu as pltpu

# ---- synthetic model configuration (stand-in for the Keras checkpoint) ----
C_IN = 4
H = W = 16
KH = KW = 3
C_HID = 8
NUM_CLASSES = 10

# ---- kernel-side padded / flattened geometry ----
B = 2                                    # batch size used throughout
CP = 8                                   # channels padded 4 -> 8 (full sublane tile)
C_HID_PAD = 128                          # lane-dense hidden channels
OUT_PAD = 128                            # lane-dense output classes (sliced back to 10)
HP, WP = H + 2, W + 2                    # 'same'-padded spatial extent (18, 18)
P = H * W                                # valid positions per image (256)
QPI_REAL = HP * WP                       # flat rows per padded image (324)
QPI = 328                                # per-image row stride, rounded to sublane multiple
L = B * QPI                              # rows produced by the conv matmuls (656)
OFF_MAX = (KH - 1) * WP + (KW - 1)       # largest shift offset (38)
XROWS = ((L + OFF_MAX + 7) // 8) * 8     # padded input rows (696)

NEG_BIG = -1e9                           # logit bias for padded (fake) classes -> exp == 0


def cnn_kernel(x_ref, w1_ref, b1_ref, w2_ref, b2_ref, mask_ref, out_ref, acc_ref):
    # x_ref:    [XROWS, CP]        bf16  flat zero-padded NHWC rows (row = b*QPI + ip*WP + jp)
    # w1_ref:   [9*CP, C_HID_PAD]  bf16  conv taps stacked per (di, dj) shift
    # b1_ref:   [1, C_HID_PAD]     f32   conv bias
    # w2_ref:   [C_HID_PAD, OUT_PAD] bf16
    # b2_ref:   [1, OUT_PAD]       f32   (NEG_BIG on padded class slots)
    # mask_ref: [QPI, 1]           f32   (1/P on valid conv-output rows, 0 elsewhere)
    # out_ref:  [B, OUT_PAD]       f32   class probabilities (padded classes -> 0)
    # acc_ref:  [L, C_HID_PAD]     f32   VMEM scratch accumulator

    # 3x3 'same' conv as 9 row-shifted matmuls (bf16 in, f32 accumulate on the MXU).
    for s in range(KH * KW):
        di, dj = s // KW, s % KW
        off = di * WP + dj
        contrib = jnp.dot(
            x_ref[pl.ds(off, L), :],
            w1_ref[pl.ds(s * CP, CP), :],
            preferred_element_type=jnp.float32,
        )
        if s == 0:
            acc_ref[...] = contrib
        else:
            acc_ref[...] += contrib

    # Conv bias + ReLU in f32 (invalid rows carry finite garbage; masked out below).
    acc_ref[...] = jnp.maximum(acc_ref[...] + b1_ref[...], 0.0)

    # Global average pool: per-image masked sublane reduction (mask already holds 1/P).
    pooled = jnp.concatenate(
        [
            jnp.sum(acc_ref[pl.ds(b * QPI, QPI), :] * mask_ref[...],
                    axis=0, keepdims=True)
            for b in range(B)
        ],
        axis=0,
    )                                                         # [B, C_HID_PAD] f32

    # Dense head + softmax (exact divide; padded classes get -1e9 bias -> exp == 0).
    logits = (
        jnp.dot(pooled.astype(jnp.bfloat16), w2_ref[...],
                preferred_element_type=jnp.float32)
        + b2_ref[...]
    )                                                         # [B, OUT_PAD] f32
    m = jnp.max(logits, axis=-1, keepdims=True)
    e = jnp.exp(logits - m)
    out_ref[...] = e / jnp.sum(e, axis=-1, keepdims=True)


def make_params():
    """Deterministic synthetic weights (stand-in for the Keras checkpoint)."""
    kw1, kb1, kw2, kb2 = jax.random.split(jax.random.PRNGKey(42), 4)
    w1 = jax.random.normal(kw1, (KH * KW * C_IN, C_HID), jnp.float32) * 0.1
    b1 = jax.random.normal(kb1, (1, C_HID), jnp.float32) * 0.01
    w2 = jax.random.normal(kw2, (C_HID, NUM_CLASSES), jnp.float32) * 0.1
    b2 = jax.random.normal(kb2, (1, NUM_CLASSES), jnp.float32) * 0.01
    return w1, b1, w2, b2


def pad_params(params):
    """Pad weights to lane-dense, kernel-friendly shapes; MXU operands in bf16."""
    w1, b1, w2, b2 = params
    w1_4d = w1.reshape(KH, KW, C_IN, C_HID)
    w1p = jnp.zeros((KH, KW, CP, C_HID_PAD), jnp.float32)
    w1p = w1p.at[:, :, :C_IN, :C_HID].set(w1_4d)
    w1p = w1p.reshape(KH * KW * CP, C_HID_PAD).astype(jnp.bfloat16)       # [72, 128]
    b1p = jnp.zeros((1, C_HID_PAD), jnp.float32).at[:, :C_HID].set(b1)
    w2p = (jnp.zeros((C_HID_PAD, OUT_PAD), jnp.float32)
           .at[:C_HID, :NUM_CLASSES].set(w2).astype(jnp.bfloat16))        # [128, 128]
    b2p = jnp.full((1, OUT_PAD), NEG_BIG, jnp.float32).at[:, :NUM_CLASSES].set(b2)
    return w1p, b1p, w2p, b2p


def _pool_mask():
    """[QPI,1] f32: 1/P on rows that correspond to valid (i<H, j<W) conv outputs."""
    q = np.arange(QPI)
    valid = ((q % WP) < W) & ((q // WP) < H)
    return jnp.asarray((valid.astype(np.float32) / float(P)).reshape(QPI, 1))


def keras_wrapper_forward(x_nchw, w1p, b1p, w2p, b2p):
    """Pallas equivalent of KerasModelWrapper.forward(x) -> class probabilities."""
    x = x_nchw.astype(jnp.float32)
    x_nhwc = jnp.transpose(x, (0, 2, 3, 1))                               # [B, 16, 16, 4]
    xp = jnp.pad(x_nhwc, ((0, 0), (1, 1), (1, 1), (0, CP - C_IN)))        # [B, 18, 18, 8]
    xflat = xp.reshape(B, QPI_REAL, CP)
    xflat = jnp.pad(xflat, ((0, 0), (0, QPI - QPI_REAL), (0, 0)))         # [B, 328, 8]
    xflat = xflat.reshape(B * QPI, CP)
    xflat = jnp.pad(xflat, ((0, XROWS - B * QPI), (0, 0)))                # [696, 8]
    xflat = xflat.astype(jnp.bfloat16)

    mask = _pool_mask()

    flops = (2 * KH * KW * L * CP * C_HID_PAD
             + 2 * B * QPI * C_HID_PAD
             + 2 * B * C_HID_PAD * OUT_PAD)
    bytes_accessed = (2 * (XROWS * CP + KH * KW * CP * C_HID_PAD + C_HID_PAD * OUT_PAD)
                      + 4 * (C_HID_PAD + OUT_PAD + QPI + B * OUT_PAD))
    ce = pl.CostEstimate(flops=flops, transcendentals=B * OUT_PAD,
                         bytes_accessed=bytes_accessed)

    out_pad = pl.pallas_call(
        cnn_kernel,
        out_shape=jax.ShapeDtypeStruct((B, OUT_PAD), jnp.float32),
        in_specs=[pl.BlockSpec(memory_space=pltpu.MemorySpace.VMEM)] * 6,
        out_specs=pl.BlockSpec(memory_space=pltpu.MemorySpace.VMEM),
        scratch_shapes=[pltpu.VMEM((L, C_HID_PAD), jnp.float32)],
        cost_estimate=ce,
    )(xflat, w1p, b1p, w2p, b2p, mask)

    return out_pad[:, :NUM_CLASSES]


# ---------------- pure-JAX f32 reference (correctness check only) ----------------
def im2col_nchw(x_nchw):
    Bx, C, Hx, Wx = x_nchw.shape
    x = jnp.transpose(x_nchw, (0, 2, 3, 1))
    xp = jnp.pad(x, ((0, 0), (1, 1), (1, 1), (0, 0)))
    patches = jnp.concatenate(
        [xp[:, i:i + Hx, j:j + Wx, :] for i in range(KH) for j in range(KW)],
        axis=-1,
    )
    return patches.reshape(Bx, Hx * Wx, KH * KW * C)


def reference_forward(x_nchw, params):
    w1, b1, w2, b2 = params
    patches = im2col_nchw(x_nchw.astype(jnp.float32))
    h = jnp.maximum(jnp.einsum("bpk,kc->bpc", patches, w1) + b1[None, :, :], 0.0)
    pooled = jnp.mean(h, axis=1)
    logits = pooled @ w2 + b2
    return jax.nn.softmax(logits, axis=-1)


if __name__ == "__main__":
    key = jax.random.PRNGKey(0)
    # Input matches the PyTorch NCHW convention: [batch, channels, H, W]
    x = jax.random.normal(key, (B, C_IN, H, W), jnp.float32)

    params = make_params()
    w1p, b1p, w2p, b2p = pad_params(params)

    fwd = jax.jit(keras_wrapper_forward)
    preds = jax.block_until_ready(fwd(x, w1p, b1p, w2p, b2p))

    ref = reference_forward(x, params)
    assert preds.shape == (B, NUM_CLASSES)
    # Tolerance covers bf16 MXU operands (f32 accumulation) vs the f32 reference.
    assert jnp.allclose(preds, ref, atol=1e-2, rtol=1e-2), "mismatch vs f32 reference"
    assert jnp.allclose(jnp.sum(preds, axis=-1), 1.0, atol=1e-5), "softmax not normalized"

    print("KERNEL_OK")
</pallas_src>

<mosaic_0001>
module attributes {stable_mosaic.version = 11 : i64} {
  func.func @cnn_kernel(%arg0: memref<696x8xbf16, #tpu.memory_space<vmem>>, %arg1: memref<72x128xbf16, #tpu.memory_space<vmem>>, %arg2: memref<1x128xf32, #tpu.memory_space<vmem>>, %arg3: memref<128x128xbf16, #tpu.memory_space<vmem>>, %arg4: memref<1x128xf32, #tpu.memory_space<vmem>>, %arg5: memref<328x1xf32, #tpu.memory_space<vmem>>, %arg6: memref<2x128xf32, #tpu.memory_space<vmem>>, %arg7: memref<656x128xf32, #tpu.memory_space<vmem>>) attributes {dimension_semantics = [], scalar_prefetch = 0 : i64, scratch_operands = 1 : i64, tpu.core_type = #tpu.core_type<tc>} {
    %c0 = arith.constant 0 : index
    %c0_0 = arith.constant 0 : index
    %0 = vector.load %arg0[%c0, %c0_0] : memref<696x8xbf16, #tpu.memory_space<vmem>>, vector<656x8xbf16>
    %c0_1 = arith.constant 0 : index
    %c0_2 = arith.constant 0 : index
    %1 = vector.load %arg1[%c0_1, %c0_2] : memref<72x128xbf16, #tpu.memory_space<vmem>>, vector<8x128xbf16>
    %cst = arith.constant dense<0.000000e+00> : vector<656x128xf32>
    %2 = tpu.matmul %0, %1, %cst {dimension_numbers = #tpu.dot_dimension_numbers<[1], [0], [0], [1], [0, 0, 1, 1], [], []>} : vector<656x8xbf16>, vector<8x128xbf16>, vector<656x128xf32> -> vector<656x128xf32>
    %c0_3 = arith.constant 0 : index
    %c0_4 = arith.constant 0 : index
    %3 = vector.load %arg7[%c0_3, %c0_4] : memref<656x128xf32, #tpu.memory_space<vmem>>, vector<656x128xf32>
    tpu.vector_store %arg7[%c0_3, %c0_4], %2 {strides = array<i32>} : memref<656x128xf32, #tpu.memory_space<vmem>>, vector<656x128xf32>,
    %c1 = arith.constant 1 : index
    %c0_5 = arith.constant 0 : index
    %4 = vector.load %arg0[%c1, %c0_5] : memref<696x8xbf16, #tpu.memory_space<vmem>>, vector<656x8xbf16>
    %c8 = arith.constant 8 : index
    %c0_6 = arith.constant 0 : index
    %5 = vector.load %arg1[%c8, %c0_6] : memref<72x128xbf16, #tpu.memory_space<vmem>>, vector<8x128xbf16>
    %cst_7 = arith.constant dense<0.000000e+00> : vector<656x128xf32>
    %6 = tpu.matmul %4, %5, %cst_7 {dimension_numbers = #tpu.dot_dimension_numbers<[1], [0], [0], [1], [0, 0, 1, 1], [], []>} : vector<656x8xbf16>, vector<8x128xbf16>, vector<656x128xf32> -> vector<656x128xf32>
    %c0_8 = arith.constant 0 : index
    %c0_9 = arith.constant 0 : index
    %7 = vector.load %arg7[%c0_8, %c0_9] : memref<656x128xf32, #tpu.memory_space<vmem>>, vector<656x128xf32>
    %8 = arith.addf %7, %6 : vector<656x128xf32>
    %c0_10 = arith.constant 0 : index
    %c0_11 = arith.constant 0 : index
    %9 = vector.load %arg7[%c0_10, %c0_11] : memref<656x128xf32, #tpu.memory_space<vmem>>, vector<656x128xf32>
    tpu.vector_store %arg7[%c0_10, %c0_11], %8 {strides = array<i32>} : memref<656x128xf32, #tpu.memory_space<vmem>>, vector<656x128xf32>,
    %c2 = arith.constant 2 : index
    %c0_12 = arith.constant 0 : index
    %10 = vector.load %arg0[%c2, %c0_12] : memref<696x8xbf16, #tpu.memory_space<vmem>>, vector<656x8xbf16>
    %c16 = arith.constant 16 : index
    %c0_13 = arith.constant 0 : index
    %11 = vector.load %arg1[%c16, %c0_13] : memref<72x128xbf16, #tpu.memory_space<vmem>>, vector<8x128xbf16>
    %cst_14 = arith.constant dense<0.000000e+00> : vector<656x128xf32>
    %12 = tpu.matmul %10, %11, %cst_14 {dimension_numbers = #tpu.dot_dimension_numbers<[1], [0], [0], [1], [0, 0, 1, 1], [], []>} : vector<656x8xbf16>, vector<8x128xbf16>, vector<656x128xf32> -> vector<656x128xf32>
    %c0_15 = arith.constant 0 : index
    %c0_16 = arith.constant 0 : index
    %13 = vector.load %arg7[%c0_15, %c0_16] : memref<656x128xf32, #tpu.memory_space<vmem>>, vector<656x128xf32>
    %14 = arith.addf %13, %12 : vector<656x128xf32>
    %c0_17 = arith.constant 0 : index
    %c0_18 = arith.constant 0 : index
    %15 = vector.load %arg7[%c0_17, %c0_18] : memref<656x128xf32, #tpu.memory_space<vmem>>, vector<656x128xf32>
    tpu.vector_store %arg7[%c0_17, %c0_18], %14 {strides = array<i32>} : memref<656x128xf32, #tpu.memory_space<vmem>>, vector<656x128xf32>,
    %c18 = arith.constant 18 : index
    %c0_19 = arith.constant 0 : index
    %16 = vector.load %arg0[%c18, %c0_19] : memref<696x8xbf16, #tpu.memory_space<vmem>>, vector<656x8xbf16>
    %c24 = arith.constant 24 : index
    %c0_20 = arith.constant 0 : index
    %17 = vector.load %arg1[%c24, %c0_20] : memref<72x128xbf16, #tpu.memory_space<vmem>>, vector<8x128xbf16>
    %cst_21 = arith.constant dense<0.000000e+00> : vector<656x128xf32>
    %18 = tpu.matmul %16, %17, %cst_21 {dimension_numbers = #tpu.dot_dimension_numbers<[1], [0], [0], [1], [0, 0, 1, 1], [], []>} : vector<656x8xbf16>, vector<8x128xbf16>, vector<656x128xf32> -> vector<656x128xf32>
    %c0_22 = arith.constant 0 : index
    %c0_23 = arith.constant 0 : index
    %19 = vector.load %arg7[%c0_22, %c0_23] : memref<656x128xf32, #tpu.memory_space<vmem>>, vector<656x128xf32>
    %20 = arith.addf %19, %18 : vector<656x128xf32>
    %c0_24 = arith.constant 0 : index
    %c0_25 = arith.constant 0 : index
    %21 = vector.load %arg7[%c0_24, %c0_25] : memref<656x128xf32, #tpu.memory_space<vmem>>, vector<656x128xf32>
    tpu.vector_store %arg7[%c0_24, %c0_25], %20 {strides = array<i32>} : memref<656x128xf32, #tpu.memory_space<vmem>>, vector<656x128xf32>,
    %c19 = arith.constant 19 : index
    %c0_26 = arith.constant 0 : index
    %22 = vector.load %arg0[%c19, %c0_26] : memref<696x8xbf16, #tpu.memory_space<vmem>>, vector<656x8xbf16>
    %c32 = arith.constant 32 : index
    %c0_27 = arith.constant 0 : index
    %23 = vector.load %arg1[%c32, %c0_27] : memref<72x128xbf16, #tpu.memory_space<vmem>>, vector<8x128xbf16>
    %cst_28 = arith.constant dense<0.000000e+00> : vector<656x128xf32>
    %24 = tpu.matmul %22, %23, %cst_28 {dimension_numbers = #tpu.dot_dimension_numbers<[1], [0], [0], [1], [0, 0, 1, 1], [], []>} : vector<656x8xbf16>, vector<8x128xbf16>, vector<656x128xf32> -> vector<656x128xf32>
    %c0_29 = arith.constant 0 : index
    %c0_30 = arith.constant 0 : index
    %25 = vector.load %arg7[%c0_29, %c0_30] : memref<656x128xf32, #tpu.memory_space<vmem>>, vector<656x128xf32>
    %26 = arith.addf %25, %24 : vector<656x128xf32>
    %c0_31 = arith.constant 0 : index
    %c0_32 = arith.constant 0 : index
    %27 = vector.load %arg7[%c0_31, %c0_32] : memref<656x128xf32, #tpu.memory_space<vmem>>, vector<656x128xf32>
    tpu.vector_store %arg7[%c0_31, %c0_32], %26 {strides = array<i32>} : memref<656x128xf32, #tpu.memory_space<vmem>>, vector<656x128xf32>,
    %c20 = arith.constant 20 : index
    %c0_33 = arith.constant 0 : index
    %28 = vector.load %arg0[%c20, %c0_33] : memref<696x8xbf16, #tpu.memory_space<vmem>>, vector<656x8xbf16>
    %c40 = arith.constant 40 : index
    %c0_34 = arith.constant 0 : index
    %29 = vector.load %arg1[%c40, %c0_34] : memref<72x128xbf16, #tpu.memory_space<vmem>>, vector<8x128xbf16>
    %cst_35 = arith.constant dense<0.000000e+00> : vector<656x128xf32>
    %30 = tpu.matmul %28, %29, %cst_35 {dimension_numbers = #tpu.dot_dimension_numbers<[1], [0], [0], [1], [0, 0, 1, 1], [], []>} : vector<656x8xbf16>, vector<8x128xbf16>, vector<656x128xf32> -> vector<656x128xf32>
    %c0_36 = arith.constant 0 : index
    %c0_37 = arith.constant 0 : index
    %31 = vector.load %arg7[%c0_36, %c0_37] : memref<656x128xf32, #tpu.memory_space<vmem>>, vector<656x128xf32>
    %32 = arith.addf %31, %30 : vector<656x128xf32>
    %c0_38 = arith.constant 0 : index
    %c0_39 = arith.constant 0 : index
    %33 = vector.load %arg7[%c0_38, %c0_39] : memref<656x128xf32, #tpu.memory_space<vmem>>, vector<656x128xf32>
    tpu.vector_store %arg7[%c0_38, %c0_39], %32 {strides = array<i32>} : memref<656x128xf32, #tpu.memory_space<vmem>>, vector<656x128xf32>,
    %c36 = arith.constant 36 : index
    %c0_40 = arith.constant 0 : index
    %34 = vector.load %arg0[%c36, %c0_40] : memref<696x8xbf16, #tpu.memory_space<vmem>>, vector<656x8xbf16>
    %c48 = arith.constant 48 : index
    %c0_41 = arith.constant 0 : index
    %35 = vector.load %arg1[%c48, %c0_41] : memref<72x128xbf16, #tpu.memory_space<vmem>>, vector<8x128xbf16>
    %cst_42 = arith.constant dense<0.000000e+00> : vector<656x128xf32>
    %36 = tpu.matmul %34, %35, %cst_42 {dimension_numbers = #tpu.dot_dimension_numbers<[1], [0], [0], [1], [0, 0, 1, 1], [], []>} : vector<656x8xbf16>, vector<8x128xbf16>, vector<656x128xf32> -> vector<656x128xf32>
    %c0_43 = arith.constant 0 : index
    %c0_44 = arith.constant 0 : index
    %37 = vector.load %arg7[%c0_43, %c0_44] : memref<656x128xf32, #tpu.memory_space<vmem>>, vector<656x128xf32>
    %38 = arith.addf %37, %36 : vector<656x128xf32>
    %c0_45 = arith.constant 0 : index
    %c0_46 = arith.constant 0 : index
    %39 = vector.load %arg7[%c0_45, %c0_46] : memref<656x128xf32, #tpu.memory_space<vmem>>, vector<656x128xf32>
    tpu.vector_store %arg7[%c0_45, %c0_46], %38 {strides = array<i32>} : memref<656x128xf32, #tpu.memory_space<vmem>>, vector<656x128xf32>,
    %c37 = arith.constant 37 : index
    %c0_47 = arith.constant 0 : index
    %40 = vector.load %arg0[%c37, %c0_47] : memref<696x8xbf16, #tpu.memory_space<vmem>>, vector<656x8xbf16>
    %c56 = arith.constant 56 : index
    %c0_48 = arith.constant 0 : index
    %41 = vector.load %arg1[%c56, %c0_48] : memref<72x128xbf16, #tpu.memory_space<vmem>>, vector<8x128xbf16>
    %cst_49 = arith.constant dense<0.000000e+00> : vector<656x128xf32>
    %42 = tpu.matmul %40, %41, %cst_49 {dimension_numbers = #tpu.dot_dimension_numbers<[1], [0], [0], [1], [0, 0, 1, 1], [], []>} : vector<656x8xbf16>, vector<8x128xbf16>, vector<656x128xf32> -> vector<656x128xf32>
    %c0_50 = arith.constant 0 : index
    %c0_51 = arith.constant 0 : index
    %43 = vector.load %arg7[%c0_50, %c0_51] : memref<656x128xf32, #tpu.memory_space<vmem>>, vector<656x128xf32>
    %44 = arith.addf %43, %42 : vector<656x128xf32>
    %c0_52 = arith.constant 0 : index
    %c0_53 = arith.constant 0 : index
    %45 = vector.load %arg7[%c0_52, %c0_53] : memref<656x128xf32, #tpu.memory_space<vmem>>, vector<656x128xf32>
    tpu.vector_store %arg7[%c0_52, %c0_53], %44 {strides = array<i32>} : memref<656x128xf32, #tpu.memory_space<vmem>>, vector<656x128xf32>,
    %c38 = arith.constant 38 : index
    %c0_54 = arith.constant 0 : index
    %46 = vector.load %arg0[%c38, %c0_54] : memref<696x8xbf16, #tpu.memory_space<vmem>>, vector<656x8xbf16>
    %c64 = arith.constant 64 : index
    %c0_55 = arith.constant 0 : index
    %47 = vector.load %arg1[%c64, %c0_55] : memref<72x128xbf16, #tpu.memory_space<vmem>>, vector<8x128xbf16>
    %cst_56 = arith.constant dense<0.000000e+00> : vector<656x128xf32>
    %48 = tpu.matmul %46, %47, %cst_56 {dimension_numbers = #tpu.dot_dimension_numbers<[1], [0], [0], [1], [0, 0, 1, 1], [], []>} : vector<656x8xbf16>, vector<8x128xbf16>, vector<656x128xf32> -> vector<656x128xf32>
    %c0_57 = arith.constant 0 : index
    %c0_58 = arith.constant 0 : index
    %49 = vector.load %arg7[%c0_57, %c0_58] : memref<656x128xf32, #tpu.memory_space<vmem>>, vector<656x128xf32>
    %50 = arith.addf %49, %48 : vector<656x128xf32>
    %c0_59 = arith.constant 0 : index
    %c0_60 = arith.constant 0 : index
    %51 = vector.load %arg7[%c0_59, %c0_60] : memref<656x128xf32, #tpu.memory_space<vmem>>, vector<656x128xf32>
    tpu.vector_store %arg7[%c0_59, %c0_60], %50 {strides = array<i32>} : memref<656x128xf32, #tpu.memory_space<vmem>>, vector<656x128xf32>,
    %c0_61 = arith.constant 0 : index
    %c0_62 = arith.constant 0 : index
    %52 = vector.load %arg7[%c0_61, %c0_62] : memref<656x128xf32, #tpu.memory_space<vmem>>, vector<656x128xf32>
    %c0_63 = arith.constant 0 : index
    %c0_64 = arith.constant 0 : index
    %53 = vector.load %arg2[%c0_63, %c0_64] : memref<1x128xf32, #tpu.memory_space<vmem>>, vector<1x128xf32>
    %54 = vector.broadcast %53 : vector<1x128xf32> to vector<656x128xf32>
    %55 = arith.addf %52, %54 : vector<656x128xf32>
    %cst_65 = arith.constant 0.000000e+00 : f32
    %56 = vector.broadcast %cst_65 : f32 to vector<656x128xf32>
    %57 = arith.maximumf %55, %56 : vector<656x128xf32>
    %c0_66 = arith.constant 0 : index
    %c0_67 = arith.constant 0 : index
    %58 = vector.load %arg7[%c0_66, %c0_67] : memref<656x128xf32, #tpu.memory_space<vmem>>, vector<656x128xf32>
    tpu.vector_store %arg7[%c0_66, %c0_67], %57 {strides = array<i32>} : memref<656x128xf32, #tpu.memory_space<vmem>>, vector<656x128xf32>,
    %c0_68 = arith.constant 0 : index
    %c0_69 = arith.constant 0 : index
    %59 = vector.load %arg7[%c0_68, %c0_69] : memref<656x128xf32, #tpu.memory_space<vmem>>, vector<328x128xf32>
    %c0_70 = arith.constant 0 : index
    %c0_71 = arith.constant 0 : index
    %60 = vector.load %arg5[%c0_70, %c0_71] : memref<328x1xf32, #tpu.memory_space<vmem>>, vector<328x1xf32>
    %61 = vector.broadcast %60 : vector<328x1xf32> to vector<328x128xf32>
    %62 = arith.mulf %59, %61 : vector<328x128xf32>
    %cst_72 = arith.constant dense<0.000000e+00> : vector<128xf32>
    %63 = vector.multi_reduction <add>, %62, %cst_72 [0] : vector<328x128xf32> to vector<128xf32>
    %64 = vector.shape_cast %63 : vector<128xf32> to vector<1x128xf32>
    %c328 = arith.constant 328 : index
    %c0_73 = arith.constant 0 : index
    %65 = vector.load %arg7[%c328, %c0_73] : memref<656x128xf32, #tpu.memory_space<vmem>>, vector<328x128xf32>
    %c0_74 = arith.constant 0 : index
    %c0_75 = arith.constant 0 : index
    %66 = vector.load %arg5[%c0_74, %c0_75] : memref<328x1xf32, #tpu.memory_space<vmem>>, vector<328x1xf32>
    %67 = vector.broadcast %66 : vector<328x1xf32> to vector<328x128xf32>
    %68 = arith.mulf %65, %67 : vector<328x128xf32>
    %cst_76 = arith.constant dense<0.000000e+00> : vector<128xf32>
    %69 = vector.multi_reduction <add>, %68, %cst_76 [0] : vector<328x128xf32> to vector<128xf32>
    %70 = vector.shape_cast %69 : vector<128xf32> to vector<1x128xf32>
    %71 = tpu.concatenate %64, %70 in 0 : vector<1x128xf32>, vector<1x128xf32> -> vector<2x128xf32>
    %72 = arith.truncf %71 : vector<2x128xf32> to vector<2x128xbf16>
    %c0_77 = arith.constant 0 : index
    %c0_78 = arith.constant 0 : index
    %73 = vector.load %arg3[%c0_77, %c0_78] : memref<128x128xbf16, #tpu.memory_space<vmem>>, vector<128x128xbf16>
    %cst_79 = arith.constant dense<0.000000e+00> : vector<2x128xf32>
    %74 = tpu.matmul %72, %73, %cst_79 {dimension_numbers = #tpu.dot_dimension_numbers<[1], [0], [0], [1], [0, 0, 1, 1], [], []>} : vector<2x128xbf16>, vector<128x128xbf16>, vector<2x128xf32> -> vector<2x128xf32>
    %c0_80 = arith.constant 0 : index
    %c0_81 = arith.constant 0 : index
    %75 = vector.load %arg4[%c0_80, %c0_81] : memref<1x128xf32, #tpu.memory_space<vmem>>, vector<1x128xf32>
    %76 = vector.broadcast %75 : vector<1x128xf32> to vector<2x128xf32>
    %77 = arith.addf %74, %76 : vector<2x128xf32>
    %cst_82 = arith.constant dense<0xFF800000> : vector<2xf32>
    %78 = vector.multi_reduction <maximumf>, %77, %cst_82 [1] : vector<2x128xf32> to vector<2xf32>
    %79 = vector.shape_cast %78 : vector<2xf32> to vector<2x1xf32>
    %80 = vector.broadcast %79 : vector<2x1xf32> to vector<2x128xf32>
    %81 = arith.subf %77, %80 : vector<2x128xf32>
    %82 = math.exp %81 : vector<2x128xf32>
    %cst_83 = arith.constant dense<0.000000e+00> : vector<2xf32>
    %83 = vector.multi_reduction <add>, %82, %cst_83 [1] : vector<2x128xf32> to vector<2xf32>
    %84 = vector.shape_cast %83 : vector<2xf32> to vector<2x1xf32>
    %85 = vector.broadcast %84 : vector<2x1xf32> to vector<2x128xf32>
    %86 = arith.divf %82, %85 : vector<2x128xf32>
    %c0_84 = arith.constant 0 : index
    %c0_85 = arith.constant 0 : index
    %87 = vector.load %arg6[%c0_84, %c0_85] : memref<2x128xf32, #tpu.memory_space<vmem>>, vector<2x128xf32>
    tpu.vector_store %arg6[%c0_84, %c0_85], %86 {strides = array<i32>} : memref<2x128xf32, #tpu.memory_space<vmem>>, vector<2x128xf32>,
    return
  }
}

</mosaic_0001>

<llo_original>
// kernel: keras_wrapper_forward.1
$region0: #{keras_wrapper_forward.1}
  #allocation0 [shape = 'u32[]', space=smem, size = 0x4, offset = 0x4, fixed_abs, tag = 'smem constant byte address 0x4 - core index']
  #allocation1 [shape = 'u32[144,128]{1,0:T(1,128)}', space=vmem, size = 0x12000, scoped, tag = 'internal scratch']
  #allocation2 [shape = 'f32[656,128]{1,0:T(8,128)}', space=vmem, size = 0x52000, scoped, tag = 'scratch operand']
  %s0 = inlined_call_operand.vmem [shape: bf16[696,8], index: 0, kind: input, shape index: {}]
  %s1 = inlined_call_operand.vmem [shape: bf16[72,128], index: 1, kind: input, shape index: {}]
  %s2 = inlined_call_operand.vmem [shape: f32[1,128], index: 2, kind: input, shape index: {}]
  %s3 = inlined_call_operand.vmem [shape: bf16[128,128], index: 3, kind: input, shape index: {}]
  %s4 = inlined_call_operand.vmem [shape: f32[1,128], index: 4, kind: input, shape index: {}]
  %s5 = inlined_call_operand.vmem [shape: f32[328,1], index: 5, kind: input, shape index: {}]
  %s6 = inlined_call_operand.hbm [shape: f32[2,128], index: 6, kind: output, shape index: {}]
  %s7 = sld [smem:[#allocation0]]
  $region34: #{keras_wrapper_forward.1} parent=0
    _
  %s9 = ssub.s32 1, %s7
  %s10 = scalar_select 0, %s9, %s7
  $region1: #{keras_wrapper_forward.1} parent=0
    #allocation3 [shape = 'u8[1024]{0}', space=vmem, size = 0x400, scoped, tag = 'output window, operand 0, single buffered']
    #allocation4 [shape = 's32[1]{0}', space=sflag, size = 0x4, scoped, tag = 'scoped memory for keras_wrapper_forward.1']
    %11 = vsyncpa [#allocation4], 0
    // Predicated region
    $region2: #{keras_wrapper_forward.1} parent=1 // pred_check
      _
    $region3: #{keras_wrapper_forward.1} parent=1 // pred_check_branch
      %13 = sbr.rel (0) target = $region5
    $region4: #{keras_wrapper_forward.1} parent=1 // pred_region
      _
    $region5: #{keras_wrapper_forward.1} parent=1 // pred_fallthru
      _
    // Predicated region
    $region6: #{keras_wrapper_forward.1} parent=1 // pred_check
      _
    $region7: #{keras_wrapper_forward.1} parent=1 // pred_check_branch
      %15 = sbr.rel (0) target = $region9
    $region8: #{keras_wrapper_forward.1} parent=1 // pred_region
      _
    $region9: #{keras_wrapper_forward.1} parent=1 // pred_fallthru
      _
    // Predicated region
    $region10: #{keras_wrapper_forward.1} parent=1 // pred_check
      _
    $region11: #{keras_wrapper_forward.1} parent=1 // pred_check_branch
      %17 = sbr.rel (0) target = $region13
    $region12: #{keras_wrapper_forward.1} parent=1 // pred_region
      _
    $region13: #{keras_wrapper_forward.1} parent=1 // pred_fallthru
      _
    // Predicated region
    $region14: #{keras_wrapper_forward.1} parent=1 // pred_check
      _
    $region15: #{keras_wrapper_forward.1} parent=1 // pred_check_branch
      %19 = sbr.rel (0) target = $region17
    $region16: #{keras_wrapper_forward.1} parent=1 // pred_region
      _
    $region17: #{keras_wrapper_forward.1} parent=1 // pred_fallthru
      _
    // Predicated region
    $region18: #{keras_wrapper_forward.1} parent=1 // pred_check
      _
    $region19: #{keras_wrapper_forward.1} parent=1 // pred_check_branch
      %21 = sbr.rel (0) target = $region21
    $region20: #{keras_wrapper_forward.1} parent=1 // pred_region
      _
    $region21: #{keras_wrapper_forward.1} parent=1 // pred_fallthru
      _
    // Predicated region
    $region22: #{keras_wrapper_forward.1} parent=1 // pred_check
      _
    $region23: #{keras_wrapper_forward.1} parent=1 // pred_check_branch
      %23 = sbr.rel (0) target = $region25
    $region24: #{keras_wrapper_forward.1} parent=1 // pred_region
      _
    $region25: #{keras_wrapper_forward.1} parent=1 // pred_fallthru
      _
    %v25 = vld [vmem:[%s0] sm:$0xf]
    %v26 = vld [vmem:[%s0 + $0x4] sm:$0xf]
    %v27 = vld [vmem:[%s0 + $0x8] sm:$0xf]
    %v28 = vld [vmem:[%s0 + $0xc] sm:$0xf]
    %v29 = vld [vmem:[%s0 + $0x10] sm:$0xf]
    %v30 = vld [vmem:[%s0 + $0x14] sm:$0xf]
    %v31 = vld [vmem:[%s0 + $0x18] sm:$0xf]
    %v32 = vld [vmem:[%s0 + $0x1c] sm:$0xf]
    %v33 = vld [vmem:[%s0 + $0x20] sm:$0xf]
    %v34 = vld [vmem:[%s0 + $0x24] sm:$0xf]
    %v35 = vld [vmem:[%s0 + $0x28] sm:$0xf]
    %v36 = vld [vmem:[%s0 + $0x2c] sm:$0xf]
    %v37 = vld [vmem:[%s0 + $0x30] sm:$0xf]
    %v38 = vld [vmem:[%s0 + $0x34] sm:$0xf]
    %v39 = vld [vmem:[%s0 + $0x38] sm:$0xf]
    %v40 = vld [vmem:[%s0 + $0x3c] sm:$0xf]
    %v41 = vld [vmem:[%s0 + $0x40] sm:$0xf]
    %v42 = vld [vmem:[%s0 + $0x44] sm:$0xf]
    %v43 = vld [vmem:[%s0 + $0x48] sm:$0xf]
    %v44 = vld [vmem:[%s0 + $0x4c] sm:$0xf]
    %v45 = vld [vmem:[%s0 + $0x50] sm:$0xf]
    %v46 = vld [vmem:[%s0 + $0x54] sm:$0xf]
    %v47 = vld [vmem:[%s0 + $0x58] sm:$0xf]
    %v48 = vld [vmem:[%s0 + $0x5c] sm:$0xf]
    %v49 = vld [vmem:[%s0 + $0x60] sm:$0xf]
    %v50 = vld [vmem:[%s0 + $0x64] sm:$0xf]
    %v51 = vld [vmem:[%s0 + $0x68] sm:$0xf]
    %v52 = vld [vmem:[%s0 + $0x6c] sm:$0xf]
    %v53 = vld [vmem:[%s0 + $0x70] sm:$0xf]
    %v54 = vld [vmem:[%s0 + $0x74] sm:$0xf]
    %v55 = vld [vmem:[%s0 + $0x78] sm:$0xf]
    %v56 = vld [vmem:[%s0 + $0x7c] sm:$0xf]
    %v57 = vld [vmem:[%s0 + $0x80] sm:$0xf]
    %v58 = vld [vmem:[%s0 + $0x84] sm:$0xf]
    %v59 = vld [vmem:[%s0 + $0x88] sm:$0xf]
    %v60 = vld [vmem:[%s0 + $0x8c] sm:$0xf]
    %v61 = vld [vmem:[%s0 + $0x90] sm:$0xf]
    %v62 = vld [vmem:[%s0 + $0x94] sm:$0xf]
    %v63 = vld [vmem:[%s0 + $0x98] sm:$0xf]
    %v64 = vld [vmem:[%s0 + $0x9c] sm:$0xf]
    %v65 = vld [vmem:[%s0 + $0xa0] sm:$0xf]
    %v66 = vld [vmem:[%s0 + $0xa4] sm:$0xf]
    %v67 = vld [vmem:[%s0 + $0xa8] sm:$0xf]
    %v68 = vld [vmem:[%s0 + $0xac] sm:$0xf]
    %v69 = vld [vmem:[%s0 + $0xb0] sm:$0xf]
    %v70 = vld [vmem:[%s0 + $0xb4] sm:$0xf]
    %v71 = vld [vmem:[%s0 + $0xb8] sm:$0xf]
    %v72 = vld [vmem:[%s0 + $0xbc] sm:$0xf]
    %v73 = vld [vmem:[%s0 + $0xc0] sm:$0xf]
    %v74 = vld [vmem:[%s0 + $0xc4] sm:$0xf]
    %v75 = vld [vmem:[%s0 + $0xc8] sm:$0xf]
    %v76 = vld [vmem:[%s0 + $0xcc] sm:$0xf]
    %v77 = vld [vmem:[%s0 + $0xd0] sm:$0xf]
    %v78 = vld [vmem:[%s0 + $0xd4] sm:$0xf]
    %v79 = vld [vmem:[%s0 + $0xd8] sm:$0xf]
    %v80 = vld [vmem:[%s0 + $0xdc] sm:$0xf]
    %v81 = vld [vmem:[%s0 + $0xe0] sm:$0xf]
    %v82 = vld [vmem:[%s0 + $0xe4] sm:$0xf]
    %v83 = vld [vmem:[%s0 + $0xe8] sm:$0xf]
    %v84 = vld [vmem:[%s0 + $0xec] sm:$0xf]
    %v85 = vld [vmem:[%s0 + $0xf0] sm:$0xf]
    %v86 = vld [vmem:[%s0 + $0xf4] sm:$0xf]
    %v87 = vld [vmem:[%s0 + $0xf8] sm:$0xf]
    %v88 = vld [vmem:[%s0 + $0xfc] sm:$0xf]
    %v89 = vld [vmem:[%s0 + $0x100] sm:$0xf]
    %v90 = vld [vmem:[%s0 + $0x104] sm:$0xf]
    %v91 = vld [vmem:[%s0 + $0x108] sm:$0xf]
    %v92 = vld [vmem:[%s0 + $0x10c] sm:$0xf]
    %v93 = vld [vmem:[%s0 + $0x110] sm:$0xf]
    %v94 = vld [vmem:[%s0 + $0x114] sm:$0xf]
    %v95 = vld [vmem:[%s0 + $0x118] sm:$0xf]
    %v96 = vld [vmem:[%s0 + $0x11c] sm:$0xf]
    %v97 = vld [vmem:[%s0 + $0x120] sm:$0xf]
    %v98 = vld [vmem:[%s0 + $0x124] sm:$0xf]
    %v99 = vld [vmem:[%s0 + $0x128] sm:$0xf]
    %v100 = vld [vmem:[%s0 + $0x12c] sm:$0xf]
    %v101 = vld [vmem:[%s0 + $0x130] sm:$0xf]
    %v102 = vld [vmem:[%s0 + $0x134] sm:$0xf]
    %v103 = vld [vmem:[%s0 + $0x138] sm:$0xf]
    %v104 = vld [vmem:[%s0 + $0x13c] sm:$0xf]
    %v105 = vld [vmem:[%s0 + $0x140] sm:$0xf]
    %v106 = vld [vmem:[%s0 + $0x144] sm:$0xf]
    %v107 = vld [vmem:[%s1] sm:$0xf]
    %v190 = vunpack.c.l.b16 %v25
    %v191 = vunpack.c.l.b16 %v26
    %v192 = vunpack.c.l.b16 %v27
    %v193 = vunpack.c.l.b16 %v28
    %v194 = vunpack.c.l.b16 %v29
    %v195 = vunpack.c.l.b16 %v30
    %v196 = vunpack.c.l.b16 %v31
    %v197 = vunpack.c.l.b16 %v32
    %v198 = vunpack.c.l.b16 %v33
    %v199 = vunpack.c.l.b16 %v34
    %v200 = vunpack.c.l.b16 %v35
    %v201 = vunpack.c.l.b16 %v36
    %v202 = vunpack.c.l.b16 %v37
    %v203 = vunpack.c.l.b16 %v38
    %v204 = vunpack.c.l.b16 %v39
    %v205 = vunpack.c.l.b16 %v40
    %v206 = vunpack.c.l.b16 %v41
    %v207 = vunpack.c.l.b16 %v42
    %v208 = vunpack.c.l.b16 %v43
    %v209 = vunpack.c.l.b16 %v44
    %v210 = vunpack.c.l.b16 %v45
    %v211 = vunpack.c.l.b16 %v46
    %v212 = vunpack.c.l.b16 %v47
    %v213 = vunpack.c.l.b16 %v48
    %v214 = vunpack.c.l.b16 %v49
    %v215 = vunpack.c.l.b16 %v50
    %v216 = vunpack.c.l.b16 %v51
    %v217 = vunpack.c.l.b16 %v52
    %v218 = vunpack.c.l.b16 %v53
    %v219 = vunpack.c.l.b16 %v54
    %v220 = vunpack.c.l.b16 %v55
    %v221 = vunpack.c.l.b16 %v56
    %v222 = vunpack.c.l.b16 %v57
    %v223 = vunpack.c.l.b16 %v58
    %v224 = vunpack.c.l.b16 %v59
    %v225 = vunpack.c.l.b16 %v60
    %v226 = vunpack.c.l.b16 %v61
    %v227 = vunpack.c.l.b16 %v62
    %v228 = vunpack.c.l.b16 %v63
    %v229 = vunpack.c.l.b16 %v64
    %v230 = vunpack.c.l.b16 %v65
    %v231 = vunpack.c.l.b16 %v66
    %v232 = vunpack.c.l.b16 %v67
    %v233 = vunpack.c.l.b16 %v68
    %v234 = vunpack.c.l.b16 %v69
    %v235 = vunpack.c.l.b16 %v70
    %v236 = vunpack.c.l.b16 %v71
    %v237 = vunpack.c.l.b16 %v72
    %v238 = vunpack.c.l.b16 %v73
    %v239 = vunpack.c.l.b16 %v74
    %v240 = vunpack.c.l.b16 %v75
    %v241 = vunpack.c.l.b16 %v76
    %v242 = vunpack.c.l.b16 %v77
    %v243 = vunpack.c.l.b16 %v78
    %v244 = vunpack.c.l.b16 %v79
    %v245 = vunpack.c.l.b16 %v80
    %v246 = vunpack.c.l.b16 %v81
    %v247 = vunpack.c.l.b16 %v82
    %v248 = vunpack.c.l.b16 %v83
    %v249 = vunpack.c.l.b16 %v84
    %v250 = vunpack.c.l.b16 %v85
    %v251 = vunpack.c.l.b16 %v86
    %v252 = vunpack.c.l.b16 %v87
    %v253 = vunpack.c.l.b16 %v88
    %v254 = vunpack.c.l.b16 %v89
    %v255 = vunpack.c.l.b16 %v90
    %v256 = vunpack.c.l.b16 %v91
    %v257 = vunpack.c.l.b16 %v92
    %v258 = vunpack.c.l.b16 %v93
    %v259 = vunpack.c.l.b16 %v94
    %v260 = vunpack.c.l.b16 %v95
    %v261 = vunpack.c.l.b16 %v96
    %v262 = vunpack.c.l.b16 %v97
    %v263 = vunpack.c.l.b16 %v98
    %v264 = vunpack.c.l.b16 %v99
    %v265 = vunpack.c.l.b16 %v100
    %v266 = vunpack.c.l.b16 %v101
    %v267 = vunpack.c.l.b16 %v102
    %v268 = vunpack.c.l.b16 %v103
    %v269 = vunpack.c.l.b16 %v104
    %v270 = vunpack.c.l.b16 %v105
    %v271 = vunpack.c.l.b16 %v106
    %v272 = vpack.c.b16 %v191, %v190
    %v273 = vpack.c.b16 %v193, %v192
    %v274 = vpack.c.b16 %v195, %v194
    %v275 = vpack.c.b16 %v197, %v196
    %v276 = vpack.c.b16 %v199, %v198
    %v277 = vpack.c.b16 %v201, %v200
    %v278 = vpack.c.b16 %v203, %v202
    %v279 = vpack.c.b16 %v205, %v204
    %v280 = vpack.c.b16 %v207, %v206
    %v281 = vpack.c.b16 %v209, %v208
    %v282 = vpack.c.b16 %v211, %v210
    %v283 = vpack.c.b16 %v213, %v212
    %v284 = vpack.c.b16 %v215, %v214
    %v285 = vpack.c.b16 %v217, %v216
    %v286 = vpack.c.b16 %v219, %v218
    %v287 = vpack.c.b16 %v221, %v220
    %v288 = vpack.c.b16 %v223, %v222
    %v289 = vpack.c.b16 %v225, %v224
    %v290 = vpack.c.b16 %v227, %v226
    %v291 = vpack.c.b16 %v229, %v228
    %v292 = vpack.c.b16 %v231, %v230
    %v293 = vpack.c.b16 %v233, %v232
    %v294 = vpack.c.b16 %v235, %v234
    %v295 = vpack.c.b16 %v237, %v236
    %v296 = vpack.c.b16 %v239, %v238
    %v297 = vpack.c.b16 %v241, %v240
    %v298 = vpack.c.b16 %v243, %v242
    %v299 = vpack.c.b16 %v245, %v244
    %v300 = vpack.c.b16 %v247, %v246
    %v301 = vpack.c.b16 %v249, %v248
    %v302 = vpack.c.b16 %v251, %v250
    %v303 = vpack.c.b16 %v253, %v252
    %v304 = vpack.c.b16 %v255, %v254
    %v305 = vpack.c.b16 %v257, %v256
    %v306 = vpack.c.b16 %v259, %v258
    %v307 = vpack.c.b16 %v261, %v260
    %v308 = vpack.c.b16 %v263, %v262
    %v309 = vpack.c.b16 %v265, %v264
    %v310 = vpack.c.b16 %v267, %v266
    %v311 = vpack.c.b16 %v269, %v268
    %v312 = vpack.c.b16 %v271, %v270
    %vm313 = vcmask 64512
    %v315 = vsel %vm313, %v272, 0
    %v318 = vsel %vm313, %v273, 0
    %v321 = vsel %vm313, %v274, 0
    %v324 = vsel %vm313, %v275, 0
    %v327 = vsel %vm313, %v276, 0
    %v330 = vsel %vm313, %v277, 0
    %v333 = vsel %vm313, %v278, 0
    %v336 = vsel %vm313, %v279, 0
    %v339 = vsel %vm313, %v280, 0
    %v342 = vsel %vm313, %v281, 0
    %v345 = vsel %vm313, %v282, 0
    %v348 = vsel %vm313, %v283, 0
    %v351 = vsel %vm313, %v284, 0
    %v354 = vsel %vm313, %v285, 0
    %v357 = vsel %vm313, %v286, 0
    %v360 = vsel %vm313, %v287, 0
    %v363 = vsel %vm313, %v288, 0
    %v366 = vsel %vm313, %v289, 0
    %v369 = vsel %vm313, %v290, 0
    %v372 = vsel %vm313, %v291, 0
    %v375 = vsel %vm313, %v292, 0
    %v378 = vsel %vm313, %v293, 0
    %v381 = vsel %vm313, %v294, 0
    %v384 = vsel %vm313, %v295, 0
    %v387 = vsel %vm313, %v296, 0
    %v390 = vsel %vm313, %v297, 0
    %v393 = vsel %vm313, %v298, 0
    %v396 = vsel %vm313, %v299, 0
    %v399 = vsel %vm313, %v300, 0
    %v402 = vsel %vm313, %v301, 0
    %v405 = vsel %vm313, %v302, 0
    %v408 = vsel %vm313, %v303, 0
    %v411 = vsel %vm313, %v304, 0
    %v414 = vsel %vm313, %v305, 0
    %v417 = vsel %vm313, %v306, 0
    %v420 = vsel %vm313, %v307, 0
    %v423 = vsel %vm313, %v308, 0
    %v426 = vsel %vm313, %v309, 0
    %v429 = vsel %vm313, %v310, 0
    %v432 = vsel %vm313, %v311, 0
    %v435 = vsel %vm313, %v312, 0
    %vm437 = vcmask 1043456
    %v439 = vsel %vm437, %v107, 0
    %441 = vmatprep.subr.bf16.mxu0 0
    %442 = vmatpush1.bf16.msra.mxu0 %v439
    %443 = vmatprep.subr.bf16.mxu0 0
    %444 = vmatpush1.bf16.msra.mxu0 0
    %445 = vmatprep.subr.bf16.mxu0 0
    %446 = vmatpush1.bf16.msra.mxu0 0
    %447 = vmatprep.subr.bf16.mxu0 0
    %448 = vmatpush1.bf16.msra.mxu0 0
    %449 = vmatprep.subr.bf16.mxu0 0
    %450 = vmatpush1.bf16.msra.mxu0 0
    %451 = vmatprep.subr.bf16.mxu0 0
    %452 = vmatpush1.bf16.msra.mxu0 0
    %453 = vmatprep.subr.bf16.mxu0 0
    %454 = vmatpush1.bf16.msra.mxu0 0
    %455 = vmatprep.subr.bf16.mxu0 0
    %456 = vmatpush1.bf16.msra.mxu0 0
    %457 = vmatprep.subr.bf16.mxu0 0
    %458 = vmatpush1.bf16.msra.mxu0 0
    %459 = vmatprep.subr.bf16.mxu0 0
    %460 = vmatpush1.bf16.msra.mxu0 0
    %461 = vmatprep.subr.bf16.mxu0 0
    %462 = vmatpush1.bf16.msra.mxu0 0
    %463 = vmatprep.subr.bf16.mxu0 0
    %464 = vmatpush1.bf16.msra.mxu0 0
    %465 = vmatprep.subr.bf16.mxu0 0
    %466 = vmatpush1.bf16.msra.mxu0 0
    %467 = vmatprep.subr.bf16.mxu0 0
    %468 = vmatpush1.bf16.msra.mxu0 0
    %469 = vmatprep.subr.bf16.mxu0 0
    %470 = vmatpush1.bf16.msra.mxu0 0
    %471 = vmatprep.subr.bf16.mxu0 0
    %472 = vmatpush1.bf16.msra.mxu0 0
    %473 = vmatprep.mubr.bf16.mxu0 0
    %474 = vmatmul.mubr.bf16.gmra.mrb[0].mxu0 %v315
    %v475 = vpop.f32.mrb[0].mxu0
    %v476 = vadd.f32 0.0, %v475
    %v477 = vpop.f32.mrb[0].mxu0
    %v478 = vpop.f32.mrb[0].mxu0
    %v479 = vadd.f32 0.0, %v478
    %v480 = vpop.f32.mrb[0].mxu0
    %481 = vmatprep.mubr.bf16.mxu0 0
    %482 = vmatmul.mubr.bf16.gmra.mrb[0].mxu0 %v318
    %v483 = vpop.f32.mrb[0].mxu0
    %v484 = vadd.f32 0.0, %v483
    %v485 = vpop.f32.mrb[0].mxu0
    %v486 = vpop.f32.mrb[0].mxu0
    %v487 = vadd.f32 0.0, %v486
    %v488 = vpop.f32.mrb[0].mxu0
    %489 = vmatprep.mubr.bf16.mxu0 0
    %490 = vmatmul.mubr.bf16.gmra.mrb[0].mxu0 %v321
    %v491 = vpop.f32.mrb[0].mxu0
    %v492 = vadd.f32 0.0, %v491
    %v493 = vpop.f32.mrb[0].mxu0
    %v494 = vpop.f32.mrb[0].mxu0
    %v495 = vadd.f32 0.0, %v494
    %v496 = vpop.f32.mrb[0].mxu0
    %497 = vmatprep.mubr.bf16.mxu0 0
    %498 = vmatmul.mubr.bf16.gmra.mrb[0].mxu0 %v324
    %v499 = vpop.f32.mrb[0].mxu0
    %v500 = vadd.f32 0.0, %v499
    %v501 = vpop.f32.mrb[0].mxu0
    %v502 = vpop.f32.mrb[0].mxu0
    %v503 = vadd.f32 0.0, %v502
    %v504 = vpop.f32.mrb[0].mxu0
    %505 = vmatprep.mubr.bf16.mxu0 0
    %506 = vmatmul.mubr.bf16.gmra.mrb[0].mxu0 %v327
    %v507 = vpop.f32.mrb[0].mxu0
    %v508 = vadd.f32 0.0, %v507
    %v509 = vpop.f32.mrb[0].mxu0
    %v510 = vpop.f32.mrb[0].mxu0
    %v511 = vadd.f32 0.0, %v510
    %v512 = vpop.f32.mrb[0].mxu0
    %513 = vmatprep.mubr.bf16.mxu0 0
    %514 = vmatmul.mubr.bf16.gmra.mrb[0].mxu0 %v330
    %v515 = vpop.f32.mrb[0].mxu0
    %v516 = vadd.f32 0.0, %v515
    %v517 = vpop.f32.mrb[0].mxu0
    %v518 = vpop.f32.mrb[0].mxu0
    %v519 = vadd.f32 0.0, %v518
    %v520 = vpop.f32.mrb[0].mxu0
    %521 = vmatprep.mubr.bf16.mxu0 0
    %522 = vmatmul.mubr.bf16.gmra.mrb[0].mxu0 %v333
    %v523 = vpop.f32.mrb[0].mxu0
    %v524 = vadd.f32 0.0, %v523
    %v525 = vpop.f32.mrb[0].mxu0
    %v526 = vpop.f32.mrb[0].mxu0
    %v527 = vadd.f32 0.0, %v526
    %v528 = vpop.f32.mrb[0].mxu0
    %529 = vmatprep.mubr.bf16.mxu0 0
    %530 = vmatmul.mubr.bf16.gmra.mrb[0].mxu0 %v336
    %v531 = vpop.f32.mrb[0].mxu0
    %v532 = vadd.f32 0.0, %v531
    %v533 = vpop.f32.mrb[0].mxu0
    %v534 = vpop.f32.mrb[0].mxu0
    %v535 = vadd.f32 0.0, %v534
    %v536 = vpop.f32.mrb[0].mxu0
    %537 = vmatprep.mubr.bf16.mxu0 0
    %538 = vmatmul.mubr.bf16.gmra.mrb[0].mxu0 %v339
    %v539 = vpop.f32.mrb[0].mxu0
    %v540 = vadd.f32 0.0, %v539
    %v541 = vpop.f32.mrb[0].mxu0
    %v542 = vpop.f32.mrb[0].mxu0
    %v543 = vadd.f32 0.0, %v542
    %v544 = vpop.f32.mrb[0].mxu0
    %545 = vmatprep.mubr.bf16.mxu0 0
    %546 = vmatmul.mubr.bf16.gmra.mrb[0].mxu0 %v342
    %v547 = vpop.f32.mrb[0].mxu0
    %v548 = vadd.f32 0.0, %v547
    %v549 = vpop.f32.mrb[0].mxu0
    %v550 = vpop.f32.mrb[0].mxu0
    %v551 = vadd.f32 0.0, %v550
    %v552 = vpop.f32.mrb[0].mxu0
    %553 = vmatprep.mubr.bf16.mxu0 0
    %554 = vmatmul.mubr.bf16.gmra.mrb[0].mxu0 %v345
    %v555 = vpop.f32.mrb[0].mxu0
    %v556 = vadd.f32 0.0, %v555
    %v557 = vpop.f32.mrb[0].mxu0
    %v558 = vpop.f32.mrb[0].mxu0
    %v559 = vadd.f32 0.0, %v558
    %v560 = vpop.f32.mrb[0].mxu0
    %561 = vmatprep.mubr.bf16.mxu0 0
    %562 = vmatmul.mubr.bf16.gmra.mrb[0].mxu0 %v348
    %v563 = vpop.f32.mrb[0].mxu0
    %v564 = vadd.f32 0.0, %v563
    %v565 = vpop.f32.mrb[0].mxu0
    %v566 = vpop.f32.mrb[0].mxu0
    %v567 = vadd.f32 0.0, %v566
    %v568 = vpop.f32.mrb[0].mxu0
    %569 = vmatprep.mubr.bf16.mxu0 0
    %570 = vmatmul.mubr.bf16.gmra.mrb[0].mxu0 %v351
    %v571 = vpop.f32.mrb[0].mxu0
    %v572 = vadd.f32 0.0, %v571
    %v573 = vpop.f32.mrb[0].mxu0
    %v574 = vpop.f32.mrb[0].mxu0
    %v575 = vadd.f32 0.0, %v574
    %v576 = vpop.f32.mrb[0].mxu0
    %577 = vmatprep.mubr.bf16.mxu0 0
    %578 = vmatmul.mubr.bf16.gmra.mrb[0].mxu0 %v354
    %v579 = vpop.f32.mrb[0].mxu0
    %v580 = vadd.f32 0.0, %v579
    %v581 = vpop.f32.mrb[0].mxu0
    %v582 = vpop.f32.mrb[0].mxu0
    %v583 = vadd.f32 0.0, %v582
    %v584 = vpop.f32.mrb[0].mxu0
    %585 = vmatprep.mubr.bf16.mxu0 0
    %586 = vmatmul.mubr.bf16.gmra.mrb[0].mxu0 %v357
    %v587 = vpop.f32.mrb[0].mxu0
    %v588 = vadd.f32 0.0, %v587
    %v589 = vpop.f32.mrb[0].mxu0
    %v590 = vpop.f32.mrb[0].mxu0
    %v591 = vadd.f32 0.0, %v590
    %v592 = vpop.f32.mrb[0].mxu0
    %593 = vmatprep.mubr.bf16.mxu0 0
    %594 = vmatmul.mubr.bf16.gmra.mrb[0].mxu0 %v360
    %v595 = vpop.f32.mrb[0].mxu0
    %v596 = vadd.f32 0.0, %v595
    %v597 = vpop.f32.mrb[0].mxu0
    %v598 = vpop.f32.mrb[0].mxu0
    %v599 = vadd.f32 0.0, %v598
    %v600 = vpop.f32.mrb[0].mxu0
    %601 = vmatprep.mubr.bf16.mxu0 0
    %602 = vmatmul.mubr.bf16.gmra.mrb[0].mxu0 %v363
    %v603 = vpop.f32.mrb[0].mxu0
    %v604 = vadd.f32 0.0, %v603
    %v605 = vpop.f32.mrb[0].mxu0
    %v606 = vpop.f32.mrb[0].mxu0
    %v607 = vadd.f32 0.0, %v606
    %v608 = vpop.f32.mrb[0].mxu0
    %609 = vmatprep.mubr.bf16.mxu0 0
    %610 = vmatmul.mubr.bf16.gmra.mrb[0].mxu0 %v366
    %v611 = vpop.f32.mrb[0].mxu0
    %v612 = vadd.f32 0.0, %v611
    %v613 = vpop.f32.mrb[0].mxu0
    %v614 = vpop.f32.mrb[0].mxu0
    %v615 = vadd.f32 0.0, %v614
    %v616 = vpop.f32.mrb[0].mxu0
    %617 = vmatprep.mubr.bf16.mxu0 0
    %618 = vmatmul.mubr.bf16.gmra.mrb[0].mxu0 %v369
    %v619 = vpop.f32.mrb[0].mxu0
    %v620 = vadd.f32 0.0, %v619
    %v621 = vpop.f32.mrb[0].mxu0
    %v622 = vpop.f32.mrb[0].mxu0
    %v623 = vadd.f32 0.0, %v622
    %v624 = vpop.f32.mrb[0].mxu0
    %625 = vmatprep.mubr.bf16.mxu0 0
    %626 = vmatmul.mubr.bf16.gmra.mrb[0].mxu0 %v372
    %v627 = vpop.f32.mrb[0].mxu0
    %v628 = vadd.f32 0.0, %v627
    %v629 = vpop.f32.mrb[0].mxu0
    %v630 = vpop.f32.mrb[0].mxu0
    %v631 = vadd.f32 0.0, %v630
    %v632 = vpop.f32.mrb[0].mxu0
    %633 = vmatprep.mubr.bf16.mxu0 0
    %634 = vmatmul.mubr.bf16.gmra.mrb[0].mxu0 %v375
    %v635 = vpop.f32.mrb[0].mxu0
    %v636 = vadd.f32 0.0, %v635
    %v637 = vpop.f32.mrb[0].mxu0
    %v638 = vpop.f32.mrb[0].mxu0
    %v639 = vadd.f32 0.0, %v638
    %v640 = vpop.f32.mrb[0].mxu0
    %641 = vmatprep.mubr.bf16.mxu0 0
    %642 = vmatmul.mubr.bf16.gmra.mrb[0].mxu0 %v378
    %v643 = vpop.f32.mrb[0].mxu0
    %v644 = vadd.f32 0.0, %v643
    %v645 = vpop.f32.mrb[0].mxu0
    %v646 = vpop.f32.mrb[0].mxu0
    %v647 = vadd.f32 0.0, %v646
    %v648 = vpop.f32.mrb[0].mxu0
    %649 = vmatprep.mubr.bf16.mxu0 0
    %650 = vmatmul.mubr.bf16.gmra.mrb[0].mxu0 %v381
    %v651 = vpop.f32.mrb[0].mxu0
    %v652 = vadd.f32 0.0, %v651
    %v653 = vpop.f32.mrb[0].mxu0
    %v654 = vpop.f32.mrb[0].mxu0
    %v655 = vadd.f32 0.0, %v654
    %v656 = vpop.f32.mrb[0].mxu0
    %657 = vmatprep.mubr.bf16.mxu0 0
    %658 = vmatmul.mubr.bf16.gmra.mrb[0].mxu0 %v384
    %v659 = vpop.f32.mrb[0].mxu0
    %v660 = vadd.f32 0.0, %v659
    %v661 = vpop.f32.mrb[0].mxu0
    %v662 = vpop.f32.mrb[0].mxu0
    %v663 = vadd.f32 0.0, %v662
    %v664 = vpop.f32.mrb[0].mxu0
    %665 = vmatprep.mubr.bf16.mxu0 0
    %666 = vmatmul.mubr.bf16.gmra.mrb[0].mxu0 %v387
    %v667 = vpop.f32.mrb[0].mxu0
    %v668 = vadd.f32 0.0, %v667
    %v669 = vpop.f32.mrb[0].mxu0
    %v670 = vpop.f32.mrb[0].mxu0
    %v671 = vadd.f32 0.0, %v670
    %v672 = vpop.f32.mrb[0].mxu0
    %673 = vmatprep.mubr.bf16.mxu0 0
    %674 = vmatmul.mubr.bf16.gmra.mrb[0].mxu0 %v390
    %v675 = vpop.f32.mrb[0].mxu0
    %v676 = vadd.f32 0.0, %v675
    %v677 = vpop.f32.mrb[0].mxu0
    %v678 = vpop.f32.mrb[0].mxu0
    %v679 = vadd.f32 0.0, %v678
    %v680 = vpop.f32.mrb[0].mxu0
    %681 = vmatprep.mubr.bf16.mxu0 0
    %682 = vmatmul.mubr.bf16.gmra.mrb[0].mxu0 %v393
    %v683 = vpop.f32.mrb[0].mxu0
    %v684 = vadd.f32 0.0, %v683
    %v685 = vpop.f32.mrb[0].mxu0
    %v686 = vpop.f32.mrb[0].mxu0
    %v687 = vadd.f32 0.0, %v686
    %v688 = vpop.f32.mrb[0].mxu0
    %689 = vmatprep.mubr.bf16.mxu0 0
    %690 = vmatmul.mubr.bf16.gmra.mrb[0].mxu0 %v396
    %v691 = vpop.f32.mrb[0].mxu0
    %v692 = vadd.f32 0.0, %v691
    %v693 = vpop.f32.mrb[0].mxu0
    %v694 = vpop.f32.mrb[0].mxu0
    %v695 = vadd.f32 0.0, %v694
    %v696 = vpop.f32.mrb[0].mxu0
    %697 = vmatprep.mubr.bf16.mxu0 0
    %698 = vmatmul.mubr.bf16.gmra.mrb[0].mxu0 %v399
    %v699 = vpop.f32.mrb[0].mxu0
    %v700 = vadd.f32 0.0, %v699
    %v701 = vpop.f32.mrb[0].mxu0
    %v702 = vpop.f32.mrb[0].mxu0
    %v703 = vadd.f32 0.0, %v702
    %v704 = vpop.f32.mrb[0].mxu0
    %705 = vmatprep.mubr.bf16.mxu0 0
    %706 = vmatmul.mubr.bf16.gmra.mrb[0].mxu0 %v402
    %v707 = vpop.f32.mrb[0].mxu0
    %v708 = vadd.f32 0.0, %v707
    %v709 = vpop.f32.mrb[0].mxu0
    %v710 = vpop.f32.mrb[0].mxu0
    %v711 = vadd.f32 0.0, %v710
    %v712 = vpop.f32.mrb[0].mxu0
    %713 = vmatprep.mubr.bf16.mxu0 0
    %714 = vmatmul.mubr.bf16.gmra.mrb[0].mxu0 %v405
    %v715 = vpop.f32.mrb[0].mxu0
    %v716 = vadd.f32 0.0, %v715
    %v717 = vpop.f32.mrb[0].mxu0
    %v718 = vpop.f32.mrb[0].mxu0
    %v719 = vadd.f32 0.0, %v718
    %v720 = vpop.f32.mrb[0].mxu0
    %721 = vmatprep.mubr.bf16.mxu0 0
    %722 = vmatmul.mubr.bf16.gmra.mrb[0].mxu0 %v408
    %v723 = vpop.f32.mrb[0].mxu0
    %v724 = vadd.f32 0.0, %v723
    %v725 = vpop.f32.mrb[0].mxu0
    %v726 = vpop.f32.mrb[0].mxu0
    %v727 = vadd.f32 0.0, %v726
    %v728 = vpop.f32.mrb[0].mxu0
    %729 = vmatprep.mubr.bf16.mxu0 0
    %730 = vmatmul.mubr.bf16.gmra.mrb[0].mxu0 %v411
    %v731 = vpop.f32.mrb[0].mxu0
    %v732 = vadd.f32 0.0, %v731
    %v733 = vpop.f32.mrb[0].mxu0
    %v734 = vpop.f32.mrb[0].mxu0
    %v735 = vadd.f32 0.0, %v734
    %v736 = vpop.f32.mrb[0].mxu0
    %737 = vmatprep.mubr.bf16.mxu0 0
    %738 = vmatmul.mubr.bf16.gmra.mrb[0].mxu0 %v414
    %v739 = vpop.f32.mrb[0].mxu0
    %v740 = vadd.f32 0.0, %v739
    %v741 = vpop.f32.mrb[0].mxu0
    %v742 = vpop.f32.mrb[0].mxu0
    %v743 = vadd.f32 0.0, %v742
    %v744 = vpop.f32.mrb[0].mxu0
    %745 = vmatprep.mubr.bf16.mxu0 0
    %746 = vmatmul.mubr.bf16.gmra.mrb[0].mxu0 %v417
    %v747 = vpop.f32.mrb[0].mxu0
    %v748 = vadd.f32 0.0, %v747
    %v749 = vpop.f32.mrb[0].mxu0
    %v750 = vpop.f32.mrb[0].mxu0
    %v751 = vadd.f32 0.0, %v750
    %v752 = vpop.f32.mrb[0].mxu0
    %753 = vmatprep.mubr.bf16.mxu0 0
    %754 = vmatmul.mubr.bf16.gmra.mrb[0].mxu0 %v420
    %v755 = vpop.f32.mrb[0].mxu0
    %v756 = vadd.f32 0.0, %v755
    %v757 = vpop.f32.mrb[0].mxu0
    %v758 = vpop.f32.mrb[0].mxu0
    %v759 = vadd.f32 0.0, %v758
    %v760 = vpop.f32.mrb[0].mxu0
    %761 = vmatprep.mubr.bf16.mxu0 0
    %762 = vmatmul.mubr.bf16.gmra.mrb[0].mxu0 %v423
    %v763 = vpop.f32.mrb[0].mxu0
    %v764 = vadd.f32 0.0, %v763
    %v765 = vpop.f32.mrb[0].mxu0
    %v766 = vpop.f32.mrb[0].mxu0
    %v767 = vadd.f32 0.0, %v766
    %v768 = vpop.f32.mrb[0].mxu0
    %769 = vmatprep.mubr.bf16.mxu0 0
    %770 = vmatmul.mubr.bf16.gmra.mrb[0].mxu0 %v426
    %v771 = vpop.f32.mrb[0].mxu0
    %v772 = vadd.f32 0.0, %v771
    %v773 = vpop.f32.mrb[0].mxu0
    %v774 = vpop.f32.mrb[0].mxu0
    %v775 = vadd.f32 0.0, %v774
    %v776 = vpop.f32.mrb[0].mxu0
    %777 = vmatprep.mubr.bf16.mxu0 0
    %778 = vmatmul.mubr.bf16.gmra.mrb[0].mxu0 %v429
    %v779 = vpop.f32.mrb[0].mxu0
    %v780 = vadd.f32 0.0, %v779
    %v781 = vpop.f32.mrb[0].mxu0
    %v782 = vpop.f32.mrb[0].mxu0
    %v783 = vadd.f32 0.0, %v782
    %v784 = vpop.f32.mrb[0].mxu0
    %785 = vmatprep.mubr.bf16.mxu0 0
    %786 = vmatmul.mubr.bf16.gmra.mrb[0].mxu0 %v432
    %v787 = vpop.f32.mrb[0].mxu0
    %v788 = vadd.f32 0.0, %v787
    %v789 = vpop.f32.mrb[0].mxu0
    %v790 = vpop.f32.mrb[0].mxu0
    %v791 = vadd.f32 0.0, %v790
    %v792 = vpop.f32.mrb[0].mxu0
    %793 = vmatprep.mubr.bf16.mxu0 0
    %794 = vmatmul.mubr.bf16.gmra.mrb[0].mxu0 %v435
    %v795 = vpop.f32.mrb[0].mxu0
    %v796 = vadd.f32 0.0, %v795
    %v797 = vpop.f32.mrb[0].mxu0
    %v798 = vpop.f32.mrb[0].mxu0
    %v799 = vadd.f32 0.0, %v798
    %v800 = vpop.f32.mrb[0].mxu0
    %801 = vdwg.mxu0
    %802 = vst [vmem:[#allocation2] sm:$0xff] %v476
    %803 = vst [vmem:[#allocation2 + $0x8] sm:$0xff] %v479
    %804 = vst [vmem:[#allocation2 + $0x10] sm:$0xff] %v484
    %805 = vst [vmem:[#allocation2 + $0x18] sm:$0xff] %v487
    %806 = vst [vmem:[#allocation2 + $0x20] sm:$0xff] %v492
    %807 = vst [vmem:[#allocation2 + $0x28] sm:$0xff] %v495
    %808 = vst [vmem:[#allocation2 + $0x30] sm:$0xff] %v500
    %809 = vst [vmem:[#allocation2 + $0x38] sm:$0xff] %v503
    %810 = vst [vmem:[#allocation2 + $0x40] sm:$0xff] %v508
    %811 = vst [vmem:[#allocation2 + $0x48] sm:$0xff] %v511
    %812 = vst [vmem:[#allocation2 + $0x50] sm:$0xff] %v516
    %813 = vst [vmem:[#allocation2 + $0x58] sm:$0xff] %v519
    %814 = vst [vmem:[#allocation2 + $0x60] sm:$0xff] %v524
    %815 = vst [vmem:[#allocation2 + $0x68] sm:$0xff] %v527
    %816 = vst [vmem:[#allocation2 + $0x70] sm:$0xff] %v532
    %817 = vst [vmem:[#allocation2 + $0x78] sm:$0xff] %v535
    %818 = vst [vmem:[#allocation2 + $0x80] sm:$0xff] %v540
    %819 = vst [vmem:[#allocation2 + $0x88] sm:$0xff] %v543
    %820 = vst [vmem:[#allocation2 + $0x90] sm:$0xff] %v548
    %821 = vst [vmem:[#allocation2 + $0x98] sm:$0xff] %v551
    %822 = vst [vmem:[#allocation2 + $0xa0] sm:$0xff] %v556
    %823 = vst [vmem:[#allocation2 + $0xa8] sm:$0xff] %v559
    %824 = vst [vmem:[#allocation2 + $0xb0] sm:$0xff] %v564
    %825 = vst [vmem:[#allocation2 + $0xb8] sm:$0xff] %v567
    %826 = vst [vmem:[#allocation2 + $0xc0] sm:$0xff] %v572
    %827 = vst [vmem:[#allocation2 + $0xc8] sm:$0xff] %v575
    %828 = vst [vmem:[#allocation2 + $0xd0] sm:$0xff] %v580
    %829 = vst [vmem:[#allocation2 + $0xd8] sm:$0xff] %v583
    %830 = vst [vmem:[#allocation2 + $0xe0] sm:$0xff] %v588
    %831 = vst [vmem:[#allocation2 + $0xe8] sm:$0xff] %v591
    %832 = vst [vmem:[#allocation2 + $0xf0] sm:$0xff] %v596
    %833 = vst [vmem:[#allocation2 + $0xf8] sm:$0xff] %v599
    %834 = vst [vmem:[#allocation2 + $0x100] sm:$0xff] %v604
    %835 = vst [vmem:[#allocation2 + $0x108] sm:$0xff] %v607
    %836 = vst [vmem:[#allocation2 + $0x110] sm:$0xff] %v612
    %837 = vst [vmem:[#allocation2 + $0x118] sm:$0xff] %v615
    %838 = vst [vmem:[#allocation2 + $0x120] sm:$0xff] %v620
    %839 = vst [vmem:[#allocation2 + $0x128] sm:$0xff] %v623
    %840 = vst [vmem:[#allocation2 + $0x130] sm:$0xff] %v628
    %841 = vst [vmem:[#allocation2 + $0x138] sm:$0xff] %v631
    %842 = vst [vmem:[#allocation2 + $0x140] sm:$0xff] %v636
    %843 = vst [vmem:[#allocation2 + $0x148] sm:$0xff] %v639
    %844 = vst [vmem:[#allocation2 + $0x150] sm:$0xff] %v644
    %845 = vst [vmem:[#allocation2 + $0x158] sm:$0xff] %v647
    %846 = vst [vmem:[#allocation2 + $0x160] sm:$0xff] %v652
    %847 = vst [vmem:[#allocation2 + $0x168] sm:$0xff] %v655
    %848 = vst [vmem:[#allocation2 + $0x170] sm:$0xff] %v660
    %849 = vst [vmem:[#allocation2 + $0x178] sm:$0xff] %v663
    %850 = vst [vmem:[#allocation2 + $0x180] sm:$0xff] %v668
    %851 = vst [vmem:[#allocation2 + $0x188] sm:$0xff] %v671
    %852 = vst [vmem:[#allocation2 + $0x190] sm:$0xff] %v676
    %853 = vst [vmem:[#allocation2 + $0x198] sm:$0xff] %v679
    %854 = vst [vmem:[#allocation2 + $0x1a0] sm:$0xff] %v684
    %855 = vst [vmem:[#allocation2 + $0x1a8] sm:$0xff] %v687
    %856 = vst [vmem:[#allocation2 + $0x1b0] sm:$0xff] %v692
    %857 = vst [vmem:[#allocation2 + $0x1b8] sm:$0xff] %v695
    %858 = vst [vmem:[#allocation2 + $0x1c0] sm:$0xff] %v700
    %859 = vst [vmem:[#allocation2 + $0x1c8] sm:$0xff] %v703
    %860 = vst [vmem:[#allocation2 + $0x1d0] sm:$0xff] %v708
    %861 = vst [vmem:[#allocation2 + $0x1d8] sm:$0xff] %v711
    %862 = vst [vmem:[#allocation2 + $0x1e0] sm:$0xff] %v716
    %863 = vst [vmem:[#allocation2 + $0x1e8] sm:$0xff] %v719
    %864 = vst [vmem:[#allocation2 + $0x1f0] sm:$0xff] %v724
    %865 = vst [vmem:[#allocation2 + $0x1f8] sm:$0xff] %v727
    %866 = vst [vmem:[#allocation2 + $0x200] sm:$0xff] %v732
    %867 = vst [vmem:[#allocation2 + $0x208] sm:$0xff] %v735
    %868 = vst [vmem:[#allocation2 + $0x210] sm:$0xff] %v740
    %869 = vst [vmem:[#allocation2 + $0x218] sm:$0xff] %v743
    %870 = vst [vmem:[#allocation2 + $0x220] sm:$0xff] %v748
    %871 = vst [vmem:[#allocation2 + $0x228] sm:$0xff] %v751
    %872 = vst [vmem:[#allocation2 + $0x230] sm:$0xff] %v756
    %873 = vst [vmem:[#allocation2 + $0x238] sm:$0xff] %v759
    %874 = vst [vmem:[#allocation2 + $0x240] sm:$0xff] %v764
    %875 = vst [vmem:[#allocation2 + $0x248] sm:$0xff] %v767
    %876 = vst [vmem:[#allocation2 + $0x250] sm:$0xff] %v772
    %877 = vst [vmem:[#allocation2 + $0x258] sm:$0xff] %v775
    %878 = vst [vmem:[#allocation2 + $0x260] sm:$0xff] %v780
    %879 = vst [vmem:[#allocation2 + $0x268] sm:$0xff] %v783
    %880 = vst [vmem:[#allocation2 + $0x270] sm:$0xff] %v788
    %881 = vst [vmem:[#allocation2 + $0x278] sm:$0xff] %v791
    %882 = vst [vmem:[#allocation2 + $0x280] sm:$0xff] %v796
    %883 = vst [vmem:[#allocation2 + $0x288] sm:$0xff] %v799
    %v884 = vld [vmem:[%s0] sm:$0xf]
    %v885 = vld [vmem:[%s0 + $0x4] sm:$0xf]
    %v886 = vld [vmem:[%s0 + $0x8] sm:$0xf]
    %v887 = vld [vmem:[%s0 + $0xc] sm:$0xf]
    %v888 = vld [vmem:[%s0 + $0x10] sm:$0xf]
    %v889 = vld [vmem:[%s0 + $0x14] sm:$0xf]
    %v890 = vld [vmem:[%s0 + $0x18] sm:$0xf]
    %v891 = vld [vmem:[%s0 + $0x1c] sm:$0xf]
    %v892 = vld [vmem:[%s0 + $0x20] sm:$0xf]
    %v893 = vld [vmem:[%s0 + $0x24] sm:$0xf]
    %v894 = vld [vmem:[%s0 + $0x28] sm:$0xf]
    %v895 = vld [vmem:[%s0 + $0x2c] sm:$0xf]
    %v896 = vld [vmem:[%s0 + $0x30] sm:$0xf]
    %v897 = vld [vmem:[%s0 + $0x34] sm:$0xf]
    %v898 = vld [vmem:[%s0 + $0x38] sm:$0xf]
    %v899 = vld [vmem:[%s0 + $0x3c] sm:$0xf]
    %v900 = vld [vmem:[%s0 + $0x40] sm:$0xf]
    %v901 = vld [vmem:[%s0 + $0x44] sm:$0xf]
    %v902 = vld [vmem:[%s0 + $0x48] sm:$0xf]
    %v903 = vld [vmem:[%s0 + $0x4c] sm:$0xf]
    %v904 = vld [vmem:[%s0 + $0x50] sm:$0xf]
    %v905 = vld [vmem:[%s0 + $0x54] sm:$0xf]
    %v906 = vld [vmem:[%s0 + $0x58] sm:$0xf]
    %v907 = vld [vmem:[%s0 + $0x5c] sm:$0xf]
    %v908 = vld [vmem:[%s0 + $0x60] sm:$0xf]
    %v909 = vld [vmem:[%s0 + $0x64] sm:$0xf]
    %v910 = vld [vmem:[%s0 + $0x68] sm:$0xf]
    %v911 = vld [vmem:[%s0 + $0x6c] sm:$0xf]
    %v912 = vld [vmem:[%s0 + $0x70] sm:$0xf]
    %v913 = vld [vmem:[%s0 + $0x74] sm:$0xf]
    %v914 = vld [vmem:[%s0 + $0x78] sm:$0xf]
    %v915 = vld [vmem:[%s0 + $0x7c] sm:$0xf]
    %v916 = vld [vmem:[%s0 + $0x80] sm:$0xf]
    %v917 = vld [vmem:[%s0 + $0x84] sm:$0xf]
    %v918 = vld [vmem:[%s0 + $0x88] sm:$0xf]
    %v919 = vld [vmem:[%s0 + $0x8c] sm:$0xf]
    %v920 = vld [vmem:[%s0 + $0x90] sm:$0xf]
    %v921 = vld [vmem:[%s0 + $0x94] sm:$0xf]
    %v922 = vld [vmem:[%s0 + $0x98] sm:$0xf]
    %v923 = vld [vmem:[%s0 + $0x9c] sm:$0xf]
    %v924 = vld [vmem:[%s0 + $0xa0] sm:$0xf]
    %v925 = vld [vmem:[%s0 + $0xa4] sm:$0xf]
    %v926 = vld [vmem:[%s0 + $0xa8] sm:$0xf]
    %v927 = vld [vmem:[%s0 + $0xac] sm:$0xf]
    %v928 = vld [vmem:[%s0 + $0xb0] sm:$0xf]
    %v929 = vld [vmem:[%s0 + $0xb4] sm:$0xf]
    %v930 = vld [vmem:[%s0 + $0xb8] sm:$0xf]
    %v931 = vld [vmem:[%s0 + $0xbc] sm:$0xf]
    %v932 = vld [vmem:[%s0 + $0xc0] sm:$0xf]
    %v933 = vld [vmem:[%s0 + $0xc4] sm:$0xf]
    %v934 = vld [vmem:[%s0 + $0xc8] sm:$0xf]
    %v935 = vld [vmem:[%s0 + $0xcc] sm:$0xf]
    %v936 = vld [vmem:[%s0 + $0xd0] sm:$0xf]
    %v937 = vld [vmem:[%s0 + $0xd4] sm:$0xf]
    %v938 = vld [vmem:[%s0 + $0xd8] sm:$0xf]
    %v939 = vld [vmem:[%s0 + $0xdc] sm:$0xf]
    %v940 = vld [vmem:[%s0 + $0xe0] sm:$0xf]
    %v941 = vld [vmem:[%s0 + $0xe4] sm:$0xf]
    %v942 = vld [vmem:[%s0 + $0xe8] sm:$0xf]
    %v943 = vld [vmem:[%s0 + $0xec] sm:$0xf]
    %v944 = vld [vmem:[%s0 + $0xf0] sm:$0xf]
    %v945 = vld [vmem:[%s0 + $0xf4] sm:$0xf]
    %v946 = vld [vmem:[%s0 + $0xf8] sm:$0xf]
    %v947 = vld [vmem:[%s0 + $0xfc] sm:$0xf]
    %v948 = vld [vmem:[%s0 + $0x100] sm:$0xf]
    %v949 = vld [vmem:[%s0 + $0x104] sm:$0xf]
    %v950 = vld [vmem:[%s0 + $0x108] sm:$0xf]
    %v951 = vld [vmem:[%s0 + $0x10c] sm:$0xf]
    %v952 = vld [vmem:[%s0 + $0x110] sm:$0xf]
    %v953 = vld [vmem:[%s0 + $0x114] sm:$0xf]
    %v954 = vld [vmem:[%s0 + $0x118] sm:$0xf]
    %v955 = vld [vmem:[%s0 + $0x11c] sm:$0xf]
    %v956 = vld [vmem:[%s0 + $0x120] sm:$0xf]
    %v957 = vld [vmem:[%s0 + $0x124] sm:$0xf]
    %v958 = vld [vmem:[%s0 + $0x128] sm:$0xf]
    %v959 = vld [vmem:[%s0 + $0x12c] sm:$0xf]
    %v960 = vld [vmem:[%s0 + $0x130] sm:$0xf]
    %v961 = vld [vmem:[%s0 + $0x134] sm:$0xf]
    %v962 = vld [vmem:[%s0 + $0x138] sm:$0xf]
    %v963 = vld [vmem:[%s0 + $0x13c] sm:$0xf]
    %v964 = vld [vmem:[%s0 + $0x140] sm:$0xf]
    %v965 = vld [vmem:[%s0 + $0x144] sm:$0xf]
    %v966 = vld [vmem:[%s0 + $0x148] sm:$0x1]
    %v967 = vld [vmem:[%s1 + $0x4] sm:$0xf]
    %v1051 = vunpack.c.l.b16 %v884
    %v1052 = vunpack.c.l.b16 %v885
    %v1053 = vunpack.c.l.b16 %v886
    %v1054 = vunpack.c.l.b16 %v887
    %v1055 = vunpack.c.l.b16 %v888
    %v1056 = vunpack.c.l.b16 %v889
    %v1057 = vunpack.c.l.b16 %v890
    %v1058 = vunpack.c.l.b16 %v891
    %v1059 = vunpack.c.l.b16 %v892
    %v1060 = vunpack.c.l.b16 %v893
    %v1061 = vunpack.c.l.b16 %v894
    %v1062 = vunpack.c.l.b16 %v895
    %v1063 = vunpack.c.l.b16 %v896
    %v1064 = vunpack.c.l.b16 %v897
    %v1065 = vunpack.c.l.b16 %v898
    %v1066 = vunpack.c.l.b16 %v899
    %v1067 = vunpack.c.l.b16 %v900
    %v1068 = vunpack.c.l.b16 %v901
    %v1069 = vunpack.c.l.b16 %v902
    %v1070 = vunpack.c.l.b16 %v903
    %v1071 = vunpack.c.l.b16 %v904
    %v1072 = vunpack.c.l.b16 %v905
    %v1073 = vunpack.c.l.b16 %v906
    %v1074 = vunpack.c.l.b16 %v907
    %v1075 = vunpack.c.l.b16 %v908
    %v1076 = vunpack.c.l.b16 %v909
    %v1077 = vunpack.c.l.b16 %v910
    %v1078 = vunpack.c.l.b16 %v911
    %v1079 = vunpack.c.l.b16 %v912
    %v1080 = vunpack.c.l.b16 %v913
    %v1081 = vunpack.c.l.b16 %v914
    %v1082 = vunpack.c.l.b16 %v915
    %v1083 = vunpack.c.l.b16 %v916
    %v1084 = vunpack.c.l.b16 %v917
    %v1085 = vunpack.c.l.b16 %v918
    %v1086 = vunpack.c.l.b16 %v919
    %v1087 = vunpack.c.l.b16 %v920
    %v1088 = vunpack.c.l.b16 %v921
    %v1089 = vunpack.c.l.b16 %v922
    %v1090 = vunpack.c.l.b16 %v923
    %v1091 = vunpack.c.l.b16 %v924
    %v1092 = vunpack.c.l.b16 %v925
    %v1093 = vunpack.c.l.b16 %v926
    %v1094 = vunpack.c.l.b16 %v927
    %v1095 = vunpack.c.l.b16 %v928
    %v1096 = vunpack.c.l.b16 %v929
    %v1097 = vunpack.c.l.b16 %v930
    %v1098 = vunpack.c.l.b16 %v931
    %v1099 = vunpack.c.l.b16 %v932
    %v1100 = vunpack.c.l.b16 %v933
    %v1101 = vunpack.c.l.b16 %v934
    %v1102 = vunpack.c.l.b16 %v935
    %v1103 = vunpack.c.l.b16 %v936
    %v1104 = vunpack.c.l.b16 %v937
    %v1105 = vunpack.c.l.b16 %v938
    %v1106 = vunpack.c.l.b16 %v939
    %v1107 = vunpack.c.l.b16 %v940
    %v1108 = vunpack.c.l.b16 %v941
    %v1109 = vunpack.c.l.b16 %v942
    %v1110 = vunpack.c.l.b16 %v943
    %v1111 = vunpack.c.l.b16 %v944
    %v1112 = vunpack.c.l.b16 %v945
    %v1113 = vunpack.c.l.b16 %v946
    %v1114 = vunpack.c.l.b16 %v947
    %v1115 = vunpack.c.l.b16 %v948
    %v1116 = vunpack.c.l.b16 %v949
    %v1117 = vunpack.c.l.b16 %v950
    %v1118 = vunpack.c.l.b16 %v951
    %v1119 = vunpack.c.l.b16 %v952
    %v1120 = vunpack.c.l.b16 %v953
    %v1121 = vunpack.c.l.b16 %v954
    %v1122 = vunpack.c.l.b16 %v955
    %v1123 = vunpack.c.l.b16 %v956
    %v1124 = vunpack.c.l.b16 %v957
    %v1125 = vunpack.c.l.b16 %v958
    %v1126 = vunpack.c.l.b16 %v959
    %v1127 = vunpack.c.l.b16 %v960
    %v1128 = vunpack.c.l.b16 %v961
    %v1129 = vunpack.c.l.b16 %v962
    %v1130 = vunpack.c.l.b16 %v963
    %v1131 = vunpack.c.l.b16 %v964
    %v1132 = vunpack.c.l.b16 %v965
    %v1133 = vunpack.c.l.b16 %v966
    %v1134 = vpack.c.b16 %v1052, %v1051
    %v1135 = vpack.c.b16 %v1054, %v1053
    %v1136 = vpack.c.b16 %v1056, %v1055
    %v1137 = vpack.c.b16 %v1058, %v1057
    %v1138 = vpack.c.b16 %v1060, %v1059
    %v1139 = vpack.c.b16 %v1062, %v1061
    %v1140 = vpack.c.b16 %v1064, %v1063
    %v1141 = vpack.c.b16 %v1066, %v1065
    %v1142 = vpack.c.b16 %v1068, %v1067
    %v1143 = vpack.c.b16 %v1070, %v1069
    %v1144 = vpack.c.b16 %v1072, %v1071
    %v1145 = vpack.c.b16 %v1074, %v1073
    %v1146 = vpack.c.b16 %v1076, %v1075
    %v1147 = vpack.c.b16 %v1078, %v1077
    %v1148 = vpack.c.b16 %v1080, %v1079
    %v1149 = vpack.c.b16 %v1082, %v1081
    %v1150 = vpack.c.b16 %v1084, %v1083
    %v1151 = vpack.c.b16 %v1086, %v1085
    %v1152 = vpack.c.b16 %v1088, %v1087
    %v1153 = vpack.c.b16 %v1090, %v1089
    %v1154 = vpack.c.b16 %v1092, %v1091
    %v1155 = vpack.c.b16 %v1094, %v1093
    %v1156 = vpack.c.b16 %v1096, %v1095
    %v1157 = vpack.c.b16 %v1098, %v1097
    %v1158 = vpack.c.b16 %v1100, %v1099
    %v1159 = vpack.c.b16 %v1102, %v1101
    %v1160 = vpack.c.b16 %v1104, %v1103
    %v1161 = vpack.c.b16 %v1106, %v1105
    %v1162 = vpack.c.b16 %v1108, %v1107
    %v1163 = vpack.c.b16 %v1110, %v1109
    %v1164 = vpack.c.b16 %v1112, %v1111
    %v1165 = vpack.c.b16 %v1114, %v1113
    %v1166 = vpack.c.b16 %v1116, %v1115
    %v1167 = vpack.c.b16 %v1118, %v1117
    %v1168 = vpack.c.b16 %v1120, %v1119
    %v1169 = vpack.c.b16 %v1122, %v1121
    %v1170 = vpack.c.b16 %v1124, %v1123
    %v1171 = vpack.c.b16 %v1126, %v1125
    %v1172 = vpack.c.b16 %v1128, %v1127
    %v1173 = vpack.c.b16 %v1130, %v1129
    %v1174 = vpack.c.b16 %v1132, %v1131
    %v1175 = vpack.c.b16 %v1133, %v1133
    %vm1176 = vsmask.f32 7424
    %v1178 = vshrl.u32 %v1134, 16
    %v1180 = vshll.u32 %v1134, 16
    %v1182 = vrot.slane %v1180, 1
    %v1183 = vor.u32 %v1178, %v1182
    %v1185 = vshll.u32 %v1135, 16
    %v1187 = vrot.slane %v1185, 1
    %v1188 = vsel %vm1176, %v1183, %v1187
    %v1189 = vshrl.u32 %v1135, 16
    %v1191 = vor.u32 %v1189, %v1187
    %v1193 = vshll.u32 %v1136, 16
    %v1195 = vrot.slane %v1193, 1
    %v1196 = vsel %vm1176, %v1191, %v1195
    %v1197 = vshrl.u32 %v1136, 16
    %v1199 = vor.u32 %v1197, %v1195
    %v1201 = vshll.u32 %v1137, 16
    %v1203 = vrot.slane %v1201, 1
    %v1204 = vsel %vm1176, %v1199, %v1203
    %v1205 = vshrl.u32 %v1137, 16
    %v1207 = vor.u32 %v1205, %v1203
    %v1209 = vshll.u32 %v1138, 16
    %v1211 = vrot.slane %v1209, 1
    %v1212 = vsel %vm1176, %v1207, %v1211
    %v1213 = vshrl.u32 %v1138, 16
    %v1215 = vor.u32 %v1213, %v1211
    %v1217 = vshll.u32 %v1139, 16
    %v1219 = vrot.slane %v1217, 1
    %v1220 = vsel %vm1176, %v1215, %v1219
    %v1221 = vshrl.u32 %v1139, 16
    %v1223 = vor.u32 %v1221, %v1219
    %v1225 = vshll.u32 %v1140, 16
    %v1227 = vrot.slane %v1225, 1
    %v1228 = vsel %vm1176, %v1223, %v1227
    %v1229 = vshrl.u32 %v1140, 16
    %v1231 = vor.u32 %v1229, %v1227
    %v1233 = vshll.u32 %v1141, 16
    %v1235 = vrot.slane %v1233, 1
    %v1236 = vsel %vm1176, %v1231, %v1235
    %v1237 = vshrl.u32 %v1141, 16
    %v1239 = vor.u32 %v1237, %v1235
    %v1241 = vshll.u32 %v1142, 16
    %v1243 = vrot.slane %v1241, 1
    %v1244 = vsel %vm1176, %v1239, %v1243
    %v1245 = vshrl.u32 %v1142, 16
    %v1247 = vor.u32 %v1245, %v1243
    %v1249 = vshll.u32 %v1143, 16
    %v1251 = vrot.slane %v1249, 1
    %v1252 = vsel %vm1176, %v1247, %v1251
    %v1253 = vshrl.u32 %v1143, 16
    %v1255 = vor.u32 %v1253, %v1251
    %v1257 = vshll.u32 %v1144, 16
    %v1259 = vrot.slane %v1257, 1
    %v1260 = vsel %vm1176, %v1255, %v1259
    %v1261 = vshrl.u32 %v1144, 16
    %v1263 = vor.u32 %v1261, %v1259
    %v1265 = vshll.u32 %v1145, 16
    %v1267 = vrot.slane %v1265, 1
    %v1268 = vsel %vm1176, %v1263, %v1267
    %v1269 = vshrl.u32 %v1145, 16
    %v1271 = vor.u32 %v1269, %v1267
    %v1273 = vshll.u32 %v1146, 16
    %v1275 = vrot.slane %v1273, 1
    %v1276 = vsel %vm1176, %v1271, %v1275
    %v1277 = vshrl.u32 %v1146, 16
    %v1279 = vor.u32 %v1277, %v1275
    %v1281 = vshll.u32 %v1147, 16
    %v1283 = vrot.slane %v1281, 1
    %v1284 = vsel %vm1176, %v1279, %v1283
    %v1285 = vshrl.u32 %v1147, 16
    %v1287 = vor.u32 %v1285, %v1283
    %v1289 = vshll.u32 %v1148, 16
    %v1291 = vrot.slane %v1289, 1
    %v1292 = vsel %vm1176, %v1287, %v1291
    %v1293 = vshrl.u32 %v1148, 16
    %v1295 = vor.u32 %v1293, %v1291
    %v1297 = vshll.u32 %v1149, 16
    %v1299 = vrot.slane %v1297, 1
    %v1300 = vsel %vm1176, %v1295, %v1299
    %v1301 = vshrl.u32 %v1149, 16
    %v1303 = vor.u32 %v1301, %v1299
    %v1305 = vshll.u32 %v1150, 16
    %v1307 = vrot.slane %v1305, 1
    %v1308 = vsel %vm1176, %v1303, %v1307
    %v1309 = vshrl.u32 %v1150, 16
    %v1311 = vor.u32 %v1309, %v1307
    %v1313 = vshll.u32 %v1151, 16
    %v1315 = vrot.slane %v1313, 1
    %v1316 = vsel %vm1176, %v1311, %v1315
    %v1317 = vshrl.u32 %v1151, 16
    %v1319 = vor.u32 %v1317, %v1315
    %v1321 = vshll.u32 %v1152, 16
    %v1323 = vrot.slane %v1321, 1
    %v1324 = vsel %vm1176, %v1319, %v1323
    %v1325 = vshrl.u32 %v1152, 16
    %v1327 = vor.u32 %v1325, %v1323
    %v1329 = vshll.u32 %v1153, 16
    %v1331 = vrot.slane %v1329, 1
    %v1332 = vsel %vm1176, %v1327, %v1331
    %v1333 = vshrl.u32 %v1153, 16
    %v1335 = vor.u32 %v1333, %v1331
    %v1337 = vshll.u32 %v1154, 16
    %v1339 = vrot.slane %v1337, 1
    %v1340 = vsel %vm1176, %v1335, %v1339
    %v1341 = vshrl.u32 %v1154, 16
    %v1343 = vor.u32 %v1341, %v1339
    %v1345 = vshll.u32 %v1155, 16
    %v1347 = vrot.slane %v1345, 1
    %v1348 = vsel %vm1176, %v1343, %v1347
    %v1349 = vshrl.u32 %v1155, 16
    %v1351 = vor.u32 %v1349, %v1347
    %v1353 = vshll.u32 %v1156, 16
    %v1355 = vrot.slane %v1353, 1
    %v1356 = vsel %vm1176, %v1351, %v1355
    %v1357 = vshrl.u32 %v1156, 16
    %v1359 = vor.u32 %v1357, %v1355
    %v1361 = vshll.u32 %v1157, 16
    %v1363 = vrot.slane %v1361, 1
    %v1364 = vsel %vm1176, %v1359, %v1363
    %v1365 = vshrl.u32 %v1157, 16
    %v1367 = vor.u32 %v1365, %v1363
    %v1369 = vshll.u32 %v1158, 16
    %v1371 = vrot.slane %v1369, 1
    %v1372 = vsel %vm1176, %v1367, %v1371
    %v1373 = vshrl.u32 %v1158, 16
    %v1375 = vor.u32 %v1373, %v1371
    %v1377 = vshll.u32 %v1159, 16
    %v1379 = vrot.slane %v1377, 1
    %v1380 = vsel %vm1176, %v1375, %v1379
    %v1381 = vshrl.u32 %v1159, 16
    %v1383 = vor.u32 %v1381, %v1379
    %v1385 = vshll.u32 %v1160, 16
    %v1387 = vrot.slane %v1385, 1
    %v1388 = vsel %vm1176, %v1383, %v1387
    %v1389 = vshrl.u32 %v1160, 16
    %v1391 = vor.u32 %v1389, %v1387
    %v1393 = vshll.u32 %v1161, 16
    %v1395 = vrot.slane %v1393, 1
    %v1396 = vsel %vm1176, %v1391, %v1395
    %v1397 = vshrl.u32 %v1161, 16
    %v1399 = vor.u32 %v1397, %v1395
    %v1401 = vshll.u32 %v1162, 16
    %v1403 = vrot.slane %v1401, 1
    %v1404 = vsel %vm1176, %v1399, %v1403
    %v1405 = vshrl.u32 %v1162, 16
    %v1407 = vor.u32 %v1405, %v1403
    %v1409 = vshll.u32 %v1163, 16
    %v1411 = vrot.slane %v1409, 1
    %v1412 = vsel %vm1176, %v1407, %v1411
    %v1413 = vshrl.u32 %v1163, 16
    %v1415 = vor.u32 %v1413, %v1411
    %v1417 = vshll.u32 %v1164, 16
    %v1419 = vrot.slane %v1417, 1
    %v1420 = vsel %vm1176, %v1415, %v1419
    %v1421 = vshrl.u32 %v1164, 16
    %v1423 = vor.u32 %v1421, %v1419
    %v1425 = vshll.u32 %v1165, 16
    %v1427 = vrot.slane %v1425, 1
    %v1428 = vsel %vm1176, %v1423, %v1427
    %v1429 = vshrl.u32 %v1165, 16
    %v1431 = vor.u32 %v1429, %v1427
    %v1433 = vshll.u32 %v1166, 16
    %v1435 = vrot.slane %v1433, 1
    %v1436 = vsel %vm1176, %v1431, %v1435
    %v1437 = vshrl.u32 %v1166, 16
    %v1439 = vor.u32 %v1437, %v1435
    %v1441 = vshll.u32 %v1167, 16
    %v1443 = vrot.slane %v1441, 1
    %v1444 = vsel %vm1176, %v1439, %v1443
    %v1445 = vshrl.u32 %v1167, 16
    %v1447 = vor.u32 %v1445, %v1443
    %v1449 = vshll.u32 %v1168, 16
    %v1451 = vrot.slane %v1449, 1
    %v1452 = vsel %vm1176, %v1447, %v1451
    %v1453 = vshrl.u32 %v1168, 16
    %v1455 = vor.u32 %v1453, %v1451
    %v1457 = vshll.u32 %v1169, 16
    %v1459 = vrot.slane %v1457, 1
    %v1460 = vsel %vm1176, %v1455, %v1459
    %v1461 = vshrl.u32 %v1169, 16
    %v1463 = vor.u32 %v1461, %v1459
    %v1465 = vshll.u32 %v1170, 16
    %v1467 = vrot.slane %v1465, 1
    %v1468 = vsel %vm1176, %v1463, %v1467
    %v1469 = vshrl.u32 %v1170, 16
    %v1471 = vor.u32 %v1469, %v1467
    %v1473 = vshll.u32 %v1171, 16
    %v1475 = vrot.slane %v1473, 1
    %v1476 = vsel %vm1176, %v1471, %v1475
    %v1477 = vshrl.u32 %v1171, 16
    %v1479 = vor.u32 %v1477, %v1475
    %v1481 = vshll.u32 %v1172, 16
    %v1483 = vrot.slane %v1481, 1
    %v1484 = vsel %vm1176, %v1479, %v1483
    %v1485 = vshrl.u32 %v1172, 16
    %v1487 = vor.u32 %v1485, %v1483
    %v1489 = vshll.u32 %v1173, 16
    %v1491 = vrot.slane %v1489, 1
    %v1492 = vsel %vm1176, %v1487, %v1491
    %v1493 = vshrl.u32 %v1173, 16
    %v1495 = vor.u32 %v1493, %v1491
    %v1497 = vshll.u32 %v1174, 16
    %v1499 = vrot.slane %v1497, 1
    %v1500 = vsel %vm1176, %v1495, %v1499
    %v1501 = vshrl.u32 %v1174, 16
    %v1503 = vor.u32 %v1501, %v1499
    %v1505 = vshll.u32 %v1175, 16
    %v1507 = vrot.slane %v1505, 1
    %v1508 = vsel %vm1176, %v1503, %v1507
    %v1510 = vsel %vm313, %v1188, 0
    %v1513 = vsel %vm313, %v1196, 0
    %v1516 = vsel %vm313, %v1204, 0
    %v1519 = vsel %vm313, %v1212, 0
    %v1522 = vsel %vm313, %v1220, 0
    %v1525 = vsel %vm313, %v1228, 0
    %v1528 = vsel %vm313, %v1236, 0
    %v1531 = vsel %vm313, %v1244, 0
    %v1534 = vsel %vm313, %v1252, 0
    %v1537 = vsel %vm313, %v1260, 0
    %v1540 = vsel %vm313, %v1268, 0
    %v1543 = vsel %vm313, %v1276, 0
    %v1546 = vsel %vm313, %v1284, 0
    %v1549 = vsel %vm313, %v1292, 0
    %v1552 = vsel %vm313, %v1300, 0
    %v1555 = vsel %vm313, %v1308, 0
    %v1558 = vsel %vm313, %v1316, 0
    %v1561 = vsel %vm313, %v1324, 0
    %v1564 = vsel %vm313, %v1332, 0
    %v1567 = vsel %vm313, %v1340, 0
    %v1570 = vsel %vm313, %v1348, 0
    %v1573 = vsel %vm313, %v1356, 0
    %v1576 = vsel %vm313, %v1364, 0
    %v1579 = vsel %vm313, %v1372, 0
    %v1582 = vsel %vm313, %v1380, 0
    %v1585 = vsel %vm313, %v1388, 0
    %v1588 = vsel %vm313, %v1396, 0
    %v1591 = vsel %vm313, %v1404, 0
    %v1594 = vsel %vm313, %v1412, 0
    %v1597 = vsel %vm313, %v1420, 0
    %v1600 = vsel %vm313, %v1428, 0
    %v1603 = vsel %vm313, %v1436, 0
    %v1606 = vsel %vm313, %v1444, 0
    %v1609 = vsel %vm313, %v1452, 0
    %v1612 = vsel %vm313, %v1460, 0
    %v1615 = vsel %vm313, %v1468, 0
    %v1618 = vsel %vm313, %v1476, 0
    %v1621 = vsel %vm313, %v1484, 0
    %v1624 = vsel %vm313, %v1492, 0
    %v1627 = vsel %vm313, %v1500, 0
    %v1630 = vsel %vm313, %v1508, 0
    %v1633 = vsel %vm437, %v967, 0
    %1635 = vmatprep.subr.bf16.mxu0 0
    %1636 = vmatpush1.bf16.msra.mxu0 %v1633
    %1637 = vmatprep.subr.bf16.mxu0 0
    %1638 = vmatpush1.bf16.msra.mxu0 0
    %1639 = vmatprep.subr.bf16.mxu0 0
    %1640 = vmatpush1.bf16.msra.mxu0 0
    %1641 = vmatprep.subr.bf16.mxu0 0
    %1642 = vmatpush1.bf16.msra.mxu0 0
    %1643 = vmatprep.subr.bf16.mxu0 0
    %1644 = vmatpush1.bf16.msra.mxu0 0
    %1645 = vmatprep.subr.bf16.mxu0 0
    %1646 = vmatpush1.bf16.msra.mxu0 0
    %1647 = vmatprep.subr.bf16.mxu0 0
    %1648 = vmatpush1.bf16.msra.mxu0 0
    %1649 = vmatprep.subr.bf16.mxu0 0
    %1650 = vmatpush1.bf16.msra.mxu0 0
    %1651 = vmatprep.subr.bf16.mxu0 0
    %1652 = vmatpush1.bf16.msra.mxu0 0
    %1653 = vmatprep.subr.bf16.mxu0 0
    %1654 = vmatpush1.bf16.msra.mxu0 0
    %1655 = vmatprep.subr.bf16.mxu0 0
    %1656 = vmatpush1.bf16.msra.mxu0 0
    %1657 = vmatprep.subr.bf16.mxu0 0
    %1658 = vmatpush1.bf16.msra.mxu0 0
    %1659 = vmatprep.subr.bf16.mxu0 0
    %1660 = vmatpush1.bf16.msra.mxu0 0
    %1661 = vmatprep.subr.bf16.mxu0 0
    %1662 = vmatpush1.bf16.msra.mxu0 0
    %1663 = vmatprep.subr.bf16.mxu0 0
    %1664 = vmatpush1.bf16.msra.mxu0 0
    %1665 = vmatprep.subr.bf16.mxu0 0
    %1666 = vmatpush1.bf16.msra.mxu0 0
    %1667 = vmatprep.mubr.bf16.mxu0 0
    %1668 = vmatmul.mubr.bf16.gmra.mrb[0].mxu0 %v1510
    %v1669 = vpop.f32.mrb[0].mxu0
    %v1670 = vadd.f32 0.0, %v1669
    %v1671 = vpop.f32.mrb[0].mxu0
    %v1672 = vpop.f32.mrb[0].mxu0
    %v1673 = vadd.f32 0.0, %v1672
    %v1674 = vpop.f32.mrb[0].mxu0
    %1675 = vmatprep.mubr.bf16.mxu0 0
    %1676 = vmatmul.mubr.bf16.gmra.mrb[0].mxu0 %v1513
    %v1677 = vpop.f32.mrb[0].mxu0
    %v1678 = vadd.f32 0.0, %v1677
    %v1679 = vpop.f32.mrb[0].mxu0
    %v1680 = vpop.f32.mrb[0].mxu0
    %v1681 = vadd.f32 0.0, %v1680
    %v1682 = vpop.f32.mrb[0].mxu0
    %1683 = vmatprep.mubr.bf16.mxu0 0
    %1684 = vmatmul.mubr.bf16.gmra.mrb[0].mxu0 %v1516
    %v1685 = vpop.f32.mrb[0].mxu0
    %v1686 = vadd.f32 0.0, %v1685
    %v1687 = vpop.f32.mrb[0].mxu0
    %v1688 = vpop.f32.mrb[0].mxu0
    %v1689 = vadd.f32 0.0, %v1688
    %v1690 = vpop.f32.mrb[0].mxu0
    %1691 = vmatprep.mubr.bf16.mxu0 0
    %1692 = vmatmul.mubr.bf16.gmra.mrb[0].mxu0 %v1519
    %v1693 = vpop.f32.mrb[0].mxu0
    %v1694 = vadd.f32 0.0, %v1693
    %v1695 = vpop.f32.mrb[0].mxu0
    %v1696 = vpop.f32.mrb[0].mxu0
    %v1697 = vadd.f32 0.0, %v1696
    %v1698 = vpop.f32.mrb[0].mxu0
    %1699 = vmatprep.mubr.bf16.mxu0 0
    %1700 = vmatmul.mubr.bf16.gmra.mrb[0].mxu0 %v1522
    %v1701 = vpop.f32.mrb[0].mxu0
    %v1702 = vadd.f32 0.0, %v1701
    %v1703 = vpop.f32.mrb[0].mxu0
    %v1704 = vpop.f32.mrb[0].mxu0
    %v1705 = vadd.f32 0.0, %v1704
    %v1706 = vpop.f32.mrb[0].mxu0
    %1707 = vmatprep.mubr.bf16.mxu0 0
    %1708 = vmatmul.mubr.bf16.gmra.mrb[0].mxu0 %v1525
    %v1709 = vpop.f32.mrb[0].mxu0
    %v1710 = vadd.f32 0.0, %v1709
    %v1711 = vpop.f32.mrb[0].mxu0
    %v1712 = vpop.f32.mrb[0].mxu0
    %v1713 = vadd.f32 0.0, %v1712
    %v1714 = vpop.f32.mrb[0].mxu0
    %1715 = vmatprep.mubr.bf16.mxu0 0
    %1716 = vmatmul.mubr.bf16.gmra.mrb[0].mxu0 %v1528
    %v1717 = vpop.f32.mrb[0].mxu0
    %v1718 = vadd.f32 0.0, %v1717
    %v1719 = vpop.f32.mrb[0].mxu0
    %v1720 = vpop.f32.mrb[0].mxu0
    %v1721 = vadd.f32 0.0, %v1720
    %v1722 = vpop.f32.mrb[0].mxu0
    %1723 = vmatprep.mubr.bf16.mxu0 0
    %1724 = vmatmul.mubr.bf16.gmra.mrb[0].mxu0 %v1531
    %v1725 = vpop.f32.mrb[0].mxu0
    %v1726 = vadd.f32 0.0, %v1725
    %v1727 = vpop.f32.mrb[0].mxu0
    %v1728 = vpop.f32.mrb[0].mxu0
    %v1729 = vadd.f32 0.0, %v1728
    %v1730 = vpop.f32.mrb[0].mxu0
    %1731 = vmatprep.mubr.bf16.mxu0 0
    %1732 = vmatmul.mubr.bf16.gmra.mrb[0].mxu0 %v1534
    %v1733 = vpop.f32.mrb[0].mxu0
    %v1734 = vadd.f32 0.0, %v1733
    %v1735 = vpop.f32.mrb[0].mxu0
    %v1736 = vpop.f32.mrb[0].mxu0
    %v1737 = vadd.f32 0.0, %v1736
    %v1738 = vpop.f32.mrb[0].mxu0
    %1739 = vmatprep.mubr.bf16.mxu0 0
    %1740 = vmatmul.mubr.bf16.gmra.mrb[0].mxu0 %v1537
    %v1741 = vpop.f32.mrb[0].mxu0
    %v1742 = vadd.f32 0.0, %v1741
    %v1743 = vpop.f32.mrb[0].mxu0
    %v1744 = vpop.f32.mrb[0].mxu0
    %v1745 = vadd.f32 0.0, %v1744
    %v1746 = vpop.f32.mrb[0].mxu0
    %1747 = vmatprep.mubr.bf16.mxu0 0
    %1748 = vmatmul.mubr.bf16.gmra.mrb[0].mxu0 %v1540
    %v1749 = vpop.f32.mrb[0].mxu0
    %v1750 = vadd.f32 0.0, %v1749
    %v1751 = vpop.f32.mrb[0].mxu0
    %v1752 = vpop.f32.mrb[0].mxu0
    %v1753 = vadd.f32 0.0, %v1752
    %v1754 = vpop.f32.mrb[0].mxu0
    %1755 = vmatprep.mubr.bf16.mxu0 0
    %1756 = vmatmul.mubr.bf16.gmra.mrb[0].mxu0 %v1543
    %v1757 = vpop.f32.mrb[0].mxu0
    %v1758 = vadd.f32 0.0, %v1757
    %v1759 = vpop.f32.mrb[0].mxu0
    %v1760 = vpop.f32.mrb[0].mxu0
    %v1761 = vadd.f32 0.0, %v1760
    %v1762 = vpop.f32.mrb[0].mxu0
    %1763 = vmatprep.mubr.bf16.mxu0 0
    %1764 = vmatmul.mubr.bf16.gmra.mrb[0].mxu0 %v1546
    %v1765 = vpop.f32.mrb[0].mxu0
    %v1766 = vadd.f32 0.0, %v1765
    %v1767 = vpop.f32.mrb[0].mxu0
    %v1768 = vpop.f32.mrb[0].mxu0
    %v1769 = vadd.f32 0.0, %v1768
    %v1770 = vpop.f32.mrb[0].mxu0
    %1771 = vmatprep.mubr.bf16.mxu0 0
    %1772 = vmatmul.mubr.bf16.gmra.mrb[0].mxu0 %v1549
    %v1773 = vpop.f32.mrb[0].mxu0
    %v1774 = vadd.f32 0.0, %v1773
    %v1775 = vpop.f32.mrb[0].mxu0
    %v1776 = vpop.f32.mrb[0].mxu0
    %v1777 = vadd.f32 0.0, %v1776
    %v1778 = vpop.f32.mrb[0].mxu0
    %1779 = vmatprep.mubr.bf16.mxu0 0
    %1780 = vmatmul.mubr.bf16.gmra.mrb[0].mxu0 %v1552
    %v1781 = vpop.f32.mrb[0].mxu0
    %v1782 = vadd.f32 0.0, %v1781
    %v1783 = vpop.f32.mrb[0].mxu0
    %v1784 = vpop.f32.mrb[0].mxu0
    %v1785 = vadd.f32 0.0, %v1784
    %v1786 = vpop.f32.mrb[0].mxu0
    %1787 = vmatprep.mubr.bf16.mxu0 0
    %1788 = vmatmul.mubr.bf16.gmra.mrb[0].mxu0 %v1555
    %v1789 = vpop.f32.mrb[0].mxu0
    %v1790 = vadd.f32 0.0, %v1789
    %v1791 = vpop.f32.mrb[0].mxu0
    %v1792 = vpop.f32.mrb[0].mxu0
    %v1793 = vadd.f32 0.0, %v1792
    %v1794 = vpop.f32.mrb[0].mxu0
    %1795 = vmatprep.mubr.bf16.mxu0 0
    %1796 = vmatmul.mubr.bf16.gmra.mrb[0].mxu0 %v1558
    %v1797 = vpop.f32.mrb[0].mxu0
    %v1798 = vadd.f32 0.0, %v1797
    %v1799 = vpop.f32.mrb[0].mxu0
    %v1800 = vpop.f32.mrb[0].mxu0
    %v1801 = vadd.f32 0.0, %v1800
    %v1802 = vpop.f32.mrb[0].mxu0
    %1803 = vmatprep.mubr.bf16.mxu0 0
    %1804 = vmatmul.mubr.bf16.gmra.mrb[0].mxu0 %v1561
    %v1805 = vpop.f32.mrb[0].mxu0
    %v1806 = vadd.f32 0.0, %v1805
    %v1807 = vpop.f32.mrb[0].mxu0
    %v1808 = vpop.f32.mrb[0].mxu0
    %v1809 = vadd.f32 0.0, %v1808
    %v1810 = vpop.f32.mrb[0].mxu0
    %1811 = vmatprep.mubr.bf16.mxu0 0
    %1812 = vmatmul.mubr.bf16.gmra.mrb[0].mxu0 %v1564
    %v1813 = vpop.f32.mrb[0].mxu0
    %v1814 = vadd.f32 0.0, %v1813
    %v1815 = vpop.f32.mrb[0].mxu0
    %v1816 = vpop.f32.mrb[0].mxu0
    %v1817 = vadd.f32 0.0, %v1816
    %v1818 = vpop.f32.mrb[0].mxu0
    %1819 = vmatprep.mubr.bf16.mxu0 0
    %1820 = vmatmul.mubr.bf16.gmra.mrb[0].mxu0 %v1567
    %v1821 = vpop.f32.mrb[0].mxu0
    %v1822 = vadd.f32 0.0, %v1821
    %v1823 = vpop.f32.mrb[0].mxu0
    %v1824 = vpop.f32.mrb[0].mxu0
    %v1825 = vadd.f32 0.0, %v1824
    %v1826 = vpop.f32.mrb[0].mxu0
    %1827 = vmatprep.mubr.bf16.mxu0 0
    %1828 = vmatmul.mubr.bf16.gmra.mrb[0].mxu0 %v1570
    %v1829 = vpop.f32.mrb[0].mxu0
    %v1830 = vadd.f32 0.0, %v1829
    %v1831 = vpop.f32.mrb[0].mxu0
    %v1832 = vpop.f32.mrb[0].mxu0
    %v1833 = vadd.f32 0.0, %v1832
    %v1834 = vpop.f32.mrb[0].mxu0
    %1835 = vmatprep.mubr.bf16.mxu0 0
    %1836 = vmatmul.mubr.bf16.gmra.mrb[0].mxu0 %v1573
    %v1837 = vpop.f32.mrb[0].mxu0
    %v1838 = vadd.f32 0.0, %v1837
    %v1839 = vpop.f32.mrb[0].mxu0
    %v1840 = vpop.f32.mrb[0].mxu0
    %v1841 = vadd.f32 0.0, %v1840
    %v1842 = vpop.f32.mrb[0].mxu0
    %1843 = vmatprep.mubr.bf16.mxu0 0
    %1844 = vmatmul.mubr.bf16.gmra.mrb[0].mxu0 %v1576
    %v1845 = vpop.f32.mrb[0].mxu0
    %v1846 = vadd.f32 0.0, %v1845
    %v1847 = vpop.f32.mrb[0].mxu0
    %v1848 = vpop.f32.mrb[0].mxu0
    %v1849 = vadd.f32 0.0, %v1848
    %v1850 = vpop.f32.mrb[0].mxu0
    %1851 = vmatprep.mubr.bf16.mxu0 0
    %1852 = vmatmul.mubr.bf16.gmra.mrb[0].mxu0 %v1579
    %v1853 = vpop.f32.mrb[0].mxu0
    %v1854 = vadd.f32 0.0, %v1853
    %v1855 = vpop.f32.mrb[0].mxu0
    %v1856 = vpop.f32.mrb[0].mxu0
    %v1857 = vadd.f32 0.0, %v1856
    %v1858 = vpop.f32.mrb[0].mxu0
    %1859 = vmatprep.mubr.bf16.mxu0 0
    %1860 = vmatmul.mubr.bf16.gmra.mrb[0].mxu0 %v1582
    %v1861 = vpop.f32.mrb[0].mxu0
    %v1862 = vadd.f32 0.0, %v1861
    %v1863 = vpop.f32.mrb[0].mxu0
    %v1864 = vpop.f32.mrb[0].mxu0
    %v1865 = vadd.f32 0.0, %v1864
    %v1866 = vpop.f32.mrb[0].mxu0
    %1867 = vmatprep.mubr.bf16.mxu0 0
    %1868 = vmatmul.mubr.bf16.gmra.mrb[0].mxu0 %v1585
    %v1869 = vpop.f32.mrb[0].mxu0
    %v1870 = vadd.f32 0.0, %v1869
    %v1871 = vpop.f32.mrb[0].mxu0
    %v1872 = vpop.f32.mrb[0].mxu0
    %v1873 = vadd.f32 0.0, %v1872
    %v1874 = vpop.f32.mrb[0].mxu0
    %1875 = vmatprep.mubr.bf16.mxu0 0
    %1876 = vmatmul.mubr.bf16.gmra.mrb[0].mxu0 %v1588
    %v1877 = vpop.f32.mrb[0].mxu0
    %v1878 = vadd.f32 0.0, %v1877
    %v1879 = vpop.f32.mrb[0].mxu0
    %v1880 = vpop.f32.mrb[0].mxu0
    %v1881 = vadd.f32 0.0, %v1880
    %v1882 = vpop.f32.mrb[0].mxu0
    %1883 = vmatprep.mubr.bf16.mxu0 0
    %1884 = vmatmul.mubr.bf16.gmra.mrb[0].mxu0 %v1591
    %v1885 = vpop.f32.mrb[0].mxu0
    %v1886 = vadd.f32 0.0, %v1885
    %v1887 = vpop.f32.mrb[0].mxu0
    %v1888 = vpop.f32.mrb[0].mxu0
    %v1889 = vadd.f32 0.0, %v1888
    %v1890 = vpop.f32.mrb[0].mxu0
    %1891 = vmatprep.mubr.bf16.mxu0 0
    %1892 = vmatmul.mubr.bf16.gmra.mrb[0].mxu0 %v1594
    %v1893 = vpop.f32.mrb[0].mxu0
    %v1894 = vadd.f32 0.0, %v1893
    %v1895 = vpop.f32.mrb[0].mxu0
    %v1896 = vpop.f32.mrb[0].mxu0
    %v1897 = vadd.f32 0.0, %v1896
    %v1898 = vpop.f32.mrb[0].mxu0
    %1899 = vmatprep.mubr.bf16.mxu0 0
    %1900 = vmatmul.mubr.bf16.gmra.mrb[0].mxu0 %v1597
    %v1901 = vpop.f32.mrb[0].mxu0
    %v1902 = vadd.f32 0.0, %v1901
    %v1903 = vpop.f32.mrb[0].mxu0
    %v1904 = vpop.f32.mrb[0].mxu0
    %v1905 = vadd.f32 0.0, %v1904
    %v1906 = vpop.f32.mrb[0].mxu0
    %1907 = vmatprep.mubr.bf16.mxu0 0
    %1908 = vmatmul.mubr.bf16.gmra.mrb[0].mxu0 %v1600
    %v1909 = vpop.f32.mrb[0].mxu0
    %v1910 = vadd.f32 0.0, %v1909
    %v1911 = vpop.f32.mrb[0].mxu0
    %v1912 = vpop.f32.mrb[0].mxu0
    %v1913 = vadd.f32 0.0, %v1912
    %v1914 = vpop.f32.mrb[0].mxu0
    %1915 = vmatprep.mubr.bf16.mxu0 0
    %1916 = vmatmul.mubr.bf16.gmra.mrb[0].mxu0 %v1603
    %v1917 = vpop.f32.mrb[0].mxu0
    %v1918 = vadd.f32 0.0, %v1917
    %v1919 = vpop.f32.mrb[0].mxu0
    %v1920 = vpop.f32.mrb[0].mxu0
    %v1921 = vadd.f32 0.0, %v1920
    %v1922 = vpop.f32.mrb[0].mxu0
    %1923 = vmatprep.mubr.bf16.mxu0 0
    %1924 = vmatmul.mubr.bf16.gmra.mrb[0].mxu0 %v1606
    %v1925 = vpop.f32.mrb[0].mxu0
    %v1926 = vadd.f32 0.0, %v1925
    %v1927 = vpop.f32.mrb[0].mxu0
    %v1928 = vpop.f32.mrb[0].mxu0
    %v1929 = vadd.f32 0.0, %v1928
    %v1930 = vpop.f32.mrb[0].mxu0
    %1931 = vmatprep.mubr.bf16.mxu0 0
    %1932 = vmatmul.mubr.bf16.gmra.mrb[0].mxu0 %v1609
    %v1933 = vpop.f32.mrb[0].mxu0
    %v1934 = vadd.f32 0.0, %v1933
    %v1935 = vpop.f32.mrb[0].mxu0
    %v1936 = vpop.f32.mrb[0].mxu0
    %v1937 = vadd.f32 0.0, %v1936
    %v1938 = vpop.f32.mrb[0].mxu0
    %1939 = vmatprep.mubr.bf16.mxu0 0
    %1940 = vmatmul.mubr.bf16.gmra.mrb[0].mxu0 %v1612
    %v1941 = vpop.f32.mrb[0].mxu0
    %v1942 = vadd.f32 0.0, %v1941
    %v1943 = vpop.f32.mrb[0].mxu0
    %v1944 = vpop.f32.mrb[0].mxu0
    %v1945 = vadd.f32 0.0, %v1944
    %v1946 = vpop.f32.mrb[0].mxu0
    %1947 = vmatprep.mubr.bf16.mxu0 0
    %1948 = vmatmul.mubr.bf16.gmra.mrb[0].mxu0 %v1615
    %v1949 = vpop.f32.mrb[0].mxu0
    %v1950 = vadd.f32 0.0, %v1949
    %v1951 = vpop.f32.mrb[0].mxu0
    %v1952 = vpop.f32.mrb[0].mxu0
    %v1953 = vadd.f32 0.0, %v1952
    %v1954 = vpop.f32.mrb[0].mxu0
    %1955 = vmatprep.mubr.bf16.mxu0 0
    %1956 = vmatmul.mubr.bf16.gmra.mrb[0].mxu0 %v1618
    %v1957 = vpop.f32.mrb[0].mxu0
    %v1958 = vadd.f32 0.0, %v1957
    %v1959 = vpop.f32.mrb[0].mxu0
    %v1960 = vpop.f32.mrb[0].mxu0
    %v1961 = vadd.f32 0.0, %v1960
    %v1962 = vpop.f32.mrb[0].mxu0
    %1963 = vmatprep.mubr.bf16.mxu0 0
    %1964 = vmatmul.mubr.bf16.gmra.mrb[0].mxu0 %v1621
    %v1965 = vpop.f32.mrb[0].mxu0
    %v1966 = vadd.f32 0.0, %v1965
    %v1967 = vpop.f32.mrb[0].mxu0
    %v1968 = vpop.f32.mrb[0].mxu0
    %v1969 = vadd.f32 0.0, %v1968
    %v1970 = vpop.f32.mrb[0].mxu0
    %1971 = vmatprep.mubr.bf16.mxu0 0
    %1972 = vmatmul.mubr.bf16.gmra.mrb[0].mxu0 %v1624
    %v1973 = vpop.f32.mrb[0].mxu0
    %v1974 = vadd.f32 0.0, %v1973
    %v1975 = vpop.f32.mrb[0].mxu0
    %v1976 = vpop.f32.mrb[0].mxu0
    %v1977 = vadd.f32 0.0, %v1976
    %v1978 = vpop.f32.mrb[0].mxu0
    %1979 = vmatprep.mubr.bf16.mxu0 0
    %1980 = vmatmul.mubr.bf16.gmra.mrb[0].mxu0 %v1627
    %v1981 = vpop.f32.mrb[0].mxu0
    %v1982 = vadd.f32 0.0, %v1981
    %v1983 = vpop.f32.mrb[0].mxu0
    %v1984 = vpop.f32.mrb[0].mxu0
    %v1985 = vadd.f32 0.0, %v1984
    %v1986 = vpop.f32.mrb[0].mxu0
    %1987 = vmatprep.mubr.bf16.mxu0 0
    %1988 = vmatmul.mubr.bf16.gmra.mrb[0].mxu0 %v1630
    %v1989 = vpop.f32.mrb[0].mxu0
    %v1990 = vadd.f32 0.0, %v1989
    %v1991 = vpop.f32.mrb[0].mxu0
    %v1992 = vpop.f32.mrb[0].mxu0
    %v1993 = vadd.f32 0.0, %v1992
    %v1994 = vpop.f32.mrb[0].mxu0
    %1995 = vdwg.mxu0
    %v1996 = vld [vmem:[#allocation2] sm:$0xff]
    %v1997 = vld [vmem:[#allocation2 + $0x8] sm:$0xff]
    %v1998 = vld [vmem:[#allocation2 + $0x10] sm:$0xff]
    %v1999 = vld [vmem:[#allocation2 + $0x18] sm:$0xff]
    %v2000 = vld [vmem:[#allocation2 + $0x20] sm:$0xff]
    %v2001 = vld [vmem:[#allocation2 + $0x28] sm:$0xff]
    %v2002 = vld [vmem:[#allocation2 + $0x30] sm:$0xff]
    %v2003 = vld [vmem:[#allocation2 + $0x38] sm:$0xff]
    %v2004 = vld [vmem:[#allocation2 + $0x40] sm:$0xff]
    %v2005 = vld [vmem:[#allocation2 + $0x48] sm:$0xff]
    %v2006 = vld [vmem:[#allocation2 + $0x50] sm:$0xff]
    %v2007 = vld [vmem:[#allocation2 + $0x58] sm:$0xff]
    %v2008 = vld [vmem:[#allocation2 + $0x60] sm:$0xff]
    %v2009 = vld [vmem:[#allocation2 + $0x68] sm:$0xff]
    %v2010 = vld [vmem:[#allocation2 + $0x70] sm:$0xff]
    %v2011 = vld [vmem:[#allocation2 + $0x78] sm:$0xff]
    %v2012 = vld [vmem:[#allocation2 + $0x80] sm:$0xff]
    %v2013 = vld [vmem:[#allocation2 + $0x88] sm:$0xff]
    %v2014 = vld [vmem:[#allocation2 + $0x90] sm:$0xff]
    %v2015 = vld [vmem:[#allocation2 + $0x98] sm:$0xff]
    %v2016 = vld [vmem:[#allocation2 + $0xa0] sm:$0xff]
    %v2017 = vld [vmem:[#allocation2 + $0xa8] sm:$0xff]
    %v2018 = vld [vmem:[#allocation2 + $0xb0] sm:$0xff]
    %v2019 = vld [vmem:[#allocation2 + $0xb8] sm:$0xff]
    %v2020 = vld [vmem:[#allocation2 + $0xc0] sm:$0xff]
    %v2021 = vld [vmem:[#allocation2 + $0xc8] sm:$0xff]
    %v2022 = vld [vmem:[#allocation2 + $0xd0] sm:$0xff]
    %v2023 = vld [vmem:[#allocation2 + $0xd8] sm:$0xff]
    %v2024 = vld [vmem:[#allocation2 + $0xe0] sm:$0xff]
    %v2025 = vld [vmem:[#allocation2 + $0xe8] sm:$0xff]
    %v2026 = vld [vmem:[#allocation2 + $0xf0] sm:$0xff]
    %v2027 = vld [vmem:[#allocation2 + $0xf8] sm:$0xff]
    %v2028 = vld [vmem:[#allocation2 + $0x100] sm:$0xff]
    %v2029 = vld [vmem:[#allocation2 + $0x108] sm:$0xff]
    %v2030 = vld [vmem:[#allocation2 + $0x110] sm:$0xff]
    %v2031 = vld [vmem:[#allocation2 + $0x118] sm:$0xff]
    %v2032 = vld [vmem:[#allocation2 + $0x120] sm:$0xff]
    %v2033 = vld [vmem:[#allocation2 + $0x128] sm:$0xff]
    %v2034 = vld [vmem:[#allocation2 + $0x130] sm:$0xff]
    %v2035 = vld [vmem:[#allocation2 + $0x138] sm:$0xff]
    %v2036 = vld [vmem:[#allocation2 + $0x140] sm:$0xff]
    %v2037 = vld [vmem:[#allocation2 + $0x148] sm:$0xff]
    %v2038 = vld [vmem:[#allocation2 + $0x150] sm:$0xff]
    %v2039 = vld [vmem:[#allocation2 + $0x158] sm:$0xff]
    %v2040 = vld [vmem:[#allocation2 + $0x160] sm:$0xff]
    %v2041 = vld [vmem:[#allocation2 + $0x168] sm:$0xff]
    %v2042 = vld [vmem:[#allocation2 + $0x170] sm:$0xff]
    %v2043 = vld [vmem:[#allocation2 + $0x178] sm:$0xff]
    %v2044 = vld [vmem:[#allocation2 + $0x180] sm:$0xff]
    %v2045 = vld [vmem:[#allocation2 + $0x188] sm:$0xff]
    %v2046 = vld [vmem:[#allocation2 + $0x190] sm:$0xff]
    %v2047 = vld [vmem:[#allocation2 + $0x198] sm:$0xff]
    %v2048 = vld [vmem:[#allocation2 + $0x1a0] sm:$0xff]
    %v2049 = vld [vmem:[#allocation2 + $0x1a8] sm:$0xff]
    %v2050 = vld [vmem:[#allocation2 + $0x1b0] sm:$0xff]
    %v2051 = vld [vmem:[#allocation2 + $0x1b8] sm:$0xff]
    %v2052 = vld [vmem:[#allocation2 + $0x1c0] sm:$0xff]
    %v2053 = vld [vmem:[#allocation2 + $0x1c8] sm:$0xff]
    %v2054 = vld [vmem:[#allocation2 + $0x1d0] sm:$0xff]
    %v2055 = vld [vmem:[#allocation2 + $0x1d8] sm:$0xff]
    %v2056 = vld [vmem:[#allocation2 + $0x1e0] sm:$0xff]
    %v2057 = vld [vmem:[#allocation2 + $0x1e8] sm:$0xff]
    %v2058 = vld [vmem:[#allocation2 + $0x1f0] sm:$0xff]
    %v2059 = vld [vmem:[#allocation2 + $0x1f8] sm:$0xff]
    %v2060 = vld [vmem:[#allocation2 + $0x200] sm:$0xff]
    %v2061 = vld [vmem:[#allocation2 + $0x208] sm:$0xff]
    %v2062 = vld [vmem:[#allocation2 + $0x210] sm:$0xff]
    %v2063 = vld [vmem:[#allocation2 + $0x218] sm:$0xff]
    %v2064 = vld [vmem:[#allocation2 + $0x220] sm:$0xff]
    %v2065 = vld [vmem:[#allocation2 + $0x228] sm:$0xff]
    %v2066 = vld [vmem:[#allocation2 + $0x230] sm:$0xff]
    %v2067 = vld [vmem:[#allocation2 + $0x238] sm:$0xff]
    %v2068 = vld [vmem:[#allocation2 + $0x240] sm:$0xff]
    %v2069 = vld [vmem:[#allocation2 + $0x248] sm:$0xff]
    %v2070 = vld [vmem:[#allocation2 + $0x250] sm:$0xff]
    %v2071 = vld [vmem:[#allocation2 + $0x258] sm:$0xff]
    %v2072 = vld [vmem:[#allocation2 + $0x260] sm:$0xff]
    %v2073 = vld [vmem:[#allocation2 + $0x268] sm:$0xff]
    %v2074 = vld [vmem:[#allocation2 + $0x270] sm:$0xff]
    %v2075 = vld [vmem:[#allocation2 + $0x278] sm:$0xff]
    %v2076 = vld [vmem:[#allocation2 + $0x280] sm:$0xff]
    %v2077 = vld [vmem:[#allocation2 + $0x288] sm:$0xff]
    %v2078 = vadd.f32 %v1996, %v1670
    %v2079 = vadd.f32 %v1997, %v1673
    %v2080 = vadd.f32 %v1998, %v1678
    %v2081 = vadd.f32 %v1999, %v1681
    %v2082 = vadd.f32 %v2000, %v1686
    %v2083 = vadd.f32 %v2001, %v1689
    %v2084 = vadd.f32 %v2002, %v1694
    %v2085 = vadd.f32 %v2003, %v1697
    %v2086 = vadd.f32 %v2004, %v1702
    %v2087 = vadd.f32 %v2005, %v1705
    %v2088 = vadd.f32 %v2006, %v1710
    %v2089 = vadd.f32 %v2007, %v1713
    %v2090 = vadd.f32 %v2008, %v1718
    %v2091 = vadd.f32 %v2009, %v1721
    %v2092 = vadd.f32 %v2010, %v1726
    %v2093 = vadd.f32 %v2011, %v1729
    %v2094 = vadd.f32 %v2012, %v1734
    %v2095 = vadd.f32 %v2013, %v1737
    %v2096 = vadd.f32 %v2014, %v1742
    %v2097 = vadd.f32 %v2015, %v1745
    %v2098 = vadd.f32 %v2016, %v1750
    %v2099 = vadd.f32 %v2017, %v1753
    %v2100 = vadd.f32 %v2018, %v1758
    %v2101 = vadd.f32 %v2019, %v1761
    %v2102 = vadd.f32 %v2020, %v1766
    %v2103 = vadd.f32 %v2021, %v1769
    %v2104 = vadd.f32 %v2022, %v1774
    %v2105 = vadd.f32 %v2023, %v1777
    %v2106 = vadd.f32 %v2024, %v1782
    %v2107 = vadd.f32 %v2025, %v1785
    %v2108 = vadd.f32 %v2026, %v1790
    %v2109 = vadd.f32 %v2027, %v1793
    %v2110 = vadd.f32 %v2028, %v1798
    %v2111 = vadd.f32 %v2029, %v1801
    %v2112 = vadd.f32 %v2030, %v1806
    %v2113 = vadd.f32 %v2031, %v1809
    %v2114 = vadd.f32 %v2032, %v1814
    %v2115 = vadd.f32 %v2033, %v1817
    %v2116 = vadd.f32 %v2034, %v1822
    %v2117 = vadd.f32 %v2035, %v1825
    %v2118 = vadd.f32 %v2036, %v1830
    %v2119 = vadd.f32 %v2037, %v1833
    %v2120 = vadd.f32 %v2038, %v1838
    %v2121 = vadd.f32 %v2039, %v1841
    %v2122 = vadd.f32 %v2040, %v1846
    %v2123 = vadd.f32 %v2041, %v1849
    %v2124 = vadd.f32 %v2042, %v1854
    %v2125 = vadd.f32 %v2043, %v1857
    %v2126 = vadd.f32 %v2044, %v1862
    %v2127 = vadd.f32 %v2045, %v1865
    %v2128 = vadd.f32 %v2046, %v1870
    %v2129 = vadd.f32 %v2047, %v1873
    %v2130 = vadd.f32 %v2048, %v1878
    %v2131 = vadd.f32 %v2049, %v1881
    %v2132 = vadd.f32 %v2050, %v1886
    %v2133 = vadd.f32 %v2051, %v1889
    %v2134 = vadd.f32 %v2052, %v1894
    %v2135 = vadd.f32 %v2053, %v1897
    %v2136 = vadd.f32 %v2054, %v1902
    %v2137 = vadd.f32 %v2055, %v1905
    %v2138 = vadd.f32 %v2056, %v1910
    %v2139 = vadd.f32 %v2057, %v1913
    %v2140 = vadd.f32 %v2058, %v1918
    %v2141 = vadd.f32 %v2059, %v1921
    %v2142 = vadd.f32 %v2060, %v1926
    %v2143 = vadd.f32 %v2061, %v1929
    %v2144 = vadd.f32 %v2062, %v1934
    %v2145 = vadd.f32 %v2063, %v1937
    %v2146 = vadd.f32 %v2064, %v1942
    %v2147 = vadd.f32 %v2065, %v1945
    %v2148 = vadd.f32 %v2066, %v1950
    %v2149 = vadd.f32 %v2067, %v1953
    %v2150 = vadd.f32 %v2068, %v1958
    %v2151 = vadd.f32 %v2069, %v1961
    %v2152 = vadd.f32 %v2070, %v1966
    %v2153 = vadd.f32 %v2071, %v1969
    %v2154 = vadd.f32 %v2072, %v1974
    %v2155 = vadd.f32 %v2073, %v1977
    %v2156 = vadd.f32 %v2074, %v1982
    %v2157 = vadd.f32 %v2075, %v1985
    %v2158 = vadd.f32 %v2076, %v1990
    %v2159 = vadd.f32 %v2077, %v1993
    %2160 = vst [vmem:[#allocation2] sm:$0xff] %v2078
    %2161 = vst [vmem:[#allocation2 + $0x8] sm:$0xff] %v2079
    %2162 = vst [vmem:[#allocation2 + $0x10] sm:$0xff] %v2080
    %2163 = vst [vmem:[#allocation2 + $0x18] sm:$0xff] %v2081
    %2164 = vst [vmem:[#allocation2 + $0x20] sm:$0xff] %v2082
    %2165 = vst [vmem:[#allocation2 + $0x28] sm:$0xff] %v2083
    %2166 = vst [vmem:[#allocation2 + $0x30] sm:$0xff] %v2084
    %2167 = vst [vmem:[#allocation2 + $0x38] sm:$0xff] %v2085
    %2168 = vst [vmem:[#allocation2 + $0x40] sm:$0xff] %v2086
    %2169 = vst [vmem:[#allocation2 + $0x48] sm:$0xff] %v2087
    %2170 = vst [vmem:[#allocation2 + $0x50] sm:$0xff] %v2088
    %2171 = vst [vmem:[#allocation2 + $0x58] sm:$0xff] %v2089
    %2172 = vst [vmem:[#allocation2 + $0x60] sm:$0xff] %v2090
    %2173 = vst [vmem:[#allocation2 + $0x68] sm:$0xff] %v2091
    %2174 = vst [vmem:[#allocation2 + $0x70] sm:$0xff] %v2092
    %2175 = vst [vmem:[#allocation2 + $0x78] sm:$0xff] %v2093
    %2176 = vst [vmem:[#allocation2 + $0x80] sm:$0xff] %v2094
    %2177 = vst [vmem:[#allocation2 + $0x88] sm:$0xff] %v2095
    %2178 = vst [vmem:[#allocation2 + $0x90] sm:$0xff] %v2096
    %2179 = vst [vmem:[#allocation2 + $0x98] sm:$0xff] %v2097
    %2180 = vst [vmem:[#allocation2 + $0xa0] sm:$0xff] %v2098
    %2181 = vst [vmem:[#allocation2 + $0xa8] sm:$0xff] %v2099
    %2182 = vst [vmem:[#allocation2 + $0xb0] sm:$0xff] %v2100
    %2183 = vst [vmem:[#allocation2 + $0xb8] sm:$0xff] %v2101
    %2184 = vst [vmem:[#allocation2 + $0xc0] sm:$0xff] %v2102
    %2185 = vst [vmem:[#allocation2 + $0xc8] sm:$0xff] %v2103
    %2186 = vst [vmem:[#allocation2 + $0xd0] sm:$0xff] %v2104
    %2187 = vst [vmem:[#allocation2 + $0xd8] sm:$0xff] %v2105
    %2188 = vst [vmem:[#allocation2 + $0xe0] sm:$0xff] %v2106
    %2189 = vst [vmem:[#allocation2 + $0xe8] sm:$0xff] %v2107
    %2190 = vst [vmem:[#allocation2 + $0xf0] sm:$0xff] %v2108
    %2191 = vst [vmem:[#allocation2 + $0xf8] sm:$0xff] %v2109
    %2192 = vst [vmem:[#allocation2 + $0x100] sm:$0xff] %v2110
    %2193 = vst [vmem:[#allocation2 + $0x108] sm:$0xff] %v2111
    %2194 = vst [vmem:[#allocation2 + $0x110] sm:$0xff] %v2112
    %2195 = vst [vmem:[#allocation2 + $0x118] sm:$0xff] %v2113
    %2196 = vst [vmem:[#allocation2 + $0x120] sm:$0xff] %v2114
    %2197 = vst [vmem:[#allocation2 + $0x128] sm:$0xff] %v2115
    %2198 = vst [vmem:[#allocation2 + $0x130] sm:$0xff] %v2116
    %2199 = vst [vmem:[#allocation2 + $0x138] sm:$0xff] %v2117
    %2200 = vst [vmem:[#allocation2 + $0x140] sm:$0xff] %v2118
    %2201 = vst [vmem:[#allocation2 + $0x148] sm:$0xff] %v2119
    %2202 = vst [vmem:[#allocation2 + $0x150] sm:$0xff] %v2120
    %2203 = vst [vmem:[#allocation2 + $0x158] sm:$0xff] %v2121
    %2204 = vst [vmem:[#allocation2 + $0x160] sm:$0xff] %v2122
    %2205 = vst [vmem:[#allocation2 + $0x168] sm:$0xff] %v2123
    %2206 = vst [vmem:[#allocation2 + $0x170] sm:$0xff] %v2124
    %2207 = vst [vmem:[#allocation2 + $0x178] sm:$0xff] %v2125
    %2208 = vst [vmem:[#allocation2 + $0x180] sm:$0xff] %v2126
    %2209 = vst [vmem:[#allocation2 + $0x188] sm:$0xff] %v2127
    %2210 = vst [vmem:[#allocation2 + $0x190] sm:$0xff] %v2128
    %2211 = vst [vmem:[#allocation2 + $0x198] sm:$0xff] %v2129
    %2212 = vst [vmem:[#allocation2 + $0x1a0] sm:$0xff] %v2130
    %2213 = vst [vmem:[#allocation2 + $0x1a8] sm:$0xff] %v2131
    %2214 = vst [vmem:[#allocation2 + $0x1b0] sm:$0xff] %v2132
    %2215 = vst [vmem:[#allocation2 + $0x1b8] sm:$0xff] %v2133
    %2216 = vst [vmem:[#allocation2 + $0x1c0] sm:$0xff] %v2134
    %2217 = vst [vmem:[#allocation2 + $0x1c8] sm:$0xff] %v2135
    %2218 = vst [vmem:[#allocation2 + $0x1d0] sm:$0xff] %v2136
    %2219 = vst [vmem:[#allocation2 + $0x1d8] sm:$0xff] %v2137
    %2220 = vst [vmem:[#allocation2 + $0x1e0] sm:$0xff] %v2138
    %2221 = vst [vmem:[#allocation2 + $0x1e8] sm:$0xff] %v2139
    %2222 = vst [vmem:[#allocation2 + $0x1f0] sm:$0xff] %v2140
    %2223 = vst [vmem:[#allocation2 + $0x1f8] sm:$0xff] %v2141
    %2224 = vst [vmem:[#allocation2 + $0x200] sm:$0xff] %v2142
    %2225 = vst [vmem:[#allocation2 + $0x208] sm:$0xff] %v2143
    %2226 = vst [vmem:[#allocation2 + $0x210] sm:$0xff] %v2144
    %2227 = vst [vmem:[#allocation2 + $0x218] sm:$0xff] %v2145
    %2228 = vst [vmem:[#allocation2 + $0x220] sm:$0xff] %v2146
    %2229 = vst [vmem:[#allocation2 + $0x228] sm:$0xff] %v2147
    %2230 = vst [vmem:[#allocation2 + $0x230] sm:$0xff] %v2148
    %2231 = vst [vmem:[#allocation2 + $0x238] sm:$0xff] %v2149
    %2232 = vst [vmem:[#allocation2 + $0x240] sm:$0xff] %v2150
    %2233 = vst [vmem:[#allocation2 + $0x248] sm:$0xff] %v2151
    %2234 = vst [vmem:[#allocation2 + $0x250] sm:$0xff] %v2152
    %2235 = vst [vmem:[#allocation2 + $0x258] sm:$0xff] %v2153
    %2236 = vst [vmem:[#allocation2 + $0x260] sm:$0xff] %v2154
    %2237 = vst [vmem:[#allocation2 + $0x268] sm:$0xff] %v2155
    %2238 = vst [vmem:[#allocation2 + $0x270] sm:$0xff] %v2156
    %2239 = vst [vmem:[#allocation2 + $0x278] sm:$0xff] %v2157
    %2240 = vst [vmem:[#allocation2 + $0x280] sm:$0xff] %v2158
    %2241 = vst [vmem:[#allocation2 + $0x288] sm:$0xff] %v2159
    %v2242 = vld [vmem:[%s0] sm:$0xe]
    %v2243 = vld [vmem:[%s0 + $0x4] sm:$0xf]
    %v2244 = vld [vmem:[%s0 + $0x8] sm:$0xf]
    %v2245 = vld [vmem:[%s0 + $0xc] sm:$0xf]
    %v2246 = vld [vmem:[%s0 + $0x10] sm:$0xf]
    %v2247 = vld [vmem:[%s0 + $0x14] sm:$0xf]
    %v2248 = vld [vmem:[%s0 + $0x18] sm:$0xf]
    %v2249 = vld [vmem:[%s0 + $0x1c] sm:$0xf]
    %v2250 = vld [vmem:[%s0 + $0x20] sm:$0xf]
    %v2251 = vld [vmem:[%s0 + $0x24] sm:$0xf]
    %v2252 = vld [vmem:[%s0 + $0x28] sm:$0xf]
    %v2253 = vld [vmem:[%s0 + $0x2c] sm:$0xf]
    %v2254 = vld [vmem:[%s0 + $0x30] sm:$0xf]
    %v2255 = vld [vmem:[%s0 + $0x34] sm:$0xf]
    %v2256 = vld [vmem:[%s0 + $0x38] sm:$0xf]
    %v2257 = vld [vmem:[%s0 + $0x3c] sm:$0xf]
    %v2258 = vld [vmem:[%s0 + $0x40] sm:$0xf]
    %v2259 = vld [vmem:[%s0 + $0x44] sm:$0xf]
    %v2260 = vld [vmem:[%s0 + $0x48] sm:$0xf]
    %v2261 = vld [vmem:[%s0 + $0x4c] sm:$0xf]
    %v2262 = vld [vmem:[%s0 + $0x50] sm:$0xf]
    %v2263 = vld [vmem:[%s0 + $0x54] sm:$0xf]
    %v2264 = vld [vmem:[%s0 + $0x58] sm:$0xf]
    %v2265 = vld [vmem:[%s0 + $0x5c] sm:$0xf]
    %v2266 = vld [vmem:[%s0 + $0x60] sm:$0xf]
    %v2267 = vld [vmem:[%s0 + $0x64] sm:$0xf]
    %v2268 = vld [vmem:[%s0 + $0x68] sm:$0xf]
    %v2269 = vld [vmem:[%s0 + $0x6c] sm:$0xf]
    %v2270 = vld [vmem:[%s0 + $0x70] sm:$0xf]
    %v2271 = vld [vmem:[%s0 + $0x74] sm:$0xf]
    %v2272 = vld [vmem:[%s0 + $0x78] sm:$0xf]
    %v2273 = vld [vmem:[%s0 + $0x7c] sm:$0xf]
    %v2274 = vld [vmem:[%s0 + $0x80] sm:$0xf]
    %v2275 = vld [vmem:[%s0 + $0x84] sm:$0xf]
    %v2276 = vld [vmem:[%s0 + $0x88] sm:$0xf]
    %v2277 = vld [vmem:[%s0 + $0x8c] sm:$0xf]
    %v2278 = vld [vmem:[%s0 + $0x90] sm:$0xf]
    %v2279 = vld [vmem:[%s0 + $0x94] sm:$0xf]
    %v2280 = vld [vmem:[%s0 + $0x98] sm:$0xf]
    %v2281 = vld [vmem:[%s0 + $0x9c] sm:$0xf]
    %v2282 = vld [vmem:[%s0 + $0xa0] sm:$0xf]
    %v2283 = vld [vmem:[%s0 + $0xa4] sm:$0xf]
    %v2284 = vld [vmem:[%s0 + $0xa8] sm:$0xf]
    %v2285 = vld [vmem:[%s0 + $0xac] sm:$0xf]
    %v2286 = vld [vmem:[%s0 + $0xb0] sm:$0xf]
    %v2287 = vld [vmem:[%s0 + $0xb4] sm:$0xf]
    %v2288 = vld [vmem:[%s0 + $0xb8] sm:$0xf]
    %v2289 = vld [vmem:[%s0 + $0xbc] sm:$0xf]
    %v2290 = vld [vmem:[%s0 + $0xc0] sm:$0xf]
    %v2291 = vld [vmem:[%s0 + $0xc4] sm:$0xf]
    %v2292 = vld [vmem:[%s0 + $0xc8] sm:$0xf]
    %v2293 = vld [vmem:[%s0 + $0xcc] sm:$0xf]
    %v2294 = vld [vmem:[%s0 + $0xd0] sm:$0xf]
    %v2295 = vld [vmem:[%s0 + $0xd4] sm:$0xf]
    %v2296 = vld [vmem:[%s0 + $0xd8] sm:$0xf]
    %v2297 = vld [vmem:[%s0 + $0xdc] sm:$0xf]
    %v2298 = vld [vmem:[%s0 + $0xe0] sm:$0xf]
    %v2299 = vld [vmem:[%s0 + $0xe4] sm:$0xf]
    %v2300 = vld [vmem:[%s0 + $0xe8] sm:$0xf]
    %v2301 = vld [vmem:[%s0 + $0xec] sm:$0xf]
    %v2302 = vld [vmem:[%s0 + $0xf0] sm:$0xf]
    %v2303 = vld [vmem:[%s0 + $0xf4] sm:$0xf]
    %v2304 = vld [vmem:[%s0 + $0xf8] sm:$0xf]
    %v2305 = vld [vmem:[%s0 + $0xfc] sm:$0xf]
    %v2306 = vld [vmem:[%s0 + $0x100] sm:$0xf]
    %v2307 = vld [vmem:[%s0 + $0x104] sm:$0xf]
    %v2308 = vld [vmem:[%s0 + $0x108] sm:$0xf]
    %v2309 = vld [vmem:[%s0 + $0x10c] sm:$0xf]
    %v2310 = vld [vmem:[%s0 + $0x110] sm:$0xf]
    %v2311 = vld [vmem:[%s0 + $0x114] sm:$0xf]
    %v2312 = vld [vmem:[%s0 + $0x118] sm:$0xf]
    %v2313 = vld [vmem:[%s0 + $0x11c] sm:$0xf]
    %v2314 = vld [vmem:[%s0 + $0x120] sm:$0xf]
    %v2315 = vld [vmem:[%s0 + $0x124] sm:$0xf]
    %v2316 = vld [vmem:[%s0 + $0x128] sm:$0xf]
    %v2317 = vld [vmem:[%s0 + $0x12c] sm:$0xf]
    %v2318 = vld [vmem:[%s0 + $0x130] sm:$0xf]
    %v2319 = vld [vmem:[%s0 + $0x134] sm:$0xf]
    %v2320 = vld [vmem:[%s0 + $0x138] sm:$0xf]
    %v2321 = vld [vmem:[%s0 + $0x13c] sm:$0xf]
    %v2322 = vld [vmem:[%s0 + $0x140] sm:$0xf]
    %v2323 = vld [vmem:[%s0 + $0x144] sm:$0xf]
    %v2324 = vld [vmem:[%s0 + $0x148] sm:$0x1]
    %v2325 = vld [vmem:[%s1 + $0x8] sm:$0xf]
    %v2409 = vunpack.c.l.b16 %v2242
    %v2410 = vunpack.c.l.b16 %v2243
    %v2411 = vunpack.c.l.b16 %v2244
    %v2412 = vunpack.c.l.b16 %v2245
    %v2413 = vunpack.c.l.b16 %v2246
    %v2414 = vunpack.c.l.b16 %v2247
    %v2415 = vunpack.c.l.b16 %v2248
    %v2416 = vunpack.c.l.b16 %v2249
    %v2417 = vunpack.c.l.b16 %v2250
    %v2418 = vunpack.c.l.b16 %v2251
    %v2419 = vunpack.c.l.b16 %v2252
    %v2420 = vunpack.c.l.b16 %v2253
    %v2421 = vunpack.c.l.b16 %v2254
    %v2422 = vunpack.c.l.b16 %v2255
    %v2423 = vunpack.c.l.b16 %v2256
    %v2424 = vunpack.c.l.b16 %v2257
    %v2425 = vunpack.c.l.b16 %v2258
    %v2426 = vunpack.c.l.b16 %v2259
    %v2427 = vunpack.c.l.b16 %v2260
    %v2428 = vunpack.c.l.b16 %v2261
    %v2429 = vunpack.c.l.b16 %v2262
    %v2430 = vunpack.c.l.b16 %v2263
    %v2431 = vunpack.c.l.b16 %v2264
    %v2432 = vunpack.c.l.b16 %v2265
    %v2433 = vunpack.c.l.b16 %v2266
    %v2434 = vunpack.c.l.b16 %v2267
    %v2435 = vunpack.c.l.b16 %v2268
    %v2436 = vunpack.c.l.b16 %v2269
    %v2437 = vunpack.c.l.b16 %v2270
    %v2438 = vunpack.c.l.b16 %v2271
    %v2439 = vunpack.c.l.b16 %v2272
    %v2440 = vunpack.c.l.b16 %v2273
    %v2441 = vunpack.c.l.b16 %v2274
    %v2442 = vunpack.c.l.b16 %v2275
    %v2443 = vunpack.c.l.b16 %v2276
    %v2444 = vunpack.c.l.b16 %v2277
    %v2445 = vunpack.c.l.b16 %v2278
    %v2446 = vunpack.c.l.b16 %v2279
    %v2447 = vunpack.c.l.b16 %v2280
    %v2448 = vunpack.c.l.b16 %v2281
    %v2449 = vunpack.c.l.b16 %v2282
    %v2450 = vunpack.c.l.b16 %v2283
    %v2451 = vunpack.c.l.b16 %v2284
    %v2452 = vunpack.c.l.b16 %v2285
    %v2453 = vunpack.c.l.b16 %v2286
    %v2454 = vunpack.c.l.b16 %v2287
    %v2455 = vunpack.c.l.b16 %v2288
    %v2456 = vunpack.c.l.b16 %v2289
    %v2457 = vunpack.c.l.b16 %v2290
    %v2458 = vunpack.c.l.b16 %v2291
    %v2459 = vunpack.c.l.b16 %v2292
    %v2460 = vunpack.c.l.b16 %v2293
    %v2461 = vunpack.c.l.b16 %v2294
    %v2462 = vunpack.c.l.b16 %v2295
    %v2463 = vunpack.c.l.b16 %v2296
    %v2464 = vunpack.c.l.b16 %v2297
    %v2465 = vunpack.c.l.b16 %v2298
    %v2466 = vunpack.c.l.b16 %v2299
    %v2467 = vunpack.c.l.b16 %v2300
    %v2468 = vunpack.c.l.b16 %v2301
    %v2469 = vunpack.c.l.b16 %v2302
    %v2470 = vunpack.c.l.b16 %v2303
    %v2471 = vunpack.c.l.b16 %v2304
    %v2472 = vunpack.c.l.b16 %v2305
    %v2473 = vunpack.c.l.b16 %v2306
    %v2474 = vunpack.c.l.b16 %v2307
    %v2475 = vunpack.c.l.b16 %v2308
    %v2476 = vunpack.c.l.b16 %v2309
    %v2477 = vunpack.c.l.b16 %v2310
    %v2478 = vunpack.c.l.b16 %v2311
    %v2479 = vunpack.c.l.b16 %v2312
    %v2480 = vunpack.c.l.b16 %v2313
    %v2481 = vunpack.c.l.b16 %v2314
    %v2482 = vunpack.c.l.b16 %v2315
    %v2483 = vunpack.c.l.b16 %v2316
    %v2484 = vunpack.c.l.b16 %v2317
    %v2485 = vunpack.c.l.b16 %v2318
    %v2486 = vunpack.c.l.b16 %v2319
    %v2487 = vunpack.c.l.b16 %v2320
    %v2488 = vunpack.c.l.b16 %v2321
    %v2489 = vunpack.c.l.b16 %v2322
    %v2490 = vunpack.c.l.b16 %v2323
    %v2491 = vunpack.c.l.b16 %v2324
    %v2492 = vpack.c.b16 %v2410, %v2409
    %v2493 = vpack.c.b16 %v2412, %v2411
    %v2494 = vpack.c.b16 %v2414, %v2413
    %v2495 = vpack.c.b16 %v2416, %v2415
    %v2496 = vpack.c.b16 %v2418, %v2417
    %v2497 = vpack.c.b16 %v2420, %v2419
    %v2498 = vpack.c.b16 %v2422, %v2421
    %v2499 = vpack.c.b16 %v2424, %v2423
    %v2500 = vpack.c.b16 %v2426, %v2425
    %v2501 = vpack.c.b16 %v2428, %v2427
    %v2502 = vpack.c.b16 %v2430, %v2429
    %v2503 = vpack.c.b16 %v2432, %v2431
    %v2504 = vpack.c.b16 %v2434, %v2433
    %v2505 = vpack.c.b16 %v2436, %v2435
    %v2506 = vpack.c.b16 %v2438, %v2437
    %v2507 = vpack.c.b16 %v2440, %v2439
    %v2508 = vpack.c.b16 %v2442, %v2441
    %v2509 = vpack.c.b16 %v2444, %v2443
    %v2510 = vpack.c.b16 %v2446, %v2445
    %v2511 = vpack.c.b16 %v2448, %v2447
    %v2512 = vpack.c.b16 %v2450, %v2449
    %v2513 = vpack.c.b16 %v2452, %v2451
    %v2514 = vpack.c.b16 %v2454, %v2453
    %v2515 = vpack.c.b16 %v2456, %v2455
    %v2516 = vpack.c.b16 %v2458, %v2457
    %v2517 = vpack.c.b16 %v2460, %v2459
    %v2518 = vpack.c.b16 %v2462, %v2461
    %v2519 = vpack.c.b16 %v2464, %v2463
    %v2520 = vpack.c.b16 %v2466, %v2465
    %v2521 = vpack.c.b16 %v2468, %v2467
    %v2522 = vpack.c.b16 %v2470, %v2469
    %v2523 = vpack.c.b16 %v2472, %v2471
    %v2524 = vpack.c.b16 %v2474, %v2473
    %v2525 = vpack.c.b16 %v2476, %v2475
    %v2526 = vpack.c.b16 %v2478, %v2477
    %v2527 = vpack.c.b16 %v2480, %v2479
    %v2528 = vpack.c.b16 %v2482, %v2481
    %v2529 = vpack.c.b16 %v2484, %v2483
    %v2530 = vpack.c.b16 %v2486, %v2485
    %v2531 = vpack.c.b16 %v2488, %v2487
    %v2532 = vpack.c.b16 %v2490, %v2489
    %v2533 = vpack.c.b16 %v2491, %v2491
    %vm2534 = vcmask 1046528
    %v2535 = vrot.slane %v2492, 1
    %v2536 = vrot.slane %v2493, 1
    %v2537 = vsel %vm2534, %v2535, %v2536
    %v2538 = vrot.slane %v2494, 1
    %v2539 = vsel %vm2534, %v2536, %v2538
    %v2540 = vrot.slane %v2495, 1
    %v2541 = vsel %vm2534, %v2538, %v2540
    %v2542 = vrot.slane %v2496, 1
    %v2543 = vsel %vm2534, %v2540, %v2542
    %v2544 = vrot.slane %v2497, 1
    %v2545 = vsel %vm2534, %v2542, %v2544
    %v2546 = vrot.slane %v2498, 1
    %v2547 = vsel %vm2534, %v2544, %v2546
    %v2548 = vrot.slane %v2499, 1
    %v2549 = vsel %vm2534, %v2546, %v2548
    %v2550 = vrot.slane %v2500, 1
    %v2551 = vsel %vm2534, %v2548, %v2550
    %v2552 = vrot.slane %v2501, 1
    %v2553 = vsel %vm2534, %v2550, %v2552
    %v2554 = vrot.slane %v2502, 1
    %v2555 = vsel %vm2534, %v2552, %v2554
    %v2556 = vrot.slane %v2503, 1
    %v2557 = vsel %vm2534, %v2554, %v2556
    %v2558 = vrot.slane %v2504, 1
    %v2559 = vsel %vm2534, %v2556, %v2558
    %v2560 = vrot.slane %v2505, 1
    %v2561 = vsel %vm2534, %v2558, %v2560
    %v2562 = vrot.slane %v2506, 1
    %v2563 = vsel %vm2534, %v2560, %v2562
    %v2564 = vrot.slane %v2507, 1
    %v2565 = vsel %vm2534, %v2562, %v2564
    %v2566 = vrot.slane %v2508, 1
    %v2567 = vsel %vm2534, %v2564, %v2566
    %v2568 = vrot.slane %v2509, 1
    %v2569 = vsel %vm2534, %v2566, %v2568
    %v2570 = vrot.slane %v2510, 1
    %v2571 = vsel %vm2534, %v2568, %v2570
    %v2572 = vrot.slane %v2511, 1
    %v2573 = vsel %vm2534, %v2570, %v2572
    %v2574 = vrot.slane %v2512, 1
    %v2575 = vsel %vm2534, %v2572, %v2574
    %v2576 = vrot.slane %v2513, 1
    %v2577 = vsel %vm2534, %v2574, %v2576
    %v2578 = vrot.slane %v2514, 1
    %v2579 = vsel %vm2534, %v2576, %v2578
    %v2580 = vrot.slane %v2515, 1
    %v2581 = vsel %vm2534, %v2578, %v2580
    %v2582 = vrot.slane %v2516, 1
    %v2583 = vsel %vm2534, %v2580, %v2582
    %v2584 = vrot.slane %v2517, 1
    %v2585 = vsel %vm2534, %v2582, %v2584
    %v2586 = vrot.slane %v2518, 1
    %v2587 = vsel %vm2534, %v2584, %v2586
    %v2588 = vrot.slane %v2519, 1
    %v2589 = vsel %vm2534, %v2586, %v2588
    %v2590 = vrot.slane %v2520, 1
    %v2591 = vsel %vm2534, %v2588, %v2590
    %v2592 = vrot.slane %v2521, 1
    %v2593 = vsel %vm2534, %v2590, %v2592
    %v2594 = vrot.slane %v2522, 1
    %v2595 = vsel %vm2534, %v2592, %v2594
    %v2596 = vrot.slane %v2523, 1
    %v2597 = vsel %vm2534, %v2594, %v2596
    %v2598 = vrot.slane %v2524, 1
    %v2599 = vsel %vm2534, %v2596, %v2598
    %v2600 = vrot.slane %v2525, 1
    %v2601 = vsel %vm2534, %v2598, %v2600
    %v2602 = vrot.slane %v2526, 1
    %v2603 = vsel %vm2534, %v2600, %v2602
    %v2604 = vrot.slane %v2527, 1
    %v2605 = vsel %vm2534, %v2602, %v2604
    %v2606 = vrot.slane %v2528, 1
    %v2607 = vsel %vm2534, %v2604, %v2606
    %v2608 = vrot.slane %v2529, 1
    %v2609 = vsel %vm2534, %v2606, %v2608
    %v2610 = vrot.slane %v2530, 1
    %v2611 = vsel %vm2534, %v2608, %v2610
    %v2612 = vrot.slane %v2531, 1
    %v2613 = vsel %vm2534, %v2610, %v2612
    %v2614 = vrot.slane %v2532, 1
    %v2615 = vsel %vm2534, %v2612, %v2614
    %v2616 = vrot.slane %v2533, 1
    %v2617 = vsel %vm2534, %v2614, %v2616
    %v2619 = vsel %vm313, %v2537, 0
    %v2622 = vsel %vm313, %v2539, 0
    %v2625 = vsel %vm313, %v2541, 0
    %v2628 = vsel %vm313, %v2543, 0
    %v2631 = vsel %vm313, %v2545, 0
    %v2634 = vsel %vm313, %v2547, 0
    %v2637 = vsel %vm313, %v2549, 0
    %v2640 = vsel %vm313, %v2551, 0
    %v2643 = vsel %vm313, %v2553, 0
    %v2646 = vsel %vm313, %v2555, 0
    %v2649 = vsel %vm313, %v2557, 0
    %v2652 = vsel %vm313, %v2559, 0
    %v2655 = vsel %vm313, %v2561, 0
    %v2658 = vsel %vm313, %v2563, 0
    %v2661 = vsel %vm313, %v2565, 0
    %v2664 = vsel %vm313, %v2567, 0
    %v2667 = vsel %vm313, %v2569, 0
    %v2670 = vsel %vm313, %v2571, 0
    %v2673 = vsel %vm313, %v2573, 0
    %v2676 = vsel %vm313, %v2575, 0
    %v2679 = vsel %vm313, %v2577, 0
    %v2682 = vsel %vm313, %v2579, 0
    %v2685 = vsel %vm313, %v2581, 0
    %v2688 = vsel %vm313, %v2583, 0
    %v2691 = vsel %vm313, %v2585, 0
    %v2694 = vsel %vm313, %v2587, 0
    %v2697 = vsel %vm313, %v2589, 0
    %v2700 = vsel %vm313, %v2591, 0
    %v2703 = vsel %vm313, %v2593, 0
    %v2706 = vsel %vm313, %v2595, 0
    %v2709 = vsel %vm313, %v2597, 0
    %v2712 = vsel %vm313, %v2599, 0
    %v2715 = vsel %vm313, %v2601, 0
    %v2718 = vsel %vm313, %v2603, 0
    %v2721 = vsel %vm313, %v2605, 0
    %v2724 = vsel %vm313, %v2607, 0
    %v2727 = vsel %vm313, %v2609, 0
    %v2730 = vsel %vm313, %v2611, 0
    %v2733 = vsel %vm313, %v2613, 0
    %v2736 = vsel %vm313, %v2615, 0
    %v2739 = vsel %vm313, %v2617, 0
    %v2742 = vsel %vm437, %v2325, 0
    %2744 = vmatprep.subr.bf16.mxu0 0
    %2745 = vmatpush1.bf16.msra.mxu0 %v2742
    %2746 = vmatprep.subr.bf16.mxu0 0
    %2747 = vmatpush1.bf16.msra.mxu0 0
    %2748 = vmatprep.subr.bf16.mxu0 0
    %2749 = vmatpush1.bf16.msra.mxu0 0
    %2750 = vmatprep.subr.bf16.mxu0 0
    %2751 = vmatpush1.bf16.msra.mxu0 0
    %2752 = vmatprep.subr.bf16.mxu0 0
    %2753 = vmatpush1.bf16.msra.mxu0 0
    %2754 = vmatprep.subr.bf16.mxu0 0
    %2755 = vmatpush1.bf16.msra.mxu0 0
    %2756 = vmatprep.subr.bf16.mxu0 0
    %2757 = vmatpush1.bf16.msra.mxu0 0
    %2758 = vmatprep.subr.bf16.mxu0 0
    %2759 = vmatpush1.bf16.msra.mxu0 0
    %2760 = vmatprep.subr.bf16.mxu0 0
    %2761 = vmatpush1.bf16.msra.mxu0 0
    %2762 = vmatprep.subr.bf16.mxu0 0
    %2763 = vmatpush1.bf16.msra.mxu0 0
    %2764 = vmatprep.subr.bf16.mxu0 0
    %2765 = vmatpush1.bf16.msra.mxu0 0
    %2766 = vmatprep.subr.bf16.mxu0 0
    %2767 = vmatpush1.bf16.msra.mxu0 0
    %2768 = vmatprep.subr.bf16.mxu0 0
    %2769 = vmatpush1.bf16.msra.mxu0 0
    %2770 = vmatprep.subr.bf16.mxu0 0
    %2771 = vmatpush1.bf16.msra.mxu0 0
    %2772 = vmatprep.subr.bf16.mxu0 0
    %2773 = vmatpush1.bf16.msra.mxu0 0
    %2774 = vmatprep.subr.bf16.mxu0 0
    %2775 = vmatpush1.bf16.msra.mxu0 0
    %2776 = vmatprep.mubr.bf16.mxu0 0
    %2777 = vmatmul.mubr.bf16.gmra.mrb[0].mxu0 %v2619
    %v2778 = vpop.f32.mrb[0].mxu0
    %v2779 = vadd.f32 0.0, %v2778
    %v2780 = vpop.f32.mrb[0].mxu0
    %v2781 = vpop.f32.mrb[0].mxu0
    %v2782 = vadd.f32 0.0, %v2781
    %v2783 = vpop.f32.mrb[0].mxu0
    %2784 = vmatprep.mubr.bf16.mxu0 0
    %2785 = vmatmul.mubr.bf16.gmra.mrb[0].mxu0 %v2622
    %v2786 = vpop.f32.mrb[0].mxu0
    %v2787 = vadd.f32 0.0, %v2786
    %v2788 = vpop.f32.mrb[0].mxu0
    %v2789 = vpop.f32.mrb[0].mxu0
    %v2790 = vadd.f32 0.0, %v2789
    %v2791 = vpop.f32.mrb[0].mxu0
    %2792 = vmatprep.mubr.bf16.mxu0 0
    %2793 = vmatmul.mubr.bf16.gmra.mrb[0].mxu0 %v2625
    %v2794 = vpop.f32.mrb[0].mxu0
    %v2795 = vadd.f32 0.0, %v2794
    %v2796 = vpop.f32.mrb[0].mxu0
    %v2797 = vpop.f32.mrb[0].mxu0
    %v2798 = vadd.f32 0.0, %v2797
    %v2799 = vpop.f32.mrb[0].mxu0
    %2800 = vmatprep.mubr.bf16.mxu0 0
    %2801 = vmatmul.mubr.bf16.gmra.mrb[0].mxu0 %v2628
    %v2802 = vpop.f32.mrb[0].mxu0
    %v2803 = vadd.f32 0.0, %v2802
    %v2804 = vpop.f32.mrb[0].mxu0
    %v2805 = vpop.f32.mrb[0].mxu0
    %v2806 = vadd.f32 0.0, %v2805
    %v2807 = vpop.f32.mrb[0].mxu0
    %2808 = vmatprep.mubr.bf16.mxu0 0
    %2809 = vmatmul.mubr.bf16.gmra.mrb[0].mxu0 %v2631
    %v2810 = vpop.f32.mrb[0].mxu0
    %v2811 = vadd.f32 0.0, %v2810
    %v2812 = vpop.f32.mrb[0].mxu0
    %v2813 = vpop.f32.mrb[0].mxu0
    %v2814 = vadd.f32 0.0, %v2813
    %v2815 = vpop.f32.mrb[0].mxu0
    %2816 = vmatprep.mubr.bf16.mxu0 0
    %2817 = vmatmul.mubr.bf16.gmra.mrb[0].mxu0 %v2634
    %v2818 = vpop.f32.mrb[0].mxu0
    %v2819 = vadd.f32 0.0, %v2818
    %v2820 = vpop.f32.mrb[0].mxu0
    %v2821 = vpop.f32.mrb[0].mxu0
    %v2822 = vadd.f32 0.0, %v2821
    %v2823 = vpop.f32.mrb[0].mxu0
    %2824 = vmatprep.mubr.bf16.mxu0 0
    %2825 = vmatmul.mubr.bf16.gmra.mrb[0].mxu0 %v2637
    %v2826 = vpop.f32.mrb[0].mxu0
    %v2827 = vadd.f32 0.0, %v2826
    %v2828 = vpop.f32.mrb[0].mxu0
    %v2829 = vpop.f32.mrb[0].mxu0
    %v2830 = vadd.f32 0.0, %v2829
    %v2831 = vpop.f32.mrb[0].mxu0
    %2832 = vmatprep.mubr.bf16.mxu0 0
    %2833 = vmatmul.mubr.bf16.gmra.mrb[0].mxu0 %v2640
    %v2834 = vpop.f32.mrb[0].mxu0
    %v2835 = vadd.f32 0.0, %v2834
    %v2836 = vpop.f32.mrb[0].mxu0
    %v2837 = vpop.f32.mrb[0].mxu0
    %v2838 = vadd.f32 0.0, %v2837
    %v2839 = vpop.f32.mrb[0].mxu0
    %2840 = vmatprep.mubr.bf16.mxu0 0
    %2841 = vmatmul.mubr.bf16.gmra.mrb[0].mxu0 %v2643
    %v2842 = vpop.f32.mrb[0].mxu0
    %v2843 = vadd.f32 0.0, %v2842
    %v2844 = vpop.f32.mrb[0].mxu0
    %v2845 = vpop.f32.mrb[0].mxu0
    %v2846 = vadd.f32 0.0, %v2845
    %v2847 = vpop.f32.mrb[0].mxu0
    %2848 = vmatprep.mubr.bf16.mxu0 0
    %2849 = vmatmul.mubr.bf16.gmra.mrb[0].mxu0 %v2646
    %v2850 = vpop.f32.mrb[0].mxu0
    %v2851 = vadd.f32 0.0, %v2850
    %v2852 = vpop.f32.mrb[0].mxu0
    %v2853 = vpop.f32.mrb[0].mxu0
    %v2854 = vadd.f32 0.0, %v2853
    %v2855 = vpop.f32.mrb[0].mxu0
    %2856 = vmatprep.mubr.bf16.mxu0 0
    %2857 = vmatmul.mubr.bf16.gmra.mrb[0].mxu0 %v2649
    %v2858 = vpop.f32.mrb[0].mxu0
    %v2859 = vadd.f32 0.0, %v2858
    %v2860 = vpop.f32.mrb[0].mxu0
    %v2861 = vpop.f32.mrb[0].mxu0
    %v2862 = vadd.f32 0.0, %v2861
    %v2863 = vpop.f32.mrb[0].mxu0
    %2864 = vmatprep.mubr.bf16.mxu0 0
    %2865 = vmatmul.mubr.bf16.gmra.mrb[0].mxu0 %v2652
    %v2866 = vpop.f32.mrb[0].mxu0
    %v2867 = vadd.f32 0.0, %v2866
    %v2868 = vpop.f32.mrb[0].mxu0
    %v2869 = vpop.f32.mrb[0].mxu0
    %v2870 = vadd.f32 0.0, %v2869
    %v2871 = vpop.f32.mrb[0].mxu0
    %2872 = vmatprep.mubr.bf16.mxu0 0
    %2873 = vmatmul.mubr.bf16.gmra.mrb[0].mxu0 %v2655
    %v2874 = vpop.f32.mrb[0].mxu0
    %v2875 = vadd.f32 0.0, %v2874
    %v2876 = vpop.f32.mrb[0].mxu0
    %v2877 = vpop.f32.mrb[0].mxu0
    %v2878 = vadd.f32 0.0, %v2877
    %v2879 = vpop.f32.mrb[0].mxu0
    %2880 = vmatprep.mubr.bf16.mxu0 0
    %2881 = vmatmul.mubr.bf16.gmra.mrb[0].mxu0 %v2658
    %v2882 = vpop.f32.mrb[0].mxu0
    %v2883 = vadd.f32 0.0, %v2882
    %v2884 = vpop.f32.mrb[0].mxu0
    %v2885 = vpop.f32.mrb[0].mxu0
    %v2886 = vadd.f32 0.0, %v2885
    %v2887 = vpop.f32.mrb[0].mxu0
    %2888 = vmatprep.mubr.bf16.mxu0 0
    %2889 = vmatmul.mubr.bf16.gmra.mrb[0].mxu0 %v2661
    %v2890 = vpop.f32.mrb[0].mxu0
    %v2891 = vadd.f32 0.0, %v2890
    %v2892 = vpop.f32.mrb[0].mxu0
    %v2893 = vpop.f32.mrb[0].mxu0
    %v2894 = vadd.f32 0.0, %v2893
    %v2895 = vpop.f32.mrb[0].mxu0
    %2896 = vmatprep.mubr.bf16.mxu0 0
    %2897 = vmatmul.mubr.bf16.gmra.mrb[0].mxu0 %v2664
    %v2898 = vpop.f32.mrb[0].mxu0
    %v2899 = vadd.f32 0.0, %v2898
    %v2900 = vpop.f32.mrb[0].mxu0
    %v2901 = vpop.f32.mrb[0].mxu0
    %v2902 = vadd.f32 0.0, %v2901
    %v2903 = vpop.f32.mrb[0].mxu0
    %2904 = vmatprep.mubr.bf16.mxu0 0
    %2905 = vmatmul.mubr.bf16.gmra.mrb[0].mxu0 %v2667
    %v2906 = vpop.f32.mrb[0].mxu0
    %v2907 = vadd.f32 0.0, %v2906
    %v2908 = vpop.f32.mrb[0].mxu0
    %v2909 = vpop.f32.mrb[0].mxu0
    %v2910 = vadd.f32 0.0, %v2909
    %v2911 = vpop.f32.mrb[0].mxu0
    %2912 = vmatprep.mubr.bf16.mxu0 0
    %2913 = vmatmul.mubr.bf16.gmra.mrb[0].mxu0 %v2670
    %v2914 = vpop.f32.mrb[0].mxu0
    %v2915 = vadd.f32 0.0, %v2914
    %v2916 = vpop.f32.mrb[0].mxu0
    %v2917 = vpop.f32.mrb[0].mxu0
    %v2918 = vadd.f32 0.0, %v2917
    %v2919 = vpop.f32.mrb[0].mxu0
    %2920 = vmatprep.mubr.bf16.mxu0 0
    %2921 = vmatmul.mubr.bf16.gmra.mrb[0].mxu0 %v2673
    %v2922 = vpop.f32.mrb[0].mxu0
    %v2923 = vadd.f32 0.0, %v2922
    %v2924 = vpop.f32.mrb[0].mxu0
    %v2925 = vpop.f32.mrb[0].mxu0
    %v2926 = vadd.f32 0.0, %v2925
    %v2927 = vpop.f32.mrb[0].mxu0
    %2928 = vmatprep.mubr.bf16.mxu0 0
    %2929 = vmatmul.mubr.bf16.gmra.mrb[0].mxu0 %v2676
    %v2930 = vpop.f32.mrb[0].mxu0
    %v2931 = vadd.f32 0.0, %v2930
    %v2932 = vpop.f32.mrb[0].mxu0
    %v2933 = vpop.f32.mrb[0].mxu0
    %v2934 = vadd.f32 0.0, %v2933
    %v2935 = vpop.f32.mrb[0].mxu0
    %2936 = vmatprep.mubr.bf16.mxu0 0
    %2937 = vmatmul.mubr.bf16.gmra.mrb[0].mxu0 %v2679
    %v2938 = vpop.f32.mrb[0].mxu0
    %v2939 = vadd.f32 0.0, %v2938
    %v2940 = vpop.f32.mrb[0].mxu0
    %v2941 = vpop.f32.mrb[0].mxu0
    %v2942 = vadd.f32 0.0, %v2941
    %v2943 = vpop.f32.mrb[0].mxu0
    %2944 = vmatprep.mubr.bf16.mxu0 0
    %2945 = vmatmul.mubr.bf16.gmra.mrb[0].mxu0 %v2682
    %v2946 = vpop.f32.mrb[0].mxu0
    %v2947 = vadd.f32 0.0, %v2946
    %v2948 = vpop.f32.mrb[0].mxu0
    %v2949 = vpop.f32.mrb[0].mxu0
    %v2950 = vadd.f32 0.0, %v2949
    %v2951 = vpop.f32.mrb[0].mxu0
    %2952 = vmatprep.mubr.bf16.mxu0 0
    %2953 = vmatmul.mubr.bf16.gmra.mrb[0].mxu0 %v2685
    %v2954 = vpop.f32.mrb[0].mxu0
    %v2955 = vadd.f32 0.0, %v2954
    %v2956 = vpop.f32.mrb[0].mxu0
    %v2957 = vpop.f32.mrb[0].mxu0
    %v2958 = vadd.f32 0.0, %v2957
    %v2959 = vpop.f32.mrb[0].mxu0
    %2960 = vmatprep.mubr.bf16.mxu0 0
    %2961 = vmatmul.mubr.bf16.gmra.mrb[0].mxu0 %v2688
    %v2962 = vpop.f32.mrb[0].mxu0
    %v2963 = vadd.f32 0.0, %v2962
    %v2964 = vpop.f32.mrb[0].mxu0
    %v2965 = vpop.f32.mrb[0].mxu0
    %v2966 = vadd.f32 0.0, %v2965
    %v2967 = vpop.f32.mrb[0].mxu0
    %2968 = vmatprep.mubr.bf16.mxu0 0
    %2969 = vmatmul.mubr.bf16.gmra.mrb[0].mxu0 %v2691
    %v2970 = vpop.f32.mrb[0].mxu0
    %v2971 = vadd.f32 0.0, %v2970
    %v2972 = vpop.f32.mrb[0].mxu0
    %v2973 = vpop.f32.mrb[0].mxu0
    %v2974 = vadd.f32 0.0, %v2973
    %v2975 = vpop.f32.mrb[0].mxu0
    %2976 = vmatprep.mubr.bf16.mxu0 0
    %2977 = vmatmul.mubr.bf16.gmra.mrb[0].mxu0 %v2694
    %v2978 = vpop.f32.mrb[0].mxu0
    %v2979 = vadd.f32 0.0, %v2978
    %v2980 = vpop.f32.mrb[0].mxu0
    %v2981 = vpop.f32.mrb[0].mxu0
    %v2982 = vadd.f32 0.0, %v2981
    %v2983 = vpop.f32.mrb[0].mxu0
    %2984 = vmatprep.mubr.bf16.mxu0 0
    %2985 = vmatmul.mubr.bf16.gmra.mrb[0].mxu0 %v2697
    %v2986 = vpop.f32.mrb[0].mxu0
    %v2987 = vadd.f32 0.0, %v2986
    %v2988 = vpop.f32.mrb[0].mxu0
    %v2989 = vpop.f32.mrb[0].mxu0
    %v2990 = vadd.f32 0.0, %v2989
    %v2991 = vpop.f32.mrb[0].mxu0
    %2992 = vmatprep.mubr.bf16.mxu0 0
    %2993 = vmatmul.mubr.bf16.gmra.mrb[0].mxu0 %v2700
    %v2994 = vpop.f32.mrb[0].mxu0
    %v2995 = vadd.f32 0.0, %v2994
    %v2996 = vpop.f32.mrb[0].mxu0
    %v2997 = vpop.f32.mrb[0].mxu0
    %v2998 = vadd.f32 0.0, %v2997
    %v2999 = vpop.f32.mrb[0].mxu0
    %3000 = vmatprep.mubr.bf16.mxu0 0
    %3001 = vmatmul.mubr.bf16.gmra.mrb[0].mxu0 %v2703
    %v3002 = vpop.f32.mrb[0].mxu0
    %v3003 = vadd.f32 0.0, %v3002
    %v3004 = vpop.f32.mrb[0].mxu0
    %v3005 = vpop.f32.mrb[0].mxu0
    %v3006 = vadd.f32 0.0, %v3005
    %v3007 = vpop.f32.mrb[0].mxu0
    %3008 = vmatprep.mubr.bf16.mxu0 0
    %3009 = vmatmul.mubr.bf16.gmra.mrb[0].mxu0 %v2706
    %v3010 = vpop.f32.mrb[0].mxu0
    %v3011 = vadd.f32 0.0, %v3010
    %v3012 = vpop.f32.mrb[0].mxu0
    %v3013 = vpop.f32.mrb[0].mxu0
    %v3014 = vadd.f32 0.0, %v3013
    %v3015 = vpop.f32.mrb[0].mxu0
    %3016 = vmatprep.mubr.bf16.mxu0 0
    %3017 = vmatmul.mubr.bf16.gmra.mrb[0].mxu0 %v2709
    %v3018 = vpop.f32.mrb[0].mxu0
    %v3019 = vadd.f32 0.0, %v3018
    %v3020 = vpop.f32.mrb[0].mxu0
    %v3021 = vpop.f32.mrb[0].mxu0
    %v3022 = vadd.f32 0.0, %v3021
    %v3023 = vpop.f32.mrb[0].mxu0
    %3024 = vmatprep.mubr.bf16.mxu0 0
    %3025 = vmatmul.mubr.bf16.gmra.mrb[0].mxu0 %v2712
    %v3026 = vpop.f32.mrb[0].mxu0
    %v3027 = vadd.f32 0.0, %v3026
    %v3028 = vpop.f32.mrb[0].mxu0
    %v3029 = vpop.f32.mrb[0].mxu0
    %v3030 = vadd.f32 0.0, %v3029
    %v3031 = vpop.f32.mrb[0].mxu0
    %3032 = vmatprep.mubr.bf16.mxu0 0
    %3033 = vmatmul.mubr.bf16.gmra.mrb[0].mxu0 %v2715
    %v3034 = vpop.f32.mrb[0].mxu0
    %v3035 = vadd.f32 0.0, %v3034
    %v3036 = vpop.f32.mrb[0].mxu0
    %v3037 = vpop.f32.mrb[0].mxu0
    %v3038 = vadd.f32 0.0, %v3037
    %v3039 = vpop.f32.mrb[0].mxu0
    %3040 = vmatprep.mubr.bf16.mxu0 0
    %3041 = vmatmul.mubr.bf16.gmra.mrb[0].mxu0 %v2718
    %v3042 = vpop.f32.mrb[0].mxu0
    %v3043 = vadd.f32 0.0, %v3042
    %v3044 = vpop.f32.mrb[0].mxu0
    %v3045 = vpop.f32.mrb[0].mxu0
    %v3046 = vadd.f32 0.0, %v3045
    %v3047 = vpop.f32.mrb[0].mxu0
    %3048 = vmatprep.mubr.bf16.mxu0 0
    %3049 = vmatmul.mubr.bf16.gmra.mrb[0].mxu0 %v2721
    %v3050 = vpop.f32.mrb[0].mxu0
    %v3051 = vadd.f32 0.0, %v3050
    %v3052 = vpop.f32.mrb[0].mxu0
    %v3053 = vpop.f32.mrb[0].mxu0
    %v3054 = vadd.f32 0.0, %v3053
    %v3055 = vpop.f32.mrb[0].mxu0
    %3056 = vmatprep.mubr.bf16.mxu0 0
    %3057 = vmatmul.mubr.bf16.gmra.mrb[0].mxu0 %v2724
    %v3058 = vpop.f32.mrb[0].mxu0
    %v3059 = vadd.f32 0.0, %v3058
    %v3060 = vpop.f32.mrb[0].mxu0
    %v3061 = vpop.f32.mrb[0].mxu0
    %v3062 = vadd.f32 0.0, %v3061
    %v3063 = vpop.f32.mrb[0].mxu0
    %3064 = vmatprep.mubr.bf16.mxu0 0
    %3065 = vmatmul.mubr.bf16.gmra.mrb[0].mxu0 %v2727
    %v3066 = vpop.f32.mrb[0].mxu0
    %v3067 = vadd.f32 0.0, %v3066
    %v3068 = vpop.f32.mrb[0].mxu0
    %v3069 = vpop.f32.mrb[0].mxu0
    %v3070 = vadd.f32 0.0, %v3069
    %v3071 = vpop.f32.mrb[0].mxu0
    %3072 = vmatprep.mubr.bf16.mxu0 0
    %3073 = vmatmul.mubr.bf16.gmra.mrb[0].mxu0 %v2730
    %v3074 = vpop.f32.mrb[0].mxu0
    %v3075 = vadd.f32 0.0, %v3074
    %v3076 = vpop.f32.mrb[0].mxu0
    %v3077 = vpop.f32.mrb[0].mxu0
    %v3078 = vadd.f32 0.0, %v3077
    %v3079 = vpop.f32.mrb[0].mxu0
    %3080 = vmatprep.mubr.bf16.mxu0 0
    %3081 = vmatmul.mubr.bf16.gmra.mrb[0].mxu0 %v2733
    %v3082 = vpop.f32.mrb[0].mxu0
    %v3083 = vadd.f32 0.0, %v3082
    %v3084 = vpop.f32.mrb[0].mxu0
    %v3085 = vpop.f32.mrb[0].mxu0
    %v3086 = vadd.f32 0.0, %v3085
    %v3087 = vpop.f32.mrb[0].mxu0
    %3088 = vmatprep.mubr.bf16.mxu0 0
    %3089 = vmatmul.mubr.bf16.gmra.mrb[0].mxu0 %v2736
    %v3090 = vpop.f32.mrb[0].mxu0
    %v3091 = vadd.f32 0.0, %v3090
    %v3092 = vpop.f32.mrb[0].mxu0
    %v3093 = vpop.f32.mrb[0].mxu0
    %v3094 = vadd.f32 0.0, %v3093
    %v3095 = vpop.f32.mrb[0].mxu0
    %3096 = vmatprep.mubr.bf16.mxu0 0
    %3097 = vmatmul.mubr.bf16.gmra.mrb[0].mxu0 %v2739
    %v3098 = vpop.f32.mrb[0].mxu0
    %v3099 = vadd.f32 0.0, %v3098
    %v3100 = vpop.f32.mrb[0].mxu0
    %v3101 = vpop.f32.mrb[0].mxu0
    %v3102 = vadd.f32 0.0, %v3101
    %v3103 = vpop.f32.mrb[0].mxu0
    %3104 = vdwg.mxu0
    %v3105 = vld [vmem:[#allocation2] sm:$0xff]
    %v3106 = vld [vmem:[#allocation2 + $0x8] sm:$0xff]
    %v3107 = vld [vmem:[#allocation2 + $0x10] sm:$0xff]
    %v3108 = vld [vmem:[#allocation2 + $0x18] sm:$0xff]
    %v3109 = vld [vmem:[#allocation2 + $0x20] sm:$0xff]
    %v3110 = vld [vmem:[#allocation2 + $0x28] sm:$0xff]
    %v3111 = vld [vmem:[#allocation2 + $0x30] sm:$0xff]
    %v3112 = vld [vmem:[#allocation2 + $0x38] sm:$0xff]
    %v3113 = vld [vmem:[#allocation2 + $0x40] sm:$0xff]
    %v3114 = vld [vmem:[#allocation2 + $0x48] sm:$0xff]
    %v3115 = vld [vmem:[#allocation2 + $0x50] sm:$0xff]
    %v3116 = vld [vmem:[#allocation2 + $0x58] sm:$0xff]
    %v3117 = vld [vmem:[#allocation2 + $0x60] sm:$0xff]
    %v3118 = vld [vmem:[#allocation2 + $0x68] sm:$0xff]
    %v3119 = vld [vmem:[#allocation2 + $0x70] sm:$0xff]
    %v3120 = vld [vmem:[#allocation2 + $0x78] sm:$0xff]
    %v3121 = vld [vmem:[#allocation2 + $0x80] sm:$0xff]
    %v3122 = vld [vmem:[#allocation2 + $0x88] sm:$0xff]
    %v3123 = vld [vmem:[#allocation2 + $0x90] sm:$0xff]
    %v3124 = vld [vmem:[#allocation2 + $0x98] sm:$0xff]
    %v3125 = vld [vmem:[#allocation2 + $0xa0] sm:$0xff]
    %v3126 = vld [vmem:[#allocation2 + $0xa8] sm:$0xff]
    %v3127 = vld [vmem:[#allocation2 + $0xb0] sm:$0xff]
    %v3128 = vld [vmem:[#allocation2 + $0xb8] sm:$0xff]
    %v3129 = vld [vmem:[#allocation2 + $0xc0] sm:$0xff]
    %v3130 = vld [vmem:[#allocation2 + $0xc8] sm:$0xff]
    %v3131 = vld [vmem:[#allocation2 + $0xd0] sm:$0xff]
    %v3132 = vld [vmem:[#allocation2 + $0xd8] sm:$0xff]
    %v3133 = vld [vmem:[#allocation2 + $0xe0] sm:$0xff]
    %v3134 = vld [vmem:[#allocation2 + $0xe8] sm:$0xff]
    %v3135 = vld [vmem:[#allocation2 + $0xf0] sm:$0xff]
    %v3136 = vld [vmem:[#allocation2 + $0xf8] sm:$0xff]
    %v3137 = vld [vmem:[#allocation2 + $0x100] sm:$0xff]
    %v3138 = vld [vmem:[#allocation2 + $0x108] sm:$0xff]
    %v3139 = vld [vmem:[#allocation2 + $0x110] sm:$0xff]
    %v3140 = vld [vmem:[#allocation2 + $0x118] sm:$0xff]
    %v3141 = vld [vmem:[#allocation2 + $0x120] sm:$0xff]
    %v3142 = vld [vmem:[#allocation2 + $0x128] sm:$0xff]
    %v3143 = vld [vmem:[#allocation2 + $0x130] sm:$0xff]
    %v3144 = vld [vmem:[#allocation2 + $0x138] sm:$0xff]
    %v3145 = vld [vmem:[#allocation2 + $0x140] sm:$0xff]
    %v3146 = vld [vmem:[#allocation2 + $0x148] sm:$0xff]
    %v3147 = vld [vmem:[#allocation2 + $0x150] sm:$0xff]
    %v3148 = vld [vmem:[#allocation2 + $0x158] sm:$0xff]
    %v3149 = vld [vmem:[#allocation2 + $0x160] sm:$0xff]
    %v3150 = vld [vmem:[#allocation2 + $0x168] sm:$0xff]
    %v3151 = vld [vmem:[#allocation2 + $0x170] sm:$0xff]
    %v3152 = vld [vmem:[#allocation2 + $0x178] sm:$0xff]
    %v3153 = vld [vmem:[#allocation2 + $0x180] sm:$0xff]
    %v3154 = vld [vmem:[#allocation2 + $0x188] sm:$0xff]
    %v3155 = vld [vmem:[#allocation2 + $0x190] sm:$0xff]
    %v3156 = vld [vmem:[#allocation2 + $0x198] sm:$0xff]
    %v3157 = vld [vmem:[#allocation2 + $0x1a0] sm:$0xff]
    %v3158 = vld [vmem:[#allocation2 + $0x1a8] sm:$0xff]
    %v3159 = vld [vmem:[#allocation2 + $0x1b0] sm:$0xff]
    %v3160 = vld [vmem:[#allocation2 + $0x1b8] sm:$0xff]
    %v3161 = vld [vmem:[#allocation2 + $0x1c0] sm:$0xff]
    %v3162 = vld [vmem:[#allocation2 + $0x1c8] sm:$0xff]
    %v3163 = vld [vmem:[#allocation2 + $0x1d0] sm:$0xff]
    %v3164 = vld [vmem:[#allocation2 + $0x1d8] sm:$0xff]
    %v3165 = vld [vmem:[#allocation2 + $0x1e0] sm:$0xff]
    %v3166 = vld [vmem:[#allocation2 + $0x1e8] sm:$0xff]
    %v3167 = vld [vmem:[#allocation2 + $0x1f0] sm:$0xff]
    %v3168 = vld [vmem:[#allocation2 + $0x1f8] sm:$0xff]
    %v3169 = vld [vmem:[#allocation2 + $0x200] sm:$0xff]
    %v3170 = vld [vmem:[#allocation2 + $0x208] sm:$0xff]
    %v3171 = vld [vmem:[#allocation2 + $0x210] sm:$0xff]
    %v3172 = vld [vmem:[#allocation2 + $0x218] sm:$0xff]
    %v3173 = vld [vmem:[#allocation2 + $0x220] sm:$0xff]
    %v3174 = vld [vmem:[#allocation2 + $0x228] sm:$0xff]
    %v3175 = vld [vmem:[#allocation2 + $0x230] sm:$0xff]
    %v3176 = vld [vmem:[#allocation2 + $0x238] sm:$0xff]
    %v3177 = vld [vmem:[#allocation2 + $0x240] sm:$0xff]
    %v3178 = vld [vmem:[#allocation2 + $0x248] sm:$0xff]
    %v3179 = vld [vmem:[#allocation2 + $0x250] sm:$0xff]
    %v3180 = vld [vmem:[#allocation2 + $0x258] sm:$0xff]
    %v3181 = vld [vmem:[#allocation2 + $0x260] sm:$0xff]
    %v3182 = vld [vmem:[#allocation2 + $0x268] sm:$0xff]
    %v3183 = vld [vmem:[#allocation2 + $0x270] sm:$0xff]
    %v3184 = vld [vmem:[#allocation2 + $0x278] sm:$0xff]
    %v3185 = vld [vmem:[#allocation2 + $0x280] sm:$0xff]
    %v3186 = vld [vmem:[#allocation2 + $0x288] sm:$0xff]
    %v3187 = vadd.f32 %v3105, %v2779
    %v3188 = vadd.f32 %v3106, %v2782
    %v3189 = vadd.f32 %v3107, %v2787
    %v3190 = vadd.f32 %v3108, %v2790
    %v3191 = vadd.f32 %v3109, %v2795
    %v3192 = vadd.f32 %v3110, %v2798
    %v3193 = vadd.f32 %v3111, %v2803
    %v3194 = vadd.f32 %v3112, %v2806
    %v3195 = vadd.f32 %v3113, %v2811
    %v3196 = vadd.f32 %v3114, %v2814
    %v3197 = vadd.f32 %v3115, %v2819
    %v3198 = vadd.f32 %v3116, %v2822
    %v3199 = vadd.f32 %v3117, %v2827
    %v3200 = vadd.f32 %v3118, %v2830
    %v3201 = vadd.f32 %v3119, %v2835
    %v3202 = vadd.f32 %v3120, %v2838
    %v3203 = vadd.f32 %v3121, %v2843
    %v3204 = vadd.f32 %v3122, %v2846
    %v3205 = vadd.f32 %v3123, %v2851
    %v3206 = vadd.f32 %v3124, %v2854
    %v3207 = vadd.f32 %v3125, %v2859
    %v3208 = vadd.f32 %v3126, %v2862
    %v3209 = vadd.f32 %v3127, %v2867
    %v3210 = vadd.f32 %v3128, %v2870
    %v3211 = vadd.f32 %v3129, %v2875
    %v3212 = vadd.f32 %v3130, %v2878
    %v3213 = vadd.f32 %v3131, %v2883
    %v3214 = vadd.f32 %v3132, %v2886
    %v3215 = vadd.f32 %v3133, %v2891
    %v3216 = vadd.f32 %v3134, %v2894
    %v3217 = vadd.f32 %v3135, %v2899
    %v3218 = vadd.f32 %v3136, %v2902
    %v3219 = vadd.f32 %v3137, %v2907
    %v3220 = vadd.f32 %v3138, %v2910
    %v3221 = vadd.f32 %v3139, %v2915
    %v3222 = vadd.f32 %v3140, %v2918
    %v3223 = vadd.f32 %v3141, %v2923
    %v3224 = vadd.f32 %v3142, %v2926
    %v3225 = vadd.f32 %v3143, %v2931
    %v3226 = vadd.f32 %v3144, %v2934
    %v3227 = vadd.f32 %v3145, %v2939
    %v3228 = vadd.f32 %v3146, %v2942
    %v3229 = vadd.f32 %v3147, %v2947
    %v3230 = vadd.f32 %v3148, %v2950
    %v3231 = vadd.f32 %v3149, %v2955
    %v3232 = vadd.f32 %v3150, %v2958
    %v3233 = vadd.f32 %v3151, %v2963
    %v3234 = vadd.f32 %v3152, %v2966
    %v3235 = vadd.f32 %v3153, %v2971
    %v3236 = vadd.f32 %v3154, %v2974
    %v3237 = vadd.f32 %v3155, %v2979
    %v3238 = vadd.f32 %v3156, %v2982
    %v3239 = vadd.f32 %v3157, %v2987
    %v3240 = vadd.f32 %v3158, %v2990
    %v3241 = vadd.f32 %v3159, %v2995
    %v3242 = vadd.f32 %v3160, %v2998
    %v3243 = vadd.f32 %v3161, %v3003
    %v3244 = vadd.f32 %v3162, %v3006
    %v3245 = vadd.f32 %v3163, %v3011
    %v3246 = vadd.f32 %v3164, %v3014
    %v3247 = vadd.f32 %v3165, %v3019
    %v3248 = vadd.f32 %v3166, %v3022
    %v3249 = vadd.f32 %v3167, %v3027
    %v3250 = vadd.f32 %v3168, %v3030
    %v3251 = vadd.f32 %v3169, %v3035
    %v3252 = vadd.f32 %v3170, %v3038
    %v3253 = vadd.f32 %v3171, %v3043
    %v3254 = vadd.f32 %v3172, %v3046
    %v3255 = vadd.f32 %v3173, %v3051
    %v3256 = vadd.f32 %v3174, %v3054
    %v3257 = vadd.f32 %v3175, %v3059
    %v3258 = vadd.f32 %v3176, %v3062
    %v3259 = vadd.f32 %v3177, %v3067
    %v3260 = vadd.f32 %v3178, %v3070
    %v3261 = vadd.f32 %v3179, %v3075
    %v3262 = vadd.f32 %v3180, %v3078
    %v3263 = vadd.f32 %v3181, %v3083
    %v3264 = vadd.f32 %v3182, %v3086
    %v3265 = vadd.f32 %v3183, %v3091
    %v3266 = vadd.f32 %v3184, %v3094
    %v3267 = vadd.f32 %v3185, %v3099
    %v3268 = vadd.f32 %v3186, %v3102
    %3269 = vst [vmem:[#allocation2] sm:$0xff] %v3187
    %3270 = vst [vmem:[#allocation2 + $0x8] sm:$0xff] %v3188
    %3271 = vst [vmem:[#allocation2 + $0x10] sm:$0xff] %v3189
    %3272 = vst [vmem:[#allocation2 + $0x18] sm:$0xff] %v3190
    %3273 = vst [vmem:[#allocation2 + $0x20] sm:$0xff] %v3191
    %3274 = vst [vmem:[#allocation2 + $0x28] sm:$0xff] %v3192
    %3275 = vst [vmem:[#allocation2 + $0x30] sm:$0xff] %v3193
    %3276 = vst [vmem:[#allocation2 + $0x38] sm:$0xff] %v3194
    %3277 = vst [vmem:[#allocation2 + $0x40] sm:$0xff] %v3195
    %3278 = vst [vmem:[#allocation2 + $0x48] sm:$0xff] %v3196
    %3279 = vst [vmem:[#allocation2 + $0x50] sm:$0xff] %v3197
    %3280 = vst [vmem:[#allocation2 + $0x58] sm:$0xff] %v3198
    %3281 = vst [vmem:[#allocation2 + $0x60] sm:$0xff] %v3199
    %3282 = vst [vmem:[#allocation2 + $0x68] sm:$0xff] %v3200
    %3283 = vst [vmem:[#allocation2 + $0x70] sm:$0xff] %v3201
    %3284 = vst [vmem:[#allocation2 + $0x78] sm:$0xff] %v3202
    %3285 = vst [vmem:[#allocation2 + $0x80] sm:$0xff] %v3203
    %3286 = vst [vmem:[#allocation2 + $0x88] sm:$0xff] %v3204
    %3287 = vst [vmem:[#allocation2 + $0x90] sm:$0xff] %v3205
    %3288 = vst [vmem:[#allocation2 + $0x98] sm:$0xff] %v3206
    %3289 = vst [vmem:[#allocation2 + $0xa0] sm:$0xff] %v3207
    %3290 = vst [vmem:[#allocation2 + $0xa8] sm:$0xff] %v3208
    %3291 = vst [vmem:[#allocation2 + $0xb0] sm:$0xff] %v3209
    %3292 = vst [vmem:[#allocation2 + $0xb8] sm:$0xff] %v3210
    %3293 = vst [vmem:[#allocation2 + $0xc0] sm:$0xff] %v3211
    %3294 = vst [vmem:[#allocation2 + $0xc8] sm:$0xff] %v3212
    %3295 = vst [vmem:[#allocation2 + $0xd0] sm:$0xff] %v3213
    %3296 = vst [vmem:[#allocation2 + $0xd8] sm:$0xff] %v3214
    %3297 = vst [vmem:[#allocation2 + $0xe0] sm:$0xff] %v3215
    %3298 = vst [vmem:[#allocation2 + $0xe8] sm:$0xff] %v3216
    %3299 = vst [vmem:[#allocation2 + $0xf0] sm:$0xff] %v3217
    %3300 = vst [vmem:[#allocation2 + $0xf8] sm:$0xff] %v3218
    %3301 = vst [vmem:[#allocation2 + $0x100] sm:$0xff] %v3219
    %3302 = vst [vmem:[#allocation2 + $0x108] sm:$0xff] %v3220
    %3303 = vst [vmem:[#allocation2 + $0x110] sm:$0xff] %v3221
    %3304 = vst [vmem:[#allocation2 + $0x118] sm:$0xff] %v3222
    %3305 = vst [vmem:[#allocation2 + $0x120] sm:$0xff] %v3223
    %3306 = vst [vmem:[#allocation2 + $0x128] sm:$0xff] %v3224
    %3307 = vst [vmem:[#allocation2 + $0x130] sm:$0xff] %v3225
    %3308 = vst [vmem:[#allocation2 + $0x138] sm:$0xff] %v3226
    %3309 = vst [vmem:[#allocation2 + $0x140] sm:$0xff] %v3227
    %3310 = vst [vmem:[#allocation2 + $0x148] sm:$0xff] %v3228
    %3311 = vst [vmem:[#allocation2 + $0x150] sm:$0xff] %v3229
    %3312 = vst [vmem:[#allocation2 + $0x158] sm:$0xff] %v3230
    %3313 = vst [vmem:[#allocation2 + $0x160] sm:$0xff] %v3231
    %3314 = vst [vmem:[#allocation2 + $0x168] sm:$0xff] %v3232
    %3315 = vst [vmem:[#allocation2 + $0x170] sm:$0xff] %v3233
    %3316 = vst [vmem:[#allocation2 + $0x178] sm:$0xff] %v3234
    %3317 = vst [vmem:[#allocation2 + $0x180] sm:$0xff] %v3235
    %3318 = vst [vmem:[#allocation2 + $0x188] sm:$0xff] %v3236
    %3319 = vst [vmem:[#allocation2 + $0x190] sm:$0xff] %v3237
    %3320 = vst [vmem:[#allocation2 + $0x198] sm:$0xff] %v3238
    %3321 = vst [vmem:[#allocation2 + $0x1a0] sm:$0xff] %v3239
    %3322 = vst [vmem:[#allocation2 + $0x1a8] sm:$0xff] %v3240
    %3323 = vst [vmem:[#allocation2 + $0x1b0] sm:$0xff] %v3241
    %3324 = vst [vmem:[#allocation2 + $0x1b8] sm:$0xff] %v3242
    %3325 = vst [vmem:[#allocation2 + $0x1c0] sm:$0xff] %v3243
    %3326 = vst [vmem:[#allocation2 + $0x1c8] sm:$0xff] %v3244
    %3327 = vst [vmem:[#allocation2 + $0x1d0] sm:$0xff] %v3245
    %3328 = vst [vmem:[#allocation2 + $0x1d8] sm:$0xff] %v3246
    %3329 = vst [vmem:[#allocation2 + $0x1e0] sm:$0xff] %v3247
    %3330 = vst [vmem:[#allocation2 + $0x1e8] sm:$0xff] %v3248
    %3331 = vst [vmem:[#allocation2 + $0x1f0] sm:$0xff] %v3249
    %3332 = vst [vmem:[#allocation2 + $0x1f8] sm:$0xff] %v3250
    %3333 = vst [vmem:[#allocation2 + $0x200] sm:$0xff] %v3251
    %3334 = vst [vmem:[#allocation2 + $0x208] sm:$0xff] %v3252
    %3335 = vst [vmem:[#allocation2 + $0x210] sm:$0xff] %v3253
    %3336 = vst [vmem:[#allocation2 + $0x218] sm:$0xff] %v3254
    %3337 = vst [vmem:[#allocation2 + $0x220] sm:$0xff] %v3255
    %3338 = vst [vmem:[#allocation2 + $0x228] sm:$0xff] %v3256
    %3339 = vst [vmem:[#allocation2 + $0x230] sm:$0xff] %v3257
    %3340 = vst [vmem:[#allocation2 + $0x238] sm:$0xff] %v3258
    %3341 = vst [vmem:[#allocation2 + $0x240] sm:$0xff] %v3259
    %3342 = vst [vmem:[#allocation2 + $0x248] sm:$0xff] %v3260
    %3343 = vst [vmem:[#allocation2 + $0x250] sm:$0xff] %v3261
    %3344 = vst [vmem:[#allocation2 + $0x258] sm:$0xff] %v3262
    %3345 = vst [vmem:[#allocation2 + $0x260] sm:$0xff] %v3263
    %3346 = vst [vmem:[#allocation2 + $0x268] sm:$0xff] %v3264
    %3347 = vst [vmem:[#allocation2 + $0x270] sm:$0xff] %v3265
    %3348 = vst [vmem:[#allocation2 + $0x278] sm:$0xff] %v3266
    %3349 = vst [vmem:[#allocation2 + $0x280] sm:$0xff] %v3267
    %3350 = vst [vmem:[#allocation2 + $0x288] sm:$0xff] %v3268
    %v3351 = vld [vmem:[%s0 + $0x8] sm:$0xe]
    %v3352 = vld [vmem:[%s0 + $0xc] sm:$0xf]
    %v3353 = vld [vmem:[%s0 + $0x10] sm:$0xf]
    %v3354 = vld [vmem:[%s0 + $0x14] sm:$0xf]
    %v3355 = vld [vmem:[%s0 + $0x18] sm:$0xf]
    %v3356 = vld [vmem:[%s0 + $0x1c] sm:$0xf]
    %v3357 = vld [vmem:[%s0 + $0x20] sm:$0xf]
    %v3358 = vld [vmem:[%s0 + $0x24] sm:$0xf]
    %v3359 = vld [vmem:[%s0 + $0x28] sm:$0xf]
    %v3360 = vld [vmem:[%s0 + $0x2c] sm:$0xf]
    %v3361 = vld [vmem:[%s0 + $0x30] sm:$0xf]
    %v3362 = vld [vmem:[%s0 + $0x34] sm:$0xf]
    %v3363 = vld [vmem:[%s0 + $0x38] sm:$0xf]
    %v3364 = vld [vmem:[%s0 + $0x3c] sm:$0xf]
    %v3365 = vld [vmem:[%s0 + $0x40] sm:$0xf]
    %v3366 = vld [vmem:[%s0 + $0x44] sm:$0xf]
    %v3367 = vld [vmem:[%s0 + $0x48] sm:$0xf]
    %v3368 = vld [vmem:[%s0 + $0x4c] sm:$0xf]
    %v3369 = vld [vmem:[%s0 + $0x50] sm:$0xf]
    %v3370 = vld [vmem:[%s0 + $0x54] sm:$0xf]
    %v3371 = vld [vmem:[%s0 + $0x58] sm:$0xf]
    %v3372 = vld [vmem:[%s0 + $0x5c] sm:$0xf]
    %v3373 = vld [vmem:[%s0 + $0x60] sm:$0xf]
    %v3374 = vld [vmem:[%s0 + $0x64] sm:$0xf]
    %v3375 = vld [vmem:[%s0 + $0x68] sm:$0xf]
    %v3376 = vld [vmem:[%s0 + $0x6c] sm:$0xf]
    %v3377 = vld [vmem:[%s0 + $0x70] sm:$0xf]
    %v3378 = vld [vmem:[%s0 + $0x74] sm:$0xf]
    %v3379 = vld [vmem:[%s0 + $0x78] sm:$0xf]
    %v3380 = vld [vmem:[%s0 + $0x7c] sm:$0xf]
    %v3381 = vld [vmem:[%s0 + $0x80] sm:$0xf]
    %v3382 = vld [vmem:[%s0 + $0x84] sm:$0xf]
    %v3383 = vld [vmem:[%s0 + $0x88] sm:$0xf]
    %v3384 = vld [vmem:[%s0 + $0x8c] sm:$0xf]
    %v3385 = vld [vmem:[%s0 + $0x90] sm:$0xf]
    %v3386 = vld [vmem:[%s0 + $0x94] sm:$0xf]
    %v3387 = vld [vmem:[%s0 + $0x98] sm:$0xf]
    %v3388 = vld [vmem:[%s0 + $0x9c] sm:$0xf]
    %v3389 = vld [vmem:[%s0 + $0xa0] sm:$0xf]
    %v3390 = vld [vmem:[%s0 + $0xa4] sm:$0xf]
    %v3391 = vld [vmem:[%s0 + $0xa8] sm:$0xf]
    %v3392 = vld [vmem:[%s0 + $0xac] sm:$0xf]
    %v3393 = vld [vmem:[%s0 + $0xb0] sm:$0xf]
    %v3394 = vld [vmem:[%s0 + $0xb4] sm:$0xf]
    %v3395 = vld [vmem:[%s0 + $0xb8] sm:$0xf]
    %v3396 = vld [vmem:[%s0 + $0xbc] sm:$0xf]
    %v3397 = vld [vmem:[%s0 + $0xc0] sm:$0xf]
    %v3398 = vld [vmem:[%s0 + $0xc4] sm:$0xf]
    %v3399 = vld [vmem:[%s0 + $0xc8] sm:$0xf]
    %v3400 = vld [vmem:[%s0 + $0xcc] sm:$0xf]
    %v3401 = vld [vmem:[%s0 + $0xd0] sm:$0xf]
    %v3402 = vld [vmem:[%s0 + $0xd4] sm:$0xf]
    %v3403 = vld [vmem:[%s0 + $0xd8] sm:$0xf]
    %v3404 = vld [vmem:[%s0 + $0xdc] sm:$0xf]
    %v3405 = vld [vmem:[%s0 + $0xe0] sm:$0xf]
    %v3406 = vld [vmem:[%s0 + $0xe4] sm:$0xf]
    %v3407 = vld [vmem:[%s0 + $0xe8] sm:$0xf]
    %v3408 = vld [vmem:[%s0 + $0xec] sm:$0xf]
    %v3409 = vld [vmem:[%s0 + $0xf0] sm:$0xf]
    %v3410 = vld [vmem:[%s0 + $0xf4] sm:$0xf]
    %v3411 = vld [vmem:[%s0 + $0xf8] sm:$0xf]
    %v3412 = vld [vmem:[%s0 + $0xfc] sm:$0xf]
    %v3413 = vld [vmem:[%s0 + $0x100] sm:$0xf]
    %v3414 = vld [vmem:[%s0 + $0x104] sm:$0xf]
    %v3415 = vld [vmem:[%s0 + $0x108] sm:$0xf]
    %v3416 = vld [vmem:[%s0 + $0x10c] sm:$0xf]
    %v3417 = vld [vmem:[%s0 + $0x110] sm:$0xf]
    %v3418 = vld [vmem:[%s0 + $0x114] sm:$0xf]
    %v3419 = vld [vmem:[%s0 + $0x118] sm:$0xf]
    %v3420 = vld [vmem:[%s0 + $0x11c] sm:$0xf]
    %v3421 = vld [vmem:[%s0 + $0x120] sm:$0xf]
    %v3422 = vld [vmem:[%s0 + $0x124] sm:$0xf]
    %v3423 = vld [vmem:[%s0 + $0x128] sm:$0xf]
    %v3424 = vld [vmem:[%s0 + $0x12c] sm:$0xf]
    %v3425 = vld [vmem:[%s0 + $0x130] sm:$0xf]
    %v3426 = vld [vmem:[%s0 + $0x134] sm:$0xf]
    %v3427 = vld [vmem:[%s0 + $0x138] sm:$0xf]
    %v3428 = vld [vmem:[%s0 + $0x13c] sm:$0xf]
    %v3429 = vld [vmem:[%s0 + $0x140] sm:$0xf]
    %v3430 = vld [vmem:[%s0 + $0x144] sm:$0xf]
    %v3431 = vld [vmem:[%s0 + $0x148] sm:$0xf]
    %v3432 = vld [vmem:[%s0 + $0x14c] sm:$0xf]
    %v3433 = vld [vmem:[%s0 + $0x150] sm:$0x1]
    %v3434 = vld [vmem:[%s1 + $0xc] sm:$0xf]
    %v3518 = vunpack.c.l.b16 %v3351
    %v3519 = vunpack.c.l.b16 %v3352
    %v3520 = vunpack.c.l.b16 %v3353
    %v3521 = vunpack.c.l.b16 %v3354
    %v3522 = vunpack.c.l.b16 %v3355
    %v3523 = vunpack.c.l.b16 %v3356
    %v3524 = vunpack.c.l.b16 %v3357
    %v3525 = vunpack.c.l.b16 %v3358
    %v3526 = vunpack.c.l.b16 %v3359
    %v3527 = vunpack.c.l.b16 %v3360
    %v3528 = vunpack.c.l.b16 %v3361
    %v3529 = vunpack.c.l.b16 %v3362
    %v3530 = vunpack.c.l.b16 %v3363
    %v3531 = vunpack.c.l.b16 %v3364
    %v3532 = vunpack.c.l.b16 %v3365
    %v3533 = vunpack.c.l.b16 %v3366
    %v3534 = vunpack.c.l.b16 %v3367
    %v3535 = vunpack.c.l.b16 %v3368
    %v3536 = vunpack.c.l.b16 %v3369
    %v3537 = vunpack.c.l.b16 %v3370
    %v3538 = vunpack.c.l.b16 %v3371
    %v3539 = vunpack.c.l.b16 %v3372
    %v3540 = vunpack.c.l.b16 %v3373
    %v3541 = vunpack.c.l.b16 %v3374
    %v3542 = vunpack.c.l.b16 %v3375
    %v3543 = vunpack.c.l.b16 %v3376
    %v3544 = vunpack.c.l.b16 %v3377
    %v3545 = vunpack.c.l.b16 %v3378
    %v3546 = vunpack.c.l.b16 %v3379
    %v3547 = vunpack.c.l.b16 %v3380
    %v3548 = vunpack.c.l.b16 %v3381
    %v3549 = vunpack.c.l.b16 %v3382
    %v3550 = vunpack.c.l.b16 %v3383
    %v3551 = vunpack.c.l.b16 %v3384
    %v3552 = vunpack.c.l.b16 %v3385
    %v3553 = vunpack.c.l.b16 %v3386
    %v3554 = vunpack.c.l.b16 %v3387
    %v3555 = vunpack.c.l.b16 %v3388
    %v3556 = vunpack.c.l.b16 %v3389
    %v3557 = vunpack.c.l.b16 %v3390
    %v3558 = vunpack.c.l.b16 %v3391
    %v3559 = vunpack.c.l.b16 %v3392
    %v3560 = vunpack.c.l.b16 %v3393
    %v3561 = vunpack.c.l.b16 %v3394
    %v3562 = vunpack.c.l.b16 %v3395
    %v3563 = vunpack.c.l.b16 %v3396
    %v3564 = vunpack.c.l.b16 %v3397
    %v3565 = vunpack.c.l.b16 %v3398
    %v3566 = vunpack.c.l.b16 %v3399
    %v3567 = vunpack.c.l.b16 %v3400
    %v3568 = vunpack.c.l.b16 %v3401
    %v3569 = vunpack.c.l.b16 %v3402
    %v3570 = vunpack.c.l.b16 %v3403
    %v3571 = vunpack.c.l.b16 %v3404
    %v3572 = vunpack.c.l.b16 %v3405
    %v3573 = vunpack.c.l.b16 %v3406
    %v3574 = vunpack.c.l.b16 %v3407
    %v3575 = vunpack.c.l.b16 %v3408
    %v3576 = vunpack.c.l.b16 %v3409
    %v3577 = vunpack.c.l.b16 %v3410
    %v3578 = vunpack.c.l.b16 %v3411
    %v3579 = vunpack.c.l.b16 %v3412
    %v3580 = vunpack.c.l.b16 %v3413
    %v3581 = vunpack.c.l.b16 %v3414
    %v3582 = vunpack.c.l.b16 %v3415
    %v3583 = vunpack.c.l.b16 %v3416
    %v3584 = vunpack.c.l.b16 %v3417
    %v3585 = vunpack.c.l.b16 %v3418
    %v3586 = vunpack.c.l.b16 %v3419
    %v3587 = vunpack.c.l.b16 %v3420
    %v3588 = vunpack.c.l.b16 %v3421
    %v3589 = vunpack.c.l.b16 %v3422
    %v3590 = vunpack.c.l.b16 %v3423
    %v3591 = vunpack.c.l.b16 %v3424
    %v3592 = vunpack.c.l.b16 %v3425
    %v3593 = vunpack.c.l.b16 %v3426
    %v3594 = vunpack.c.l.b16 %v3427
    %v3595 = vunpack.c.l.b16 %v3428
    %v3596 = vunpack.c.l.b16 %v3429
    %v3597 = vunpack.c.l.b16 %v3430
    %v3598 = vunpack.c.l.b16 %v3431
    %v3599 = vunpack.c.l.b16 %v3432
    %v3600 = vunpack.c.l.b16 %v3433
    %v3601 = vpack.c.b16 %v3519, %v3518
    %v3602 = vpack.c.b16 %v3521, %v3520
    %v3603 = vpack.c.b16 %v3523, %v3522
    %v3604 = vpack.c.b16 %v3525, %v3524
    %v3605 = vpack.c.b16 %v3527, %v3526
    %v3606 = vpack.c.b16 %v3529, %v3528
    %v3607 = vpack.c.b16 %v3531, %v3530
    %v3608 = vpack.c.b16 %v3533, %v3532
    %v3609 = vpack.c.b16 %v3535, %v3534
    %v3610 = vpack.c.b16 %v3537, %v3536
    %v3611 = vpack.c.b16 %v3539, %v3538
    %v3612 = vpack.c.b16 %v3541, %v3540
    %v3613 = vpack.c.b16 %v3543, %v3542
    %v3614 = vpack.c.b16 %v3545, %v3544
    %v3615 = vpack.c.b16 %v3547, %v3546
    %v3616 = vpack.c.b16 %v3549, %v3548
    %v3617 = vpack.c.b16 %v3551, %v3550
    %v3618 = vpack.c.b16 %v3553, %v3552
    %v3619 = vpack.c.b16 %v3555, %v3554
    %v3620 = vpack.c.b16 %v3557, %v3556
    %v3621 = vpack.c.b16 %v3559, %v3558
    %v3622 = vpack.c.b16 %v3561, %v3560
    %v3623 = vpack.c.b16 %v3563, %v3562
    %v3624 = vpack.c.b16 %v3565, %v3564
    %v3625 = vpack.c.b16 %v3567, %v3566
    %v3626 = vpack.c.b16 %v3569, %v3568
    %v3627 = vpack.c.b16 %v3571, %v3570
    %v3628 = vpack.c.b16 %v3573, %v3572
    %v3629 = vpack.c.b16 %v3575, %v3574
    %v3630 = vpack.c.b16 %v3577, %v3576
    %v3631 = vpack.c.b16 %v3579, %v3578
    %v3632 = vpack.c.b16 %v3581, %v3580
    %v3633 = vpack.c.b16 %v3583, %v3582
    %v3634 = vpack.c.b16 %v3585, %v3584
    %v3635 = vpack.c.b16 %v3587, %v3586
    %v3636 = vpack.c.b16 %v3589, %v3588
    %v3637 = vpack.c.b16 %v3591, %v3590
    %v3638 = vpack.c.b16 %v3593, %v3592
    %v3639 = vpack.c.b16 %v3595, %v3594
    %v3640 = vpack.c.b16 %v3597, %v3596
    %v3641 = vpack.c.b16 %v3599, %v3598
    %v3642 = vpack.c.b16 %v3600, %v3600
    %v3643 = vrot.slane %v3601, 1
    %v3644 = vrot.slane %v3602, 1
    %v3645 = vsel %vm2534, %v3643, %v3644
    %v3646 = vrot.slane %v3603, 1
    %v3647 = vsel %vm2534, %v3644, %v3646
    %v3648 = vrot.slane %v3604, 1
    %v3649 = vsel %vm2534, %v3646, %v3648
    %v3650 = vrot.slane %v3605, 1
    %v3651 = vsel %vm2534, %v3648, %v3650
    %v3652 = vrot.slane %v3606, 1
    %v3653 = vsel %vm2534, %v3650, %v3652
    %v3654 = vrot.slane %v3607, 1
    %v3655 = vsel %vm2534, %v3652, %v3654
    %v3656 = vrot.slane %v3608, 1
    %v3657 = vsel %vm2534, %v3654, %v3656
    %v3658 = vrot.slane %v3609, 1
    %v3659 = vsel %vm2534, %v3656, %v3658
    %v3660 = vrot.slane %v3610, 1
    %v3661 = vsel %vm2534, %v3658, %v3660
    %v3662 = vrot.slane %v3611, 1
    %v3663 = vsel %vm2534, %v3660, %v3662
    %v3664 = vrot.slane %v3612, 1
    %v3665 = vsel %vm2534, %v3662, %v3664
    %v3666 = vrot.slane %v3613, 1
    %v3667 = vsel %vm2534, %v3664, %v3666
    %v3668 = vrot.slane %v3614, 1
    %v3669 = vsel %vm2534, %v3666, %v3668
    %v3670 = vrot.slane %v3615, 1
    %v3671 = vsel %vm2534, %v3668, %v3670
    %v3672 = vrot.slane %v3616, 1
    %v3673 = vsel %vm2534, %v3670, %v3672
    %v3674 = vrot.slane %v3617, 1
    %v3675 = vsel %vm2534, %v3672, %v3674
    %v3676 = vrot.slane %v3618, 1
    %v3677 = vsel %vm2534, %v3674, %v3676
    %v3678 = vrot.slane %v3619, 1
    %v3679 = vsel %vm2534, %v3676, %v3678
    %v3680 = vrot.slane %v3620, 1
    %v3681 = vsel %vm2534, %v3678, %v3680
    %v3682 = vrot.slane %v3621, 1
    %v3683 = vsel %vm2534, %v3680, %v3682
    %v3684 = vrot.slane %v3622, 1
    %v3685 = vsel %vm2534, %v3682, %v3684
    %v3686 = vrot.slane %v3623, 1
    %v3687 = vsel %vm2534, %v3684, %v3686
    %v3688 = vrot.slane %v3624, 1
    %v3689 = vsel %vm2534, %v3686, %v3688
    %v3690 = vrot.slane %v3625, 1
    %v3691 = vsel %vm2534, %v3688, %v3690
    %v3692 = vrot.slane %v3626, 1
    %v3693 = vsel %vm2534, %v3690, %v3692
    %v3694 = vrot.slane %v3627, 1
    %v3695 = vsel %vm2534, %v3692, %v3694
    %v3696 = vrot.slane %v3628, 1
    %v3697 = vsel %vm2534, %v3694, %v3696
    %v3698 = vrot.slane %v3629, 1
    %v3699 = vsel %vm2534, %v3696, %v3698
    %v3700 = vrot.slane %v3630, 1
    %v3701 = vsel %vm2534, %v3698, %v3700
    %v3702 = vrot.slane %v3631, 1
    %v3703 = vsel %vm2534, %v3700, %v3702
    %v3704 = vrot.slane %v3632, 1
    %v3705 = vsel %vm2534, %v3702, %v3704
    %v3706 = vrot.slane %v3633, 1
    %v3707 = vsel %vm2534, %v3704, %v3706
    %v3708 = vrot.slane %v3634, 1
    %v3709 = vsel %vm2534, %v3706, %v3708
    %v3710 = vrot.slane %v3635, 1
    %v3711 = vsel %vm2534, %v3708, %v3710
    %v3712 = vrot.slane %v3636, 1
    %v3713 = vsel %vm2534, %v3710, %v3712
    %v3714 = vrot.slane %v3637, 1
    %v3715 = vsel %vm2534, %v3712, %v3714
    %v3716 = vrot.slane %v3638, 1
    %v3717 = vsel %vm2534, %v3714, %v3716
    %v3718 = vrot.slane %v3639, 1
    %v3719 = vsel %vm2534, %v3716, %v3718
    %v3720 = vrot.slane %v3640, 1
    %v3721 = vsel %vm2534, %v3718, %v3720
    %v3722 = vrot.slane %v3641, 1
    %v3723 = vsel %vm2534, %v3720, %v3722
    %v3724 = vrot.slane %v3642, 1
    %v3725 = vsel %vm2534, %v3722, %v3724
    %v3727 = vsel %vm313, %v3645, 0
    %v3730 = vsel %vm313, %v3647, 0
    %v3733 = vsel %vm313, %v3649, 0
    %v3736 = vsel %vm313, %v3651, 0
    %v3739 = vsel %vm313, %v3653, 0
    %v3742 = vsel %vm313, %v3655, 0
    %v3745 = vsel %vm313, %v3657, 0
    %v3748 = vsel %vm313, %v3659, 0
    %v3751 = vsel %vm313, %v3661, 0
    %v3754 = vsel %vm313, %v3663, 0
    %v3757 = vsel %vm313, %v3665, 0
    %v3760 = vsel %vm313, %v3667, 0
    %v3763 = vsel %vm313, %v3669, 0
    %v3766 = vsel %vm313, %v3671, 0
    %v3769 = vsel %vm313, %v3673, 0
    %v3772 = vsel %vm313, %v3675, 0
    %v3775 = vsel %vm313, %v3677, 0
    %v3778 = vsel %vm313, %v3679, 0
    %v3781 = vsel %vm313, %v3681, 0
    %v3784 = vsel %vm313, %v3683, 0
    %v3787 = vsel %vm313, %v3685, 0
    %v3790 = vsel %vm313, %v3687, 0
    %v3793 = vsel %vm313, %v3689, 0
    %v3796 = vsel %vm313, %v3691, 0
    %v3799 = vsel %vm313, %v3693, 0
    %v3802 = vsel %vm313, %v3695, 0
    %v3805 = vsel %vm313, %v3697, 0
    %v3808 = vsel %vm313, %v3699, 0
    %v3811 = vsel %vm313, %v3701, 0
    %v3814 = vsel %vm313, %v3703, 0
    %v3817 = vsel %vm313, %v3705, 0
    %v3820 = vsel %vm313, %v3707, 0
    %v3823 = vsel %vm313, %v3709, 0
    %v3826 = vsel %vm313, %v3711, 0
    %v3829 = vsel %vm313, %v3713, 0
    %v3832 = vsel %vm313, %v3715, 0
    %v3835 = vsel %vm313, %v3717, 0
    %v3838 = vsel %vm313, %v3719, 0
    %v3841 = vsel %vm313, %v3721, 0
    %v3844 = vsel %vm313, %v3723, 0
    %v3847 = vsel %vm313, %v3725, 0
    %v3850 = vsel %vm437, %v3434, 0
    %3852 = vmatprep.subr.bf16.mxu0 0
    %3853 = vmatpush1.bf16.msra.mxu0 %v3850
    %3854 = vmatprep.subr.bf16.mxu0 0
    %3855 = vmatpush1.bf16.msra.mxu0 0
    %3856 = vmatprep.subr.bf16.mxu0 0
    %3857 = vmatpush1.bf16.msra.mxu0 0
    %3858 = vmatprep.subr.bf16.mxu0 0
    %3859 = vmatpush1.bf16.msra.mxu0 0
    %3860 = vmatprep.subr.bf16.mxu0 0
    %3861 = vmatpush1.bf16.msra.mxu0 0
    %3862 = vmatprep.subr.bf16.mxu0 0
    %3863 = vmatpush1.bf16.msra.mxu0 0
    %3864 = vmatprep.subr.bf16.mxu0 0
    %3865 = vmatpush1.bf16.msra.mxu0 0
    %3866 = vmatprep.subr.bf16.mxu0 0
    %3867 = vmatpush1.bf16.msra.mxu0 0
    %3868 = vmatprep.subr.bf16.mxu0 0
    %3869 = vmatpush1.bf16.msra.mxu0 0
    %3870 = vmatprep.subr.bf16.mxu0 0
    %3871 = vmatpush1.bf16.msra.mxu0 0
    %3872 = vmatprep.subr.bf16.mxu0 0
    %3873 = vmatpush1.bf16.msra.mxu0 0
    %3874 = vmatprep.subr.bf16.mxu0 0
    %3875 = vmatpush1.bf16.msra.mxu0 0
    %3876 = vmatprep.subr.bf16.mxu0 0
    %3877 = vmatpush1.bf16.msra.mxu0 0
    %3878 = vmatprep.subr.bf16.mxu0 0
    %3879 = vmatpush1.bf16.msra.mxu0 0
    %3880 = vmatprep.subr.bf16.mxu0 0
    %3881 = vmatpush1.bf16.msra.mxu0 0
    %3882 = vmatprep.subr.bf16.mxu0 0
    %3883 = vmatpush1.bf16.msra.mxu0 0
    %3884 = vmatprep.mubr.bf16.mxu0 0
    %3885 = vmatmul.mubr.bf16.gmra.mrb[0].mxu0 %v3727
    %v3886 = vpop.f32.mrb[0].mxu0
    %v3887 = vadd.f32 0.0, %v3886
    %v3888 = vpop.f32.mrb[0].mxu0
    %v3889 = vpop.f32.mrb[0].mxu0
    %v3890 = vadd.f32 0.0, %v3889
    %v3891 = vpop.f32.mrb[0].mxu0
    %3892 = vmatprep.mubr.bf16.mxu0 0
    %3893 = vmatmul.mubr.bf16.gmra.mrb[0].mxu0 %v3730
    %v3894 = vpop.f32.mrb[0].mxu0
    %v3895 = vadd.f32 0.0, %v3894
    %v3896 = vpop.f32.mrb[0].mxu0
    %v3897 = vpop.f32.mrb[0].mxu0
    %v3898 = vadd.f32 0.0, %v3897
    %v3899 = vpop.f32.mrb[0].mxu0
    %3900 = vmatprep.mubr.bf16.mxu0 0
    %3901 = vmatmul.mubr.bf16.gmra.mrb[0].mxu0 %v3733
    %v3902 = vpop.f32.mrb[0].mxu0
    %v3903 = vadd.f32 0.0, %v3902
    %v3904 = vpop.f32.mrb[0].mxu0
    %v3905 = vpop.f32.mrb[0].mxu0
    %v3906 = vadd.f32 0.0, %v3905
    %v3907 = vpop.f32.mrb[0].mxu0
    %3908 = vmatprep.mubr.bf16.mxu0 0
    %3909 = vmatmul.mubr.bf16.gmra.mrb[0].mxu0 %v3736
    %v3910 = vpop.f32.mrb[0].mxu0
    %v3911 = vadd.f32 0.0, %v3910
    %v3912 = vpop.f32.mrb[0].mxu0
    %v3913 = vpop.f32.mrb[0].mxu0
    %v3914 = vadd.f32 0.0, %v3913
    %v3915 = vpop.f32.mrb[0].mxu0
    %3916 = vmatprep.mubr.bf16.mxu0 0
    %3917 = vmatmul.mubr.bf16.gmra.mrb[0].mxu0 %v3739
    %v3918 = vpop.f32.mrb[0].mxu0
    %v3919 = vadd.f32 0.0, %v3918
    %v3920 = vpop.f32.mrb[0].mxu0
    %v3921 = vpop.f32.mrb[0].mxu0
    %v3922 = vadd.f32 0.0, %v3921
    %v3923 = vpop.f32.mrb[0].mxu0
    %3924 = vmatprep.mubr.bf16.mxu0 0
    %3925 = vmatmul.mubr.bf16.gmra.mrb[0].mxu0 %v3742
    %v3926 = vpop.f32.mrb[0].mxu0
    %v3927 = vadd.f32 0.0, %v3926
    %v3928 = vpop.f32.mrb[0].mxu0
    %v3929 = vpop.f32.mrb[0].mxu0
    %v3930 = vadd.f32 0.0, %v3929
    %v3931 = vpop.f32.mrb[0].mxu0
    %3932 = vmatprep.mubr.bf16.mxu0 0
    %3933 = vmatmul.mubr.bf16.gmra.mrb[0].mxu0 %v3745
    %v3934 = vpop.f32.mrb[0].mxu0
    %v3935 = vadd.f32 0.0, %v3934
    %v3936 = vpop.f32.mrb[0].mxu0
    %v3937 = vpop.f32.mrb[0].mxu0
    %v3938 = vadd.f32 0.0, %v3937
    %v3939 = vpop.f32.mrb[0].mxu0
    %3940 = vmatprep.mubr.bf16.mxu0 0
    %3941 = vmatmul.mubr.bf16.gmra.mrb[0].mxu0 %v3748
    %v3942 = vpop.f32.mrb[0].mxu0
    %v3943 = vadd.f32 0.0, %v3942
    %v3944 = vpop.f32.mrb[0].mxu0
    %v3945 = vpop.f32.mrb[0].mxu0
    %v3946 = vadd.f32 0.0, %v3945
    %v3947 = vpop.f32.mrb[0].mxu0
    %3948 = vmatprep.mubr.bf16.mxu0 0
    %3949 = vmatmul.mubr.bf16.gmra.mrb[0].mxu0 %v3751
    %v3950 = vpop.f32.mrb[0].mxu0
    %v3951 = vadd.f32 0.0, %v3950
    %v3952 = vpop.f32.mrb[0].mxu0
    %v3953 = vpop.f32.mrb[0].mxu0
    %v3954 = vadd.f32 0.0, %v3953
    %v3955 = vpop.f32.mrb[0].mxu0
    %3956 = vmatprep.mubr.bf16.mxu0 0
    %3957 = vmatmul.mubr.bf16.gmra.mrb[0].mxu0 %v3754
    %v3958 = vpop.f32.mrb[0].mxu0
    %v3959 = vadd.f32 0.0, %v3958
    %v3960 = vpop.f32.mrb[0].mxu0
    %v3961 = vpop.f32.mrb[0].mxu0
    %v3962 = vadd.f32 0.0, %v3961
    %v3963 = vpop.f32.mrb[0].mxu0
    %3964 = vmatprep.mubr.bf16.mxu0 0
    %3965 = vmatmul.mubr.bf16.gmra.mrb[0].mxu0 %v3757
    %v3966 = vpop.f32.mrb[0].mxu0
    %v3967 = vadd.f32 0.0, %v3966
    %v3968 = vpop.f32.mrb[0].mxu0
    %v3969 = vpop.f32.mrb[0].mxu0
    %v3970 = vadd.f32 0.0, %v3969
    %v3971 = vpop.f32.mrb[0].mxu0
    %3972 = vmatprep.mubr.bf16.mxu0 0
    %3973 = vmatmul.mubr.bf16.gmra.mrb[0].mxu0 %v3760
    %v3974 = vpop.f32.mrb[0].mxu0
    %v3975 = vadd.f32 0.0, %v3974
    %v3976 = vpop.f32.mrb[0].mxu0
    %v3977 = vpop.f32.mrb[0].mxu0
    %v3978 = vadd.f32 0.0, %v3977
    %v3979 = vpop.f32.mrb[0].mxu0
    %3980 = vmatprep.mubr.bf16.mxu0 0
    %3981 = vmatmul.mubr.bf16.gmra.mrb[0].mxu0 %v3763
    %v3982 = vpop.f32.mrb[0].mxu0
    %v3983 = vadd.f32 0.0, %v3982
    %v3984 = vpop.f32.mrb[0].mxu0
    %v3985 = vpop.f32.mrb[0].mxu0
    %v3986 = vadd.f32 0.0, %v3985
    %v3987 = vpop.f32.mrb[0].mxu0
    %3988 = vmatprep.mubr.bf16.mxu0 0
    %3989 = vmatmul.mubr.bf16.gmra.mrb[0].mxu0 %v3766
    %v3990 = vpop.f32.mrb[0].mxu0
    %v3991 = vadd.f32 0.0, %v3990
    %v3992 = vpop.f32.mrb[0].mxu0
    %v3993 = vpop.f32.mrb[0].mxu0
    %v3994 = vadd.f32 0.0, %v3993
    %v3995 = vpop.f32.mrb[0].mxu0
    %3996 = vmatprep.mubr.bf16.mxu0 0
    %3997 = vmatmul.mubr.bf16.gmra.mrb[0].mxu0 %v3769
    %v3998 = vpop.f32.mrb[0].mxu0
    %v3999 = vadd.f32 0.0, %v3998
    %v4000 = vpop.f32.mrb[0].mxu0
    %v4001 = vpop.f32.mrb[0].mxu0
    %v4002 = vadd.f32 0.0, %v4001
    %v4003 = vpop.f32.mrb[0].mxu0
    %4004 = vmatprep.mubr.bf16.mxu0 0
    %4005 = vmatmul.mubr.bf16.gmra.mrb[0].mxu0 %v3772
    %v4006 = vpop.f32.mrb[0].mxu0
    %v4007 = vadd.f32 0.0, %v4006
    %v4008 = vpop.f32.mrb[0].mxu0
    %v4009 = vpop.f32.mrb[0].mxu0
    %v4010 = vadd.f32 0.0, %v4009
    %v4011 = vpop.f32.mrb[0].mxu0
    %4012 = vmatprep.mubr.bf16.mxu0 0
    %4013 = vmatmul.mubr.bf16.gmra.mrb[0].mxu0 %v3775
    %v4014 = vpop.f32.mrb[0].mxu0
    %v4015 = vadd.f32 0.0, %v4014
    %v4016 = vpop.f32.mrb[0].mxu0
    %v4017 = vpop.f32.mrb[0].mxu0
    %v4018 = vadd.f32 0.0, %v4017
    %v4019 = vpop.f32.mrb[0].mxu0
    %4020 = vmatprep.mubr.bf16.mxu0 0
    %4021 = vmatmul.mubr.bf16.gmra.mrb[0].mxu0 %v3778
    %v4022 = vpop.f32.mrb[0].mxu0
    %v4023 = vadd.f32 0.0, %v4022
    %v4024 = vpop.f32.mrb[0].mxu0
    %v4025 = vpop.f32.mrb[0].mxu0
    %v4026 = vadd.f32 0.0, %v4025
    %v4027 = vpop.f32.mrb[0].mxu0
    %4028 = vmatprep.mubr.bf16.mxu0 0
    %4029 = vmatmul.mubr.bf16.gmra.mrb[0].mxu0 %v3781
    %v4030 = vpop.f32.mrb[0].mxu0
    %v4031 = vadd.f32 0.0, %v4030
    %v4032 = vpop.f32.mrb[0].mxu0
    %v4033 = vpop.f32.mrb[0].mxu0
    %v4034 = vadd.f32 0.0, %v4033
    %v4035 = vpop.f32.mrb[0].mxu0
    %4036 = vmatprep.mubr.bf16.mxu0 0
    %4037 = vmatmul.mubr.bf16.gmra.mrb[0].mxu0 %v3784
    %v4038 = vpop.f32.mrb[0].mxu0
    %v4039 = vadd.f32 0.0, %v4038
    %v4040 = vpop.f32.mrb[0].mxu0
    %v4041 = vpop.f32.mrb[0].mxu0
    %v4042 = vadd.f32 0.0, %v4041
    %v4043 = vpop.f32.mrb[0].mxu0
    %4044 = vmatprep.mubr.bf16.mxu0 0
    %4045 = vmatmul.mubr.bf16.gmra.mrb[0].mxu0 %v3787
    %v4046 = vpop.f32.mrb[0].mxu0
    %v4047 = vadd.f32 0.0, %v4046
    %v4048 = vpop.f32.mrb[0].mxu0
    %v4049 = vpop.f32.mrb[0].mxu0
    %v4050 = vadd.f32 0.0, %v4049
    %v4051 = vpop.f32.mrb[0].mxu0
    %4052 = vmatprep.mubr.bf16.mxu0 0
    %4053 = vmatmul.mubr.bf16.gmra.mrb[0].mxu0 %v3790
    %v4054 = vpop.f32.mrb[0].mxu0
    %v4055 = vadd.f32 0.0, %v4054
    %v4056 = vpop.f32.mrb[0].mxu0
    %v4057 = vpop.f32.mrb[0].mxu0
    %v4058 = vadd.f32 0.0, %v4057
    %v4059 = vpop.f32.mrb[0].mxu0
    %4060 = vmatprep.mubr.bf16.mxu0 0
    %4061 = vmatmul.mubr.bf16.gmra.mrb[0].mxu0 %v3793
    %v4062 = vpop.f32.mrb[0].mxu0
    %v4063 = vadd.f32 0.0, %v4062
    %v4064 = vpop.f32.mrb[0].mxu0
    %v4065 = vpop.f32.mrb[0].mxu0
    %v4066 = vadd.f32 0.0, %v4065
    %v4067 = vpop.f32.mrb[0].mxu0
    %4068 = vmatprep.mubr.bf16.mxu0 0
    %4069 = vmatmul.mubr.bf16.gmra.mrb[0].mxu0 %v3796
    %v4070 = vpop.f32.mrb[0].mxu0
    %v4071 = vadd.f32 0.0, %v4070
    %v4072 = vpop.f32.mrb[0].mxu0
    %v4073 = vpop.f32.mrb[0].mxu0
    %v4074 = vadd.f32 0.0, %v4073
    %v4075 = vpop.f32.mrb[0].mxu0
    %4076 = vmatprep.mubr.bf16.mxu0 0
    %4077 = vmatmul.mubr.bf16.gmra.mrb[0].mxu0 %v3799
    %v4078 = vpop.f32.mrb[0].mxu0
    %v4079 = vadd.f32 0.0, %v4078
    %v4080 = vpop.f32.mrb[0].mxu0
    %v4081 = vpop.f32.mrb[0].mxu0
    %v4082 = vadd.f32 0.0, %v4081
    %v4083 = vpop.f32.mrb[0].mxu0
    %4084 = vmatprep.mubr.bf16.mxu0 0
    %4085 = vmatmul.mubr.bf16.gmra.mrb[0].mxu0 %v3802
    %v4086 = vpop.f32.mrb[0].mxu0
    %v4087 = vadd.f32 0.0, %v4086
    %v4088 = vpop.f32.mrb[0].mxu0
    %v4089 = vpop.f32.mrb[0].mxu0
    %v4090 = vadd.f32 0.0, %v4089
    %v4091 = vpop.f32.mrb[0].mxu0
    %4092 = vmatprep.mubr.bf16.mxu0 0
    %4093 = vmatmul.mubr.bf16.gmra.mrb[0].mxu0 %v3805
    %v4094 = vpop.f32.mrb[0].mxu0
    %v4095 = vadd.f32 0.0, %v4094
    %v4096 = vpop.f32.mrb[0].mxu0
    %v4097 = vpop.f32.mrb[0].mxu0
    %v4098 = vadd.f32 0.0, %v4097
    %v4099 = vpop.f32.mrb[0].mxu0
    %4100 = vmatprep.mubr.bf16.mxu0 0
    %4101 = vmatmul.mubr.bf16.gmra.mrb[0].mxu0 %v3808
    %v4102 = vpop.f32.mrb[0].mxu0
    %v4103 = vadd.f32 0.0, %v4102
    %v4104 = vpop.f32.mrb[0].mxu0
    %v4105 = vpop.f32.mrb[0].mxu0
    %v4106 = vadd.f32 0.0, %v4105
    %v4107 = vpop.f32.mrb[0].mxu0
    %4108 = vmatprep.mubr.bf16.mxu0 0
    %4109 = vmatmul.mubr.bf16.gmra.mrb[0].mxu0 %v3811
    %v4110 = vpop.f32.mrb[0].mxu0
    %v4111 = vadd.f32 0.0, %v4110
    %v4112 = vpop.f32.mrb[0].mxu0
    %v4113 = vpop.f32.mrb[0].mxu0
    %v4114 = vadd.f32 0.0, %v4113
    %v4115 = vpop.f32.mrb[0].mxu0
    %4116 = vmatprep.mubr.bf16.mxu0 0
    %4117 = vmatmul.mubr.bf16.gmra.mrb[0].mxu0 %v3814
    %v4118 = vpop.f32.mrb[0].mxu0
    %v4119 = vadd.f32 0.0, %v4118
    %v4120 = vpop.f32.mrb[0].mxu0
    %v4121 = vpop.f32.mrb[0].mxu0
    %v4122 = vadd.f32 0.0, %v4121
    %v4123 = vpop.f32.mrb[0].mxu0
    %4124 = vmatprep.mubr.bf16.mxu0 0
    %4125 = vmatmul.mubr.bf16.gmra.mrb[0].mxu0 %v3817
    %v4126 = vpop.f32.mrb[0].mxu0
    %v4127 = vadd.f32 0.0, %v4126
    %v4128 = vpop.f32.mrb[0].mxu0
    %v4129 = vpop.f32.mrb[0].mxu0
    %v4130 = vadd.f32 0.0, %v4129
    %v4131 = vpop.f32.mrb[0].mxu0
    %4132 = vmatprep.mubr.bf16.mxu0 0
    %4133 = vmatmul.mubr.bf16.gmra.mrb[0].mxu0 %v3820
    %v4134 = vpop.f32.mrb[0].mxu0
    %v4135 = vadd.f32 0.0, %v4134
    %v4136 = vpop.f32.mrb[0].mxu0
    %v4137 = vpop.f32.mrb[0].mxu0
    %v4138 = vadd.f32 0.0, %v4137
    %v4139 = vpop.f32.mrb[0].mxu0
    %4140 = vmatprep.mubr.bf16.mxu0 0
    %4141 = vmatmul.mubr.bf16.gmra.mrb[0].mxu0 %v3823
    %v4142 = vpop.f32.mrb[0].mxu0
    %v4143 = vadd.f32 0.0, %v4142
    %v4144 = vpop.f32.mrb[0].mxu0
    %v4145 = vpop.f32.mrb[0].mxu0
    %v4146 = vadd.f32 0.0, %v4145
    %v4147 = vpop.f32.mrb[0].mxu0
    %4148 = vmatprep.mubr.bf16.mxu0 0
    %4149 = vmatmul.mubr.bf16.gmra.mrb[0].mxu0 %v3826
    %v4150 = vpop.f32.mrb[0].mxu0
    %v4151 = vadd.f32 0.0, %v4150
    %v4152 = vpop.f32.mrb[0].mxu0
    %v4153 = vpop.f32.mrb[0].mxu0
    %v4154 = vadd.f32 0.0, %v4153
    %v4155 = vpop.f32.mrb[0].mxu0
    %4156 = vmatprep.mubr.bf16.mxu0 0
    %4157 = vmatmul.mubr.bf16.gmra.mrb[0].mxu0 %v3829
    %v4158 = vpop.f32.mrb[0].mxu0
    %v4159 = vadd.f32 0.0, %v4158
    %v4160 = vpop.f32.mrb[0].mxu0
    %v4161 = vpop.f32.mrb[0].mxu0
    %v4162 = vadd.f32 0.0, %v4161
    %v4163 = vpop.f32.mrb[0].mxu0
    %4164 = vmatprep.mubr.bf16.mxu0 0
    %4165 = vmatmul.mubr.bf16.gmra.mrb[0].mxu0 %v3832
    %v4166 = vpop.f32.mrb[0].mxu0
    %v4167 = vadd.f32 0.0, %v4166
    %v4168 = vpop.f32.mrb[0].mxu0
    %v4169 = vpop.f32.mrb[0].mxu0
    %v4170 = vadd.f32 0.0, %v4169
    %v4171 = vpop.f32.mrb[0].mxu0
    %4172 = vmatprep.mubr.bf16.mxu0 0
    %4173 = vmatmul.mubr.bf16.gmra.mrb[0].mxu0 %v3835
    %v4174 = vpop.f32.mrb[0].mxu0
    %v4175 = vadd.f32 0.0, %v4174
    %v4176 = vpop.f32.mrb[0].mxu0
    %v4177 = vpop.f32.mrb[0].mxu0
    %v4178 = vadd.f32 0.0, %v4177
    %v4179 = vpop.f32.mrb[0].mxu0
    %4180 = vmatprep.mubr.bf16.mxu0 0
    %4181 = vmatmul.mubr.bf16.gmra.mrb[0].mxu0 %v3838
    %v4182 = vpop.f32.mrb[0].mxu0
    %v4183 = vadd.f32 0.0, %v4182
    %v4184 = vpop.f32.mrb[0].mxu0
    %v4185 = vpop.f32.mrb[0].mxu0
    %v4186 = vadd.f32 0.0, %v4185
    %v4187 = vpop.f32.mrb[0].mxu0
    %4188 = vmatprep.mubr.bf16.mxu0 0
    %4189 = vmatmul.mubr.bf16.gmra.mrb[0].mxu0 %v3841
    %v4190 = vpop.f32.mrb[0].mxu0
    %v4191 = vadd.f32 0.0, %v4190
    %v4192 = vpop.f32.mrb[0].mxu0
    %v4193 = vpop.f32.mrb[0].mxu0
    %v4194 = vadd.f32 0.0, %v4193
    %v4195 = vpop.f32.mrb[0].mxu0
    %4196 = vmatprep.mubr.bf16.mxu0 0
    %4197 = vmatmul.mubr.bf16.gmra.mrb[0].mxu0 %v3844
    %v4198 = vpop.f32.mrb[0].mxu0
    %v4199 = vadd.f32 0.0, %v4198
    %v4200 = vpop.f32.mrb[0].mxu0
    %v4201 = vpop.f32.mrb[0].mxu0
    %v4202 = vadd.f32 0.0, %v4201
    %v4203 = vpop.f32.mrb[0].mxu0
    %4204 = vmatprep.mubr.bf16.mxu0 0
    %4205 = vmatmul.mubr.bf16.gmra.mrb[0].mxu0 %v3847
    %v4206 = vpop.f32.mrb[0].mxu0
    %v4207 = vadd.f32 0.0, %v4206
    %v4208 = vpop.f32.mrb[0].mxu0
    %v4209 = vpop.f32.mrb[0].mxu0
    %v4210 = vadd.f32 0.0, %v4209
    %v4211 = vpop.f32.mrb[0].mxu0
    %4212 = vdwg.mxu0
    %v4213 = vld [vmem:[#allocation2] sm:$0xff]
    %v4214 = vld [vmem:[#allocation2 + $0x8] sm:$0xff]
    %v4215 = vld [vmem:[#allocation2 + $0x10] sm:$0xff]
    %v4216 = vld [vmem:[#allocation2 + $0x18] sm:$0xff]
    %v4217 = vld [vmem:[#allocation2 + $0x20] sm:$0xff]
    %v4218 = vld [vmem:[#allocation2 + $0x28] sm:$0xff]
    %v4219 = vld [vmem:[#allocation2 + $0x30] sm:$0xff]
    %v4220 = vld [vmem:[#allocation2 + $0x38] sm:$0xff]
    %v4221 = vld [vmem:[#allocation2 + $0x40] sm:$0xff]
    %v4222 = vld [vmem:[#allocation2 + $0x48] sm:$0xff]
    %v4223 = vld [vmem:[#allocation2 + $0x50] sm:$0xff]
    %v4224 = vld [vmem:[#allocation2 + $0x58] sm:$0xff]
    %v4225 = vld [vmem:[#allocation2 + $0x60] sm:$0xff]
    %v4226 = vld [vmem:[#allocation2 + $0x68] sm:$0xff]
    %v4227 = vld [vmem:[#allocation2 + $0x70] sm:$0xff]
    %v4228 = vld [vmem:[#allocation2 + $0x78] sm:$0xff]
    %v4229 = vld [vmem:[#allocation2 + $0x80] sm:$0xff]
    %v4230 = vld [vmem:[#allocation2 + $0x88] sm:$0xff]
    %v4231 = vld [vmem:[#allocation2 + $0x90] sm:$0xff]
    %v4232 = vld [vmem:[#allocation2 + $0x98] sm:$0xff]
    %v4233 = vld [vmem:[#allocation2 + $0xa0] sm:$0xff]
    %v4234 = vld [vmem:[#allocation2 + $0xa8] sm:$0xff]
    %v4235 = vld [vmem:[#allocation2 + $0xb0] sm:$0xff]
    %v4236 = vld [vmem:[#allocation2 + $0xb8] sm:$0xff]
    %v4237 = vld [vmem:[#allocation2 + $0xc0] sm:$0xff]
    %v4238 = vld [vmem:[#allocation2 + $0xc8] sm:$0xff]
    %v4239 = vld [vmem:[#allocation2 + $0xd0] sm:$0xff]
    %v4240 = vld [vmem:[#allocation2 + $0xd8] sm:$0xff]
    %v4241 = vld [vmem:[#allocation2 + $0xe0] sm:$0xff]
    %v4242 = vld [vmem:[#allocation2 + $0xe8] sm:$0xff]
    %v4243 = vld [vmem:[#allocation2 + $0xf0] sm:$0xff]
    %v4244 = vld [vmem:[#allocation2 + $0xf8] sm:$0xff]
    %v4245 = vld [vmem:[#allocation2 + $0x100] sm:$0xff]
    %v4246 = vld [vmem:[#allocation2 + $0x108] sm:$0xff]
    %v4247 = vld [vmem:[#allocation2 + $0x110] sm:$0xff]
    %v4248 = vld [vmem:[#allocation2 + $0x118] sm:$0xff]
    %v4249 = vld [vmem:[#allocation2 + $0x120] sm:$0xff]
    %v4250 = vld [vmem:[#allocation2 + $0x128] sm:$0xff]
    %v4251 = vld [vmem:[#allocation2 + $0x130] sm:$0xff]
    %v4252 = vld [vmem:[#allocation2 + $0x138] sm:$0xff]
    %v4253 = vld [vmem:[#allocation2 + $0x140] sm:$0xff]
    %v4254 = vld [vmem:[#allocation2 + $0x148] sm:$0xff]
    %v4255 = vld [vmem:[#allocation2 + $0x150] sm:$0xff]
    %v4256 = vld [vmem:[#allocation2 + $0x158] sm:$0xff]
    %v4257 = vld [vmem:[#allocation2 + $0x160] sm:$0xff]
    %v4258 = vld [vmem:[#allocation2 + $0x168] sm:$0xff]
    %v4259 = vld [vmem:[#allocation2 + $0x170] sm:$0xff]
    %v4260 = vld [vmem:[#allocation2 + $0x178] sm:$0xff]
    %v4261 = vld [vmem:[#allocation2 + $0x180] sm:$0xff]
    %v4262 = vld [vmem:[#allocation2 + $0x188] sm:$0xff]
    %v4263 = vld [vmem:[#allocation2 + $0x190] sm:$0xff]
    %v4264 = vld [vmem:[#allocation2 + $0x198] sm:$0xff]
    %v4265 = vld [vmem:[#allocation2 + $0x1a0] sm:$0xff]
    %v4266 = vld [vmem:[#allocation2 + $0x1a8] sm:$0xff]
    %v4267 = vld [vmem:[#allocation2 + $0x1b0] sm:$0xff]
    %v4268 = vld [vmem:[#allocation2 + $0x1b8] sm:$0xff]
    %v4269 = vld [vmem:[#allocation2 + $0x1c0] sm:$0xff]
    %v4270 = vld [vmem:[#allocation2 + $0x1c8] sm:$0xff]
    %v4271 = vld [vmem:[#allocation2 + $0x1d0] sm:$0xff]
    %v4272 = vld [vmem:[#allocation2 + $0x1d8] sm:$0xff]
    %v4273 = vld [vmem:[#allocation2 + $0x1e0] sm:$0xff]
    %v4274 = vld [vmem:[#allocation2 + $0x1e8] sm:$0xff]
    %v4275 = vld [vmem:[#allocation2 + $0x1f0] sm:$0xff]
    %v4276 = vld [vmem:[#allocation2 + $0x1f8] sm:$0xff]
    %v4277 = vld [vmem:[#allocation2 + $0x200] sm:$0xff]
    %v4278 = vld [vmem:[#allocation2 + $0x208] sm:$0xff]
    %v4279 = vld [vmem:[#allocation2 + $0x210] sm:$0xff]
    %v4280 = vld [vmem:[#allocation2 + $0x218] sm:$0xff]
    %v4281 = vld [vmem:[#allocation2 + $0x220] sm:$0xff]
    %v4282 = vld [vmem:[#allocation2 + $0x228] sm:$0xff]
    %v4283 = vld [vmem:[#allocation2 + $0x230] sm:$0xff]
    %v4284 = vld [vmem:[#allocation2 + $0x238] sm:$0xff]
    %v4285 = vld [vmem:[#allocation2 + $0x240] sm:$0xff]
    %v4286 = vld [vmem:[#allocation2 + $0x248] sm:$0xff]
    %v4287 = vld [vmem:[#allocation2 + $0x250] sm:$0xff]
    %v4288 = vld [vmem:[#allocation2 + $0x258] sm:$0xff]
    %v4289 = vld [vmem:[#allocation2 + $0x260] sm:$0xff]
    %v4290 = vld [vmem:[#allocation2 + $0x268] sm:$0xff]
    %v4291 = vld [vmem:[#allocation2 + $0x270] sm:$0xff]
    %v4292 = vld [vmem:[#allocation2 + $0x278] sm:$0xff]
    %v4293 = vld [vmem:[#allocation2 + $0x280] sm:$0xff]
    %v4294 = vld [vmem:[#allocation2 + $0x288] sm:$0xff]
    %v4295 = vadd.f32 %v4213, %v3887
    %v4296 = vadd.f32 %v4214, %v3890
    %v4297 = vadd.f32 %v4215, %v3895
    %v4298 = vadd.f32 %v4216, %v3898
    %v4299 = vadd.f32 %v4217, %v3903
    %v4300 = vadd.f32 %v4218, %v3906
    %v4301 = vadd.f32 %v4219, %v3911
    %v4302 = vadd.f32 %v4220, %v3914
    %v4303 = vadd.f32 %v4221, %v3919
    %v4304 = vadd.f32 %v4222, %v3922
    %v4305 = vadd.f32 %v4223, %v3927
    %v4306 = vadd.f32 %v4224, %v3930
    %v4307 = vadd.f32 %v4225, %v3935
    %v4308 = vadd.f32 %v4226, %v3938
    %v4309 = vadd.f32 %v4227, %v3943
    %v4310 = vadd.f32 %v4228, %v3946
    %v4311 = vadd.f32 %v4229, %v3951
    %v4312 = vadd.f32 %v4230, %v3954
    %v4313 = vadd.f32 %v4231, %v3959
    %v4314 = vadd.f32 %v4232, %v3962
    %v4315 = vadd.f32 %v4233, %v3967
    %v4316 = vadd.f32 %v4234, %v3970
    %v4317 = vadd.f32 %v4235, %v3975
    %v4318 = vadd.f32 %v4236, %v3978
    %v4319 = vadd.f32 %v4237, %v3983
    %v4320 = vadd.f32 %v4238, %v3986
    %v4321 = vadd.f32 %v4239, %v3991
    %v4322 = vadd.f32 %v4240, %v3994
    %v4323 = vadd.f32 %v4241, %v3999
    %v4324 = vadd.f32 %v4242, %v4002
    %v4325 = vadd.f32 %v4243, %v4007
    %v4326 = vadd.f32 %v4244, %v4010
    %v4327 = vadd.f32 %v4245, %v4015
    %v4328 = vadd.f32 %v4246, %v4018
    %v4329 = vadd.f32 %v4247, %v4023
    %v4330 = vadd.f32 %v4248, %v4026
    %v4331 = vadd.f32 %v4249, %v4031
    %v4332 = vadd.f32 %v4250, %v4034
    %v4333 = vadd.f32 %v4251, %v4039
    %v4334 = vadd.f32 %v4252, %v4042
    %v4335 = vadd.f32 %v4253, %v4047
    %v4336 = vadd.f32 %v4254, %v4050
    %v4337 = vadd.f32 %v4255, %v4055
    %v4338 = vadd.f32 %v4256, %v4058
    %v4339 = vadd.f32 %v4257, %v4063
    %v4340 = vadd.f32 %v4258, %v4066
    %v4341 = vadd.f32 %v4259, %v4071
    %v4342 = vadd.f32 %v4260, %v4074
    %v4343 = vadd.f32 %v4261, %v4079
    %v4344 = vadd.f32 %v4262, %v4082
    %v4345 = vadd.f32 %v4263, %v4087
    %v4346 = vadd.f32 %v4264, %v4090
    %v4347 = vadd.f32 %v4265, %v4095
    %v4348 = vadd.f32 %v4266, %v4098
    %v4349 = vadd.f32 %v4267, %v4103
    %v4350 = vadd.f32 %v4268, %v4106
    %v4351 = vadd.f32 %v4269, %v4111
    %v4352 = vadd.f32 %v4270, %v4114
    %v4353 = vadd.f32 %v4271, %v4119
    %v4354 = vadd.f32 %v4272, %v4122
    %v4355 = vadd.f32 %v4273, %v4127
    %v4356 = vadd.f32 %v4274, %v4130
    %v4357 = vadd.f32 %v4275, %v4135
    %v4358 = vadd.f32 %v4276, %v4138
    %v4359 = vadd.f32 %v4277, %v4143
    %v4360 = vadd.f32 %v4278, %v4146
    %v4361 = vadd.f32 %v4279, %v4151
    %v4362 = vadd.f32 %v4280, %v4154
    %v4363 = vadd.f32 %v4281, %v4159
    %v4364 = vadd.f32 %v4282, %v4162
    %v4365 = vadd.f32 %v4283, %v4167
    %v4366 = vadd.f32 %v4284, %v4170
    %v4367 = vadd.f32 %v4285, %v4175
    %v4368 = vadd.f32 %v4286, %v4178
    %v4369 = vadd.f32 %v4287, %v4183
    %v4370 = vadd.f32 %v4288, %v4186
    %v4371 = vadd.f32 %v4289, %v4191
    %v4372 = vadd.f32 %v4290, %v4194
    %v4373 = vadd.f32 %v4291, %v4199
    %v4374 = vadd.f32 %v4292, %v4202
    %v4375 = vadd.f32 %v4293, %v4207
    %v4376 = vadd.f32 %v4294, %v4210
    %4377 = vst [vmem:[#allocation2] sm:$0xff] %v4295
    %4378 = vst [vmem:[#allocation2 + $0x8] sm:$0xff] %v4296
    %4379 = vst [vmem:[#allocation2 + $0x10] sm:$0xff] %v4297
    %4380 = vst [vmem:[#allocation2 + $0x18] sm:$0xff] %v4298
    %4381 = vst [vmem:[#allocation2 + $0x20] sm:$0xff] %v4299
    %4382 = vst [vmem:[#allocation2 + $0x28] sm:$0xff] %v4300
    %4383 = vst [vmem:[#allocation2 + $0x30] sm:$0xff] %v4301
    %4384 = vst [vmem:[#allocation2 + $0x38] sm:$0xff] %v4302
    %4385 = vst [vmem:[#allocation2 + $0x40] sm:$0xff] %v4303
    %4386 = vst [vmem:[#allocation2 + $0x48] sm:$0xff] %v4304
    %4387 = vst [vmem:[#allocation2 + $0x50] sm:$0xff] %v4305
    %4388 = vst [vmem:[#allocation2 + $0x58] sm:$0xff] %v4306
    %4389 = vst [vmem:[#allocation2 + $0x60] sm:$0xff] %v4307
    %4390 = vst [vmem:[#allocation2 + $0x68] sm:$0xff] %v4308
    %4391 = vst [vmem:[#allocation2 + $0x70] sm:$0xff] %v4309
    %4392 = vst [vmem:[#allocation2 + $0x78] sm:$0xff] %v4310
    %4393 = vst [vmem:[#allocation2 + $0x80] sm:$0xff] %v4311
    %4394 = vst [vmem:[#allocation2 + $0x88] sm:$0xff] %v4312
    %4395 = vst [vmem:[#allocation2 + $0x90] sm:$0xff] %v4313
    %4396 = vst [vmem:[#allocation2 + $0x98] sm:$0xff] %v4314
    %4397 = vst [vmem:[#allocation2 + $0xa0] sm:$0xff] %v4315
    %4398 = vst [vmem:[#allocation2 + $0xa8] sm:$0xff] %v4316
    %4399 = vst [vmem:[#allocation2 + $0xb0] sm:$0xff] %v4317
    %4400 = vst [vmem:[#allocation2 + $0xb8] sm:$0xff] %v4318
    %4401 = vst [vmem:[#allocation2 + $0xc0] sm:$0xff] %v4319
    %4402 = vst [vmem:[#allocation2 + $0xc8] sm:$0xff] %v4320
    %4403 = vst [vmem:[#allocation2 + $0xd0] sm:$0xff] %v4321
    %4404 = vst [vmem:[#allocation2 + $0xd8] sm:$0xff] %v4322
    %4405 = vst [vmem:[#allocation2 + $0xe0] sm:$0xff] %v4323
    %4406 = vst [vmem:[#allocation2 + $0xe8] sm:$0xff] %v4324
    %4407 = vst [vmem:[#allocation2 + $0xf0] sm:$0xff] %v4325
    %4408 = vst [vmem:[#allocation2 + $0xf8] sm:$0xff] %v4326
    %4409 = vst [vmem:[#allocation2 + $0x100] sm:$0xff] %v4327
    %4410 = vst [vmem:[#allocation2 + $0x108] sm:$0xff] %v4328
    %4411 = vst [vmem:[#allocation2 + $0x110] sm:$0xff] %v4329
    %4412 = vst [vmem:[#allocation2 + $0x118] sm:$0xff] %v4330
    %4413 = vst [vmem:[#allocation2 + $0x120] sm:$0xff] %v4331
    %4414 = vst [vmem:[#allocation2 + $0x128] sm:$0xff] %v4332
    %4415 = vst [vmem:[#allocation2 + $0x130] sm:$0xff] %v4333
    %4416 = vst [vmem:[#allocation2 + $0x138] sm:$0xff] %v4334
    %4417 = vst [vmem:[#allocation2 + $0x140] sm:$0xff] %v4335
    %4418 = vst [vmem:[#allocation2 + $0x148] sm:$0xff] %v4336
    %4419 = vst [vmem:[#allocation2 + $0x150] sm:$0xff] %v4337
    %4420 = vst [vmem:[#allocation2 + $0x158] sm:$0xff] %v4338
    %4421 = vst [vmem:[#allocation2 + $0x160] sm:$0xff] %v4339
    %4422 = vst [vmem:[#allocation2 + $0x168] sm:$0xff] %v4340
    %4423 = vst [vmem:[#allocation2 + $0x170] sm:$0xff] %v4341
    %4424 = vst [vmem:[#allocation2 + $0x178] sm:$0xff] %v4342
    %4425 = vst [vmem:[#allocation2 + $0x180] sm:$0xff] %v4343
    %4426 = vst [vmem:[#allocation2 + $0x188] sm:$0xff] %v4344
    %4427 = vst [vmem:[#allocation2 + $0x190] sm:$0xff] %v4345
    %4428 = vst [vmem:[#allocation2 + $0x198] sm:$0xff] %v4346
    %4429 = vst [vmem:[#allocation2 + $0x1a0] sm:$0xff] %v4347
    %4430 = vst [vmem:[#allocation2 + $0x1a8] sm:$0xff] %v4348
    %4431 = vst [vmem:[#allocation2 + $0x1b0] sm:$0xff] %v4349
    %4432 = vst [vmem:[#allocation2 + $0x1b8] sm:$0xff] %v4350
    %4433 = vst [vmem:[#allocation2 + $0x1c0] sm:$0xff] %v4351
    %4434 = vst [vmem:[#allocation2 + $0x1c8] sm:$0xff] %v4352
    %4435 = vst [vmem:[#allocation2 + $0x1d0] sm:$0xff] %v4353
    %4436 = vst [vmem:[#allocation2 + $0x1d8] sm:$0xff] %v4354
    %4437 = vst [vmem:[#allocation2 + $0x1e0] sm:$0xff] %v4355
    %4438 = vst [vmem:[#allocation2 + $0x1e8] sm:$0xff] %v4356
    %4439 = vst [vmem:[#allocation2 + $0x1f0] sm:$0xff] %v4357
    %4440 = vst [vmem:[#allocation2 + $0x1f8] sm:$0xff] %v4358
    %4441 = vst [vmem:[#allocation2 + $0x200] sm:$0xff] %v4359
    %4442 = vst [vmem:[#allocation2 + $0x208] sm:$0xff] %v4360
    %4443 = vst [vmem:[#allocation2 + $0x210] sm:$0xff] %v4361
    %4444 = vst [vmem:[#allocation2 + $0x218] sm:$0xff] %v4362
    %4445 = vst [vmem:[#allocation2 + $0x220] sm:$0xff] %v4363
    %4446 = vst [vmem:[#allocation2 + $0x228] sm:$0xff] %v4364
    %4447 = vst [vmem:[#allocation2 + $0x230] sm:$0xff] %v4365
    %4448 = vst [vmem:[#allocation2 + $0x238] sm:$0xff] %v4366
    %4449 = vst [vmem:[#allocation2 + $0x240] sm:$0xff] %v4367
    %4450 = vst [vmem:[#allocation2 + $0x248] sm:$0xff] %v4368
    %4451 = vst [vmem:[#allocation2 + $0x250] sm:$0xff] %v4369
    %4452 = vst [vmem:[#allocation2 + $0x258] sm:$0xff] %v4370
    %4453 = vst [vmem:[#allocation2 + $0x260] sm:$0xff] %v4371
    %4454 = vst [vmem:[#allocation2 + $0x268] sm:$0xff] %v4372
    %4455 = vst [vmem:[#allocation2 + $0x270] sm:$0xff] %v4373
    %4456 = vst [vmem:[#allocation2 + $0x278] sm:$0xff] %v4374
    %4457 = vst [vmem:[#allocation2 + $0x280] sm:$0xff] %v4375
    %4458 = vst [vmem:[#allocation2 + $0x288] sm:$0xff] %v4376
    %v4459 = vld [vmem:[%s0 + $0x8] sm:$0xe]
    %v4460 = vld [vmem:[%s0 + $0xc] sm:$0xf]
    %v4461 = vld [vmem:[%s0 + $0x10] sm:$0xf]
    %v4462 = vld [vmem:[%s0 + $0x14] sm:$0xf]
    %v4463 = vld [vmem:[%s0 + $0x18] sm:$0xf]
    %v4464 = vld [vmem:[%s0 + $0x1c] sm:$0xf]
    %v4465 = vld [vmem:[%s0 + $0x20] sm:$0xf]
    %v4466 = vld [vmem:[%s0 + $0x24] sm:$0xf]
    %v4467 = vld [vmem:[%s0 + $0x28] sm:$0xf]
    %v4468 = vld [vmem:[%s0 + $0x2c] sm:$0xf]
    %v4469 = vld [vmem:[%s0 + $0x30] sm:$0xf]
    %v4470 = vld [vmem:[%s0 + $0x34] sm:$0xf]
    %v4471 = vld [vmem:[%s0 + $0x38] sm:$0xf]
    %v4472 = vld [vmem:[%s0 + $0x3c] sm:$0xf]
    %v4473 = vld [vmem:[%s0 + $0x40] sm:$0xf]
    %v4474 = vld [vmem:[%s0 + $0x44] sm:$0xf]
    %v4475 = vld [vmem:[%s0 + $0x48] sm:$0xf]
    %v4476 = vld [vmem:[%s0 + $0x4c] sm:$0xf]
    %v4477 = vld [vmem:[%s0 + $0x50] sm:$0xf]
    %v4478 = vld [vmem:[%s0 + $0x54] sm:$0xf]
    %v4479 = vld [vmem:[%s0 + $0x58] sm:$0xf]
    %v4480 = vld [vmem:[%s0 + $0x5c] sm:$0xf]
    %v4481 = vld [vmem:[%s0 + $0x60] sm:$0xf]
    %v4482 = vld [vmem:[%s0 + $0x64] sm:$0xf]
    %v4483 = vld [vmem:[%s0 + $0x68] sm:$0xf]
    %v4484 = vld [vmem:[%s0 + $0x6c] sm:$0xf]
    %v4485 = vld [vmem:[%s0 + $0x70] sm:$0xf]
    %v4486 = vld [vmem:[%s0 + $0x74] sm:$0xf]
    %v4487 = vld [vmem:[%s0 + $0x78] sm:$0xf]
    %v4488 = vld [vmem:[%s0 + $0x7c] sm:$0xf]
    %v4489 = vld [vmem:[%s0 + $0x80] sm:$0xf]
    %v4490 = vld [vmem:[%s0 + $0x84] sm:$0xf]
    %v4491 = vld [vmem:[%s0 + $0x88] sm:$0xf]
    %v4492 = vld [vmem:[%s0 + $0x8c] sm:$0xf]
    %v4493 = vld [vmem:[%s0 + $0x90] sm:$0xf]
    %v4494 = vld [vmem:[%s0 + $0x94] sm:$0xf]
    %v4495 = vld [vmem:[%s0 + $0x98] sm:$0xf]
    %v4496 = vld [vmem:[%s0 + $0x9c] sm:$0xf]
    %v4497 = vld [vmem:[%s0 + $0xa0] sm:$0xf]
    %v4498 = vld [vmem:[%s0 + $0xa4] sm:$0xf]
    %v4499 = vld [vmem:[%s0 + $0xa8] sm:$0xf]
    %v4500 = vld [vmem:[%s0 + $0xac] sm:$0xf]
    %v4501 = vld [vmem:[%s0 + $0xb0] sm:$0xf]
    %v4502 = vld [vmem:[%s0 + $0xb4] sm:$0xf]
    %v4503 = vld [vmem:[%s0 + $0xb8] sm:$0xf]
    %v4504 = vld [vmem:[%s0 + $0xbc] sm:$0xf]
    %v4505 = vld [vmem:[%s0 + $0xc0] sm:$0xf]
    %v4506 = vld [vmem:[%s0 + $0xc4] sm:$0xf]
    %v4507 = vld [vmem:[%s0 + $0xc8] sm:$0xf]
    %v4508 = vld [vmem:[%s0 + $0xcc] sm:$0xf]
    %v4509 = vld [vmem:[%s0 + $0xd0] sm:$0xf]
    %v4510 = vld [vmem:[%s0 + $0xd4] sm:$0xf]
    %v4511 = vld [vmem:[%s0 + $0xd8] sm:$0xf]
    %v4512 = vld [vmem:[%s0 + $0xdc] sm:$0xf]
    %v4513 = vld [vmem:[%s0 + $0xe0] sm:$0xf]
    %v4514 = vld [vmem:[%s0 + $0xe4] sm:$0xf]
    %v4515 = vld [vmem:[%s0 + $0xe8] sm:$0xf]
    %v4516 = vld [vmem:[%s0 + $0xec] sm:$0xf]
    %v4517 = vld [vmem:[%s0 + $0xf0] sm:$0xf]
    %v4518 = vld [vmem:[%s0 + $0xf4] sm:$0xf]
    %v4519 = vld [vmem:[%s0 + $0xf8] sm:$0xf]
    %v4520 = vld [vmem:[%s0 + $0xfc] sm:$0xf]
    %v4521 = vld [vmem:[%s0 + $0x100] sm:$0xf]
    %v4522 = vld [vmem:[%s0 + $0x104] sm:$0xf]
    %v4523 = vld [vmem:[%s0 + $0x108] sm:$0xf]
    %v4524 = vld [vmem:[%s0 + $0x10c] sm:$0xf]
    %v4525 = vld [vmem:[%s0 + $0x110] sm:$0xf]
    %v4526 = vld [vmem:[%s0 + $0x114] sm:$0xf]
    %v4527 = vld [vmem:[%s0 + $0x118] sm:$0xf]
    %v4528 = vld [vmem:[%s0 + $0x11c] sm:$0xf]
    %v4529 = vld [vmem:[%s0 + $0x120] sm:$0xf]
    %v4530 = vld [vmem:[%s0 + $0x124] sm:$0xf]
    %v4531 = vld [vmem:[%s0 + $0x128] sm:$0xf]
    %v4532 = vld [vmem:[%s0 + $0x12c] sm:$0xf]
    %v4533 = vld [vmem:[%s0 + $0x130] sm:$0xf]
    %v4534 = vld [vmem:[%s0 + $0x134] sm:$0xf]
    %v4535 = vld [vmem:[%s0 + $0x138] sm:$0xf]
    %v4536 = vld [vmem:[%s0 + $0x13c] sm:$0xf]
    %v4537 = vld [vmem:[%s0 + $0x140] sm:$0xf]
    %v4538 = vld [vmem:[%s0 + $0x144] sm:$0xf]
    %v4539 = vld [vmem:[%s0 + $0x148] sm:$0xf]
    %v4540 = vld [vmem:[%s0 + $0x14c] sm:$0xf]
    %v4541 = vld [vmem:[%s0 + $0x150] sm:$0x3]
    %v4542 = vld [vmem:[%s1 + $0x10] sm:$0xf]
    %v4626 = vunpack.c.l.b16 %v4459
    %v4627 = vunpack.c.l.b16 %v4460
    %v4628 = vunpack.c.l.b16 %v4461
    %v4629 = vunpack.c.l.b16 %v4462
    %v4630 = vunpack.c.l.b16 %v4463
    %v4631 = vunpack.c.l.b16 %v4464
    %v4632 = vunpack.c.l.b16 %v4465
    %v4633 = vunpack.c.l.b16 %v4466
    %v4634 = vunpack.c.l.b16 %v4467
    %v4635 = vunpack.c.l.b16 %v4468
    %v4636 = vunpack.c.l.b16 %v4469
    %v4637 = vunpack.c.l.b16 %v4470
    %v4638 = vunpack.c.l.b16 %v4471
    %v4639 = vunpack.c.l.b16 %v4472
    %v4640 = vunpack.c.l.b16 %v4473
    %v4641 = vunpack.c.l.b16 %v4474
    %v4642 = vunpack.c.l.b16 %v4475
    %v4643 = vunpack.c.l.b16 %v4476
    %v4644 = vunpack.c.l.b16 %v4477
    %v4645 = vunpack.c.l.b16 %v4478
    %v4646 = vunpack.c.l.b16 %v4479
    %v4647 = vunpack.c.l.b16 %v4480
    %v4648 = vunpack.c.l.b16 %v4481
    %v4649 = vunpack.c.l.b16 %v4482
    %v4650 = vunpack.c.l.b16 %v4483
    %v4651 = vunpack.c.l.b16 %v4484
    %v4652 = vunpack.c.l.b16 %v4485
    %v4653 = vunpack.c.l.b16 %v4486
    %v4654 = vunpack.c.l.b16 %v4487
    %v4655 = vunpack.c.l.b16 %v4488
    %v4656 = vunpack.c.l.b16 %v4489
    %v4657 = vunpack.c.l.b16 %v4490
    %v4658 = vunpack.c.l.b16 %v4491
    %v4659 = vunpack.c.l.b16 %v4492
    %v4660 = vunpack.c.l.b16 %v4493
    %v4661 = vunpack.c.l.b16 %v4494
    %v4662 = vunpack.c.l.b16 %v4495
    %v4663 = vunpack.c.l.b16 %v4496
    %v4664 = vunpack.c.l.b16 %v4497
    %v4665 = vunpack.c.l.b16 %v4498
    %v4666 = vunpack.c.l.b16 %v4499
    %v4667 = vunpack.c.l.b16 %v4500
    %v4668 = vunpack.c.l.b16 %v4501
    %v4669 = vunpack.c.l.b16 %v4502
    %v4670 = vunpack.c.l.b16 %v4503
    %v4671 = vunpack.c.l.b16 %v4504
    %v4672 = vunpack.c.l.b16 %v4505
    %v4673 = vunpack.c.l.b16 %v4506
    %v4674 = vunpack.c.l.b16 %v4507
    %v4675 = vunpack.c.l.b16 %v4508
    %v4676 = vunpack.c.l.b16 %v4509
    %v4677 = vunpack.c.l.b16 %v4510
    %v4678 = vunpack.c.l.b16 %v4511
    %v4679 = vunpack.c.l.b16 %v4512
    %v4680 = vunpack.c.l.b16 %v4513
    %v4681 = vunpack.c.l.b16 %v4514
    %v4682 = vunpack.c.l.b16 %v4515
    %v4683 = vunpack.c.l.b16 %v4516
    %v4684 = vunpack.c.l.b16 %v4517
    %v4685 = vunpack.c.l.b16 %v4518
    %v4686 = vunpack.c.l.b16 %v4519
    %v4687 = vunpack.c.l.b16 %v4520
    %v4688 = vunpack.c.l.b16 %v4521
    %v4689 = vunpack.c.l.b16 %v4522
    %v4690 = vunpack.c.l.b16 %v4523
    %v4691 = vunpack.c.l.b16 %v4524
    %v4692 = vunpack.c.l.b16 %v4525
    %v4693 = vunpack.c.l.b16 %v4526
    %v4694 = vunpack.c.l.b16 %v4527
    %v4695 = vunpack.c.l.b16 %v4528
    %v4696 = vunpack.c.l.b16 %v4529
    %v4697 = vunpack.c.l.b16 %v4530
    %v4698 = vunpack.c.l.b16 %v4531
    %v4699 = vunpack.c.l.b16 %v4532
    %v4700 = vunpack.c.l.b16 %v4533
    %v4701 = vunpack.c.l.b16 %v4534
    %v4702 = vunpack.c.l.b16 %v4535
    %v4703 = vunpack.c.l.b16 %v4536
    %v4704 = vunpack.c.l.b16 %v4537
    %v4705 = vunpack.c.l.b16 %v4538
    %v4706 = vunpack.c.l.b16 %v4539
    %v4707 = vunpack.c.l.b16 %v4540
    %v4708 = vunpack.c.l.b16 %v4541
    %v4709 = vpack.c.b16 %v4627, %v4626
    %v4710 = vpack.c.b16 %v4629, %v4628
    %v4711 = vpack.c.b16 %v4631, %v4630
    %v4712 = vpack.c.b16 %v4633, %v4632
    %v4713 = vpack.c.b16 %v4635, %v4634
    %v4714 = vpack.c.b16 %v4637, %v4636
    %v4715 = vpack.c.b16 %v4639, %v4638
    %v4716 = vpack.c.b16 %v4641, %v4640
    %v4717 = vpack.c.b16 %v4643, %v4642
    %v4718 = vpack.c.b16 %v4645, %v4644
    %v4719 = vpack.c.b16 %v4647, %v4646
    %v4720 = vpack.c.b16 %v4649, %v4648
    %v4721 = vpack.c.b16 %v4651, %v4650
    %v4722 = vpack.c.b16 %v4653, %v4652
    %v4723 = vpack.c.b16 %v4655, %v4654
    %v4724 = vpack.c.b16 %v4657, %v4656
    %v4725 = vpack.c.b16 %v4659, %v4658
    %v4726 = vpack.c.b16 %v4661, %v4660
    %v4727 = vpack.c.b16 %v4663, %v4662
    %v4728 = vpack.c.b16 %v4665, %v4664
    %v4729 = vpack.c.b16 %v4667, %v4666
    %v4730 = vpack.c.b16 %v4669, %v4668
    %v4731 = vpack.c.b16 %v4671, %v4670
    %v4732 = vpack.c.b16 %v4673, %v4672
    %v4733 = vpack.c.b16 %v4675, %v4674
    %v4734 = vpack.c.b16 %v4677, %v4676
    %v4735 = vpack.c.b16 %v4679, %v4678
    %v4736 = vpack.c.b16 %v4681, %v4680
    %v4737 = vpack.c.b16 %v4683, %v4682
    %v4738 = vpack.c.b16 %v4685, %v4684
    %v4739 = vpack.c.b16 %v4687, %v4686
    %v4740 = vpack.c.b16 %v4689, %v4688
    %v4741 = vpack.c.b16 %v4691, %v4690
    %v4742 = vpack.c.b16 %v4693, %v4692
    %v4743 = vpack.c.b16 %v4695, %v4694
    %v4744 = vpack.c.b16 %v4697, %v4696
    %v4745 = vpack.c.b16 %v4699, %v4698
    %v4746 = vpack.c.b16 %v4701, %v4700
    %v4747 = vpack.c.b16 %v4703, %v4702
    %v4748 = vpack.c.b16 %v4705, %v4704
    %v4749 = vpack.c.b16 %v4707, %v4706
    %v4750 = vpack.c.b16 %v4708, %v4708
    %vm4751 = vsmask.f32 6400
    %v4753 = vshrl.u32 %v4709, 16
    %v4755 = vrot.slane %v4753, 1
    %v4756 = vshll.u32 %v4709, 16
    %v4758 = vrot.slane %v4756, 2
    %v4759 = vor.u32 %v4755, %v4758
    %v4761 = vshrl.u32 %v4710, 16
    %v4763 = vrot.slane %v4761, 1
    %v4764 = vshll.u32 %v4710, 16
    %v4766 = vrot.slane %v4764, 2
    %v4767 = vor.u32 %v4763, %v4766
    %v4768 = vsel %vm4751, %v4759, %v4767
    %v4770 = vshrl.u32 %v4711, 16
    %v4772 = vrot.slane %v4770, 1
    %v4773 = vshll.u32 %v4711, 16
    %v4775 = vrot.slane %v4773, 2
    %v4776 = vor.u32 %v4772, %v4775
    %v4777 = vsel %vm4751, %v4767, %v4776
    %v4779 = vshrl.u32 %v4712, 16
    %v4781 = vrot.slane %v4779, 1
    %v4782 = vshll.u32 %v4712, 16
    %v4784 = vrot.slane %v4782, 2
    %v4785 = vor.u32 %v4781, %v4784
    %v4786 = vsel %vm4751, %v4776, %v4785
    %v4788 = vshrl.u32 %v4713, 16
    %v4790 = vrot.slane %v4788, 1
    %v4791 = vshll.u32 %v4713, 16
    %v4793 = vrot.slane %v4791, 2
    %v4794 = vor.u32 %v4790, %v4793
    %v4795 = vsel %vm4751, %v4785, %v4794
    %v4797 = vshrl.u32 %v4714, 16
    %v4799 = vrot.slane %v4797, 1
    %v4800 = vshll.u32 %v4714, 16
    %v4802 = vrot.slane %v4800, 2
    %v4803 = vor.u32 %v4799, %v4802
    %v4804 = vsel %vm4751, %v4794, %v4803
    %v4806 = vshrl.u32 %v4715, 16
    %v4808 = vrot.slane %v4806, 1
    %v4809 = vshll.u32 %v4715, 16
    %v4811 = vrot.slane %v4809, 2
    %v4812 = vor.u32 %v4808, %v4811
    %v4813 = vsel %vm4751, %v4803, %v4812
    %v4815 = vshrl.u32 %v4716, 16
    %v4817 = vrot.slane %v4815, 1
    %v4818 = vshll.u32 %v4716, 16
    %v4820 = vrot.slane %v4818, 2
    %v4821 = vor.u32 %v4817, %v4820
    %v4822 = vsel %vm4751, %v4812, %v4821
    %v4824 = vshrl.u32 %v4717, 16
    %v4826 = vrot.slane %v4824, 1
    %v4827 = vshll.u32 %v4717, 16
    %v4829 = vrot.slane %v4827, 2
    %v4830 = vor.u32 %v4826, %v4829
    %v4831 = vsel %vm4751, %v4821, %v4830
    %v4833 = vshrl.u32 %v4718, 16
    %v4835 = vrot.slane %v4833, 1
    %v4836 = vshll.u32 %v4718, 16
    %v4838 = vrot.slane %v4836, 2
    %v4839 = vor.u32 %v4835, %v4838
    %v4840 = vsel %vm4751, %v4830, %v4839
    %v4842 = vshrl.u32 %v4719, 16
    %v4844 = vrot.slane %v4842, 1
    %v4845 = vshll.u32 %v4719, 16
    %v4847 = vrot.slane %v4845, 2
    %v4848 = vor.u32 %v4844, %v4847
    %v4849 = vsel %vm4751, %v4839, %v4848
    %v4851 = vshrl.u32 %v4720, 16
    %v4853 = vrot.slane %v4851, 1
    %v4854 = vshll.u32 %v4720, 16
    %v4856 = vrot.slane %v4854, 2
    %v4857 = vor.u32 %v4853, %v4856
    %v4858 = vsel %vm4751, %v4848, %v4857
    %v4860 = vshrl.u32 %v4721, 16
    %v4862 = vrot.slane %v4860, 1
    %v4863 = vshll.u32 %v4721, 16
    %v4865 = vrot.slane %v4863, 2
    %v4866 = vor.u32 %v4862, %v4865
    %v4867 = vsel %vm4751, %v4857, %v4866
    %v4869 = vshrl.u32 %v4722, 16
    %v4871 = vrot.slane %v4869, 1
    %v4872 = vshll.u32 %v4722, 16
    %v4874 = vrot.slane %v4872, 2
    %v4875 = vor.u32 %v4871, %v4874
    %v4876 = vsel %vm4751, %v4866, %v4875
    %v4878 = vshrl.u32 %v4723, 16
    %v4880 = vrot.slane %v4878, 1
    %v4881 = vshll.u32 %v4723, 16
    %v4883 = vrot.slane %v4881, 2
    %v4884 = vor.u32 %v4880, %v4883
    %v4885 = vsel %vm4751, %v4875, %v4884
    %v4887 = vshrl.u32 %v4724, 16
    %v4889 = vrot.slane %v4887, 1
    %v4890 = vshll.u32 %v4724, 16
    %v4892 = vrot.slane %v4890, 2
    %v4893 = vor.u32 %v4889, %v4892
    %v4894 = vsel %vm4751, %v4884, %v4893
    %v4896 = vshrl.u32 %v4725, 16
    %v4898 = vrot.slane %v4896, 1
    %v4899 = vshll.u32 %v4725, 16
    %v4901 = vrot.slane %v4899, 2
    %v4902 = vor.u32 %v4898, %v4901
    %v4903 = vsel %vm4751, %v4893, %v4902
    %v4905 = vshrl.u32 %v4726, 16
    %v4907 = vrot.slane %v4905, 1
    %v4908 = vshll.u32 %v4726, 16
    %v4910 = vrot.slane %v4908, 2
    %v4911 = vor.u32 %v4907, %v4910
    %v4912 = vsel %vm4751, %v4902, %v4911
    %v4914 = vshrl.u32 %v4727, 16
    %v4916 = vrot.slane %v4914, 1
    %v4917 = vshll.u32 %v4727, 16
    %v4919 = vrot.slane %v4917, 2
    %v4920 = vor.u32 %v4916, %v4919
    %v4921 = vsel %vm4751, %v4911, %v4920
    %v4923 = vshrl.u32 %v4728, 16
    %v4925 = vrot.slane %v4923, 1
    %v4926 = vshll.u32 %v4728, 16
    %v4928 = vrot.slane %v4926, 2
    %v4929 = vor.u32 %v4925, %v4928
    %v4930 = vsel %vm4751, %v4920, %v4929
    %v4932 = vshrl.u32 %v4729, 16
    %v4934 = vrot.slane %v4932, 1
    %v4935 = vshll.u32 %v4729, 16
    %v4937 = vrot.slane %v4935, 2
    %v4938 = vor.u32 %v4934, %v4937
    %v4939 = vsel %vm4751, %v4929, %v4938
    %v4941 = vshrl.u32 %v4730, 16
    %v4943 = vrot.slane %v4941, 1
    %v4944 = vshll.u32 %v4730, 16
    %v4946 = vrot.slane %v4944, 2
    %v4947 = vor.u32 %v4943, %v4946
    %v4948 = vsel %vm4751, %v4938, %v4947
    %v4950 = vshrl.u32 %v4731, 16
    %v4952 = vrot.slane %v4950, 1
    %v4953 = vshll.u32 %v4731, 16
    %v4955 = vrot.slane %v4953, 2
    %v4956 = vor.u32 %v4952, %v4955
    %v4957 = vsel %vm4751, %v4947, %v4956
    %v4959 = vshrl.u32 %v4732, 16
    %v4961 = vrot.slane %v4959, 1
    %v4962 = vshll.u32 %v4732, 16
    %v4964 = vrot.slane %v4962, 2
    %v4965 = vor.u32 %v4961, %v4964
    %v4966 = vsel %vm4751, %v4956, %v4965
    %v4968 = vshrl.u32 %v4733, 16
    %v4970 = vrot.slane %v4968, 1
    %v4971 = vshll.u32 %v4733, 16
    %v4973 = vrot.slane %v4971, 2
    %v4974 = vor.u32 %v4970, %v4973
    %v4975 = vsel %vm4751, %v4965, %v4974
    %v4977 = vshrl.u32 %v4734, 16
    %v4979 = vrot.slane %v4977, 1
    %v4980 = vshll.u32 %v4734, 16
    %v4982 = vrot.slane %v4980, 2
    %v4983 = vor.u32 %v4979, %v4982
    %v4984 = vsel %vm4751, %v4974, %v4983
    %v4986 = vshrl.u32 %v4735, 16
    %v4988 = vrot.slane %v4986, 1
    %v4989 = vshll.u32 %v4735, 16
    %v4991 = vrot.slane %v4989, 2
    %v4992 = vor.u32 %v4988, %v4991
    %v4993 = vsel %vm4751, %v4983, %v4992
    %v4995 = vshrl.u32 %v4736, 16
    %v4997 = vrot.slane %v4995, 1
    %v4998 = vshll.u32 %v4736, 16
    %v5000 = vrot.slane %v4998, 2
    %v5001 = vor.u32 %v4997, %v5000
    %v5002 = vsel %vm4751, %v4992, %v5001
    %v5004 = vshrl.u32 %v4737, 16
    %v5006 = vrot.slane %v5004, 1
    %v5007 = vshll.u32 %v4737, 16
    %v5009 = vrot.slane %v5007, 2
    %v5010 = vor.u32 %v5006, %v5009
    %v5011 = vsel %vm4751, %v5001, %v5010
    %v5013 = vshrl.u32 %v4738, 16
    %v5015 = vrot.slane %v5013, 1
    %v5016 = vshll.u32 %v4738, 16
    %v5018 = vrot.slane %v5016, 2
    %v5019 = vor.u32 %v5015, %v5018
    %v5020 = vsel %vm4751, %v5010, %v5019
    %v5022 = vshrl.u32 %v4739, 16
    %v5024 = vrot.slane %v5022, 1
    %v5025 = vshll.u32 %v4739, 16
    %v5027 = vrot.slane %v5025, 2
    %v5028 = vor.u32 %v5024, %v5027
    %v5029 = vsel %vm4751, %v5019, %v5028
    %v5031 = vshrl.u32 %v4740, 16
    %v5033 = vrot.slane %v5031, 1
    %v5034 = vshll.u32 %v4740, 16
    %v5036 = vrot.slane %v5034, 2
    %v5037 = vor.u32 %v5033, %v5036
    %v5038 = vsel %vm4751, %v5028, %v5037
    %v5040 = vshrl.u32 %v4741, 16
    %v5042 = vrot.slane %v5040, 1
    %v5043 = vshll.u32 %v4741, 16
    %v5045 = vrot.slane %v5043, 2
    %v5046 = vor.u32 %v5042, %v5045
    %v5047 = vsel %vm4751, %v5037, %v5046
    %v5049 = vshrl.u32 %v4742, 16
    %v5051 = vrot.slane %v5049, 1
    %v5052 = vshll.u32 %v4742, 16
    %v5054 = vrot.slane %v5052, 2
    %v5055 = vor.u32 %v5051, %v5054
    %v5056 = vsel %vm4751, %v5046, %v5055
    %v5058 = vshrl.u32 %v4743, 16
    %v5060 = vrot.slane %v5058, 1
    %v5061 = vshll.u32 %v4743, 16
    %v5063 = vrot.slane %v5061, 2
    %v5064 = vor.u32 %v5060, %v5063
    %v5065 = vsel %vm4751, %v5055, %v5064
    %v5067 = vshrl.u32 %v4744, 16
    %v5069 = vrot.slane %v5067, 1
    %v5070 = vshll.u32 %v4744, 16
    %v5072 = vrot.slane %v5070, 2
    %v5073 = vor.u32 %v5069, %v5072
    %v5074 = vsel %vm4751, %v5064, %v5073
    %v5076 = vshrl.u32 %v4745, 16
    %v5078 = vrot.slane %v5076, 1
    %v5079 = vshll.u32 %v4745, 16
    %v5081 = vrot.slane %v5079, 2
    %v5082 = vor.u32 %v5078, %v5081
    %v5083 = vsel %vm4751, %v5073, %v5082
    %v5085 = vshrl.u32 %v4746, 16
    %v5087 = vrot.slane %v5085, 1
    %v5088 = vshll.u32 %v4746, 16
    %v5090 = vrot.slane %v5088, 2
    %v5091 = vor.u32 %v5087, %v5090
    %v5092 = vsel %vm4751, %v5082, %v5091
    %v5094 = vshrl.u32 %v4747, 16
    %v5096 = vrot.slane %v5094, 1
    %v5097 = vshll.u32 %v4747, 16
    %v5099 = vrot.slane %v5097, 2
    %v5100 = vor.u32 %v5096, %v5099
    %v5101 = vsel %vm4751, %v5091, %v5100
    %v5103 = vshrl.u32 %v4748, 16
    %v5105 = vrot.slane %v5103, 1
    %v5106 = vshll.u32 %v4748, 16
    %v5108 = vrot.slane %v5106, 2
    %v5109 = vor.u32 %v5105, %v5108
    %v5110 = vsel %vm4751, %v5100, %v5109
    %v5112 = vshrl.u32 %v4749, 16
    %v5114 = vrot.slane %v5112, 1
    %v5115 = vshll.u32 %v4749, 16
    %v5117 = vrot.slane %v5115, 2
    %v5118 = vor.u32 %v5114, %v5117
    %v5119 = vsel %vm4751, %v5109, %v5118
    %v5121 = vshrl.u32 %v4750, 16
    %v5123 = vrot.slane %v5121, 1
    %v5124 = vshll.u32 %v4750, 16
    %v5126 = vrot.slane %v5124, 2
    %v5127 = vor.u32 %v5123, %v5126
    %v5128 = vsel %vm4751, %v5118, %v5127
    %v5130 = vsel %vm313, %v4768, 0
    %v5133 = vsel %vm313, %v4777, 0
    %v5136 = vsel %vm313, %v4786, 0
    %v5139 = vsel %vm313, %v4795, 0
    %v5142 = vsel %vm313, %v4804, 0
    %v5145 = vsel %vm313, %v4813, 0
    %v5148 = vsel %vm313, %v4822, 0
    %v5151 = vsel %vm313, %v4831, 0
    %v5154 = vsel %vm313, %v4840, 0
    %v5157 = vsel %vm313, %v4849, 0
    %v5160 = vsel %vm313, %v4858, 0
    %v5163 = vsel %vm313, %v4867, 0
    %v5166 = vsel %vm313, %v4876, 0
    %v5169 = vsel %vm313, %v4885, 0
    %v5172 = vsel %vm313, %v4894, 0
    %v5175 = vsel %vm313, %v4903, 0
    %v5178 = vsel %vm313, %v4912, 0
    %v5181 = vsel %vm313, %v4921, 0
    %v5184 = vsel %vm313, %v4930, 0
    %v5187 = vsel %vm313, %v4939, 0
    %v5190 = vsel %vm313, %v4948, 0
    %v5193 = vsel %vm313, %v4957, 0
    %v5196 = vsel %vm313, %v4966, 0
    %v5199 = vsel %vm313, %v4975, 0
    %v5202 = vsel %vm313, %v4984, 0
    %v5205 = vsel %vm313, %v4993, 0
    %v5208 = vsel %vm313, %v5002, 0
    %v5211 = vsel %vm313, %v5011, 0
    %v5214 = vsel %vm313, %v5020, 0
    %v5217 = vsel %vm313, %v5029, 0
    %v5220 = vsel %vm313, %v5038, 0
    %v5223 = vsel %vm313, %v5047, 0
    %v5226 = vsel %vm313, %v5056, 0
    %v5229 = vsel %vm313, %v5065, 0
    %v5232 = vsel %vm313, %v5074, 0
    %v5235 = vsel %vm313, %v5083, 0
    %v5238 = vsel %vm313, %v5092, 0
    %v5241 = vsel %vm313, %v5101, 0
    %v5244 = vsel %vm313, %v5110, 0
    %v5247 = vsel %vm313, %v5119, 0
    %v5250 = vsel %vm313, %v5128, 0
    %v5253 = vsel %vm437, %v4542, 0
    %5255 = vmatprep.subr.bf16.mxu0 0
    %5256 = vmatpush1.bf16.msra.mxu0 %v5253
    %5257 = vmatprep.subr.bf16.mxu0 0
    %5258 = vmatpush1.bf16.msra.mxu0 0
    %5259 = vmatprep.subr.bf16.mxu0 0
    %5260 = vmatpush1.bf16.msra.mxu0 0
    %5261 = vmatprep.subr.bf16.mxu0 0
    %5262 = vmatpush1.bf16.msra.mxu0 0
    %5263 = vmatprep.subr.bf16.mxu0 0
    %5264 = vmatpush1.bf16.msra.mxu0 0
    %5265 = vmatprep.subr.bf16.mxu0 0
    %5266 = vmatpush1.bf16.msra.mxu0 0
    %5267 = vmatprep.subr.bf16.mxu0 0
    %5268 = vmatpush1.bf16.msra.mxu0 0
    %5269 = vmatprep.subr.bf16.mxu0 0
    %5270 = vmatpush1.bf16.msra.mxu0 0
    %5271 = vmatprep.subr.bf16.mxu0 0
    %5272 = vmatpush1.bf16.msra.mxu0 0
    %5273 = vmatprep.subr.bf16.mxu0 0
    %5274 = vmatpush1.bf16.msra.mxu0 0
    %5275 = vmatprep.subr.bf16.mxu0 0
    %5276 = vmatpush1.bf16.msra.mxu0 0
    %5277 = vmatprep.subr.bf16.mxu0 0
    %5278 = vmatpush1.bf16.msra.mxu0 0
    %5279 = vmatprep.subr.bf16.mxu0 0
    %5280 = vmatpush1.bf16.msra.mxu0 0
    %5281 = vmatprep.subr.bf16.mxu0 0
    %5282 = vmatpush1.bf16.msra.mxu0 0
    %5283 = vmatprep.subr.bf16.mxu0 0
    %5284 = vmatpush1.bf16.msra.mxu0 0
    %5285 = vmatprep.subr.bf16.mxu0 0
    %5286 = vmatpush1.bf16.msra.mxu0 0
    %5287 = vmatprep.mubr.bf16.mxu0 0
    %5288 = vmatmul.mubr.bf16.gmra.mrb[0].mxu0 %v5130
    %v5289 = vpop.f32.mrb[0].mxu0
    %v5290 = vadd.f32 0.0, %v5289
    %v5291 = vpop.f32.mrb[0].mxu0
    %v5292 = vpop.f32.mrb[0].mxu0
    %v5293 = vadd.f32 0.0, %v5292
    %v5294 = vpop.f32.mrb[0].mxu0
    %5295 = vmatprep.mubr.bf16.mxu0 0
    %5296 = vmatmul.mubr.bf16.gmra.mrb[0].mxu0 %v5133
    %v5297 = vpop.f32.mrb[0].mxu0
    %v5298 = vadd.f32 0.0, %v5297
    %v5299 = vpop.f32.mrb[0].mxu0
    %v5300 = vpop.f32.mrb[0].mxu0
    %v5301 = vadd.f32 0.0, %v5300
    %v5302 = vpop.f32.mrb[0].mxu0
    %5303 = vmatprep.mubr.bf16.mxu0 0
    %5304 = vmatmul.mubr.bf16.gmra.mrb[0].mxu0 %v5136
    %v5305 = vpop.f32.mrb[0].mxu0
    %v5306 = vadd.f32 0.0, %v5305
    %v5307 = vpop.f32.mrb[0].mxu0
    %v5308 = vpop.f32.mrb[0].mxu0
    %v5309 = vadd.f32 0.0, %v5308
    %v5310 = vpop.f32.mrb[0].mxu0
    %5311 = vmatprep.mubr.bf16.mxu0 0
    %5312 = vmatmul.mubr.bf16.gmra.mrb[0].mxu0 %v5139
    %v5313 = vpop.f32.mrb[0].mxu0
    %v5314 = vadd.f32 0.0, %v5313
    %v5315 = vpop.f32.mrb[0].mxu0
    %v5316 = vpop.f32.mrb[0].mxu0
    %v5317 = vadd.f32 0.0, %v5316
    %v5318 = vpop.f32.mrb[0].mxu0
    %5319 = vmatprep.mubr.bf16.mxu0 0
    %5320 = vmatmul.mubr.bf16.gmra.mrb[0].mxu0 %v5142
    %v5321 = vpop.f32.mrb[0].mxu0
    %v5322 = vadd.f32 0.0, %v5321
    %v5323 = vpop.f32.mrb[0].mxu0
    %v5324 = vpop.f32.mrb[0].mxu0
    %v5325 = vadd.f32 0.0, %v5324
    %v5326 = vpop.f32.mrb[0].mxu0
    %5327 = vmatprep.mubr.bf16.mxu0 0
    %5328 = vmatmul.mubr.bf16.gmra.mrb[0].mxu0 %v5145
    %v5329 = vpop.f32.mrb[0].mxu0
    %v5330 = vadd.f32 0.0, %v5329
    %v5331 = vpop.f32.mrb[0].mxu0
    %v5332 = vpop.f32.mrb[0].mxu0
    %v5333 = vadd.f32 0.0, %v5332
    %v5334 = vpop.f32.mrb[0].mxu0
    %5335 = vmatprep.mubr.bf16.mxu0 0
    %5336 = vmatmul.mubr.bf16.gmra.mrb[0].mxu0 %v5148
    %v5337 = vpop.f32.mrb[0].mxu0
    %v5338 = vadd.f32 0.0, %v5337
    %v5339 = vpop.f32.mrb[0].mxu0
    %v5340 = vpop.f32.mrb[0].mxu0
    %v5341 = vadd.f32 0.0, %v5340
    %v5342 = vpop.f32.mrb[0].mxu0
    %5343 = vmatprep.mubr.bf16.mxu0 0
    %5344 = vmatmul.mubr.bf16.gmra.mrb[0].mxu0 %v5151
    %v5345 = vpop.f32.mrb[0].mxu0
    %v5346 = vadd.f32 0.0, %v5345
    %v5347 = vpop.f32.mrb[0].mxu0
    %v5348 = vpop.f32.mrb[0].mxu0
    %v5349 = vadd.f32 0.0, %v5348
    %v5350 = vpop.f32.mrb[0].mxu0
    %5351 = vmatprep.mubr.bf16.mxu0 0
    %5352 = vmatmul.mubr.bf16.gmra.mrb[0].mxu0 %v5154
    %v5353 = vpop.f32.mrb[0].mxu0
    %v5354 = vadd.f32 0.0, %v5353
    %v5355 = vpop.f32.mrb[0].mxu0
    %v5356 = vpop.f32.mrb[0].mxu0
    %v5357 = vadd.f32 0.0, %v5356
    %v5358 = vpop.f32.mrb[0].mxu0
    %5359 = vmatprep.mubr.bf16.mxu0 0
    %5360 = vmatmul.mubr.bf16.gmra.mrb[0].mxu0 %v5157
    %v5361 = vpop.f32.mrb[0].mxu0
    %v5362 = vadd.f32 0.0, %v5361
    %v5363 = vpop.f32.mrb[0].mxu0
    %v5364 = vpop.f32.mrb[0].mxu0
    %v5365 = vadd.f32 0.0, %v5364
    %v5366 = vpop.f32.mrb[0].mxu0
    %5367 = vmatprep.mubr.bf16.mxu0 0
    %5368 = vmatmul.mubr.bf16.gmra.mrb[0].mxu0 %v5160
    %v5369 = vpop.f32.mrb[0].mxu0
    %v5370 = vadd.f32 0.0, %v5369
    %v5371 = vpop.f32.mrb[0].mxu0
    %v5372 = vpop.f32.mrb[0].mxu0
    %v5373 = vadd.f32 0.0, %v5372
    %v5374 = vpop.f32.mrb[0].mxu0
    %5375 = vmatprep.mubr.bf16.mxu0 0
    %5376 = vmatmul.mubr.bf16.gmra.mrb[0].mxu0 %v5163
    %v5377 = vpop.f32.mrb[0].mxu0
    %v5378 = vadd.f32 0.0, %v5377
    %v5379 = vpop.f32.mrb[0].mxu0
    %v5380 = vpop.f32.mrb[0].mxu0
    %v5381 = vadd.f32 0.0, %v5380
    %v5382 = vpop.f32.mrb[0].mxu0
    %5383 = vmatprep.mubr.bf16.mxu0 0
    %5384 = vmatmul.mubr.bf16.gmra.mrb[0].mxu0 %v5166
    %v5385 = vpop.f32.mrb[0].mxu0
    %v5386 = vadd.f32 0.0, %v5385
    %v5387 = vpop.f32.mrb[0].mxu0
    %v5388 = vpop.f32.mrb[0].mxu0
    %v5389 = vadd.f32 0.0, %v5388
    %v5390 = vpop.f32.mrb[0].mxu0
    %5391 = vmatprep.mubr.bf16.mxu0 0
    %5392 = vmatmul.mubr.bf16.gmra.mrb[0].mxu0 %v5169
    %v5393 = vpop.f32.mrb[0].mxu0
    %v5394 = vadd.f32 0.0, %v5393
    %v5395 = vpop.f32.mrb[0].mxu0
    %v5396 = vpop.f32.mrb[0].mxu0
    %v5397 = vadd.f32 0.0, %v5396
    %v5398 = vpop.f32.mrb[0].mxu0
    %5399 = vmatprep.mubr.bf16.mxu0 0
    %5400 = vmatmul.mubr.bf16.gmra.mrb[0].mxu0 %v5172
    %v5401 = vpop.f32.mrb[0].mxu0
    %v5402 = vadd.f32 0.0, %v5401
    %v5403 = vpop.f32.mrb[0].mxu0
    %v5404 = vpop.f32.mrb[0].mxu0
    %v5405 = vadd.f32 0.0, %v5404
    %v5406 = vpop.f32.mrb[0].mxu0
    %5407 = vmatprep.mubr.bf16.mxu0 0
    %5408 = vmatmul.mubr.bf16.gmra.mrb[0].mxu0 %v5175
    %v5409 = vpop.f32.mrb[0].mxu0
    %v5410 = vadd.f32 0.0, %v5409
    %v5411 = vpop.f32.mrb[0].mxu0
    %v5412 = vpop.f32.mrb[0].mxu0
    %v5413 = vadd.f32 0.0, %v5412
    %v5414 = vpop.f32.mrb[0].mxu0
    %5415 = vmatprep.mubr.bf16.mxu0 0
    %5416 = vmatmul.mubr.bf16.gmra.mrb[0].mxu0 %v5178
    %v5417 = vpop.f32.mrb[0].mxu0
    %v5418 = vadd.f32 0.0, %v5417
    %v5419 = vpop.f32.mrb[0].mxu0
    %v5420 = vpop.f32.mrb[0].mxu0
    %v5421 = vadd.f32 0.0, %v5420
    %v5422 = vpop.f32.mrb[0].mxu0
    %5423 = vmatprep.mubr.bf16.mxu0 0
    %5424 = vmatmul.mubr.bf16.gmra.mrb[0].mxu0 %v5181
    %v5425 = vpop.f32.mrb[0].mxu0
    %v5426 = vadd.f32 0.0, %v5425
    %v5427 = vpop.f32.mrb[0].mxu0
    %v5428 = vpop.f32.mrb[0].mxu0
    %v5429 = vadd.f32 0.0, %v5428
    %v5430 = vpop.f32.mrb[0].mxu0
    %5431 = vmatprep.mubr.bf16.mxu0 0
    %5432 = vmatmul.mubr.bf16.gmra.mrb[0].mxu0 %v5184
    %v5433 = vpop.f32.mrb[0].mxu0
    %v5434 = vadd.f32 0.0, %v5433
    %v5435 = vpop.f32.mrb[0].mxu0
    %v5436 = vpop.f32.mrb[0].mxu0
    %v5437 = vadd.f32 0.0, %v5436
    %v5438 = vpop.f32.mrb[0].mxu0
    %5439 = vmatprep.mubr.bf16.mxu0 0
    %5440 = vmatmul.mubr.bf16.gmra.mrb[0].mxu0 %v5187
    %v5441 = vpop.f32.mrb[0].mxu0
    %v5442 = vadd.f32 0.0, %v5441
    %v5443 = vpop.f32.mrb[0].mxu0
    %v5444 = vpop.f32.mrb[0].mxu0
    %v5445 = vadd.f32 0.0, %v5444
    %v5446 = vpop.f32.mrb[0].mxu0
    %5447 = vmatprep.mubr.bf16.mxu0 0
    %5448 = vmatmul.mubr.bf16.gmra.mrb[0].mxu0 %v5190
    %v5449 = vpop.f32.mrb[0].mxu0
    %v5450 = vadd.f32 0.0, %v5449
    %v5451 = vpop.f32.mrb[0].mxu0
    %v5452 = vpop.f32.mrb[0].mxu0
    %v5453 = vadd.f32 0.0, %v5452
    %v5454 = vpop.f32.mrb[0].mxu0
    %5455 = vmatprep.mubr.bf16.mxu0 0
    %5456 = vmatmul.mubr.bf16.gmra.mrb[0].mxu0 %v5193
    %v5457 = vpop.f32.mrb[0].mxu0
    %v5458 = vadd.f32 0.0, %v5457
    %v5459 = vpop.f32.mrb[0].mxu0
    %v5460 = vpop.f32.mrb[0].mxu0
    %v5461 = vadd.f32 0.0, %v5460
    %v5462 = vpop.f32.mrb[0].mxu0
    %5463 = vmatprep.mubr.bf16.mxu0 0
    %5464 = vmatmul.mubr.bf16.gmra.mrb[0].mxu0 %v5196
    %v5465 = vpop.f32.mrb[0].mxu0
    %v5466 = vadd.f32 0.0, %v5465
    %v5467 = vpop.f32.mrb[0].mxu0
    %v5468 = vpop.f32.mrb[0].mxu0
    %v5469 = vadd.f32 0.0, %v5468
    %v5470 = vpop.f32.mrb[0].mxu0
    %5471 = vmatprep.mubr.bf16.mxu0 0
    %5472 = vmatmul.mubr.bf16.gmra.mrb[0].mxu0 %v5199
    %v5473 = vpop.f32.mrb[0].mxu0
    %v5474 = vadd.f32 0.0, %v5473
    %v5475 = vpop.f32.mrb[0].mxu0
    %v5476 = vpop.f32.mrb[0].mxu0
    %v5477 = vadd.f32 0.0, %v5476
    %v5478 = vpop.f32.mrb[0].mxu0
    %5479 = vmatprep.mubr.bf16.mxu0 0
    %5480 = vmatmul.mubr.bf16.gmra.mrb[0].mxu0 %v5202
    %v5481 = vpop.f32.mrb[0].mxu0
    %v5482 = vadd.f32 0.0, %v5481
    %v5483 = vpop.f32.mrb[0].mxu0
    %v5484 = vpop.f32.mrb[0].mxu0
    %v5485 = vadd.f32 0.0, %v5484
    %v5486 = vpop.f32.mrb[0].mxu0
    %5487 = vmatprep.mubr.bf16.mxu0 0
    %5488 = vmatmul.mubr.bf16.gmra.mrb[0].mxu0 %v5205
    %v5489 = vpop.f32.mrb[0].mxu0
    %v5490 = vadd.f32 0.0, %v5489
    %v5491 = vpop.f32.mrb[0].mxu0
    %v5492 = vpop.f32.mrb[0].mxu0
    %v5493 = vadd.f32 0.0, %v5492
    %v5494 = vpop.f32.mrb[0].mxu0
    %5495 = vmatprep.mubr.bf16.mxu0 0
    %5496 = vmatmul.mubr.bf16.gmra.mrb[0].mxu0 %v5208
    %v5497 = vpop.f32.mrb[0].mxu0
    %v5498 = vadd.f32 0.0, %v5497
    %v5499 = vpop.f32.mrb[0].mxu0
    %v5500 = vpop.f32.mrb[0].mxu0
    %v5501 = vadd.f32 0.0, %v5500
    %v5502 = vpop.f32.mrb[0].mxu0
    %5503 = vmatprep.mubr.bf16.mxu0 0
    %5504 = vmatmul.mubr.bf16.gmra.mrb[0].mxu0 %v5211
    %v5505 = vpop.f32.mrb[0].mxu0
    %v5506 = vadd.f32 0.0, %v5505
    %v5507 = vpop.f32.mrb[0].mxu0
    %v5508 = vpop.f32.mrb[0].mxu0
    %v5509 = vadd.f32 0.0, %v5508
    %v5510 = vpop.f32.mrb[0].mxu0
    %5511 = vmatprep.mubr.bf16.mxu0 0
    %5512 = vmatmul.mubr.bf16.gmra.mrb[0].mxu0 %v5214
    %v5513 = vpop.f32.mrb[0].mxu0
    %v5514 = vadd.f32 0.0, %v5513
    %v5515 = vpop.f32.mrb[0].mxu0
    %v5516 = vpop.f32.mrb[0].mxu0
    %v5517 = vadd.f32 0.0, %v5516
    %v5518 = vpop.f32.mrb[0].mxu0
    %5519 = vmatprep.mubr.bf16.mxu0 0
    %5520 = vmatmul.mubr.bf16.gmra.mrb[0].mxu0 %v5217
    %v5521 = vpop.f32.mrb[0].mxu0
    %v5522 = vadd.f32 0.0, %v5521
    %v5523 = vpop.f32.mrb[0].mxu0
    %v5524 = vpop.f32.mrb[0].mxu0
    %v5525 = vadd.f32 0.0, %v5524
    %v5526 = vpop.f32.mrb[0].mxu0
    %5527 = vmatprep.mubr.bf16.mxu0 0
    %5528 = vmatmul.mubr.bf16.gmra.mrb[0].mxu0 %v5220
    %v5529 = vpop.f32.mrb[0].mxu0
    %v5530 = vadd.f32 0.0, %v5529
    %v5531 = vpop.f32.mrb[0].mxu0
    %v5532 = vpop.f32.mrb[0].mxu0
    %v5533 = vadd.f32 0.0, %v5532
    %v5534 = vpop.f32.mrb[0].mxu0
    %5535 = vmatprep.mubr.bf16.mxu0 0
    %5536 = vmatmul.mubr.bf16.gmra.mrb[0].mxu0 %v5223
    %v5537 = vpop.f32.mrb[0].mxu0
    %v5538 = vadd.f32 0.0, %v5537
    %v5539 = vpop.f32.mrb[0].mxu0
    %v5540 = vpop.f32.mrb[0].mxu0
    %v5541 = vadd.f32 0.0, %v5540
    %v5542 = vpop.f32.mrb[0].mxu0
    %5543 = vmatprep.mubr.bf16.mxu0 0
    %5544 = vmatmul.mubr.bf16.gmra.mrb[0].mxu0 %v5226
    %v5545 = vpop.f32.mrb[0].mxu0
    %v5546 = vadd.f32 0.0, %v5545
    %v5547 = vpop.f32.mrb[0].mxu0
    %v5548 = vpop.f32.mrb[0].mxu0
    %v5549 = vadd.f32 0.0, %v5548
    %v5550 = vpop.f32.mrb[0].mxu0
    %5551 = vmatprep.mubr.bf16.mxu0 0
    %5552 = vmatmul.mubr.bf16.gmra.mrb[0].mxu0 %v5229
    %v5553 = vpop.f32.mrb[0].mxu0
    %v5554 = vadd.f32 0.0, %v5553
    %v5555 = vpop.f32.mrb[0].mxu0
    %v5556 = vpop.f32.mrb[0].mxu0
    %v5557 = vadd.f32 0.0, %v5556
    %v5558 = vpop.f32.mrb[0].mxu0
    %5559 = vmatprep.mubr.bf16.mxu0 0
    %5560 = vmatmul.mubr.bf16.gmra.mrb[0].mxu0 %v5232
    %v5561 = vpop.f32.mrb[0].mxu0
    %v5562 = vadd.f32 0.0, %v5561
    %v5563 = vpop.f32.mrb[0].mxu0
    %v5564 = vpop.f32.mrb[0].mxu0
    %v5565 = vadd.f32 0.0, %v5564
    %v5566 = vpop.f32.mrb[0].mxu0
    %5567 = vmatprep.mubr.bf16.mxu0 0
    %5568 = vmatmul.mubr.bf16.gmra.mrb[0].mxu0 %v5235
    %v5569 = vpop.f32.mrb[0].mxu0
    %v5570 = vadd.f32 0.0, %v5569
    %v5571 = vpop.f32.mrb[0].mxu0
    %v5572 = vpop.f32.mrb[0].mxu0
    %v5573 = vadd.f32 0.0, %v5572
    %v5574 = vpop.f32.mrb[0].mxu0
    %5575 = vmatprep.mubr.bf16.mxu0 0
    %5576 = vmatmul.mubr.bf16.gmra.mrb[0].mxu0 %v5238
    %v5577 = vpop.f32.mrb[0].mxu0
    %v5578 = vadd.f32 0.0, %v5577
    %v5579 = vpop.f32.mrb[0].mxu0
    %v5580 = vpop.f32.mrb[0].mxu0
    %v5581 = vadd.f32 0.0, %v5580
    %v5582 = vpop.f32.mrb[0].mxu0
    %5583 = vmatprep.mubr.bf16.mxu0 0
    %5584 = vmatmul.mubr.bf16.gmra.mrb[0].mxu0 %v5241
    %v5585 = vpop.f32.mrb[0].mxu0
    %v5586 = vadd.f32 0.0, %v5585
    %v5587 = vpop.f32.mrb[0].mxu0
    %v5588 = vpop.f32.mrb[0].mxu0
    %v5589 = vadd.f32 0.0, %v5588
    %v5590 = vpop.f32.mrb[0].mxu0
    %5591 = vmatprep.mubr.bf16.mxu0 0
    %5592 = vmatmul.mubr.bf16.gmra.mrb[0].mxu0 %v5244
    %v5593 = vpop.f32.mrb[0].mxu0
    %v5594 = vadd.f32 0.0, %v5593
    %v5595 = vpop.f32.mrb[0].mxu0
    %v5596 = vpop.f32.mrb[0].mxu0
    %v5597 = vadd.f32 0.0, %v5596
    %v5598 = vpop.f32.mrb[0].mxu0
    %5599 = vmatprep.mubr.bf16.mxu0 0
    %5600 = vmatmul.mubr.bf16.gmra.mrb[0].mxu0 %v5247
    %v5601 = vpop.f32.mrb[0].mxu0
    %v5602 = vadd.f32 0.0, %v5601
    %v5603 = vpop.f32.mrb[0].mxu0
    %v5604 = vpop.f32.mrb[0].mxu0
    %v5605 = vadd.f32 0.0, %v5604
    %v5606 = vpop.f32.mrb[0].mxu0
    %5607 = vmatprep.mubr.bf16.mxu0 0
    %5608 = vmatmul.mubr.bf16.gmra.mrb[0].mxu0 %v5250
    %v5609 = vpop.f32.mrb[0].mxu0
    %v5610 = vadd.f32 0.0, %v5609
    %v5611 = vpop.f32.mrb[0].mxu0
    %v5612 = vpop.f32.mrb[0].mxu0
    %v5613 = vadd.f32 0.0, %v5612
    %v5614 = vpop.f32.mrb[0].mxu0
    %5615 = vdwg.mxu0
    %v5616 = vld [vmem:[#allocation2] sm:$0xff]
    %v5617 = vld [vmem:[#allocation2 + $0x8] sm:$0xff]
    %v5618 = vld [vmem:[#allocation2 + $0x10] sm:$0xff]
    %v5619 = vld [vmem:[#allocation2 + $0x18] sm:$0xff]
    %v5620 = vld [vmem:[#allocation2 + $0x20] sm:$0xff]
    %v5621 = vld [vmem:[#allocation2 + $0x28] sm:$0xff]
    %v5622 = vld [vmem:[#allocation2 + $0x30] sm:$0xff]
    %v5623 = vld [vmem:[#allocation2 + $0x38] sm:$0xff]
    %v5624 = vld [vmem:[#allocation2 + $0x40] sm:$0xff]
    %v5625 = vld [vmem:[#allocation2 + $0x48] sm:$0xff]
    %v5626 = vld [vmem:[#allocation2 + $0x50] sm:$0xff]
    %v5627 = vld [vmem:[#allocation2 + $0x58] sm:$0xff]
    %v5628 = vld [vmem:[#allocation2 + $0x60] sm:$0xff]
    %v5629 = vld [vmem:[#allocation2 + $0x68] sm:$0xff]
    %v5630 = vld [vmem:[#allocation2 + $0x70] sm:$0xff]
    %v5631 = vld [vmem:[#allocation2 + $0x78] sm:$0xff]
    %v5632 = vld [vmem:[#allocation2 + $0x80] sm:$0xff]
    %v5633 = vld [vmem:[#allocation2 + $0x88] sm:$0xff]
    %v5634 = vld [vmem:[#allocation2 + $0x90] sm:$0xff]
    %v5635 = vld [vmem:[#allocation2 + $0x98] sm:$0xff]
    %v5636 = vld [vmem:[#allocation2 + $0xa0] sm:$0xff]
    %v5637 = vld [vmem:[#allocation2 + $0xa8] sm:$0xff]
    %v5638 = vld [vmem:[#allocation2 + $0xb0] sm:$0xff]
    %v5639 = vld [vmem:[#allocation2 + $0xb8] sm:$0xff]
    %v5640 = vld [vmem:[#allocation2 + $0xc0] sm:$0xff]
    %v5641 = vld [vmem:[#allocation2 + $0xc8] sm:$0xff]
    %v5642 = vld [vmem:[#allocation2 + $0xd0] sm:$0xff]
    %v5643 = vld [vmem:[#allocation2 + $0xd8] sm:$0xff]
    %v5644 = vld [vmem:[#allocation2 + $0xe0] sm:$0xff]
    %v5645 = vld [vmem:[#allocation2 + $0xe8] sm:$0xff]
    %v5646 = vld [vmem:[#allocation2 + $0xf0] sm:$0xff]
    %v5647 = vld [vmem:[#allocation2 + $0xf8] sm:$0xff]
    %v5648 = vld [vmem:[#allocation2 + $0x100] sm:$0xff]
    %v5649 = vld [vmem:[#allocation2 + $0x108] sm:$0xff]
    %v5650 = vld [vmem:[#allocation2 + $0x110] sm:$0xff]
    %v5651 = vld [vmem:[#allocation2 + $0x118] sm:$0xff]
    %v5652 = vld [vmem:[#allocation2 + $0x120] sm:$0xff]
    %v5653 = vld [vmem:[#allocation2 + $0x128] sm:$0xff]
    %v5654 = vld [vmem:[#allocation2 + $0x130] sm:$0xff]
    %v5655 = vld [vmem:[#allocation2 + $0x138] sm:$0xff]
    %v5656 = vld [vmem:[#allocation2 + $0x140] sm:$0xff]
    %v5657 = vld [vmem:[#allocation2 + $0x148] sm:$0xff]
    %v5658 = vld [vmem:[#allocation2 + $0x150] sm:$0xff]
    %v5659 = vld [vmem:[#allocation2 + $0x158] sm:$0xff]
    %v5660 = vld [vmem:[#allocation2 + $0x160] sm:$0xff]
    %v5661 = vld [vmem:[#allocation2 + $0x168] sm:$0xff]
    %v5662 = vld [vmem:[#allocation2 + $0x170] sm:$0xff]
    %v5663 = vld [vmem:[#allocation2 + $0x178] sm:$0xff]
    %v5664 = vld [vmem:[#allocation2 + $0x180] sm:$0xff]
    %v5665 = vld [vmem:[#allocation2 + $0x188] sm:$0xff]
    %v5666 = vld [vmem:[#allocation2 + $0x190] sm:$0xff]
    %v5667 = vld [vmem:[#allocation2 + $0x198] sm:$0xff]
    %v5668 = vld [vmem:[#allocation2 + $0x1a0] sm:$0xff]
    %v5669 = vld [vmem:[#allocation2 + $0x1a8] sm:$0xff]
    %v5670 = vld [vmem:[#allocation2 + $0x1b0] sm:$0xff]
    %v5671 = vld [vmem:[#allocation2 + $0x1b8] sm:$0xff]
    %v5672 = vld [vmem:[#allocation2 + $0x1c0] sm:$0xff]
    %v5673 = vld [vmem:[#allocation2 + $0x1c8] sm:$0xff]
    %v5674 = vld [vmem:[#allocation2 + $0x1d0] sm:$0xff]
    %v5675 = vld [vmem:[#allocation2 + $0x1d8] sm:$0xff]
    %v5676 = vld [vmem:[#allocation2 + $0x1e0] sm:$0xff]
    %v5677 = vld [vmem:[#allocation2 + $0x1e8] sm:$0xff]
    %v5678 = vld [vmem:[#allocation2 + $0x1f0] sm:$0xff]
    %v5679 = vld [vmem:[#allocation2 + $0x1f8] sm:$0xff]
    %v5680 = vld [vmem:[#allocation2 + $0x200] sm:$0xff]
    %v5681 = vld [vmem:[#allocation2 + $0x208] sm:$0xff]
    %v5682 = vld [vmem:[#allocation2 + $0x210] sm:$0xff]
    %v5683 = vld [vmem:[#allocation2 + $0x218] sm:$0xff]
    %v5684 = vld [vmem:[#allocation2 + $0x220] sm:$0xff]
    %v5685 = vld [vmem:[#allocation2 + $0x228] sm:$0xff]
    %v5686 = vld [vmem:[#allocation2 + $0x230] sm:$0xff]
    %v5687 = vld [vmem:[#allocation2 + $0x238] sm:$0xff]
    %v5688 = vld [vmem:[#allocation2 + $0x240] sm:$0xff]
    %v5689 = vld [vmem:[#allocation2 + $0x248] sm:$0xff]
    %v5690 = vld [vmem:[#allocation2 + $0x250] sm:$0xff]
    %v5691 = vld [vmem:[#allocation2 + $0x258] sm:$0xff]
    %v5692 = vld [vmem:[#allocation2 + $0x260] sm:$0xff]
    %v5693 = vld [vmem:[#allocation2 + $0x268] sm:$0xff]
    %v5694 = vld [vmem:[#allocation2 + $0x270] sm:$0xff]
    %v5695 = vld [vmem:[#allocation2 + $0x278] sm:$0xff]
    %v5696 = vld [vmem:[#allocation2 + $0x280] sm:$0xff]
    %v5697 = vld [vmem:[#allocation2 + $0x288] sm:$0xff]
    %v5698 = vadd.f32 %v5616, %v5290
    %v5699 = vadd.f32 %v5617, %v5293
    %v5700 = vadd.f32 %v5618, %v5298
    %v5701 = vadd.f32 %v5619, %v5301
    %v5702 = vadd.f32 %v5620, %v5306
    %v5703 = vadd.f32 %v5621, %v5309
    %v5704 = vadd.f32 %v5622, %v5314
    %v5705 = vadd.f32 %v5623, %v5317
    %v5706 = vadd.f32 %v5624, %v5322
    %v5707 = vadd.f32 %v5625, %v5325
    %v5708 = vadd.f32 %v5626, %v5330
    %v5709 = vadd.f32 %v5627, %v5333
    %v5710 = vadd.f32 %v5628, %v5338
    %v5711 = vadd.f32 %v5629, %v5341
    %v5712 = vadd.f32 %v5630, %v5346
    %v5713 = vadd.f32 %v5631, %v5349
    %v5714 = vadd.f32 %v5632, %v5354
    %v5715 = vadd.f32 %v5633, %v5357
    %v5716 = vadd.f32 %v5634, %v5362
    %v5717 = vadd.f32 %v5635, %v5365
    %v5718 = vadd.f32 %v5636, %v5370
    %v5719 = vadd.f32 %v5637, %v5373
    %v5720 = vadd.f32 %v5638, %v5378
    %v5721 = vadd.f32 %v5639, %v5381
    %v5722 = vadd.f32 %v5640, %v5386
    %v5723 = vadd.f32 %v5641, %v5389
    %v5724 = vadd.f32 %v5642, %v5394
    %v5725 = vadd.f32 %v5643, %v5397
    %v5726 = vadd.f32 %v5644, %v5402
    %v5727 = vadd.f32 %v5645, %v5405
    %v5728 = vadd.f32 %v5646, %v5410
    %v5729 = vadd.f32 %v5647, %v5413
    %v5730 = vadd.f32 %v5648, %v5418
    %v5731 = vadd.f32 %v5649, %v5421
    %v5732 = vadd.f32 %v5650, %v5426
    %v5733 = vadd.f32 %v5651, %v5429
    %v5734 = vadd.f32 %v5652, %v5434
    %v5735 = vadd.f32 %v5653, %v5437
    %v5736 = vadd.f32 %v5654, %v5442
    %v5737 = vadd.f32 %v5655, %v5445
    %v5738 = vadd.f32 %v5656, %v5450
    %v5739 = vadd.f32 %v5657, %v5453
    %v5740 = vadd.f32 %v5658, %v5458
    %v5741 = vadd.f32 %v5659, %v5461
    %v5742 = vadd.f32 %v5660, %v5466
    %v5743 = vadd.f32 %v5661, %v5469
    %v5744 = vadd.f32 %v5662, %v5474
    %v5745 = vadd.f32 %v5663, %v5477
    %v5746 = vadd.f32 %v5664, %v5482
    %v5747 = vadd.f32 %v5665, %v5485
    %v5748 = vadd.f32 %v5666, %v5490
    %v5749 = vadd.f32 %v5667, %v5493
    %v5750 = vadd.f32 %v5668, %v5498
    %v5751 = vadd.f32 %v5669, %v5501
    %v5752 = vadd.f32 %v5670, %v5506
    %v5753 = vadd.f32 %v5671, %v5509
    %v5754 = vadd.f32 %v5672, %v5514
    %v5755 = vadd.f32 %v5673, %v5517
    %v5756 = vadd.f32 %v5674, %v5522
    %v5757 = vadd.f32 %v5675, %v5525
    %v5758 = vadd.f32 %v5676, %v5530
    %v5759 = vadd.f32 %v5677, %v5533
    %v5760 = vadd.f32 %v5678, %v5538
    %v5761 = vadd.f32 %v5679, %v5541
    %v5762 = vadd.f32 %v5680, %v5546
    %v5763 = vadd.f32 %v5681, %v5549
    %v5764 = vadd.f32 %v5682, %v5554
    %v5765 = vadd.f32 %v5683, %v5557
    %v5766 = vadd.f32 %v5684, %v5562
    %v5767 = vadd.f32 %v5685, %v5565
    %v5768 = vadd.f32 %v5686, %v5570
    %v5769 = vadd.f32 %v5687, %v5573
    %v5770 = vadd.f32 %v5688, %v5578
    %v5771 = vadd.f32 %v5689, %v5581
    %v5772 = vadd.f32 %v5690, %v5586
    %v5773 = vadd.f32 %v5691, %v5589
    %v5774 = vadd.f32 %v5692, %v5594
    %v5775 = vadd.f32 %v5693, %v5597
    %v5776 = vadd.f32 %v5694, %v5602
    %v5777 = vadd.f32 %v5695, %v5605
    %v5778 = vadd.f32 %v5696, %v5610
    %v5779 = vadd.f32 %v5697, %v5613
    %5780 = vst [vmem:[#allocation2] sm:$0xff] %v5698
    %5781 = vst [vmem:[#allocation2 + $0x8] sm:$0xff] %v5699
    %5782 = vst [vmem:[#allocation2 + $0x10] sm:$0xff] %v5700
    %5783 = vst [vmem:[#allocation2 + $0x18] sm:$0xff] %v5701
    %5784 = vst [vmem:[#allocation2 + $0x20] sm:$0xff] %v5702
    %5785 = vst [vmem:[#allocation2 + $0x28] sm:$0xff] %v5703
    %5786 = vst [vmem:[#allocation2 + $0x30] sm:$0xff] %v5704
    %5787 = vst [vmem:[#allocation2 + $0x38] sm:$0xff] %v5705
    %5788 = vst [vmem:[#allocation2 + $0x40] sm:$0xff] %v5706
    %5789 = vst [vmem:[#allocation2 + $0x48] sm:$0xff] %v5707
    %5790 = vst [vmem:[#allocation2 + $0x50] sm:$0xff] %v5708
    %5791 = vst [vmem:[#allocation2 + $0x58] sm:$0xff] %v5709
    %5792 = vst [vmem:[#allocation2 + $0x60] sm:$0xff] %v5710
    %5793 = vst [vmem:[#allocation2 + $0x68] sm:$0xff] %v5711
    %5794 = vst [vmem:[#allocation2 + $0x70] sm:$0xff] %v5712
    %5795 = vst [vmem:[#allocation2 + $0x78] sm:$0xff] %v5713
    %5796 = vst [vmem:[#allocation2 + $0x80] sm:$0xff] %v5714
    %5797 = vst [vmem:[#allocation2 + $0x88] sm:$0xff] %v5715
    %5798 = vst [vmem:[#allocation2 + $0x90] sm:$0xff] %v5716
    %5799 = vst [vmem:[#allocation2 + $0x98] sm:$0xff] %v5717
    %5800 = vst [vmem:[#allocation2 + $0xa0] sm:$0xff] %v5718
    %5801 = vst [vmem:[#allocation2 + $0xa8] sm:$0xff] %v5719
    %5802 = vst [vmem:[#allocation2 + $0xb0] sm:$0xff] %v5720
    %5803 = vst [vmem:[#allocation2 + $0xb8] sm:$0xff] %v5721
    %5804 = vst [vmem:[#allocation2 + $0xc0] sm:$0xff] %v5722
    %5805 = vst [vmem:[#allocation2 + $0xc8] sm:$0xff] %v5723
    %5806 = vst [vmem:[#allocation2 + $0xd0] sm:$0xff] %v5724
    %5807 = vst [vmem:[#allocation2 + $0xd8] sm:$0xff] %v5725
    %5808 = vst [vmem:[#allocation2 + $0xe0] sm:$0xff] %v5726
    %5809 = vst [vmem:[#allocation2 + $0xe8] sm:$0xff] %v5727
    %5810 = vst [vmem:[#allocation2 + $0xf0] sm:$0xff] %v5728
    %5811 = vst [vmem:[#allocation2 + $0xf8] sm:$0xff] %v5729
    %5812 = vst [vmem:[#allocation2 + $0x100] sm:$0xff] %v5730
    %5813 = vst [vmem:[#allocation2 + $0x108] sm:$0xff] %v5731
    %5814 = vst [vmem:[#allocation2 + $0x110] sm:$0xff] %v5732
    %5815 = vst [vmem:[#allocation2 + $0x118] sm:$0xff] %v5733
    %5816 = vst [vmem:[#allocation2 + $0x120] sm:$0xff] %v5734
    %5817 = vst [vmem:[#allocation2 + $0x128] sm:$0xff] %v5735
    %5818 = vst [vmem:[#allocation2 + $0x130] sm:$0xff] %v5736
    %5819 = vst [vmem:[#allocation2 + $0x138] sm:$0xff] %v5737
    %5820 = vst [vmem:[#allocation2 + $0x140] sm:$0xff] %v5738
    %5821 = vst [vmem:[#allocation2 + $0x148] sm:$0xff] %v5739
    %5822 = vst [vmem:[#allocation2 + $0x150] sm:$0xff] %v5740
    %5823 = vst [vmem:[#allocation2 + $0x158] sm:$0xff] %v5741
    %5824 = vst [vmem:[#allocation2 + $0x160] sm:$0xff] %v5742
    %5825 = vst [vmem:[#allocation2 + $0x168] sm:$0xff] %v5743
    %5826 = vst [vmem:[#allocation2 + $0x170] sm:$0xff] %v5744
    %5827 = vst [vmem:[#allocation2 + $0x178] sm:$0xff] %v5745
    %5828 = vst [vmem:[#allocation2 + $0x180] sm:$0xff] %v5746
    %5829 = vst [vmem:[#allocation2 + $0x188] sm:$0xff] %v5747
    %5830 = vst [vmem:[#allocation2 + $0x190] sm:$0xff] %v5748
    %5831 = vst [vmem:[#allocation2 + $0x198] sm:$0xff] %v5749
    %5832 = vst [vmem:[#allocation2 + $0x1a0] sm:$0xff] %v5750
    %5833 = vst [vmem:[#allocation2 + $0x1a8] sm:$0xff] %v5751
    %5834 = vst [vmem:[#allocation2 + $0x1b0] sm:$0xff] %v5752
    %5835 = vst [vmem:[#allocation2 + $0x1b8] sm:$0xff] %v5753
    %5836 = vst [vmem:[#allocation2 + $0x1c0] sm:$0xff] %v5754
    %5837 = vst [vmem:[#allocation2 + $0x1c8] sm:$0xff] %v5755
    %5838 = vst [vmem:[#allocation2 + $0x1d0] sm:$0xff] %v5756
    %5839 = vst [vmem:[#allocation2 + $0x1d8] sm:$0xff] %v5757
    %5840 = vst [vmem:[#allocation2 + $0x1e0] sm:$0xff] %v5758
    %5841 = vst [vmem:[#allocation2 + $0x1e8] sm:$0xff] %v5759
    %5842 = vst [vmem:[#allocation2 + $0x1f0] sm:$0xff] %v5760
    %5843 = vst [vmem:[#allocation2 + $0x1f8] sm:$0xff] %v5761
    %5844 = vst [vmem:[#allocation2 + $0x200] sm:$0xff] %v5762
    %5845 = vst [vmem:[#allocation2 + $0x208] sm:$0xff] %v5763
    %5846 = vst [vmem:[#allocation2 + $0x210] sm:$0xff] %v5764
    %5847 = vst [vmem:[#allocation2 + $0x218] sm:$0xff] %v5765
    %5848 = vst [vmem:[#allocation2 + $0x220] sm:$0xff] %v5766
    %5849 = vst [vmem:[#allocation2 + $0x228] sm:$0xff] %v5767
    %5850 = vst [vmem:[#allocation2 + $0x230] sm:$0xff] %v5768
    %5851 = vst [vmem:[#allocation2 + $0x238] sm:$0xff] %v5769
    %5852 = vst [vmem:[#allocation2 + $0x240] sm:$0xff] %v5770
    %5853 = vst [vmem:[#allocation2 + $0x248] sm:$0xff] %v5771
    %5854 = vst [vmem:[#allocation2 + $0x250] sm:$0xff] %v5772
    %5855 = vst [vmem:[#allocation2 + $0x258] sm:$0xff] %v5773
    %5856 = vst [vmem:[#allocation2 + $0x260] sm:$0xff] %v5774
    %5857 = vst [vmem:[#allocation2 + $0x268] sm:$0xff] %v5775
    %5858 = vst [vmem:[#allocation2 + $0x270] sm:$0xff] %v5776
    %5859 = vst [vmem:[#allocation2 + $0x278] sm:$0xff] %v5777
    %5860 = vst [vmem:[#allocation2 + $0x280] sm:$0xff] %v5778
    %5861 = vst [vmem:[#allocation2 + $0x288] sm:$0xff] %v5779
    %v5862 = vld [vmem:[%s0 + $0x8] sm:$0xc]
    %v5863 = vld [vmem:[%s0 + $0xc] sm:$0xf]
    %v5864 = vld [vmem:[%s0 + $0x10] sm:$0xf]
    %v5865 = vld [vmem:[%s0 + $0x14] sm:$0xf]
    %v5866 = vld [vmem:[%s0 + $0x18] sm:$0xf]
    %v5867 = vld [vmem:[%s0 + $0x1c] sm:$0xf]
    %v5868 = vld [vmem:[%s0 + $0x20] sm:$0xf]
    %v5869 = vld [vmem:[%s0 + $0x24] sm:$0xf]
    %v5870 = vld [vmem:[%s0 + $0x28] sm:$0xf]
    %v5871 = vld [vmem:[%s0 + $0x2c] sm:$0xf]
    %v5872 = vld [vmem:[%s0 + $0x30] sm:$0xf]
    %v5873 = vld [vmem:[%s0 + $0x34] sm:$0xf]
    %v5874 = vld [vmem:[%s0 + $0x38] sm:$0xf]
    %v5875 = vld [vmem:[%s0 + $0x3c] sm:$0xf]
    %v5876 = vld [vmem:[%s0 + $0x40] sm:$0xf]
    %v5877 = vld [vmem:[%s0 + $0x44] sm:$0xf]
    %v5878 = vld [vmem:[%s0 + $0x48] sm:$0xf]
    %v5879 = vld [vmem:[%s0 + $0x4c] sm:$0xf]
    %v5880 = vld [vmem:[%s0 + $0x50] sm:$0xf]
    %v5881 = vld [vmem:[%s0 + $0x54] sm:$0xf]
    %v5882 = vld [vmem:[%s0 + $0x58] sm:$0xf]
    %v5883 = vld [vmem:[%s0 + $0x5c] sm:$0xf]
    %v5884 = vld [vmem:[%s0 + $0x60] sm:$0xf]
    %v5885 = vld [vmem:[%s0 + $0x64] sm:$0xf]
    %v5886 = vld [vmem:[%s0 + $0x68] sm:$0xf]
    %v5887 = vld [vmem:[%s0 + $0x6c] sm:$0xf]
    %v5888 = vld [vmem:[%s0 + $0x70] sm:$0xf]
    %v5889 = vld [vmem:[%s0 + $0x74] sm:$0xf]
    %v5890 = vld [vmem:[%s0 + $0x78] sm:$0xf]
    %v5891 = vld [vmem:[%s0 + $0x7c] sm:$0xf]
    %v5892 = vld [vmem:[%s0 + $0x80] sm:$0xf]
    %v5893 = vld [vmem:[%s0 + $0x84] sm:$0xf]
    %v5894 = vld [vmem:[%s0 + $0x88] sm:$0xf]
    %v5895 = vld [vmem:[%s0 + $0x8c] sm:$0xf]
    %v5896 = vld [vmem:[%s0 + $0x90] sm:$0xf]
    %v5897 = vld [vmem:[%s0 + $0x94] sm:$0xf]
    %v5898 = vld [vmem:[%s0 + $0x98] sm:$0xf]
    %v5899 = vld [vmem:[%s0 + $0x9c] sm:$0xf]
    %v5900 = vld [vmem:[%s0 + $0xa0] sm:$0xf]
    %v5901 = vld [vmem:[%s0 + $0xa4] sm:$0xf]
    %v5902 = vld [vmem:[%s0 + $0xa8] sm:$0xf]
    %v5903 = vld [vmem:[%s0 + $0xac] sm:$0xf]
    %v5904 = vld [vmem:[%s0 + $0xb0] sm:$0xf]
    %v5905 = vld [vmem:[%s0 + $0xb4] sm:$0xf]
    %v5906 = vld [vmem:[%s0 + $0xb8] sm:$0xf]
    %v5907 = vld [vmem:[%s0 + $0xbc] sm:$0xf]
    %v5908 = vld [vmem:[%s0 + $0xc0] sm:$0xf]
    %v5909 = vld [vmem:[%s0 + $0xc4] sm:$0xf]
    %v5910 = vld [vmem:[%s0 + $0xc8] sm:$0xf]
    %v5911 = vld [vmem:[%s0 + $0xcc] sm:$0xf]
    %v5912 = vld [vmem:[%s0 + $0xd0] sm:$0xf]
    %v5913 = vld [vmem:[%s0 + $0xd4] sm:$0xf]
    %v5914 = vld [vmem:[%s0 + $0xd8] sm:$0xf]
    %v5915 = vld [vmem:[%s0 + $0xdc] sm:$0xf]
    %v5916 = vld [vmem:[%s0 + $0xe0] sm:$0xf]
    %v5917 = vld [vmem:[%s0 + $0xe4] sm:$0xf]
    %v5918 = vld [vmem:[%s0 + $0xe8] sm:$0xf]
    %v5919 = vld [vmem:[%s0 + $0xec] sm:$0xf]
    %v5920 = vld [vmem:[%s0 + $0xf0] sm:$0xf]
    %v5921 = vld [vmem:[%s0 + $0xf4] sm:$0xf]
    %v5922 = vld [vmem:[%s0 + $0xf8] sm:$0xf]
    %v5923 = vld [vmem:[%s0 + $0xfc] sm:$0xf]
    %v5924 = vld [vmem:[%s0 + $0x100] sm:$0xf]
    %v5925 = vld [vmem:[%s0 + $0x104] sm:$0xf]
    %v5926 = vld [vmem:[%s0 + $0x108] sm:$0xf]
    %v5927 = vld [vmem:[%s0 + $0x10c] sm:$0xf]
    %v5928 = vld [vmem:[%s0 + $0x110] sm:$0xf]
    %v5929 = vld [vmem:[%s0 + $0x114] sm:$0xf]
    %v5930 = vld [vmem:[%s0 + $0x118] sm:$0xf]
    %v5931 = vld [vmem:[%s0 + $0x11c] sm:$0xf]
    %v5932 = vld [vmem:[%s0 + $0x120] sm:$0xf]
    %v5933 = vld [vmem:[%s0 + $0x124] sm:$0xf]
    %v5934 = vld [vmem:[%s0 + $0x128] sm:$0xf]
    %v5935 = vld [vmem:[%s0 + $0x12c] sm:$0xf]
    %v5936 = vld [vmem:[%s0 + $0x130] sm:$0xf]
    %v5937 = vld [vmem:[%s0 + $0x134] sm:$0xf]
    %v5938 = vld [vmem:[%s0 + $0x138] sm:$0xf]
    %v5939 = vld [vmem:[%s0 + $0x13c] sm:$0xf]
    %v5940 = vld [vmem:[%s0 + $0x140] sm:$0xf]
    %v5941 = vld [vmem:[%s0 + $0x144] sm:$0xf]
    %v5942 = vld [vmem:[%s0 + $0x148] sm:$0xf]
    %v5943 = vld [vmem:[%s0 + $0x14c] sm:$0xf]
    %v5944 = vld [vmem:[%s0 + $0x150] sm:$0x3]
    %v5945 = vld [vmem:[%s1 + $0x14] sm:$0xf]
    %v6029 = vunpack.c.l.b16 %v5862
    %v6030 = vunpack.c.l.b16 %v5863
    %v6031 = vunpack.c.l.b16 %v5864
    %v6032 = vunpack.c.l.b16 %v5865
    %v6033 = vunpack.c.l.b16 %v5866
    %v6034 = vunpack.c.l.b16 %v5867
    %v6035 = vunpack.c.l.b16 %v5868
    %v6036 = vunpack.c.l.b16 %v5869
    %v6037 = vunpack.c.l.b16 %v5870
    %v6038 = vunpack.c.l.b16 %v5871
    %v6039 = vunpack.c.l.b16 %v5872
    %v6040 = vunpack.c.l.b16 %v5873
    %v6041 = vunpack.c.l.b16 %v5874
    %v6042 = vunpack.c.l.b16 %v5875
    %v6043 = vunpack.c.l.b16 %v5876
    %v6044 = vunpack.c.l.b16 %v5877
    %v6045 = vunpack.c.l.b16 %v5878
    %v6046 = vunpack.c.l.b16 %v5879
    %v6047 = vunpack.c.l.b16 %v5880
    %v6048 = vunpack.c.l.b16 %v5881
    %v6049 = vunpack.c.l.b16 %v5882
    %v6050 = vunpack.c.l.b16 %v5883
    %v6051 = vunpack.c.l.b16 %v5884
    %v6052 = vunpack.c.l.b16 %v5885
    %v6053 = vunpack.c.l.b16 %v5886
    %v6054 = vunpack.c.l.b16 %v5887
    %v6055 = vunpack.c.l.b16 %v5888
    %v6056 = vunpack.c.l.b16 %v5889
    %v6057 = vunpack.c.l.b16 %v5890
    %v6058 = vunpack.c.l.b16 %v5891
    %v6059 = vunpack.c.l.b16 %v5892
    %v6060 = vunpack.c.l.b16 %v5893
    %v6061 = vunpack.c.l.b16 %v5894
    %v6062 = vunpack.c.l.b16 %v5895
    %v6063 = vunpack.c.l.b16 %v5896
    %v6064 = vunpack.c.l.b16 %v5897
    %v6065 = vunpack.c.l.b16 %v5898
    %v6066 = vunpack.c.l.b16 %v5899
    %v6067 = vunpack.c.l.b16 %v5900
    %v6068 = vunpack.c.l.b16 %v5901
    %v6069 = vunpack.c.l.b16 %v5902
    %v6070 = vunpack.c.l.b16 %v5903
    %v6071 = vunpack.c.l.b16 %v5904
    %v6072 = vunpack.c.l.b16 %v5905
    %v6073 = vunpack.c.l.b16 %v5906
    %v6074 = vunpack.c.l.b16 %v5907
    %v6075 = vunpack.c.l.b16 %v5908
    %v6076 = vunpack.c.l.b16 %v5909
    %v6077 = vunpack.c.l.b16 %v5910
    %v6078 = vunpack.c.l.b16 %v5911
    %v6079 = vunpack.c.l.b16 %v5912
    %v6080 = vunpack.c.l.b16 %v5913
    %v6081 = vunpack.c.l.b16 %v5914
    %v6082 = vunpack.c.l.b16 %v5915
    %v6083 = vunpack.c.l.b16 %v5916
    %v6084 = vunpack.c.l.b16 %v5917
    %v6085 = vunpack.c.l.b16 %v5918
    %v6086 = vunpack.c.l.b16 %v5919
    %v6087 = vunpack.c.l.b16 %v5920
    %v6088 = vunpack.c.l.b16 %v5921
    %v6089 = vunpack.c.l.b16 %v5922
    %v6090 = vunpack.c.l.b16 %v5923
    %v6091 = vunpack.c.l.b16 %v5924
    %v6092 = vunpack.c.l.b16 %v5925
    %v6093 = vunpack.c.l.b16 %v5926
    %v6094 = vunpack.c.l.b16 %v5927
    %v6095 = vunpack.c.l.b16 %v5928
    %v6096 = vunpack.c.l.b16 %v5929
    %v6097 = vunpack.c.l.b16 %v5930
    %v6098 = vunpack.c.l.b16 %v5931
    %v6099 = vunpack.c.l.b16 %v5932
    %v6100 = vunpack.c.l.b16 %v5933
    %v6101 = vunpack.c.l.b16 %v5934
    %v6102 = vunpack.c.l.b16 %v5935
    %v6103 = vunpack.c.l.b16 %v5936
    %v6104 = vunpack.c.l.b16 %v5937
    %v6105 = vunpack.c.l.b16 %v5938
    %v6106 = vunpack.c.l.b16 %v5939
    %v6107 = vunpack.c.l.b16 %v5940
    %v6108 = vunpack.c.l.b16 %v5941
    %v6109 = vunpack.c.l.b16 %v5942
    %v6110 = vunpack.c.l.b16 %v5943
    %v6111 = vunpack.c.l.b16 %v5944
    %v6112 = vpack.c.b16 %v6030, %v6029
    %v6113 = vpack.c.b16 %v6032, %v6031
    %v6114 = vpack.c.b16 %v6034, %v6033
    %v6115 = vpack.c.b16 %v6036, %v6035
    %v6116 = vpack.c.b16 %v6038, %v6037
    %v6117 = vpack.c.b16 %v6040, %v6039
    %v6118 = vpack.c.b16 %v6042, %v6041
    %v6119 = vpack.c.b16 %v6044, %v6043
    %v6120 = vpack.c.b16 %v6046, %v6045
    %v6121 = vpack.c.b16 %v6048, %v6047
    %v6122 = vpack.c.b16 %v6050, %v6049
    %v6123 = vpack.c.b16 %v6052, %v6051
    %v6124 = vpack.c.b16 %v6054, %v6053
    %v6125 = vpack.c.b16 %v6056, %v6055
    %v6126 = vpack.c.b16 %v6058, %v6057
    %v6127 = vpack.c.b16 %v6060, %v6059
    %v6128 = vpack.c.b16 %v6062, %v6061
    %v6129 = vpack.c.b16 %v6064, %v6063
    %v6130 = vpack.c.b16 %v6066, %v6065
    %v6131 = vpack.c.b16 %v6068, %v6067
    %v6132 = vpack.c.b16 %v6070, %v6069
    %v6133 = vpack.c.b16 %v6072, %v6071
    %v6134 = vpack.c.b16 %v6074, %v6073
    %v6135 = vpack.c.b16 %v6076, %v6075
    %v6136 = vpack.c.b16 %v6078, %v6077
    %v6137 = vpack.c.b16 %v6080, %v6079
    %v6138 = vpack.c.b16 %v6082, %v6081
    %v6139 = vpack.c.b16 %v6084, %v6083
    %v6140 = vpack.c.b16 %v6086, %v6085
    %v6141 = vpack.c.b16 %v6088, %v6087
    %v6142 = vpack.c.b16 %v6090, %v6089
    %v6143 = vpack.c.b16 %v6092, %v6091
    %v6144 = vpack.c.b16 %v6094, %v6093
    %v6145 = vpack.c.b16 %v6096, %v6095
    %v6146 = vpack.c.b16 %v6098, %v6097
    %v6147 = vpack.c.b16 %v6100, %v6099
    %v6148 = vpack.c.b16 %v6102, %v6101
    %v6149 = vpack.c.b16 %v6104, %v6103
    %v6150 = vpack.c.b16 %v6106, %v6105
    %v6151 = vpack.c.b16 %v6108, %v6107
    %v6152 = vpack.c.b16 %v6110, %v6109
    %v6153 = vpack.c.b16 %v6111, %v6111
    %vm6154 = vcmask 1045504
    %v6155 = vrot.slane %v6112, 2
    %v6156 = vrot.slane %v6113, 2
    %v6157 = vsel %vm6154, %v6155, %v6156
    %v6158 = vrot.slane %v6114, 2
    %v6159 = vsel %vm6154, %v6156, %v6158
    %v6160 = vrot.slane %v6115, 2
    %v6161 = vsel %vm6154, %v6158, %v6160
    %v6162 = vrot.slane %v6116, 2
    %v6163 = vsel %vm6154, %v6160, %v6162
    %v6164 = vrot.slane %v6117, 2
    %v6165 = vsel %vm6154, %v6162, %v6164
    %v6166 = vrot.slane %v6118, 2
    %v6167 = vsel %vm6154, %v6164, %v6166
    %v6168 = vrot.slane %v6119, 2
    %v6169 = vsel %vm6154, %v6166, %v6168
    %v6170 = vrot.slane %v6120, 2
    %v6171 = vsel %vm6154, %v6168, %v6170
    %v6172 = vrot.slane %v6121, 2
    %v6173 = vsel %vm6154, %v6170, %v6172
    %v6174 = vrot.slane %v6122, 2
    %v6175 = vsel %vm6154, %v6172, %v6174
    %v6176 = vrot.slane %v6123, 2
    %v6177 = vsel %vm6154, %v6174, %v6176
    %v6178 = vrot.slane %v6124, 2
    %v6179 = vsel %vm6154, %v6176, %v6178
    %v6180 = vrot.slane %v6125, 2
    %v6181 = vsel %vm6154, %v6178, %v6180
    %v6182 = vrot.slane %v6126, 2
    %v6183 = vsel %vm6154, %v6180, %v6182
    %v6184 = vrot.slane %v6127, 2
    %v6185 = vsel %vm6154, %v6182, %v6184
    %v6186 = vrot.slane %v6128, 2
    %v6187 = vsel %vm6154, %v6184, %v6186
    %v6188 = vrot.slane %v6129, 2
    %v6189 = vsel %vm6154, %v6186, %v6188
    %v6190 = vrot.slane %v6130, 2
    %v6191 = vsel %vm6154, %v6188, %v6190
    %v6192 = vrot.slane %v6131, 2
    %v6193 = vsel %vm6154, %v6190, %v6192
    %v6194 = vrot.slane %v6132, 2
    %v6195 = vsel %vm6154, %v6192, %v6194
    %v6196 = vrot.slane %v6133, 2
    %v6197 = vsel %vm6154, %v6194, %v6196
    %v6198 = vrot.slane %v6134, 2
    %v6199 = vsel %vm6154, %v6196, %v6198
    %v6200 = vrot.slane %v6135, 2
    %v6201 = vsel %vm6154, %v6198, %v6200
    %v6202 = vrot.slane %v6136, 2
    %v6203 = vsel %vm6154, %v6200, %v6202
    %v6204 = vrot.slane %v6137, 2
    %v6205 = vsel %vm6154, %v6202, %v6204
    %v6206 = vrot.slane %v6138, 2
    %v6207 = vsel %vm6154, %v6204, %v6206
    %v6208 = vrot.slane %v6139, 2
    %v6209 = vsel %vm6154, %v6206, %v6208
    %v6210 = vrot.slane %v6140, 2
    %v6211 = vsel %vm6154, %v6208, %v6210
    %v6212 = vrot.slane %v6141, 2
    %v6213 = vsel %vm6154, %v6210, %v6212
    %v6214 = vrot.slane %v6142, 2
    %v6215 = vsel %vm6154, %v6212, %v6214
    %v6216 = vrot.slane %v6143, 2
    %v6217 = vsel %vm6154, %v6214, %v6216
    %v6218 = vrot.slane %v6144, 2
    %v6219 = vsel %vm6154, %v6216, %v6218
    %v6220 = vrot.slane %v6145, 2
    %v6221 = vsel %vm6154, %v6218, %v6220
    %v6222 = vrot.slane %v6146, 2
    %v6223 = vsel %vm6154, %v6220, %v6222
    %v6224 = vrot.slane %v6147, 2
    %v6225 = vsel %vm6154, %v6222, %v6224
    %v6226 = vrot.slane %v6148, 2
    %v6227 = vsel %vm6154, %v6224, %v6226
    %v6228 = vrot.slane %v6149, 2
    %v6229 = vsel %vm6154, %v6226, %v6228
    %v6230 = vrot.slane %v6150, 2
    %v6231 = vsel %vm6154, %v6228, %v6230
    %v6232 = vrot.slane %v6151, 2
    %v6233 = vsel %vm6154, %v6230, %v6232
    %v6234 = vrot.slane %v6152, 2
    %v6235 = vsel %vm6154, %v6232, %v6234
    %v6236 = vrot.slane %v6153, 2
    %v6237 = vsel %vm6154, %v6234, %v6236
    %v6239 = vsel %vm313, %v6157, 0
    %v6242 = vsel %vm313, %v6159, 0
    %v6245 = vsel %vm313, %v6161, 0
    %v6248 = vsel %vm313, %v6163, 0
    %v6251 = vsel %vm313, %v6165, 0
    %v6254 = vsel %vm313, %v6167, 0
    %v6257 = vsel %vm313, %v6169, 0
    %v6260 = vsel %vm313, %v6171, 0
    %v6263 = vsel %vm313, %v6173, 0
    %v6266 = vsel %vm313, %v6175, 0
    %v6269 = vsel %vm313, %v6177, 0
    %v6272 = vsel %vm313, %v6179, 0
    %v6275 = vsel %vm313, %v6181, 0
    %v6278 = vsel %vm313, %v6183, 0
    %v6281 = vsel %vm313, %v6185, 0
    %v6284 = vsel %vm313, %v6187, 0
    %v6287 = vsel %vm313, %v6189, 0
    %v6290 = vsel %vm313, %v6191, 0
    %v6293 = vsel %vm313, %v6193, 0
    %v6296 = vsel %vm313, %v6195, 0
    %v6299 = vsel %vm313, %v6197, 0
    %v6302 = vsel %vm313, %v6199, 0
    %v6305 = vsel %vm313, %v6201, 0
    %v6308 = vsel %vm313, %v6203, 0
    %v6311 = vsel %vm313, %v6205, 0
    %v6314 = vsel %vm313, %v6207, 0
    %v6317 = vsel %vm313, %v6209, 0
    %v6320 = vsel %vm313, %v6211, 0
    %v6323 = vsel %vm313, %v6213, 0
    %v6326 = vsel %vm313, %v6215, 0
    %v6329 = vsel %vm313, %v6217, 0
    %v6332 = vsel %vm313, %v6219, 0
    %v6335 = vsel %vm313, %v6221, 0
    %v6338 = vsel %vm313, %v6223, 0
    %v6341 = vsel %vm313, %v6225, 0
    %v6344 = vsel %vm313, %v6227, 0
    %v6347 = vsel %vm313, %v6229, 0
    %v6350 = vsel %vm313, %v6231, 0
    %v6353 = vsel %vm313, %v6233, 0
    %v6356 = vsel %vm313, %v6235, 0
    %v6359 = vsel %vm313, %v6237, 0
    %v6362 = vsel %vm437, %v5945, 0
    %6364 = vmatprep.subr.bf16.mxu0 0
    %6365 = vmatpush1.bf16.msra.mxu0 %v6362
    %6366 = vmatprep.subr.bf16.mxu0 0
    %6367 = vmatpush1.bf16.msra.mxu0 0
    %6368 = vmatprep.subr.bf16.mxu0 0
    %6369 = vmatpush1.bf16.msra.mxu0 0
    %6370 = vmatprep.subr.bf16.mxu0 0
    %6371 = vmatpush1.bf16.msra.mxu0 0
    %6372 = vmatprep.subr.bf16.mxu0 0
    %6373 = vmatpush1.bf16.msra.mxu0 0
    %6374 = vmatprep.subr.bf16.mxu0 0
    %6375 = vmatpush1.bf16.msra.mxu0 0
    %6376 = vmatprep.subr.bf16.mxu0 0
    %6377 = vmatpush1.bf16.msra.mxu0 0
    %6378 = vmatprep.subr.bf16.mxu0 0
    %6379 = vmatpush1.bf16.msra.mxu0 0
    %6380 = vmatprep.subr.bf16.mxu0 0
    %6381 = vmatpush1.bf16.msra.mxu0 0
    %6382 = vmatprep.subr.bf16.mxu0 0
    %6383 = vmatpush1.bf16.msra.mxu0 0
    %6384 = vmatprep.subr.bf16.mxu0 0
    %6385 = vmatpush1.bf16.msra.mxu0 0
    %6386 = vmatprep.subr.bf16.mxu0 0
    %6387 = vmatpush1.bf16.msra.mxu0 0
    %6388 = vmatprep.subr.bf16.mxu0 0
    %6389 = vmatpush1.bf16.msra.mxu0 0
    %6390 = vmatprep.subr.bf16.mxu0 0
    %6391 = vmatpush1.bf16.msra.mxu0 0
    %6392 = vmatprep.subr.bf16.mxu0 0
    %6393 = vmatpush1.bf16.msra.mxu0 0
    %6394 = vmatprep.subr.bf16.mxu0 0
    %6395 = vmatpush1.bf16.msra.mxu0 0
    %6396 = vmatprep.mubr.bf16.mxu0 0
    %6397 = vmatmul.mubr.bf16.gmra.mrb[0].mxu0 %v6239
    %v6398 = vpop.f32.mrb[0].mxu0
    %v6399 = vadd.f32 0.0, %v6398
    %v6400 = vpop.f32.mrb[0].mxu0
    %v6401 = vpop.f32.mrb[0].mxu0
    %v6402 = vadd.f32 0.0, %v6401
    %v6403 = vpop.f32.mrb[0].mxu0
    %6404 = vmatprep.mubr.bf16.mxu0 0
    %6405 = vmatmul.mubr.bf16.gmra.mrb[0].mxu0 %v6242
    %v6406 = vpop.f32.mrb[0].mxu0
    %v6407 = vadd.f32 0.0, %v6406
    %v6408 = vpop.f32.mrb[0].mxu0
    %v6409 = vpop.f32.mrb[0].mxu0
    %v6410 = vadd.f32 0.0, %v6409
    %v6411 = vpop.f32.mrb[0].mxu0
    %6412 = vmatprep.mubr.bf16.mxu0 0
    %6413 = vmatmul.mubr.bf16.gmra.mrb[0].mxu0 %v6245
    %v6414 = vpop.f32.mrb[0].mxu0
    %v6415 = vadd.f32 0.0, %v6414
    %v6416 = vpop.f32.mrb[0].mxu0
    %v6417 = vpop.f32.mrb[0].mxu0
    %v6418 = vadd.f32 0.0, %v6417
    %v6419 = vpop.f32.mrb[0].mxu0
    %6420 = vmatprep.mubr.bf16.mxu0 0
    %6421 = vmatmul.mubr.bf16.gmra.mrb[0].mxu0 %v6248
    %v6422 = vpop.f32.mrb[0].mxu0
    %v6423 = vadd.f32 0.0, %v6422
    %v6424 = vpop.f32.mrb[0].mxu0
    %v6425 = vpop.f32.mrb[0].mxu0
    %v6426 = vadd.f32 0.0, %v6425
    %v6427 = vpop.f32.mrb[0].mxu0
    %6428 = vmatprep.mubr.bf16.mxu0 0
    %6429 = vmatmul.mubr.bf16.gmra.mrb[0].mxu0 %v6251
    %v6430 = vpop.f32.mrb[0].mxu0
    %v6431 = vadd.f32 0.0, %v6430
    %v6432 = vpop.f32.mrb[0].mxu0
    %v6433 = vpop.f32.mrb[0].mxu0
    %v6434 = vadd.f32 0.0, %v6433
    %v6435 = vpop.f32.mrb[0].mxu0
    %6436 = vmatprep.mubr.bf16.mxu0 0
    %6437 = vmatmul.mubr.bf16.gmra.mrb[0].mxu0 %v6254
    %v6438 = vpop.f32.mrb[0].mxu0
    %v6439 = vadd.f32 0.0, %v6438
    %v6440 = vpop.f32.mrb[0].mxu0
    %v6441 = vpop.f32.mrb[0].mxu0
    %v6442 = vadd.f32 0.0, %v6441
    %v6443 = vpop.f32.mrb[0].mxu0
    %6444 = vmatprep.mubr.bf16.mxu0 0
    %6445 = vmatmul.mubr.bf16.gmra.mrb[0].mxu0 %v6257
    %v6446 = vpop.f32.mrb[0].mxu0
    %v6447 = vadd.f32 0.0, %v6446
    %v6448 = vpop.f32.mrb[0].mxu0
    %v6449 = vpop.f32.mrb[0].mxu0
    %v6450 = vadd.f32 0.0, %v6449
    %v6451 = vpop.f32.mrb[0].mxu0
    %6452 = vmatprep.mubr.bf16.mxu0 0
    %6453 = vmatmul.mubr.bf16.gmra.mrb[0].mxu0 %v6260
    %v6454 = vpop.f32.mrb[0].mxu0
    %v6455 = vadd.f32 0.0, %v6454
    %v6456 = vpop.f32.mrb[0].mxu0
    %v6457 = vpop.f32.mrb[0].mxu0
    %v6458 = vadd.f32 0.0, %v6457
    %v6459 = vpop.f32.mrb[0].mxu0
    %6460 = vmatprep.mubr.bf16.mxu0 0
    %6461 = vmatmul.mubr.bf16.gmra.mrb[0].mxu0 %v6263
    %v6462 = vpop.f32.mrb[0].mxu0
    %v6463 = vadd.f32 0.0, %v6462
    %v6464 = vpop.f32.mrb[0].mxu0
    %v6465 = vpop.f32.mrb[0].mxu0
    %v6466 = vadd.f32 0.0, %v6465
    %v6467 = vpop.f32.mrb[0].mxu0
    %6468 = vmatprep.mubr.bf16.mxu0 0
    %6469 = vmatmul.mubr.bf16.gmra.mrb[0].mxu0 %v6266
    %v6470 = vpop.f32.mrb[0].mxu0
    %v6471 = vadd.f32 0.0, %v6470
    %v6472 = vpop.f32.mrb[0].mxu0
    %v6473 = vpop.f32.mrb[0].mxu0
    %v6474 = vadd.f32 0.0, %v6473
    %v6475 = vpop.f32.mrb[0].mxu0
    %6476 = vmatprep.mubr.bf16.mxu0 0
    %6477 = vmatmul.mubr.bf16.gmra.mrb[0].mxu0 %v6269
    %v6478 = vpop.f32.mrb[0].mxu0
    %v6479 = vadd.f32 0.0, %v6478
    %v6480 = vpop.f32.mrb[0].mxu0
    %v6481 = vpop.f32.mrb[0].mxu0
    %v6482 = vadd.f32 0.0, %v6481
    %v6483 = vpop.f32.mrb[0].mxu0
    %6484 = vmatprep.mubr.bf16.mxu0 0
    %6485 = vmatmul.mubr.bf16.gmra.mrb[0].mxu0 %v6272
    %v6486 = vpop.f32.mrb[0].mxu0
    %v6487 = vadd.f32 0.0, %v6486
    %v6488 = vpop.f32.mrb[0].mxu0
    %v6489 = vpop.f32.mrb[0].mxu0
    %v6490 = vadd.f32 0.0, %v6489
    %v6491 = vpop.f32.mrb[0].mxu0
    %6492 = vmatprep.mubr.bf16.mxu0 0
    %6493 = vmatmul.mubr.bf16.gmra.mrb[0].mxu0 %v6275
    %v6494 = vpop.f32.mrb[0].mxu0
    %v6495 = vadd.f32 0.0, %v6494
    %v6496 = vpop.f32.mrb[0].mxu0
    %v6497 = vpop.f32.mrb[0].mxu0
    %v6498 = vadd.f32 0.0, %v6497
    %v6499 = vpop.f32.mrb[0].mxu0
    %6500 = vmatprep.mubr.bf16.mxu0 0
    %6501 = vmatmul.mubr.bf16.gmra.mrb[0].mxu0 %v6278
    %v6502 = vpop.f32.mrb[0].mxu0
    %v6503 = vadd.f32 0.0, %v6502
    %v6504 = vpop.f32.mrb[0].mxu0
    %v6505 = vpop.f32.mrb[0].mxu0
    %v6506 = vadd.f32 0.0, %v6505
    %v6507 = vpop.f32.mrb[0].mxu0
    %6508 = vmatprep.mubr.bf16.mxu0 0
    %6509 = vmatmul.mubr.bf16.gmra.mrb[0].mxu0 %v6281
    %v6510 = vpop.f32.mrb[0].mxu0
    %v6511 = vadd.f32 0.0, %v6510
    %v6512 = vpop.f32.mrb[0].mxu0
    %v6513 = vpop.f32.mrb[0].mxu0
    %v6514 = vadd.f32 0.0, %v6513
    %v6515 = vpop.f32.mrb[0].mxu0
    %6516 = vmatprep.mubr.bf16.mxu0 0
    %6517 = vmatmul.mubr.bf16.gmra.mrb[0].mxu0 %v6284
    %v6518 = vpop.f32.mrb[0].mxu0
    %v6519 = vadd.f32 0.0, %v6518
    %v6520 = vpop.f32.mrb[0].mxu0
    %v6521 = vpop.f32.mrb[0].mxu0
    %v6522 = vadd.f32 0.0, %v6521
    %v6523 = vpop.f32.mrb[0].mxu0
    %6524 = vmatprep.mubr.bf16.mxu0 0
    %6525 = vmatmul.mubr.bf16.gmra.mrb[0].mxu0 %v6287
    %v6526 = vpop.f32.mrb[0].mxu0
    %v6527 = vadd.f32 0.0, %v6526
    %v6528 = vpop.f32.mrb[0].mxu0
    %v6529 = vpop.f32.mrb[0].mxu0
    %v6530 = vadd.f32 0.0, %v6529
    %v6531 = vpop.f32.mrb[0].mxu0
    %6532 = vmatprep.mubr.bf16.mxu0 0
    %6533 = vmatmul.mubr.bf16.gmra.mrb[0].mxu0 %v6290
    %v6534 = vpop.f32.mrb[0].mxu0
    %v6535 = vadd.f32 0.0, %v6534
    %v6536 = vpop.f32.mrb[0].mxu0
    %v6537 = vpop.f32.mrb[0].mxu0
    %v6538 = vadd.f32 0.0, %v6537
    %v6539 = vpop.f32.mrb[0].mxu0
    %6540 = vmatprep.mubr.bf16.mxu0 0
    %6541 = vmatmul.mubr.bf16.gmra.mrb[0].mxu0 %v6293
    %v6542 = vpop.f32.mrb[0].mxu0
    %v6543 = vadd.f32 0.0, %v6542
    %v6544 = vpop.f32.mrb[0].mxu0
    %v6545 = vpop.f32.mrb[0].mxu0
    %v6546 = vadd.f32 0.0, %v6545
    %v6547 = vpop.f32.mrb[0].mxu0
    %6548 = vmatprep.mubr.bf16.mxu0 0
    %6549 = vmatmul.mubr.bf16.gmra.mrb[0].mxu0 %v6296
    %v6550 = vpop.f32.mrb[0].mxu0
    %v6551 = vadd.f32 0.0, %v6550
    %v6552 = vpop.f32.mrb[0].mxu0
    %v6553 = vpop.f32.mrb[0].mxu0
    %v6554 = vadd.f32 0.0, %v6553
    %v6555 = vpop.f32.mrb[0].mxu0
    %6556 = vmatprep.mubr.bf16.mxu0 0
    %6557 = vmatmul.mubr.bf16.gmra.mrb[0].mxu0 %v6299
    %v6558 = vpop.f32.mrb[0].mxu0
    %v6559 = vadd.f32 0.0, %v6558
    %v6560 = vpop.f32.mrb[0].mxu0
    %v6561 = vpop.f32.mrb[0].mxu0
    %v6562 = vadd.f32 0.0, %v6561
    %v6563 = vpop.f32.mrb[0].mxu0
    %6564 = vmatprep.mubr.bf16.mxu0 0
    %6565 = vmatmul.mubr.bf16.gmra.mrb[0].mxu0 %v6302
    %v6566 = vpop.f32.mrb[0].mxu0
    %v6567 = vadd.f32 0.0, %v6566
    %v6568 = vpop.f32.mrb[0].mxu0
    %v6569 = vpop.f32.mrb[0].mxu0
    %v6570 = vadd.f32 0.0, %v6569
    %v6571 = vpop.f32.mrb[0].mxu0
    %6572 = vmatprep.mubr.bf16.mxu0 0
    %6573 = vmatmul.mubr.bf16.gmra.mrb[0].mxu0 %v6305
    %v6574 = vpop.f32.mrb[0].mxu0
    %v6575 = vadd.f32 0.0, %v6574
    %v6576 = vpop.f32.mrb[0].mxu0
    %v6577 = vpop.f32.mrb[0].mxu0
    %v6578 = vadd.f32 0.0, %v6577
    %v6579 = vpop.f32.mrb[0].mxu0
    %6580 = vmatprep.mubr.bf16.mxu0 0
    %6581 = vmatmul.mubr.bf16.gmra.mrb[0].mxu0 %v6308
    %v6582 = vpop.f32.mrb[0].mxu0
    %v6583 = vadd.f32 0.0, %v6582
    %v6584 = vpop.f32.mrb[0].mxu0
    %v6585 = vpop.f32.mrb[0].mxu0
    %v6586 = vadd.f32 0.0, %v6585
    %v6587 = vpop.f32.mrb[0].mxu0
    %6588 = vmatprep.mubr.bf16.mxu0 0
    %6589 = vmatmul.mubr.bf16.gmra.mrb[0].mxu0 %v6311
    %v6590 = vpop.f32.mrb[0].mxu0
    %v6591 = vadd.f32 0.0, %v6590
    %v6592 = vpop.f32.mrb[0].mxu0
    %v6593 = vpop.f32.mrb[0].mxu0
    %v6594 = vadd.f32 0.0, %v6593
    %v6595 = vpop.f32.mrb[0].mxu0
    %6596 = vmatprep.mubr.bf16.mxu0 0
    %6597 = vmatmul.mubr.bf16.gmra.mrb[0].mxu0 %v6314
    %v6598 = vpop.f32.mrb[0].mxu0
    %v6599 = vadd.f32 0.0, %v6598
    %v6600 = vpop.f32.mrb[0].mxu0
    %v6601 = vpop.f32.mrb[0].mxu0
    %v6602 = vadd.f32 0.0, %v6601
    %v6603 = vpop.f32.mrb[0].mxu0
    %6604 = vmatprep.mubr.bf16.mxu0 0
    %6605 = vmatmul.mubr.bf16.gmra.mrb[0].mxu0 %v6317
    %v6606 = vpop.f32.mrb[0].mxu0
    %v6607 = vadd.f32 0.0, %v6606
    %v6608 = vpop.f32.mrb[0].mxu0
    %v6609 = vpop.f32.mrb[0].mxu0
    %v6610 = vadd.f32 0.0, %v6609
    %v6611 = vpop.f32.mrb[0].mxu0
    %6612 = vmatprep.mubr.bf16.mxu0 0
    %6613 = vmatmul.mubr.bf16.gmra.mrb[0].mxu0 %v6320
    %v6614 = vpop.f32.mrb[0].mxu0
    %v6615 = vadd.f32 0.0, %v6614
    %v6616 = vpop.f32.mrb[0].mxu0
    %v6617 = vpop.f32.mrb[0].mxu0
    %v6618 = vadd.f32 0.0, %v6617
    %v6619 = vpop.f32.mrb[0].mxu0
    %6620 = vmatprep.mubr.bf16.mxu0 0
    %6621 = vmatmul.mubr.bf16.gmra.mrb[0].mxu0 %v6323
    %v6622 = vpop.f32.mrb[0].mxu0
    %v6623 = vadd.f32 0.0, %v6622
    %v6624 = vpop.f32.mrb[0].mxu0
    %v6625 = vpop.f32.mrb[0].mxu0
    %v6626 = vadd.f32 0.0, %v6625
    %v6627 = vpop.f32.mrb[0].mxu0
    %6628 = vmatprep.mubr.bf16.mxu0 0
    %6629 = vmatmul.mubr.bf16.gmra.mrb[0].mxu0 %v6326
    %v6630 = vpop.f32.mrb[0].mxu0
    %v6631 = vadd.f32 0.0, %v6630
    %v6632 = vpop.f32.mrb[0].mxu0
    %v6633 = vpop.f32.mrb[0].mxu0
    %v6634 = vadd.f32 0.0, %v6633
    %v6635 = vpop.f32.mrb[0].mxu0
    %6636 = vmatprep.mubr.bf16.mxu0 0
    %6637 = vmatmul.mubr.bf16.gmra.mrb[0].mxu0 %v6329
    %v6638 = vpop.f32.mrb[0].mxu0
    %v6639 = vadd.f32 0.0, %v6638
    %v6640 = vpop.f32.mrb[0].mxu0
    %v6641 = vpop.f32.mrb[0].mxu0
    %v6642 = vadd.f32 0.0, %v6641
    %v6643 = vpop.f32.mrb[0].mxu0
    %6644 = vmatprep.mubr.bf16.mxu0 0
    %6645 = vmatmul.mubr.bf16.gmra.mrb[0].mxu0 %v6332
    %v6646 = vpop.f32.mrb[0].mxu0
    %v6647 = vadd.f32 0.0, %v6646
    %v6648 = vpop.f32.mrb[0].mxu0
    %v6649 = vpop.f32.mrb[0].mxu0
    %v6650 = vadd.f32 0.0, %v6649
    %v6651 = vpop.f32.mrb[0].mxu0
    %6652 = vmatprep.mubr.bf16.mxu0 0
    %6653 = vmatmul.mubr.bf16.gmra.mrb[0].mxu0 %v6335
    %v6654 = vpop.f32.mrb[0].mxu0
    %v6655 = vadd.f32 0.0, %v6654
    %v6656 = vpop.f32.mrb[0].mxu0
    %v6657 = vpop.f32.mrb[0].mxu0
    %v6658 = vadd.f32 0.0, %v6657
    %v6659 = vpop.f32.mrb[0].mxu0
    %6660 = vmatprep.mubr.bf16.mxu0 0
    %6661 = vmatmul.mubr.bf16.gmra.mrb[0].mxu0 %v6338
    %v6662 = vpop.f32.mrb[0].mxu0
    %v6663 = vadd.f32 0.0, %v6662
    %v6664 = vpop.f32.mrb[0].mxu0
    %v6665 = vpop.f32.mrb[0].mxu0
    %v6666 = vadd.f32 0.0, %v6665
    %v6667 = vpop.f32.mrb[0].mxu0
    %6668 = vmatprep.mubr.bf16.mxu0 0
    %6669 = vmatmul.mubr.bf16.gmra.mrb[0].mxu0 %v6341
    %v6670 = vpop.f32.mrb[0].mxu0
    %v6671 = vadd.f32 0.0, %v6670
    %v6672 = vpop.f32.mrb[0].mxu0
    %v6673 = vpop.f32.mrb[0].mxu0
    %v6674 = vadd.f32 0.0, %v6673
    %v6675 = vpop.f32.mrb[0].mxu0
    %6676 = vmatprep.mubr.bf16.mxu0 0
    %6677 = vmatmul.mubr.bf16.gmra.mrb[0].mxu0 %v6344
    %v6678 = vpop.f32.mrb[0].mxu0
    %v6679 = vadd.f32 0.0, %v6678
    %v6680 = vpop.f32.mrb[0].mxu0
    %v6681 = vpop.f32.mrb[0].mxu0
    %v6682 = vadd.f32 0.0, %v6681
    %v6683 = vpop.f32.mrb[0].mxu0
    %6684 = vmatprep.mubr.bf16.mxu0 0
    %6685 = vmatmul.mubr.bf16.gmra.mrb[0].mxu0 %v6347
    %v6686 = vpop.f32.mrb[0].mxu0
    %v6687 = vadd.f32 0.0, %v6686
    %v6688 = vpop.f32.mrb[0].mxu0
    %v6689 = vpop.f32.mrb[0].mxu0
    %v6690 = vadd.f32 0.0, %v6689
    %v6691 = vpop.f32.mrb[0].mxu0
    %6692 = vmatprep.mubr.bf16.mxu0 0
    %6693 = vmatmul.mubr.bf16.gmra.mrb[0].mxu0 %v6350
    %v6694 = vpop.f32.mrb[0].mxu0
    %v6695 = vadd.f32 0.0, %v6694
    %v6696 = vpop.f32.mrb[0].mxu0
    %v6697 = vpop.f32.mrb[0].mxu0
    %v6698 = vadd.f32 0.0, %v6697
    %v6699 = vpop.f32.mrb[0].mxu0
    %6700 = vmatprep.mubr.bf16.mxu0 0
    %6701 = vmatmul.mubr.bf16.gmra.mrb[0].mxu0 %v6353
    %v6702 = vpop.f32.mrb[0].mxu0
    %v6703 = vadd.f32 0.0, %v6702
    %v6704 = vpop.f32.mrb[0].mxu0
    %v6705 = vpop.f32.mrb[0].mxu0
    %v6706 = vadd.f32 0.0, %v6705
    %v6707 = vpop.f32.mrb[0].mxu0
    %6708 = vmatprep.mubr.bf16.mxu0 0
    %6709 = vmatmul.mubr.bf16.gmra.mrb[0].mxu0 %v6356
    %v6710 = vpop.f32.mrb[0].mxu0
    %v6711 = vadd.f32 0.0, %v6710
    %v6712 = vpop.f32.mrb[0].mxu0
    %v6713 = vpop.f32.mrb[0].mxu0
    %v6714 = vadd.f32 0.0, %v6713
    %v6715 = vpop.f32.mrb[0].mxu0
    %6716 = vmatprep.mubr.bf16.mxu0 0
    %6717 = vmatmul.mubr.bf16.gmra.mrb[0].mxu0 %v6359
    %v6718 = vpop.f32.mrb[0].mxu0
    %v6719 = vadd.f32 0.0, %v6718
    %v6720 = vpop.f32.mrb[0].mxu0
    %v6721 = vpop.f32.mrb[0].mxu0
    %v6722 = vadd.f32 0.0, %v6721
    %v6723 = vpop.f32.mrb[0].mxu0
    %6724 = vdwg.mxu0
    %v6725 = vld [vmem:[#allocation2] sm:$0xff]
    %v6726 = vld [vmem:[#allocation2 + $0x8] sm:$0xff]
    %v6727 = vld [vmem:[#allocation2 + $0x10] sm:$0xff]
    %v6728 = vld [vmem:[#allocation2 + $0x18] sm:$0xff]
    %v6729 = vld [vmem:[#allocation2 + $0x20] sm:$0xff]
    %v6730 = vld [vmem:[#allocation2 + $0x28] sm:$0xff]
    %v6731 = vld [vmem:[#allocation2 + $0x30] sm:$0xff]
    %v6732 = vld [vmem:[#allocation2 + $0x38] sm:$0xff]
    %v6733 = vld [vmem:[#allocation2 + $0x40] sm:$0xff]
    %v6734 = vld [vmem:[#allocation2 + $0x48] sm:$0xff]
    %v6735 = vld [vmem:[#allocation2 + $0x50] sm:$0xff]
    %v6736 = vld [vmem:[#allocation2 + $0x58] sm:$0xff]
    %v6737 = vld [vmem:[#allocation2 + $0x60] sm:$0xff]
    %v6738 = vld [vmem:[#allocation2 + $0x68] sm:$0xff]
    %v6739 = vld [vmem:[#allocation2 + $0x70] sm:$0xff]
    %v6740 = vld [vmem:[#allocation2 + $0x78] sm:$0xff]
    %v6741 = vld [vmem:[#allocation2 + $0x80] sm:$0xff]
    %v6742 = vld [vmem:[#allocation2 + $0x88] sm:$0xff]
    %v6743 = vld [vmem:[#allocation2 + $0x90] sm:$0xff]
    %v6744 = vld [vmem:[#allocation2 + $0x98] sm:$0xff]
    %v6745 = vld [vmem:[#allocation2 + $0xa0] sm:$0xff]
    %v6746 = vld [vmem:[#allocation2 + $0xa8] sm:$0xff]
    %v6747 = vld [vmem:[#allocation2 + $0xb0] sm:$0xff]
    %v6748 = vld [vmem:[#allocation2 + $0xb8] sm:$0xff]
    %v6749 = vld [vmem:[#allocation2 + $0xc0] sm:$0xff]
    %v6750 = vld [vmem:[#allocation2 + $0xc8] sm:$0xff]
    %v6751 = vld [vmem:[#allocation2 + $0xd0] sm:$0xff]
    %v6752 = vld [vmem:[#allocation2 + $0xd8] sm:$0xff]
    %v6753 = vld [vmem:[#allocation2 + $0xe0] sm:$0xff]
    %v6754 = vld [vmem:[#allocation2 + $0xe8] sm:$0xff]
    %v6755 = vld [vmem:[#allocation2 + $0xf0] sm:$0xff]
    %v6756 = vld [vmem:[#allocation2 + $0xf8] sm:$0xff]
    %v6757 = vld [vmem:[#allocation2 + $0x100] sm:$0xff]
    %v6758 = vld [vmem:[#allocation2 + $0x108] sm:$0xff]
    %v6759 = vld [vmem:[#allocation2 + $0x110] sm:$0xff]
    %v6760 = vld [vmem:[#allocation2 + $0x118] sm:$0xff]
    %v6761 = vld [vmem:[#allocation2 + $0x120] sm:$0xff]
    %v6762 = vld [vmem:[#allocation2 + $0x128] sm:$0xff]
    %v6763 = vld [vmem:[#allocation2 + $0x130] sm:$0xff]
    %v6764 = vld [vmem:[#allocation2 + $0x138] sm:$0xff]
    %v6765 = vld [vmem:[#allocation2 + $0x140] sm:$0xff]
    %v6766 = vld [vmem:[#allocation2 + $0x148] sm:$0xff]
    %v6767 = vld [vmem:[#allocation2 + $0x150] sm:$0xff]
    %v6768 = vld [vmem:[#allocation2 + $0x158] sm:$0xff]
    %v6769 = vld [vmem:[#allocation2 + $0x160] sm:$0xff]
    %v6770 = vld [vmem:[#allocation2 + $0x168] sm:$0xff]
    %v6771 = vld [vmem:[#allocation2 + $0x170] sm:$0xff]
    %v6772 = vld [vmem:[#allocation2 + $0x178] sm:$0xff]
    %v6773 = vld [vmem:[#allocation2 + $0x180] sm:$0xff]
    %v6774 = vld [vmem:[#allocation2 + $0x188] sm:$0xff]
    %v6775 = vld [vmem:[#allocation2 + $0x190] sm:$0xff]
    %v6776 = vld [vmem:[#allocation2 + $0x198] sm:$0xff]
    %v6777 = vld [vmem:[#allocation2 + $0x1a0] sm:$0xff]
    %v6778 = vld [vmem:[#allocation2 + $0x1a8] sm:$0xff]
    %v6779 = vld [vmem:[#allocation2 + $0x1b0] sm:$0xff]
    %v6780 = vld [vmem:[#allocation2 + $0x1b8] sm:$0xff]
    %v6781 = vld [vmem:[#allocation2 + $0x1c0] sm:$0xff]
    %v6782 = vld [vmem:[#allocation2 + $0x1c8] sm:$0xff]
    %v6783 = vld [vmem:[#allocation2 + $0x1d0] sm:$0xff]
    %v6784 = vld [vmem:[#allocation2 + $0x1d8] sm:$0xff]
    %v6785 = vld [vmem:[#allocation2 + $0x1e0] sm:$0xff]
    %v6786 = vld [vmem:[#allocation2 + $0x1e8] sm:$0xff]
    %v6787 = vld [vmem:[#allocation2 + $0x1f0] sm:$0xff]
    %v6788 = vld [vmem:[#allocation2 + $0x1f8] sm:$0xff]
    %v6789 = vld [vmem:[#allocation2 + $0x200] sm:$0xff]
    %v6790 = vld [vmem:[#allocation2 + $0x208] sm:$0xff]
    %v6791 = vld [vmem:[#allocation2 + $0x210] sm:$0xff]
    %v6792 = vld [vmem:[#allocation2 + $0x218] sm:$0xff]
    %v6793 = vld [vmem:[#allocation2 + $0x220] sm:$0xff]
    %v6794 = vld [vmem:[#allocation2 + $0x228] sm:$0xff]
    %v6795 = vld [vmem:[#allocation2 + $0x230] sm:$0xff]
    %v6796 = vld [vmem:[#allocation2 + $0x238] sm:$0xff]
    %v6797 = vld [vmem:[#allocation2 + $0x240] sm:$0xff]
    %v6798 = vld [vmem:[#allocation2 + $0x248] sm:$0xff]
    %v6799 = vld [vmem:[#allocation2 + $0x250] sm:$0xff]
    %v6800 = vld [vmem:[#allocation2 + $0x258] sm:$0xff]
    %v6801 = vld [vmem:[#allocation2 + $0x260] sm:$0xff]
    %v6802 = vld [vmem:[#allocation2 + $0x268] sm:$0xff]
    %v6803 = vld [vmem:[#allocation2 + $0x270] sm:$0xff]
    %v6804 = vld [vmem:[#allocation2 + $0x278] sm:$0xff]
    %v6805 = vld [vmem:[#allocation2 + $0x280] sm:$0xff]
    %v6806 = vld [vmem:[#allocation2 + $0x288] sm:$0xff]
    %v6807 = vadd.f32 %v6725, %v6399
    %v6808 = vadd.f32 %v6726, %v6402
    %v6809 = vadd.f32 %v6727, %v6407
    %v6810 = vadd.f32 %v6728, %v6410
    %v6811 = vadd.f32 %v6729, %v6415
    %v6812 = vadd.f32 %v6730, %v6418
    %v6813 = vadd.f32 %v6731, %v6423
    %v6814 = vadd.f32 %v6732, %v6426
    %v6815 = vadd.f32 %v6733, %v6431
    %v6816 = vadd.f32 %v6734, %v6434
    %v6817 = vadd.f32 %v6735, %v6439
    %v6818 = vadd.f32 %v6736, %v6442
    %v6819 = vadd.f32 %v6737, %v6447
    %v6820 = vadd.f32 %v6738, %v6450
    %v6821 = vadd.f32 %v6739, %v6455
    %v6822 = vadd.f32 %v6740, %v6458
    %v6823 = vadd.f32 %v6741, %v6463
    %v6824 = vadd.f32 %v6742, %v6466
    %v6825 = vadd.f32 %v6743, %v6471
    %v6826 = vadd.f32 %v6744, %v6474
    %v6827 = vadd.f32 %v6745, %v6479
    %v6828 = vadd.f32 %v6746, %v6482
    %v6829 = vadd.f32 %v6747, %v6487
    %v6830 = vadd.f32 %v6748, %v6490
    %v6831 = vadd.f32 %v6749, %v6495
    %v6832 = vadd.f32 %v6750, %v6498
    %v6833 = vadd.f32 %v6751, %v6503
    %v6834 = vadd.f32 %v6752, %v6506
    %v6835 = vadd.f32 %v6753, %v6511
    %v6836 = vadd.f32 %v6754, %v6514
    %v6837 = vadd.f32 %v6755, %v6519
    %v6838 = vadd.f32 %v6756, %v6522
    %v6839 = vadd.f32 %v6757, %v6527
    %v6840 = vadd.f32 %v6758, %v6530
    %v6841 = vadd.f32 %v6759, %v6535
    %v6842 = vadd.f32 %v6760, %v6538
    %v6843 = vadd.f32 %v6761, %v6543
    %v6844 = vadd.f32 %v6762, %v6546
    %v6845 = vadd.f32 %v6763, %v6551
    %v6846 = vadd.f32 %v6764, %v6554
    %v6847 = vadd.f32 %v6765, %v6559
    %v6848 = vadd.f32 %v6766, %v6562
    %v6849 = vadd.f32 %v6767, %v6567
    %v6850 = vadd.f32 %v6768, %v6570
    %v6851 = vadd.f32 %v6769, %v6575
    %v6852 = vadd.f32 %v6770, %v6578
    %v6853 = vadd.f32 %v6771, %v6583
    %v6854 = vadd.f32 %v6772, %v6586
    %v6855 = vadd.f32 %v6773, %v6591
    %v6856 = vadd.f32 %v6774, %v6594
    %v6857 = vadd.f32 %v6775, %v6599
    %v6858 = vadd.f32 %v6776, %v6602
    %v6859 = vadd.f32 %v6777, %v6607
    %v6860 = vadd.f32 %v6778, %v6610
    %v6861 = vadd.f32 %v6779, %v6615
    %v6862 = vadd.f32 %v6780, %v6618
    %v6863 = vadd.f32 %v6781, %v6623
    %v6864 = vadd.f32 %v6782, %v6626
    %v6865 = vadd.f32 %v6783, %v6631
    %v6866 = vadd.f32 %v6784, %v6634
    %v6867 = vadd.f32 %v6785, %v6639
    %v6868 = vadd.f32 %v6786, %v6642
    %v6869 = vadd.f32 %v6787, %v6647
    %v6870 = vadd.f32 %v6788, %v6650
    %v6871 = vadd.f32 %v6789, %v6655
    %v6872 = vadd.f32 %v6790, %v6658
    %v6873 = vadd.f32 %v6791, %v6663
    %v6874 = vadd.f32 %v6792, %v6666
    %v6875 = vadd.f32 %v6793, %v6671
    %v6876 = vadd.f32 %v6794, %v6674
    %v6877 = vadd.f32 %v6795, %v6679
    %v6878 = vadd.f32 %v6796, %v6682
    %v6879 = vadd.f32 %v6797, %v6687
    %v6880 = vadd.f32 %v6798, %v6690
    %v6881 = vadd.f32 %v6799, %v6695
    %v6882 = vadd.f32 %v6800, %v6698
    %v6883 = vadd.f32 %v6801, %v6703
    %v6884 = vadd.f32 %v6802, %v6706
    %v6885 = vadd.f32 %v6803, %v6711
    %v6886 = vadd.f32 %v6804, %v6714
    %v6887 = vadd.f32 %v6805, %v6719
    %v6888 = vadd.f32 %v6806, %v6722
    %6889 = vst [vmem:[#allocation2] sm:$0xff] %v6807
    %6890 = vst [vmem:[#allocation2 + $0x8] sm:$0xff] %v6808
    %6891 = vst [vmem:[#allocation2 + $0x10] sm:$0xff] %v6809
    %6892 = vst [vmem:[#allocation2 + $0x18] sm:$0xff] %v6810
    %6893 = vst [vmem:[#allocation2 + $0x20] sm:$0xff] %v6811
    %6894 = vst [vmem:[#allocation2 + $0x28] sm:$0xff] %v6812
    %6895 = vst [vmem:[#allocation2 + $0x30] sm:$0xff] %v6813
    %6896 = vst [vmem:[#allocation2 + $0x38] sm:$0xff] %v6814
    %6897 = vst [vmem:[#allocation2 + $0x40] sm:$0xff] %v6815
    %6898 = vst [vmem:[#allocation2 + $0x48] sm:$0xff] %v6816
    %6899 = vst [vmem:[#allocation2 + $0x50] sm:$0xff] %v6817
    %6900 = vst [vmem:[#allocation2 + $0x58] sm:$0xff] %v6818
    %6901 = vst [vmem:[#allocation2 + $0x60] sm:$0xff] %v6819
    %6902 = vst [vmem:[#allocation2 + $0x68] sm:$0xff] %v6820
    %6903 = vst [vmem:[#allocation2 + $0x70] sm:$0xff] %v6821
    %6904 = vst [vmem:[#allocation2 + $0x78] sm:$0xff] %v6822
    %6905 = vst [vmem:[#allocation2 + $0x80] sm:$0xff] %v6823
    %6906 = vst [vmem:[#allocation2 + $0x88] sm:$0xff] %v6824
    %6907 = vst [vmem:[#allocation2 + $0x90] sm:$0xff] %v6825
    %6908 = vst [vmem:[#allocation2 + $0x98] sm:$0xff] %v6826
    %6909 = vst [vmem:[#allocation2 + $0xa0] sm:$0xff] %v6827
    %6910 = vst [vmem:[#allocation2 + $0xa8] sm:$0xff] %v6828
    %6911 = vst [vmem:[#allocation2 + $0xb0] sm:$0xff] %v6829
    %6912 = vst [vmem:[#allocation2 + $0xb8] sm:$0xff] %v6830
    %6913 = vst [vmem:[#allocation2 + $0xc0] sm:$0xff] %v6831
    %6914 = vst [vmem:[#allocation2 + $0xc8] sm:$0xff] %v6832
    %6915 = vst [vmem:[#allocation2 + $0xd0] sm:$0xff] %v6833
    %6916 = vst [vmem:[#allocation2 + $0xd8] sm:$0xff] %v6834
    %6917 = vst [vmem:[#allocation2 + $0xe0] sm:$0xff] %v6835
    %6918 = vst [vmem:[#allocation2 + $0xe8] sm:$0xff] %v6836
    %6919 = vst [vmem:[#allocation2 + $0xf0] sm:$0xff] %v6837
    %6920 = vst [vmem:[#allocation2 + $0xf8] sm:$0xff] %v6838
    %6921 = vst [vmem:[#allocation2 + $0x100] sm:$0xff] %v6839
    %6922 = vst [vmem:[#allocation2 + $0x108] sm:$0xff] %v6840
    %6923 = vst [vmem:[#allocation2 + $0x110] sm:$0xff] %v6841
    %6924 = vst [vmem:[#allocation2 + $0x118] sm:$0xff] %v6842
    %6925 = vst [vmem:[#allocation2 + $0x120] sm:$0xff] %v6843
    %6926 = vst [vmem:[#allocation2 + $0x128] sm:$0xff] %v6844
    %6927 = vst [vmem:[#allocation2 + $0x130] sm:$0xff] %v6845
    %6928 = vst [vmem:[#allocation2 + $0x138] sm:$0xff] %v6846
    %6929 = vst [vmem:[#allocation2 + $0x140] sm:$0xff] %v6847
    %6930 = vst [vmem:[#allocation2 + $0x148] sm:$0xff] %v6848
    %6931 = vst [vmem:[#allocation2 + $0x150] sm:$0xff] %v6849
    %6932 = vst [vmem:[#allocation2 + $0x158] sm:$0xff] %v6850
    %6933 = vst [vmem:[#allocation2 + $0x160] sm:$0xff] %v6851
    %6934 = vst [vmem:[#allocation2 + $0x168] sm:$0xff] %v6852
    %6935 = vst [vmem:[#allocation2 + $0x170] sm:$0xff] %v6853
    %6936 = vst [vmem:[#allocation2 + $0x178] sm:$0xff] %v6854
    %6937 = vst [vmem:[#allocation2 + $0x180] sm:$0xff] %v6855
    %6938 = vst [vmem:[#allocation2 + $0x188] sm:$0xff] %v6856
    %6939 = vst [vmem:[#allocation2 + $0x190] sm:$0xff] %v6857
    %6940 = vst [vmem:[#allocation2 + $0x198] sm:$0xff] %v6858
    %6941 = vst [vmem:[#allocation2 + $0x1a0] sm:$0xff] %v6859
    %6942 = vst [vmem:[#allocation2 + $0x1a8] sm:$0xff] %v6860
    %6943 = vst [vmem:[#allocation2 + $0x1b0] sm:$0xff] %v6861
    %6944 = vst [vmem:[#allocation2 + $0x1b8] sm:$0xff] %v6862
    %6945 = vst [vmem:[#allocation2 + $0x1c0] sm:$0xff] %v6863
    %6946 = vst [vmem:[#allocation2 + $0x1c8] sm:$0xff] %v6864
    %6947 = vst [vmem:[#allocation2 + $0x1d0] sm:$0xff] %v6865
    %6948 = vst [vmem:[#allocation2 + $0x1d8] sm:$0xff] %v6866
    %6949 = vst [vmem:[#allocation2 + $0x1e0] sm:$0xff] %v6867
    %6950 = vst [vmem:[#allocation2 + $0x1e8] sm:$0xff] %v6868
    %6951 = vst [vmem:[#allocation2 + $0x1f0] sm:$0xff] %v6869
    %6952 = vst [vmem:[#allocation2 + $0x1f8] sm:$0xff] %v6870
    %6953 = vst [vmem:[#allocation2 + $0x200] sm:$0xff] %v6871
    %6954 = vst [vmem:[#allocation2 + $0x208] sm:$0xff] %v6872
    %6955 = vst [vmem:[#allocation2 + $0x210] sm:$0xff] %v6873
    %6956 = vst [vmem:[#allocation2 + $0x218] sm:$0xff] %v6874
    %6957 = vst [vmem:[#allocation2 + $0x220] sm:$0xff] %v6875
    %6958 = vst [vmem:[#allocation2 + $0x228] sm:$0xff] %v6876
    %6959 = vst [vmem:[#allocation2 + $0x230] sm:$0xff] %v6877
    %6960 = vst [vmem:[#allocation2 + $0x238] sm:$0xff] %v6878
    %6961 = vst [vmem:[#allocation2 + $0x240] sm:$0xff] %v6879
    %6962 = vst [vmem:[#allocation2 + $0x248] sm:$0xff] %v6880
    %6963 = vst [vmem:[#allocation2 + $0x250] sm:$0xff] %v6881
    %6964 = vst [vmem:[#allocation2 + $0x258] sm:$0xff] %v6882
    %6965 = vst [vmem:[#allocation2 + $0x260] sm:$0xff] %v6883
    %6966 = vst [vmem:[#allocation2 + $0x268] sm:$0xff] %v6884
    %6967 = vst [vmem:[#allocation2 + $0x270] sm:$0xff] %v6885
    %6968 = vst [vmem:[#allocation2 + $0x278] sm:$0xff] %v6886
    %6969 = vst [vmem:[#allocation2 + $0x280] sm:$0xff] %v6887
    %6970 = vst [vmem:[#allocation2 + $0x288] sm:$0xff] %v6888
    %v6971 = vld [vmem:[%s0 + $0x10] sm:$0xc]
    %v6972 = vld [vmem:[%s0 + $0x14] sm:$0xf]
    %v6973 = vld [vmem:[%s0 + $0x18] sm:$0xf]
    %v6974 = vld [vmem:[%s0 + $0x1c] sm:$0xf]
    %v6975 = vld [vmem:[%s0 + $0x20] sm:$0xf]
    %v6976 = vld [vmem:[%s0 + $0x24] sm:$0xf]
    %v6977 = vld [vmem:[%s0 + $0x28] sm:$0xf]
    %v6978 = vld [vmem:[%s0 + $0x2c] sm:$0xf]
    %v6979 = vld [vmem:[%s0 + $0x30] sm:$0xf]
    %v6980 = vld [vmem:[%s0 + $0x34] sm:$0xf]
    %v6981 = vld [vmem:[%s0 + $0x38] sm:$0xf]
    %v6982 = vld [vmem:[%s0 + $0x3c] sm:$0xf]
    %v6983 = vld [vmem:[%s0 + $0x40] sm:$0xf]
    %v6984 = vld [vmem:[%s0 + $0x44] sm:$0xf]
    %v6985 = vld [vmem:[%s0 + $0x48] sm:$0xf]
    %v6986 = vld [vmem:[%s0 + $0x4c] sm:$0xf]
    %v6987 = vld [vmem:[%s0 + $0x50] sm:$0xf]
    %v6988 = vld [vmem:[%s0 + $0x54] sm:$0xf]
    %v6989 = vld [vmem:[%s0 + $0x58] sm:$0xf]
    %v6990 = vld [vmem:[%s0 + $0x5c] sm:$0xf]
    %v6991 = vld [vmem:[%s0 + $0x60] sm:$0xf]
    %v6992 = vld [vmem:[%s0 + $0x64] sm:$0xf]
    %v6993 = vld [vmem:[%s0 + $0x68] sm:$0xf]
    %v6994 = vld [vmem:[%s0 + $0x6c] sm:$0xf]
    %v6995 = vld [vmem:[%s0 + $0x70] sm:$0xf]
    %v6996 = vld [vmem:[%s0 + $0x74] sm:$0xf]
    %v6997 = vld [vmem:[%s0 + $0x78] sm:$0xf]
    %v6998 = vld [vmem:[%s0 + $0x7c] sm:$0xf]
    %v6999 = vld [vmem:[%s0 + $0x80] sm:$0xf]
    %v7000 = vld [vmem:[%s0 + $0x84] sm:$0xf]
    %v7001 = vld [vmem:[%s0 + $0x88] sm:$0xf]
    %v7002 = vld [vmem:[%s0 + $0x8c] sm:$0xf]
    %v7003 = vld [vmem:[%s0 + $0x90] sm:$0xf]
    %v7004 = vld [vmem:[%s0 + $0x94] sm:$0xf]
    %v7005 = vld [vmem:[%s0 + $0x98] sm:$0xf]
    %v7006 = vld [vmem:[%s0 + $0x9c] sm:$0xf]
    %v7007 = vld [vmem:[%s0 + $0xa0] sm:$0xf]
    %v7008 = vld [vmem:[%s0 + $0xa4] sm:$0xf]
    %v7009 = vld [vmem:[%s0 + $0xa8] sm:$0xf]
    %v7010 = vld [vmem:[%s0 + $0xac] sm:$0xf]
    %v7011 = vld [vmem:[%s0 + $0xb0] sm:$0xf]
    %v7012 = vld [vmem:[%s0 + $0xb4] sm:$0xf]
    %v7013 = vld [vmem:[%s0 + $0xb8] sm:$0xf]
    %v7014 = vld [vmem:[%s0 + $0xbc] sm:$0xf]
    %v7015 = vld [vmem:[%s0 + $0xc0] sm:$0xf]
    %v7016 = vld [vmem:[%s0 + $0xc4] sm:$0xf]
    %v7017 = vld [vmem:[%s0 + $0xc8] sm:$0xf]
    %v7018 = vld [vmem:[%s0 + $0xcc] sm:$0xf]
    %v7019 = vld [vmem:[%s0 + $0xd0] sm:$0xf]
    %v7020 = vld [vmem:[%s0 + $0xd4] sm:$0xf]
    %v7021 = vld [vmem:[%s0 + $0xd8] sm:$0xf]
    %v7022 = vld [vmem:[%s0 + $0xdc] sm:$0xf]
    %v7023 = vld [vmem:[%s0 + $0xe0] sm:$0xf]
    %v7024 = vld [vmem:[%s0 + $0xe4] sm:$0xf]
    %v7025 = vld [vmem:[%s0 + $0xe8] sm:$0xf]
    %v7026 = vld [vmem:[%s0 + $0xec] sm:$0xf]
    %v7027 = vld [vmem:[%s0 + $0xf0] sm:$0xf]
    %v7028 = vld [vmem:[%s0 + $0xf4] sm:$0xf]
    %v7029 = vld [vmem:[%s0 + $0xf8] sm:$0xf]
    %v7030 = vld [vmem:[%s0 + $0xfc] sm:$0xf]
    %v7031 = vld [vmem:[%s0 + $0x100] sm:$0xf]
    %v7032 = vld [vmem:[%s0 + $0x104] sm:$0xf]
    %v7033 = vld [vmem:[%s0 + $0x108] sm:$0xf]
    %v7034 = vld [vmem:[%s0 + $0x10c] sm:$0xf]
    %v7035 = vld [vmem:[%s0 + $0x110] sm:$0xf]
    %v7036 = vld [vmem:[%s0 + $0x114] sm:$0xf]
    %v7037 = vld [vmem:[%s0 + $0x118] sm:$0xf]
    %v7038 = vld [vmem:[%s0 + $0x11c] sm:$0xf]
    %v7039 = vld [vmem:[%s0 + $0x120] sm:$0xf]
    %v7040 = vld [vmem:[%s0 + $0x124] sm:$0xf]
    %v7041 = vld [vmem:[%s0 + $0x128] sm:$0xf]
    %v7042 = vld [vmem:[%s0 + $0x12c] sm:$0xf]
    %v7043 = vld [vmem:[%s0 + $0x130] sm:$0xf]
    %v7044 = vld [vmem:[%s0 + $0x134] sm:$0xf]
    %v7045 = vld [vmem:[%s0 + $0x138] sm:$0xf]
    %v7046 = vld [vmem:[%s0 + $0x13c] sm:$0xf]
    %v7047 = vld [vmem:[%s0 + $0x140] sm:$0xf]
    %v7048 = vld [vmem:[%s0 + $0x144] sm:$0xf]
    %v7049 = vld [vmem:[%s0 + $0x148] sm:$0xf]
    %v7050 = vld [vmem:[%s0 + $0x14c] sm:$0xf]
    %v7051 = vld [vmem:[%s0 + $0x150] sm:$0xf]
    %v7052 = vld [vmem:[%s0 + $0x154] sm:$0xf]
    %v7053 = vld [vmem:[%s0 + $0x158] sm:$0x3]
    %v7054 = vld [vmem:[%s1 + $0x18] sm:$0xf]
    %v7138 = vunpack.c.l.b16 %v6971
    %v7139 = vunpack.c.l.b16 %v6972
    %v7140 = vunpack.c.l.b16 %v6973
    %v7141 = vunpack.c.l.b16 %v6974
    %v7142 = vunpack.c.l.b16 %v6975
    %v7143 = vunpack.c.l.b16 %v6976
    %v7144 = vunpack.c.l.b16 %v6977
    %v7145 = vunpack.c.l.b16 %v6978
    %v7146 = vunpack.c.l.b16 %v6979
    %v7147 = vunpack.c.l.b16 %v6980
    %v7148 = vunpack.c.l.b16 %v6981
    %v7149 = vunpack.c.l.b16 %v6982
    %v7150 = vunpack.c.l.b16 %v6983
    %v7151 = vunpack.c.l.b16 %v6984
    %v7152 = vunpack.c.l.b16 %v6985
    %v7153 = vunpack.c.l.b16 %v6986
    %v7154 = vunpack.c.l.b16 %v6987
    %v7155 = vunpack.c.l.b16 %v6988
    %v7156 = vunpack.c.l.b16 %v6989
    %v7157 = vunpack.c.l.b16 %v6990
    %v7158 = vunpack.c.l.b16 %v6991
    %v7159 = vunpack.c.l.b16 %v6992
    %v7160 = vunpack.c.l.b16 %v6993
    %v7161 = vunpack.c.l.b16 %v6994
    %v7162 = vunpack.c.l.b16 %v6995
    %v7163 = vunpack.c.l.b16 %v6996
    %v7164 = vunpack.c.l.b16 %v6997
    %v7165 = vunpack.c.l.b16 %v6998
    %v7166 = vunpack.c.l.b16 %v6999
    %v7167 = vunpack.c.l.b16 %v7000
    %v7168 = vunpack.c.l.b16 %v7001
    %v7169 = vunpack.c.l.b16 %v7002
    %v7170 = vunpack.c.l.b16 %v7003
    %v7171 = vunpack.c.l.b16 %v7004
    %v7172 = vunpack.c.l.b16 %v7005
    %v7173 = vunpack.c.l.b16 %v7006
    %v7174 = vunpack.c.l.b16 %v7007
    %v7175 = vunpack.c.l.b16 %v7008
    %v7176 = vunpack.c.l.b16 %v7009
    %v7177 = vunpack.c.l.b16 %v7010
    %v7178 = vunpack.c.l.b16 %v7011
    %v7179 = vunpack.c.l.b16 %v7012
    %v7180 = vunpack.c.l.b16 %v7013
    %v7181 = vunpack.c.l.b16 %v7014
    %v7182 = vunpack.c.l.b16 %v7015
    %v7183 = vunpack.c.l.b16 %v7016
    %v7184 = vunpack.c.l.b16 %v7017
    %v7185 = vunpack.c.l.b16 %v7018
    %v7186 = vunpack.c.l.b16 %v7019
    %v7187 = vunpack.c.l.b16 %v7020
    %v7188 = vunpack.c.l.b16 %v7021
    %v7189 = vunpack.c.l.b16 %v7022
    %v7190 = vunpack.c.l.b16 %v7023
    %v7191 = vunpack.c.l.b16 %v7024
    %v7192 = vunpack.c.l.b16 %v7025
    %v7193 = vunpack.c.l.b16 %v7026
    %v7194 = vunpack.c.l.b16 %v7027
    %v7195 = vunpack.c.l.b16 %v7028
    %v7196 = vunpack.c.l.b16 %v7029
    %v7197 = vunpack.c.l.b16 %v7030
    %v7198 = vunpack.c.l.b16 %v7031
    %v7199 = vunpack.c.l.b16 %v7032
    %v7200 = vunpack.c.l.b16 %v7033
    %v7201 = vunpack.c.l.b16 %v7034
    %v7202 = vunpack.c.l.b16 %v7035
    %v7203 = vunpack.c.l.b16 %v7036
    %v7204 = vunpack.c.l.b16 %v7037
    %v7205 = vunpack.c.l.b16 %v7038
    %v7206 = vunpack.c.l.b16 %v7039
    %v7207 = vunpack.c.l.b16 %v7040
    %v7208 = vunpack.c.l.b16 %v7041
    %v7209 = vunpack.c.l.b16 %v7042
    %v7210 = vunpack.c.l.b16 %v7043
    %v7211 = vunpack.c.l.b16 %v7044
    %v7212 = vunpack.c.l.b16 %v7045
    %v7213 = vunpack.c.l.b16 %v7046
    %v7214 = vunpack.c.l.b16 %v7047
    %v7215 = vunpack.c.l.b16 %v7048
    %v7216 = vunpack.c.l.b16 %v7049
    %v7217 = vunpack.c.l.b16 %v7050
    %v7218 = vunpack.c.l.b16 %v7051
    %v7219 = vunpack.c.l.b16 %v7052
    %v7220 = vunpack.c.l.b16 %v7053
    %v7221 = vpack.c.b16 %v7139, %v7138
    %v7222 = vpack.c.b16 %v7141, %v7140
    %v7223 = vpack.c.b16 %v7143, %v7142
    %v7224 = vpack.c.b16 %v7145, %v7144
    %v7225 = vpack.c.b16 %v7147, %v7146
    %v7226 = vpack.c.b16 %v7149, %v7148
    %v7227 = vpack.c.b16 %v7151, %v7150
    %v7228 = vpack.c.b16 %v7153, %v7152
    %v7229 = vpack.c.b16 %v7155, %v7154
    %v7230 = vpack.c.b16 %v7157, %v7156
    %v7231 = vpack.c.b16 %v7159, %v7158
    %v7232 = vpack.c.b16 %v7161, %v7160
    %v7233 = vpack.c.b16 %v7163, %v7162
    %v7234 = vpack.c.b16 %v7165, %v7164
    %v7235 = vpack.c.b16 %v7167, %v7166
    %v7236 = vpack.c.b16 %v7169, %v7168
    %v7237 = vpack.c.b16 %v7171, %v7170
    %v7238 = vpack.c.b16 %v7173, %v7172
    %v7239 = vpack.c.b16 %v7175, %v7174
    %v7240 = vpack.c.b16 %v7177, %v7176
    %v7241 = vpack.c.b16 %v7179, %v7178
    %v7242 = vpack.c.b16 %v7181, %v7180
    %v7243 = vpack.c.b16 %v7183, %v7182
    %v7244 = vpack.c.b16 %v7185, %v7184
    %v7245 = vpack.c.b16 %v7187, %v7186
    %v7246 = vpack.c.b16 %v7189, %v7188
    %v7247 = vpack.c.b16 %v7191, %v7190
    %v7248 = vpack.c.b16 %v7193, %v7192
    %v7249 = vpack.c.b16 %v7195, %v7194
    %v7250 = vpack.c.b16 %v7197, %v7196
    %v7251 = vpack.c.b16 %v7199, %v7198
    %v7252 = vpack.c.b16 %v7201, %v7200
    %v7253 = vpack.c.b16 %v7203, %v7202
    %v7254 = vpack.c.b16 %v7205, %v7204
    %v7255 = vpack.c.b16 %v7207, %v7206
    %v7256 = vpack.c.b16 %v7209, %v7208
    %v7257 = vpack.c.b16 %v7211, %v7210
    %v7258 = vpack.c.b16 %v7213, %v7212
    %v7259 = vpack.c.b16 %v7215, %v7214
    %v7260 = vpack.c.b16 %v7217, %v7216
    %v7261 = vpack.c.b16 %v7219, %v7218
    %v7262 = vpack.c.b16 %v7220, %v7220
    %v7263 = vrot.slane %v7221, 2
    %v7264 = vrot.slane %v7222, 2
    %v7265 = vsel %vm6154, %v7263, %v7264
    %v7266 = vrot.slane %v7223, 2
    %v7267 = vsel %vm6154, %v7264, %v7266
    %v7268 = vrot.slane %v7224, 2
    %v7269 = vsel %vm6154, %v7266, %v7268
    %v7270 = vrot.slane %v7225, 2
    %v7271 = vsel %vm6154, %v7268, %v7270
    %v7272 = vrot.slane %v7226, 2
    %v7273 = vsel %vm6154, %v7270, %v7272
    %v7274 = vrot.slane %v7227, 2
    %v7275 = vsel %vm6154, %v7272, %v7274
    %v7276 = vrot.slane %v7228, 2
    %v7277 = vsel %vm6154, %v7274, %v7276
    %v7278 = vrot.slane %v7229, 2
    %v7279 = vsel %vm6154, %v7276, %v7278
    %v7280 = vrot.slane %v7230, 2
    %v7281 = vsel %vm6154, %v7278, %v7280
    %v7282 = vrot.slane %v7231, 2
    %v7283 = vsel %vm6154, %v7280, %v7282
    %v7284 = vrot.slane %v7232, 2
    %v7285 = vsel %vm6154, %v7282, %v7284
    %v7286 = vrot.slane %v7233, 2
    %v7287 = vsel %vm6154, %v7284, %v7286
    %v7288 = vrot.slane %v7234, 2
    %v7289 = vsel %vm6154, %v7286, %v7288
    %v7290 = vrot.slane %v7235, 2
    %v7291 = vsel %vm6154, %v7288, %v7290
    %v7292 = vrot.slane %v7236, 2
    %v7293 = vsel %vm6154, %v7290, %v7292
    %v7294 = vrot.slane %v7237, 2
    %v7295 = vsel %vm6154, %v7292, %v7294
    %v7296 = vrot.slane %v7238, 2
    %v7297 = vsel %vm6154, %v7294, %v7296
    %v7298 = vrot.slane %v7239, 2
    %v7299 = vsel %vm6154, %v7296, %v7298
    %v7300 = vrot.slane %v7240, 2
    %v7301 = vsel %vm6154, %v7298, %v7300
    %v7302 = vrot.slane %v7241, 2
    %v7303 = vsel %vm6154, %v7300, %v7302
    %v7304 = vrot.slane %v7242, 2
    %v7305 = vsel %vm6154, %v7302, %v7304
    %v7306 = vrot.slane %v7243, 2
    %v7307 = vsel %vm6154, %v7304, %v7306
    %v7308 = vrot.slane %v7244, 2
    %v7309 = vsel %vm6154, %v7306, %v7308
    %v7310 = vrot.slane %v7245, 2
    %v7311 = vsel %vm6154, %v7308, %v7310
    %v7312 = vrot.slane %v7246, 2
    %v7313 = vsel %vm6154, %v7310, %v7312
    %v7314 = vrot.slane %v7247, 2
    %v7315 = vsel %vm6154, %v7312, %v7314
    %v7316 = vrot.slane %v7248, 2
    %v7317 = vsel %vm6154, %v7314, %v7316
    %v7318 = vrot.slane %v7249, 2
    %v7319 = vsel %vm6154, %v7316, %v7318
    %v7320 = vrot.slane %v7250, 2
    %v7321 = vsel %vm6154, %v7318, %v7320
    %v7322 = vrot.slane %v7251, 2
    %v7323 = vsel %vm6154, %v7320, %v7322
    %v7324 = vrot.slane %v7252, 2
    %v7325 = vsel %vm6154, %v7322, %v7324
    %v7326 = vrot.slane %v7253, 2
    %v7327 = vsel %vm6154, %v7324, %v7326
    %v7328 = vrot.slane %v7254, 2
    %v7329 = vsel %vm6154, %v7326, %v7328
    %v7330 = vrot.slane %v7255, 2
    %v7331 = vsel %vm6154, %v7328, %v7330
    %v7332 = vrot.slane %v7256, 2
    %v7333 = vsel %vm6154, %v7330, %v7332
    %v7334 = vrot.slane %v7257, 2
    %v7335 = vsel %vm6154, %v7332, %v7334
    %v7336 = vrot.slane %v7258, 2
    %v7337 = vsel %vm6154, %v7334, %v7336
    %v7338 = vrot.slane %v7259, 2
    %v7339 = vsel %vm6154, %v7336, %v7338
    %v7340 = vrot.slane %v7260, 2
    %v7341 = vsel %vm6154, %v7338, %v7340
    %v7342 = vrot.slane %v7261, 2
    %v7343 = vsel %vm6154, %v7340, %v7342
    %v7344 = vrot.slane %v7262, 2
    %v7345 = vsel %vm6154, %v7342, %v7344
    %v7347 = vsel %vm313, %v7265, 0
    %v7350 = vsel %vm313, %v7267, 0
    %v7353 = vsel %vm313, %v7269, 0
    %v7356 = vsel %vm313, %v7271, 0
    %v7359 = vsel %vm313, %v7273, 0
    %v7362 = vsel %vm313, %v7275, 0
    %v7365 = vsel %vm313, %v7277, 0
    %v7368 = vsel %vm313, %v7279, 0
    %v7371 = vsel %vm313, %v7281, 0
    %v7374 = vsel %vm313, %v7283, 0
    %v7377 = vsel %vm313, %v7285, 0
    %v7380 = vsel %vm313, %v7287, 0
    %v7383 = vsel %vm313, %v7289, 0
    %v7386 = vsel %vm313, %v7291, 0
    %v7389 = vsel %vm313, %v7293, 0
    %v7392 = vsel %vm313, %v7295, 0
    %v7395 = vsel %vm313, %v7297, 0
    %v7398 = vsel %vm313, %v7299, 0
    %v7401 = vsel %vm313, %v7301, 0
    %v7404 = vsel %vm313, %v7303, 0
    %v7407 = vsel %vm313, %v7305, 0
    %v7410 = vsel %vm313, %v7307, 0
    %v7413 = vsel %vm313, %v7309, 0
    %v7416 = vsel %vm313, %v7311, 0
    %v7419 = vsel %vm313, %v7313, 0
    %v7422 = vsel %vm313, %v7315, 0
    %v7425 = vsel %vm313, %v7317, 0
    %v7428 = vsel %vm313, %v7319, 0
    %v7431 = vsel %vm313, %v7321, 0
    %v7434 = vsel %vm313, %v7323, 0
    %v7437 = vsel %vm313, %v7325, 0
    %v7440 = vsel %vm313, %v7327, 0
    %v7443 = vsel %vm313, %v7329, 0
    %v7446 = vsel %vm313, %v7331, 0
    %v7449 = vsel %vm313, %v7333, 0
    %v7452 = vsel %vm313, %v7335, 0
    %v7455 = vsel %vm313, %v7337, 0
    %v7458 = vsel %vm313, %v7339, 0
    %v7461 = vsel %vm313, %v7341, 0
    %v7464 = vsel %vm313, %v7343, 0
    %v7467 = vsel %vm313, %v7345, 0
    %v7470 = vsel %vm437, %v7054, 0
    %7472 = vmatprep.subr.bf16.mxu0 0
    %7473 = vmatpush1.bf16.msra.mxu0 %v7470
    %7474 = vmatprep.subr.bf16.mxu0 0
    %7475 = vmatpush1.bf16.msra.mxu0 0
    %7476 = vmatprep.subr.bf16.mxu0 0
    %7477 = vmatpush1.bf16.msra.mxu0 0
    %7478 = vmatprep.subr.bf16.mxu0 0
    %7479 = vmatpush1.bf16.msra.mxu0 0
    %7480 = vmatprep.subr.bf16.mxu0 0
    %7481 = vmatpush1.bf16.msra.mxu0 0
    %7482 = vmatprep.subr.bf16.mxu0 0
    %7483 = vmatpush1.bf16.msra.mxu0 0
    %7484 = vmatprep.subr.bf16.mxu0 0
    %7485 = vmatpush1.bf16.msra.mxu0 0
    %7486 = vmatprep.subr.bf16.mxu0 0
    %7487 = vmatpush1.bf16.msra.mxu0 0
    %7488 = vmatprep.subr.bf16.mxu0 0
    %7489 = vmatpush1.bf16.msra.mxu0 0
    %7490 = vmatprep.subr.bf16.mxu0 0
    %7491 = vmatpush1.bf16.msra.mxu0 0
    %7492 = vmatprep.subr.bf16.mxu0 0
    %7493 = vmatpush1.bf16.msra.mxu0 0
    %7494 = vmatprep.subr.bf16.mxu0 0
    %7495 = vmatpush1.bf16.msra.mxu0 0
    %7496 = vmatprep.subr.bf16.mxu0 0
    %7497 = vmatpush1.bf16.msra.mxu0 0
    %7498 = vmatprep.subr.bf16.mxu0 0
    %7499 = vmatpush1.bf16.msra.mxu0 0
    %7500 = vmatprep.subr.bf16.mxu0 0
    %7501 = vmatpush1.bf16.msra.mxu0 0
    %7502 = vmatprep.subr.bf16.mxu0 0
    %7503 = vmatpush1.bf16.msra.mxu0 0
    %7504 = vmatprep.mubr.bf16.mxu0 0
    %7505 = vmatmul.mubr.bf16.gmra.mrb[0].mxu0 %v7347
    %v7506 = vpop.f32.mrb[0].mxu0
    %v7507 = vadd.f32 0.0, %v7506
    %v7508 = vpop.f32.mrb[0].mxu0
    %v7509 = vpop.f32.mrb[0].mxu0
    %v7510 = vadd.f32 0.0, %v7509
    %v7511 = vpop.f32.mrb[0].mxu0
    %7512 = vmatprep.mubr.bf16.mxu0 0
    %7513 = vmatmul.mubr.bf16.gmra.mrb[0].mxu0 %v7350
    %v7514 = vpop.f32.mrb[0].mxu0
    %v7515 = vadd.f32 0.0, %v7514
    %v7516 = vpop.f32.mrb[0].mxu0
    %v7517 = vpop.f32.mrb[0].mxu0
    %v7518 = vadd.f32 0.0, %v7517
    %v7519 = vpop.f32.mrb[0].mxu0
    %7520 = vmatprep.mubr.bf16.mxu0 0
    %7521 = vmatmul.mubr.bf16.gmra.mrb[0].mxu0 %v7353
    %v7522 = vpop.f32.mrb[0].mxu0
    %v7523 = vadd.f32 0.0, %v7522
    %v7524 = vpop.f32.mrb[0].mxu0
    %v7525 = vpop.f32.mrb[0].mxu0
    %v7526 = vadd.f32 0.0, %v7525
    %v7527 = vpop.f32.mrb[0].mxu0
    %7528 = vmatprep.mubr.bf16.mxu0 0
    %7529 = vmatmul.mubr.bf16.gmra.mrb[0].mxu0 %v7356
    %v7530 = vpop.f32.mrb[0].mxu0
    %v7531 = vadd.f32 0.0, %v7530
    %v7532 = vpop.f32.mrb[0].mxu0
    %v7533 = vpop.f32.mrb[0].mxu0
    %v7534 = vadd.f32 0.0, %v7533
    %v7535 = vpop.f32.mrb[0].mxu0
    %7536 = vmatprep.mubr.bf16.mxu0 0
    %7537 = vmatmul.mubr.bf16.gmra.mrb[0].mxu0 %v7359
    %v7538 = vpop.f32.mrb[0].mxu0
    %v7539 = vadd.f32 0.0, %v7538
    %v7540 = vpop.f32.mrb[0].mxu0
    %v7541 = vpop.f32.mrb[0].mxu0
    %v7542 = vadd.f32 0.0, %v7541
    %v7543 = vpop.f32.mrb[0].mxu0
    %7544 = vmatprep.mubr.bf16.mxu0 0
    %7545 = vmatmul.mubr.bf16.gmra.mrb[0].mxu0 %v7362
    %v7546 = vpop.f32.mrb[0].mxu0
    %v7547 = vadd.f32 0.0, %v7546
    %v7548 = vpop.f32.mrb[0].mxu0
    %v7549 = vpop.f32.mrb[0].mxu0
    %v7550 = vadd.f32 0.0, %v7549
    %v7551 = vpop.f32.mrb[0].mxu0
    %7552 = vmatprep.mubr.bf16.mxu0 0
    %7553 = vmatmul.mubr.bf16.gmra.mrb[0].mxu0 %v7365
    %v7554 = vpop.f32.mrb[0].mxu0
    %v7555 = vadd.f32 0.0, %v7554
    %v7556 = vpop.f32.mrb[0].mxu0
    %v7557 = vpop.f32.mrb[0].mxu0
    %v7558 = vadd.f32 0.0, %v7557
    %v7559 = vpop.f32.mrb[0].mxu0
    %7560 = vmatprep.mubr.bf16.mxu0 0
    %7561 = vmatmul.mubr.bf16.gmra.mrb[0].mxu0 %v7368
    %v7562 = vpop.f32.mrb[0].mxu0
    %v7563 = vadd.f32 0.0, %v7562
    %v7564 = vpop.f32.mrb[0].mxu0
    %v7565 = vpop.f32.mrb[0].mxu0
    %v7566 = vadd.f32 0.0, %v7565
    %v7567 = vpop.f32.mrb[0].mxu0
    %7568 = vmatprep.mubr.bf16.mxu0 0
    %7569 = vmatmul.mubr.bf16.gmra.mrb[0].mxu0 %v7371
    %v7570 = vpop.f32.mrb[0].mxu0
    %v7571 = vadd.f32 0.0, %v7570
    %v7572 = vpop.f32.mrb[0].mxu0
    %v7573 = vpop.f32.mrb[0].mxu0
    %v7574 = vadd.f32 0.0, %v7573
    %v7575 = vpop.f32.mrb[0].mxu0
    %7576 = vmatprep.mubr.bf16.mxu0 0
    %7577 = vmatmul.mubr.bf16.gmra.mrb[0].mxu0 %v7374
    %v7578 = vpop.f32.mrb[0].mxu0
    %v7579 = vadd.f32 0.0, %v7578
    %v7580 = vpop.f32.mrb[0].mxu0
    %v7581 = vpop.f32.mrb[0].mxu0
    %v7582 = vadd.f32 0.0, %v7581
    %v7583 = vpop.f32.mrb[0].mxu0
    %7584 = vmatprep.mubr.bf16.mxu0 0
    %7585 = vmatmul.mubr.bf16.gmra.mrb[0].mxu0 %v7377
    %v7586 = vpop.f32.mrb[0].mxu0
    %v7587 = vadd.f32 0.0, %v7586
    %v7588 = vpop.f32.mrb[0].mxu0
    %v7589 = vpop.f32.mrb[0].mxu0
    %v7590 = vadd.f32 0.0, %v7589
    %v7591 = vpop.f32.mrb[0].mxu0
    %7592 = vmatprep.mubr.bf16.mxu0 0
    %7593 = vmatmul.mubr.bf16.gmra.mrb[0].mxu0 %v7380
    %v7594 = vpop.f32.mrb[0].mxu0
    %v7595 = vadd.f32 0.0, %v7594
    %v7596 = vpop.f32.mrb[0].mxu0
    %v7597 = vpop.f32.mrb[0].mxu0
    %v7598 = vadd.f32 0.0, %v7597
    %v7599 = vpop.f32.mrb[0].mxu0
    %7600 = vmatprep.mubr.bf16.mxu0 0
    %7601 = vmatmul.mubr.bf16.gmra.mrb[0].mxu0 %v7383
    %v7602 = vpop.f32.mrb[0].mxu0
    %v7603 = vadd.f32 0.0, %v7602
    %v7604 = vpop.f32.mrb[0].mxu0
    %v7605 = vpop.f32.mrb[0].mxu0
    %v7606 = vadd.f32 0.0, %v7605
    %v7607 = vpop.f32.mrb[0].mxu0
    %7608 = vmatprep.mubr.bf16.mxu0 0
    %7609 = vmatmul.mubr.bf16.gmra.mrb[0].mxu0 %v7386
    %v7610 = vpop.f32.mrb[0].mxu0
    %v7611 = vadd.f32 0.0, %v7610
    %v7612 = vpop.f32.mrb[0].mxu0
    %v7613 = vpop.f32.mrb[0].mxu0
    %v7614 = vadd.f32 0.0, %v7613
    %v7615 = vpop.f32.mrb[0].mxu0
    %7616 = vmatprep.mubr.bf16.mxu0 0
    %7617 = vmatmul.mubr.bf16.gmra.mrb[0].mxu0 %v7389
    %v7618 = vpop.f32.mrb[0].mxu0
    %v7619 = vadd.f32 0.0, %v7618
    %v7620 = vpop.f32.mrb[0].mxu0
    %v7621 = vpop.f32.mrb[0].mxu0
    %v7622 = vadd.f32 0.0, %v7621
    %v7623 = vpop.f32.mrb[0].mxu0
    %7624 = vmatprep.mubr.bf16.mxu0 0
    %7625 = vmatmul.mubr.bf16.gmra.mrb[0].mxu0 %v7392
    %v7626 = vpop.f32.mrb[0].mxu0
    %v7627 = vadd.f32 0.0, %v7626
    %v7628 = vpop.f32.mrb[0].mxu0
    %v7629 = vpop.f32.mrb[0].mxu0
    %v7630 = vadd.f32 0.0, %v7629
    %v7631 = vpop.f32.mrb[0].mxu0
    %7632 = vmatprep.mubr.bf16.mxu0 0
    %7633 = vmatmul.mubr.bf16.gmra.mrb[0].mxu0 %v7395
    %v7634 = vpop.f32.mrb[0].mxu0
    %v7635 = vadd.f32 0.0, %v7634
    %v7636 = vpop.f32.mrb[0].mxu0
    %v7637 = vpop.f32.mrb[0].mxu0
    %v7638 = vadd.f32 0.0, %v7637
    %v7639 = vpop.f32.mrb[0].mxu0
    %7640 = vmatprep.mubr.bf16.mxu0 0
    %7641 = vmatmul.mubr.bf16.gmra.mrb[0].mxu0 %v7398
    %v7642 = vpop.f32.mrb[0].mxu0
    %v7643 = vadd.f32 0.0, %v7642
    %v7644 = vpop.f32.mrb[0].mxu0
    %v7645 = vpop.f32.mrb[0].mxu0
    %v7646 = vadd.f32 0.0, %v7645
    %v7647 = vpop.f32.mrb[0].mxu0
    %7648 = vmatprep.mubr.bf16.mxu0 0
    %7649 = vmatmul.mubr.bf16.gmra.mrb[0].mxu0 %v7401
    %v7650 = vpop.f32.mrb[0].mxu0
    %v7651 = vadd.f32 0.0, %v7650
    %v7652 = vpop.f32.mrb[0].mxu0
    %v7653 = vpop.f32.mrb[0].mxu0
    %v7654 = vadd.f32 0.0, %v7653
    %v7655 = vpop.f32.mrb[0].mxu0
    %7656 = vmatprep.mubr.bf16.mxu0 0
    %7657 = vmatmul.mubr.bf16.gmra.mrb[0].mxu0 %v7404
    %v7658 = vpop.f32.mrb[0].mxu0
    %v7659 = vadd.f32 0.0, %v7658
    %v7660 = vpop.f32.mrb[0].mxu0
    %v7661 = vpop.f32.mrb[0].mxu0
    %v7662 = vadd.f32 0.0, %v7661
    %v7663 = vpop.f32.mrb[0].mxu0
    %7664 = vmatprep.mubr.bf16.mxu0 0
    %7665 = vmatmul.mubr.bf16.gmra.mrb[0].mxu0 %v7407
    %v7666 = vpop.f32.mrb[0].mxu0
    %v7667 = vadd.f32 0.0, %v7666
    %v7668 = vpop.f32.mrb[0].mxu0
    %v7669 = vpop.f32.mrb[0].mxu0
    %v7670 = vadd.f32 0.0, %v7669
    %v7671 = vpop.f32.mrb[0].mxu0
    %7672 = vmatprep.mubr.bf16.mxu0 0
    %7673 = vmatmul.mubr.bf16.gmra.mrb[0].mxu0 %v7410
    %v7674 = vpop.f32.mrb[0].mxu0
    %v7675 = vadd.f32 0.0, %v7674
    %v7676 = vpop.f32.mrb[0].mxu0
    %v7677 = vpop.f32.mrb[0].mxu0
    %v7678 = vadd.f32 0.0, %v7677
    %v7679 = vpop.f32.mrb[0].mxu0
    %7680 = vmatprep.mubr.bf16.mxu0 0
    %7681 = vmatmul.mubr.bf16.gmra.mrb[0].mxu0 %v7413
    %v7682 = vpop.f32.mrb[0].mxu0
    %v7683 = vadd.f32 0.0, %v7682
    %v7684 = vpop.f32.mrb[0].mxu0
    %v7685 = vpop.f32.mrb[0].mxu0
    %v7686 = vadd.f32 0.0, %v7685
    %v7687 = vpop.f32.mrb[0].mxu0
    %7688 = vmatprep.mubr.bf16.mxu0 0
    %7689 = vmatmul.mubr.bf16.gmra.mrb[0].mxu0 %v7416
    %v7690 = vpop.f32.mrb[0].mxu0
    %v7691 = vadd.f32 0.0, %v7690
    %v7692 = vpop.f32.mrb[0].mxu0
    %v7693 = vpop.f32.mrb[0].mxu0
    %v7694 = vadd.f32 0.0, %v7693
    %v7695 = vpop.f32.mrb[0].mxu0
    %7696 = vmatprep.mubr.bf16.mxu0 0
    %7697 = vmatmul.mubr.bf16.gmra.mrb[0].mxu0 %v7419
    %v7698 = vpop.f32.mrb[0].mxu0
    %v7699 = vadd.f32 0.0, %v7698
    %v7700 = vpop.f32.mrb[0].mxu0
    %v7701 = vpop.f32.mrb[0].mxu0
    %v7702 = vadd.f32 0.0, %v7701
    %v7703 = vpop.f32.mrb[0].mxu0
    %7704 = vmatprep.mubr.bf16.mxu0 0
    %7705 = vmatmul.mubr.bf16.gmra.mrb[0].mxu0 %v7422
    %v7706 = vpop.f32.mrb[0].mxu0
    %v7707 = vadd.f32 0.0, %v7706
    %v7708 = vpop.f32.mrb[0].mxu0
    %v7709 = vpop.f32.mrb[0].mxu0
    %v7710 = vadd.f32 0.0, %v7709
    %v7711 = vpop.f32.mrb[0].mxu0
    %7712 = vmatprep.mubr.bf16.mxu0 0
    %7713 = vmatmul.mubr.bf16.gmra.mrb[0].mxu0 %v7425
    %v7714 = vpop.f32.mrb[0].mxu0
    %v7715 = vadd.f32 0.0, %v7714
    %v7716 = vpop.f32.mrb[0].mxu0
    %v7717 = vpop.f32.mrb[0].mxu0
    %v7718 = vadd.f32 0.0, %v7717
    %v7719 = vpop.f32.mrb[0].mxu0
    %7720 = vmatprep.mubr.bf16.mxu0 0
    %7721 = vmatmul.mubr.bf16.gmra.mrb[0].mxu0 %v7428
    %v7722 = vpop.f32.mrb[0].mxu0
    %v7723 = vadd.f32 0.0, %v7722
    %v7724 = vpop.f32.mrb[0].mxu0
    %v7725 = vpop.f32.mrb[0].mxu0
    %v7726 = vadd.f32 0.0, %v7725
    %v7727 = vpop.f32.mrb[0].mxu0
    %7728 = vmatprep.mubr.bf16.mxu0 0
    %7729 = vmatmul.mubr.bf16.gmra.mrb[0].mxu0 %v7431
    %v7730 = vpop.f32.mrb[0].mxu0
    %v7731 = vadd.f32 0.0, %v7730
    %v7732 = vpop.f32.mrb[0].mxu0
    %v7733 = vpop.f32.mrb[0].mxu0
    %v7734 = vadd.f32 0.0, %v7733
    %v7735 = vpop.f32.mrb[0].mxu0
    %7736 = vmatprep.mubr.bf16.mxu0 0
    %7737 = vmatmul.mubr.bf16.gmra.mrb[0].mxu0 %v7434
    %v7738 = vpop.f32.mrb[0].mxu0
    %v7739 = vadd.f32 0.0, %v7738
    %v7740 = vpop.f32.mrb[0].mxu0
    %v7741 = vpop.f32.mrb[0].mxu0
    %v7742 = vadd.f32 0.0, %v7741
    %v7743 = vpop.f32.mrb[0].mxu0
    %7744 = vmatprep.mubr.bf16.mxu0 0
    %7745 = vmatmul.mubr.bf16.gmra.mrb[0].mxu0 %v7437
    %v7746 = vpop.f32.mrb[0].mxu0
    %v7747 = vadd.f32 0.0, %v7746
    %v7748 = vpop.f32.mrb[0].mxu0
    %v7749 = vpop.f32.mrb[0].mxu0
    %v7750 = vadd.f32 0.0, %v7749
    %v7751 = vpop.f32.mrb[0].mxu0
    %7752 = vmatprep.mubr.bf16.mxu0 0
    %7753 = vmatmul.mubr.bf16.gmra.mrb[0].mxu0 %v7440
    %v7754 = vpop.f32.mrb[0].mxu0
    %v7755 = vadd.f32 0.0, %v7754
    %v7756 = vpop.f32.mrb[0].mxu0
    %v7757 = vpop.f32.mrb[0].mxu0
    %v7758 = vadd.f32 0.0, %v7757
    %v7759 = vpop.f32.mrb[0].mxu0
    %7760 = vmatprep.mubr.bf16.mxu0 0
    %7761 = vmatmul.mubr.bf16.gmra.mrb[0].mxu0 %v7443
    %v7762 = vpop.f32.mrb[0].mxu0
    %v7763 = vadd.f32 0.0, %v7762
    %v7764 = vpop.f32.mrb[0].mxu0
    %v7765 = vpop.f32.mrb[0].mxu0
    %v7766 = vadd.f32 0.0, %v7765
    %v7767 = vpop.f32.mrb[0].mxu0
    %7768 = vmatprep.mubr.bf16.mxu0 0
    %7769 = vmatmul.mubr.bf16.gmra.mrb[0].mxu0 %v7446
    %v7770 = vpop.f32.mrb[0].mxu0
    %v7771 = vadd.f32 0.0, %v7770
    %v7772 = vpop.f32.mrb[0].mxu0
    %v7773 = vpop.f32.mrb[0].mxu0
    %v7774 = vadd.f32 0.0, %v7773
    %v7775 = vpop.f32.mrb[0].mxu0
    %7776 = vmatprep.mubr.bf16.mxu0 0
    %7777 = vmatmul.mubr.bf16.gmra.mrb[0].mxu0 %v7449
    %v7778 = vpop.f32.mrb[0].mxu0
    %v7779 = vadd.f32 0.0, %v7778
    %v7780 = vpop.f32.mrb[0].mxu0
    %v7781 = vpop.f32.mrb[0].mxu0
    %v7782 = vadd.f32 0.0, %v7781
    %v7783 = vpop.f32.mrb[0].mxu0
    %7784 = vmatprep.mubr.bf16.mxu0 0
    %7785 = vmatmul.mubr.bf16.gmra.mrb[0].mxu0 %v7452
    %v7786 = vpop.f32.mrb[0].mxu0
    %v7787 = vadd.f32 0.0, %v7786
    %v7788 = vpop.f32.mrb[0].mxu0
    %v7789 = vpop.f32.mrb[0].mxu0
    %v7790 = vadd.f32 0.0, %v7789
    %v7791 = vpop.f32.mrb[0].mxu0
    %7792 = vmatprep.mubr.bf16.mxu0 0
    %7793 = vmatmul.mubr.bf16.gmra.mrb[0].mxu0 %v7455
    %v7794 = vpop.f32.mrb[0].mxu0
    %v7795 = vadd.f32 0.0, %v7794
    %v7796 = vpop.f32.mrb[0].mxu0
    %v7797 = vpop.f32.mrb[0].mxu0
    %v7798 = vadd.f32 0.0, %v7797
    %v7799 = vpop.f32.mrb[0].mxu0
    %7800 = vmatprep.mubr.bf16.mxu0 0
    %7801 = vmatmul.mubr.bf16.gmra.mrb[0].mxu0 %v7458
    %v7802 = vpop.f32.mrb[0].mxu0
    %v7803 = vadd.f32 0.0, %v7802
    %v7804 = vpop.f32.mrb[0].mxu0
    %v7805 = vpop.f32.mrb[0].mxu0
    %v7806 = vadd.f32 0.0, %v7805
    %v7807 = vpop.f32.mrb[0].mxu0
    %7808 = vmatprep.mubr.bf16.mxu0 0
    %7809 = vmatmul.mubr.bf16.gmra.mrb[0].mxu0 %v7461
    %v7810 = vpop.f32.mrb[0].mxu0
    %v7811 = vadd.f32 0.0, %v7810
    %v7812 = vpop.f32.mrb[0].mxu0
    %v7813 = vpop.f32.mrb[0].mxu0
    %v7814 = vadd.f32 0.0, %v7813
    %v7815 = vpop.f32.mrb[0].mxu0
    %7816 = vmatprep.mubr.bf16.mxu0 0
    %7817 = vmatmul.mubr.bf16.gmra.mrb[0].mxu0 %v7464
    %v7818 = vpop.f32.mrb[0].mxu0
    %v7819 = vadd.f32 0.0, %v7818
    %v7820 = vpop.f32.mrb[0].mxu0
    %v7821 = vpop.f32.mrb[0].mxu0
    %v7822 = vadd.f32 0.0, %v7821
    %v7823 = vpop.f32.mrb[0].mxu0
    %7824 = vmatprep.mubr.bf16.mxu0 0
    %7825 = vmatmul.mubr.bf16.gmra.mrb[0].mxu0 %v7467
    %v7826 = vpop.f32.mrb[0].mxu0
    %v7827 = vadd.f32 0.0, %v7826
    %v7828 = vpop.f32.mrb[0].mxu0
    %v7829 = vpop.f32.mrb[0].mxu0
    %v7830 = vadd.f32 0.0, %v7829
    %v7831 = vpop.f32.mrb[0].mxu0
    %7832 = vdwg.mxu0
    %v7833 = vld [vmem:[#allocation2] sm:$0xff]
    %v7834 = vld [vmem:[#allocation2 + $0x8] sm:$0xff]
    %v7835 = vld [vmem:[#allocation2 + $0x10] sm:$0xff]
    %v7836 = vld [vmem:[#allocation2 + $0x18] sm:$0xff]
    %v7837 = vld [vmem:[#allocation2 + $0x20] sm:$0xff]
    %v7838 = vld [vmem:[#allocation2 + $0x28] sm:$0xff]
    %v7839 = vld [vmem:[#allocation2 + $0x30] sm:$0xff]
    %v7840 = vld [vmem:[#allocation2 + $0x38] sm:$0xff]
    %v7841 = vld [vmem:[#allocation2 + $0x40] sm:$0xff]
    %v7842 = vld [vmem:[#allocation2 + $0x48] sm:$0xff]
    %v7843 = vld [vmem:[#allocation2 + $0x50] sm:$0xff]
    %v7844 = vld [vmem:[#allocation2 + $0x58] sm:$0xff]
    %v7845 = vld [vmem:[#allocation2 + $0x60] sm:$0xff]
    %v7846 = vld [vmem:[#allocation2 + $0x68] sm:$0xff]
    %v7847 = vld [vmem:[#allocation2 + $0x70] sm:$0xff]
    %v7848 = vld [vmem:[#allocation2 + $0x78] sm:$0xff]
    %v7849 = vld [vmem:[#allocation2 + $0x80] sm:$0xff]
    %v7850 = vld [vmem:[#allocation2 + $0x88] sm:$0xff]
    %v7851 = vld [vmem:[#allocation2 + $0x90] sm:$0xff]
    %v7852 = vld [vmem:[#allocation2 + $0x98] sm:$0xff]
    %v7853 = vld [vmem:[#allocation2 + $0xa0] sm:$0xff]
    %v7854 = vld [vmem:[#allocation2 + $0xa8] sm:$0xff]
    %v7855 = vld [vmem:[#allocation2 + $0xb0] sm:$0xff]
    %v7856 = vld [vmem:[#allocation2 + $0xb8] sm:$0xff]
    %v7857 = vld [vmem:[#allocation2 + $0xc0] sm:$0xff]
    %v7858 = vld [vmem:[#allocation2 + $0xc8] sm:$0xff]
    %v7859 = vld [vmem:[#allocation2 + $0xd0] sm:$0xff]
    %v7860 = vld [vmem:[#allocation2 + $0xd8] sm:$0xff]
    %v7861 = vld [vmem:[#allocation2 + $0xe0] sm:$0xff]
    %v7862 = vld [vmem:[#allocation2 + $0xe8] sm:$0xff]
    %v7863 = vld [vmem:[#allocation2 + $0xf0] sm:$0xff]
    %v7864 = vld [vmem:[#allocation2 + $0xf8] sm:$0xff]
    %v7865 = vld [vmem:[#allocation2 + $0x100] sm:$0xff]
    %v7866 = vld [vmem:[#allocation2 + $0x108] sm:$0xff]
    %v7867 = vld [vmem:[#allocation2 + $0x110] sm:$0xff]
    %v7868 = vld [vmem:[#allocation2 + $0x118] sm:$0xff]
    %v7869 = vld [vmem:[#allocation2 + $0x120] sm:$0xff]
    %v7870 = vld [vmem:[#allocation2 + $0x128] sm:$0xff]
    %v7871 = vld [vmem:[#allocation2 + $0x130] sm:$0xff]
    %v7872 = vld [vmem:[#allocation2 + $0x138] sm:$0xff]
    %v7873 = vld [vmem:[#allocation2 + $0x140] sm:$0xff]
    %v7874 = vld [vmem:[#allocation2 + $0x148] sm:$0xff]
    %v7875 = vld [vmem:[#allocation2 + $0x150] sm:$0xff]
    %v7876 = vld [vmem:[#allocation2 + $0x158] sm:$0xff]
    %v7877 = vld [vmem:[#allocation2 + $0x160] sm:$0xff]
    %v7878 = vld [vmem:[#allocation2 + $0x168] sm:$0xff]
    %v7879 = vld [vmem:[#allocation2 + $0x170] sm:$0xff]
    %v7880 = vld [vmem:[#allocation2 + $0x178] sm:$0xff]
    %v7881 = vld [vmem:[#allocation2 + $0x180] sm:$0xff]
    %v7882 = vld [vmem:[#allocation2 + $0x188] sm:$0xff]
    %v7883 = vld [vmem:[#allocation2 + $0x190] sm:$0xff]
    %v7884 = vld [vmem:[#allocation2 + $0x198] sm:$0xff]
    %v7885 = vld [vmem:[#allocation2 + $0x1a0] sm:$0xff]
    %v7886 = vld [vmem:[#allocation2 + $0x1a8] sm:$0xff]
    %v7887 = vld [vmem:[#allocation2 + $0x1b0] sm:$0xff]
    %v7888 = vld [vmem:[#allocation2 + $0x1b8] sm:$0xff]
    %v7889 = vld [vmem:[#allocation2 + $0x1c0] sm:$0xff]
    %v7890 = vld [vmem:[#allocation2 + $0x1c8] sm:$0xff]
    %v7891 = vld [vmem:[#allocation2 + $0x1d0] sm:$0xff]
    %v7892 = vld [vmem:[#allocation2 + $0x1d8] sm:$0xff]
    %v7893 = vld [vmem:[#allocation2 + $0x1e0] sm:$0xff]
    %v7894 = vld [vmem:[#allocation2 + $0x1e8] sm:$0xff]
    %v7895 = vld [vmem:[#allocation2 + $0x1f0] sm:$0xff]
    %v7896 = vld [vmem:[#allocation2 + $0x1f8] sm:$0xff]
    %v7897 = vld [vmem:[#allocation2 + $0x200] sm:$0xff]
    %v7898 = vld [vmem:[#allocation2 + $0x208] sm:$0xff]
    %v7899 = vld [vmem:[#allocation2 + $0x210] sm:$0xff]
    %v7900 = vld [vmem:[#allocation2 + $0x218] sm:$0xff]
    %v7901 = vld [vmem:[#allocation2 + $0x220] sm:$0xff]
    %v7902 = vld [vmem:[#allocation2 + $0x228] sm:$0xff]
    %v7903 = vld [vmem:[#allocation2 + $0x230] sm:$0xff]
    %v7904 = vld [vmem:[#allocation2 + $0x238] sm:$0xff]
    %v7905 = vld [vmem:[#allocation2 + $0x240] sm:$0xff]
    %v7906 = vld [vmem:[#allocation2 + $0x248] sm:$0xff]
    %v7907 = vld [vmem:[#allocation2 + $0x250] sm:$0xff]
    %v7908 = vld [vmem:[#allocation2 + $0x258] sm:$0xff]
    %v7909 = vld [vmem:[#allocation2 + $0x260] sm:$0xff]
    %v7910 = vld [vmem:[#allocation2 + $0x268] sm:$0xff]
    %v7911 = vld [vmem:[#allocation2 + $0x270] sm:$0xff]
    %v7912 = vld [vmem:[#allocation2 + $0x278] sm:$0xff]
    %v7913 = vld [vmem:[#allocation2 + $0x280] sm:$0xff]
    %v7914 = vld [vmem:[#allocation2 + $0x288] sm:$0xff]
    %v7915 = vadd.f32 %v7833, %v7507
    %v7916 = vadd.f32 %v7834, %v7510
    %v7917 = vadd.f32 %v7835, %v7515
    %v7918 = vadd.f32 %v7836, %v7518
    %v7919 = vadd.f32 %v7837, %v7523
    %v7920 = vadd.f32 %v7838, %v7526
    %v7921 = vadd.f32 %v7839, %v7531
    %v7922 = vadd.f32 %v7840, %v7534
    %v7923 = vadd.f32 %v7841, %v7539
    %v7924 = vadd.f32 %v7842, %v7542
    %v7925 = vadd.f32 %v7843, %v7547
    %v7926 = vadd.f32 %v7844, %v7550
    %v7927 = vadd.f32 %v7845, %v7555
    %v7928 = vadd.f32 %v7846, %v7558
    %v7929 = vadd.f32 %v7847, %v7563
    %v7930 = vadd.f32 %v7848, %v7566
    %v7931 = vadd.f32 %v7849, %v7571
    %v7932 = vadd.f32 %v7850, %v7574
    %v7933 = vadd.f32 %v7851, %v7579
    %v7934 = vadd.f32 %v7852, %v7582
    %v7935 = vadd.f32 %v7853, %v7587
    %v7936 = vadd.f32 %v7854, %v7590
    %v7937 = vadd.f32 %v7855, %v7595
    %v7938 = vadd.f32 %v7856, %v7598
    %v7939 = vadd.f32 %v7857, %v7603
    %v7940 = vadd.f32 %v7858, %v7606
    %v7941 = vadd.f32 %v7859, %v7611
    %v7942 = vadd.f32 %v7860, %v7614
    %v7943 = vadd.f32 %v7861, %v7619
    %v7944 = vadd.f32 %v7862, %v7622
    %v7945 = vadd.f32 %v7863, %v7627
    %v7946 = vadd.f32 %v7864, %v7630
    %v7947 = vadd.f32 %v7865, %v7635
    %v7948 = vadd.f32 %v7866, %v7638
    %v7949 = vadd.f32 %v7867, %v7643
    %v7950 = vadd.f32 %v7868, %v7646
    %v7951 = vadd.f32 %v7869, %v7651
    %v7952 = vadd.f32 %v7870, %v7654
    %v7953 = vadd.f32 %v7871, %v7659
    %v7954 = vadd.f32 %v7872, %v7662
    %v7955 = vadd.f32 %v7873, %v7667
    %v7956 = vadd.f32 %v7874, %v7670
    %v7957 = vadd.f32 %v7875, %v7675
    %v7958 = vadd.f32 %v7876, %v7678
    %v7959 = vadd.f32 %v7877, %v7683
    %v7960 = vadd.f32 %v7878, %v7686
    %v7961 = vadd.f32 %v7879, %v7691
    %v7962 = vadd.f32 %v7880, %v7694
    %v7963 = vadd.f32 %v7881, %v7699
    %v7964 = vadd.f32 %v7882, %v7702
    %v7965 = vadd.f32 %v7883, %v7707
    %v7966 = vadd.f32 %v7884, %v7710
    %v7967 = vadd.f32 %v7885, %v7715
    %v7968 = vadd.f32 %v7886, %v7718
    %v7969 = vadd.f32 %v7887, %v7723
    %v7970 = vadd.f32 %v7888, %v7726
    %v7971 = vadd.f32 %v7889, %v7731
    %v7972 = vadd.f32 %v7890, %v7734
    %v7973 = vadd.f32 %v7891, %v7739
    %v7974 = vadd.f32 %v7892, %v7742
    %v7975 = vadd.f32 %v7893, %v7747
    %v7976 = vadd.f32 %v7894, %v7750
    %v7977 = vadd.f32 %v7895, %v7755
    %v7978 = vadd.f32 %v7896, %v7758
    %v7979 = vadd.f32 %v7897, %v7763
    %v7980 = vadd.f32 %v7898, %v7766
    %v7981 = vadd.f32 %v7899, %v7771
    %v7982 = vadd.f32 %v7900, %v7774
    %v7983 = vadd.f32 %v7901, %v7779
    %v7984 = vadd.f32 %v7902, %v7782
    %v7985 = vadd.f32 %v7903, %v7787
    %v7986 = vadd.f32 %v7904, %v7790
    %v7987 = vadd.f32 %v7905, %v7795
    %v7988 = vadd.f32 %v7906, %v7798
    %v7989 = vadd.f32 %v7907, %v7803
    %v7990 = vadd.f32 %v7908, %v7806
    %v7991 = vadd.f32 %v7909, %v7811
    %v7992 = vadd.f32 %v7910, %v7814
    %v7993 = vadd.f32 %v7911, %v7819
    %v7994 = vadd.f32 %v7912, %v7822
    %v7995 = vadd.f32 %v7913, %v7827
    %v7996 = vadd.f32 %v7914, %v7830
    %7997 = vst [vmem:[#allocation2] sm:$0xff] %v7915
    %7998 = vst [vmem:[#allocation2 + $0x8] sm:$0xff] %v7916
    %7999 = vst [vmem:[#allocation2 + $0x10] sm:$0xff] %v7917
    %8000 = vst [vmem:[#allocation2 + $0x18] sm:$0xff] %v7918
    %8001 = vst [vmem:[#allocation2 + $0x20] sm:$0xff] %v7919
    %8002 = vst [vmem:[#allocation2 + $0x28] sm:$0xff] %v7920
    %8003 = vst [vmem:[#allocation2 + $0x30] sm:$0xff] %v7921
    %8004 = vst [vmem:[#allocation2 + $0x38] sm:$0xff] %v7922
    %8005 = vst [vmem:[#allocation2 + $0x40] sm:$0xff] %v7923
    %8006 = vst [vmem:[#allocation2 + $0x48] sm:$0xff] %v7924
    %8007 = vst [vmem:[#allocation2 + $0x50] sm:$0xff] %v7925
    %8008 = vst [vmem:[#allocation2 + $0x58] sm:$0xff] %v7926
    %8009 = vst [vmem:[#allocation2 + $0x60] sm:$0xff] %v7927
    %8010 = vst [vmem:[#allocation2 + $0x68] sm:$0xff] %v7928
    %8011 = vst [vmem:[#allocation2 + $0x70] sm:$0xff] %v7929
    %8012 = vst [vmem:[#allocation2 + $0x78] sm:$0xff] %v7930
    %8013 = vst [vmem:[#allocation2 + $0x80] sm:$0xff] %v7931
    %8014 = vst [vmem:[#allocation2 + $0x88] sm:$0xff] %v7932
    %8015 = vst [vmem:[#allocation2 + $0x90] sm:$0xff] %v7933
    %8016 = vst [vmem:[#allocation2 + $0x98] sm:$0xff] %v7934
    %8017 = vst [vmem:[#allocation2 + $0xa0] sm:$0xff] %v7935
    %8018 = vst [vmem:[#allocation2 + $0xa8] sm:$0xff] %v7936
    %8019 = vst [vmem:[#allocation2 + $0xb0] sm:$0xff] %v7937
    %8020 = vst [vmem:[#allocation2 + $0xb8] sm:$0xff] %v7938
    %8021 = vst [vmem:[#allocation2 + $0xc0] sm:$0xff] %v7939
    %8022 = vst [vmem:[#allocation2 + $0xc8] sm:$0xff] %v7940
    %8023 = vst [vmem:[#allocation2 + $0xd0] sm:$0xff] %v7941
    %8024 = vst [vmem:[#allocation2 + $0xd8] sm:$0xff] %v7942
    %8025 = vst [vmem:[#allocation2 + $0xe0] sm:$0xff] %v7943
    %8026 = vst [vmem:[#allocation2 + $0xe8] sm:$0xff] %v7944
    %8027 = vst [vmem:[#allocation2 + $0xf0] sm:$0xff] %v7945
    %8028 = vst [vmem:[#allocation2 + $0xf8] sm:$0xff] %v7946
    %8029 = vst [vmem:[#allocation2 + $0x100] sm:$0xff] %v7947
    %8030 = vst [vmem:[#allocation2 + $0x108] sm:$0xff] %v7948
    %8031 = vst [vmem:[#allocation2 + $0x110] sm:$0xff] %v7949
    %8032 = vst [vmem:[#allocation2 + $0x118] sm:$0xff] %v7950
    %8033 = vst [vmem:[#allocation2 + $0x120] sm:$0xff] %v7951
    %8034 = vst [vmem:[#allocation2 + $0x128] sm:$0xff] %v7952
    %8035 = vst [vmem:[#allocation2 + $0x130] sm:$0xff] %v7953
    %8036 = vst [vmem:[#allocation2 + $0x138] sm:$0xff] %v7954
    %8037 = vst [vmem:[#allocation2 + $0x140] sm:$0xff] %v7955
    %8038 = vst [vmem:[#allocation2 + $0x148] sm:$0xff] %v7956
    %8039 = vst [vmem:[#allocation2 + $0x150] sm:$0xff] %v7957
    %8040 = vst [vmem:[#allocation2 + $0x158] sm:$0xff] %v7958
    %8041 = vst [vmem:[#allocation2 + $0x160] sm:$0xff] %v7959
    %8042 = vst [vmem:[#allocation2 + $0x168] sm:$0xff] %v7960
    %8043 = vst [vmem:[#allocation2 + $0x170] sm:$0xff] %v7961
    %8044 = vst [vmem:[#allocation2 + $0x178] sm:$0xff] %v7962
    %8045 = vst [vmem:[#allocation2 + $0x180] sm:$0xff] %v7963
    %8046 = vst [vmem:[#allocation2 + $0x188] sm:$0xff] %v7964
    %8047 = vst [vmem:[#allocation2 + $0x190] sm:$0xff] %v7965
    %8048 = vst [vmem:[#allocation2 + $0x198] sm:$0xff] %v7966
    %8049 = vst [vmem:[#allocation2 + $0x1a0] sm:$0xff] %v7967
    %8050 = vst [vmem:[#allocation2 + $0x1a8] sm:$0xff] %v7968
    %8051 = vst [vmem:[#allocation2 + $0x1b0] sm:$0xff] %v7969
    %8052 = vst [vmem:[#allocation2 + $0x1b8] sm:$0xff] %v7970
    %8053 = vst [vmem:[#allocation2 + $0x1c0] sm:$0xff] %v7971
    %8054 = vst [vmem:[#allocation2 + $0x1c8] sm:$0xff] %v7972
    %8055 = vst [vmem:[#allocation2 + $0x1d0] sm:$0xff] %v7973
    %8056 = vst [vmem:[#allocation2 + $0x1d8] sm:$0xff] %v7974
    %8057 = vst [vmem:[#allocation2 + $0x1e0] sm:$0xff] %v7975
    %8058 = vst [vmem:[#allocation2 + $0x1e8] sm:$0xff] %v7976
    %8059 = vst [vmem:[#allocation2 + $0x1f0] sm:$0xff] %v7977
    %8060 = vst [vmem:[#allocation2 + $0x1f8] sm:$0xff] %v7978
    %8061 = vst [vmem:[#allocation2 + $0x200] sm:$0xff] %v7979
    %8062 = vst [vmem:[#allocation2 + $0x208] sm:$0xff] %v7980
    %8063 = vst [vmem:[#allocation2 + $0x210] sm:$0xff] %v7981
    %8064 = vst [vmem:[#allocation2 + $0x218] sm:$0xff] %v7982
    %8065 = vst [vmem:[#allocation2 + $0x220] sm:$0xff] %v7983
    %8066 = vst [vmem:[#allocation2 + $0x228] sm:$0xff] %v7984
    %8067 = vst [vmem:[#allocation2 + $0x230] sm:$0xff] %v7985
    %8068 = vst [vmem:[#allocation2 + $0x238] sm:$0xff] %v7986
    %8069 = vst [vmem:[#allocation2 + $0x240] sm:$0xff] %v7987
    %8070 = vst [vmem:[#allocation2 + $0x248] sm:$0xff] %v7988
    %8071 = vst [vmem:[#allocation2 + $0x250] sm:$0xff] %v7989
    %8072 = vst [vmem:[#allocation2 + $0x258] sm:$0xff] %v7990
    %8073 = vst [vmem:[#allocation2 + $0x260] sm:$0xff] %v7991
    %8074 = vst [vmem:[#allocation2 + $0x268] sm:$0xff] %v7992
    %8075 = vst [vmem:[#allocation2 + $0x270] sm:$0xff] %v7993
    %8076 = vst [vmem:[#allocation2 + $0x278] sm:$0xff] %v7994
    %8077 = vst [vmem:[#allocation2 + $0x280] sm:$0xff] %v7995
    %8078 = vst [vmem:[#allocation2 + $0x288] sm:$0xff] %v7996
    %v8079 = vld [vmem:[%s0 + $0x10] sm:$0xc]
    %v8080 = vld [vmem:[%s0 + $0x14] sm:$0xf]
    %v8081 = vld [vmem:[%s0 + $0x18] sm:$0xf]
    %v8082 = vld [vmem:[%s0 + $0x1c] sm:$0xf]
    %v8083 = vld [vmem:[%s0 + $0x20] sm:$0xf]
    %v8084 = vld [vmem:[%s0 + $0x24] sm:$0xf]
    %v8085 = vld [vmem:[%s0 + $0x28] sm:$0xf]
    %v8086 = vld [vmem:[%s0 + $0x2c] sm:$0xf]
    %v8087 = vld [vmem:[%s0 + $0x30] sm:$0xf]
    %v8088 = vld [vmem:[%s0 + $0x34] sm:$0xf]
    %v8089 = vld [vmem:[%s0 + $0x38] sm:$0xf]
    %v8090 = vld [vmem:[%s0 + $0x3c] sm:$0xf]
    %v8091 = vld [vmem:[%s0 + $0x40] sm:$0xf]
    %v8092 = vld [vmem:[%s0 + $0x44] sm:$0xf]
    %v8093 = vld [vmem:[%s0 + $0x48] sm:$0xf]
    %v8094 = vld [vmem:[%s0 + $0x4c] sm:$0xf]
    %v8095 = vld [vmem:[%s0 + $0x50] sm:$0xf]
    %v8096 = vld [vmem:[%s0 + $0x54] sm:$0xf]
    %v8097 = vld [vmem:[%s0 + $0x58] sm:$0xf]
    %v8098 = vld [vmem:[%s0 + $0x5c] sm:$0xf]
    %v8099 = vld [vmem:[%s0 + $0x60] sm:$0xf]
    %v8100 = vld [vmem:[%s0 + $0x64] sm:$0xf]
    %v8101 = vld [vmem:[%s0 + $0x68] sm:$0xf]
    %v8102 = vld [vmem:[%s0 + $0x6c] sm:$0xf]
    %v8103 = vld [vmem:[%s0 + $0x70] sm:$0xf]
    %v8104 = vld [vmem:[%s0 + $0x74] sm:$0xf]
    %v8105 = vld [vmem:[%s0 + $0x78] sm:$0xf]
    %v8106 = vld [vmem:[%s0 + $0x7c] sm:$0xf]
    %v8107 = vld [vmem:[%s0 + $0x80] sm:$0xf]
    %v8108 = vld [vmem:[%s0 + $0x84] sm:$0xf]
    %v8109 = vld [vmem:[%s0 + $0x88] sm:$0xf]
    %v8110 = vld [vmem:[%s0 + $0x8c] sm:$0xf]
    %v8111 = vld [vmem:[%s0 + $0x90] sm:$0xf]
    %v8112 = vld [vmem:[%s0 + $0x94] sm:$0xf]
    %v8113 = vld [vmem:[%s0 + $0x98] sm:$0xf]
    %v8114 = vld [vmem:[%s0 + $0x9c] sm:$0xf]
    %v8115 = vld [vmem:[%s0 + $0xa0] sm:$0xf]
    %v8116 = vld [vmem:[%s0 + $0xa4] sm:$0xf]
    %v8117 = vld [vmem:[%s0 + $0xa8] sm:$0xf]
    %v8118 = vld [vmem:[%s0 + $0xac] sm:$0xf]
    %v8119 = vld [vmem:[%s0 + $0xb0] sm:$0xf]
    %v8120 = vld [vmem:[%s0 + $0xb4] sm:$0xf]
    %v8121 = vld [vmem:[%s0 + $0xb8] sm:$0xf]
    %v8122 = vld [vmem:[%s0 + $0xbc] sm:$0xf]
    %v8123 = vld [vmem:[%s0 + $0xc0] sm:$0xf]
    %v8124 = vld [vmem:[%s0 + $0xc4] sm:$0xf]
    %v8125 = vld [vmem:[%s0 + $0xc8] sm:$0xf]
    %v8126 = vld [vmem:[%s0 + $0xcc] sm:$0xf]
    %v8127 = vld [vmem:[%s0 + $0xd0] sm:$0xf]
    %v8128 = vld [vmem:[%s0 + $0xd4] sm:$0xf]
    %v8129 = vld [vmem:[%s0 + $0xd8] sm:$0xf]
    %v8130 = vld [vmem:[%s0 + $0xdc] sm:$0xf]
    %v8131 = vld [vmem:[%s0 + $0xe0] sm:$0xf]
    %v8132 = vld [vmem:[%s0 + $0xe4] sm:$0xf]
    %v8133 = vld [vmem:[%s0 + $0xe8] sm:$0xf]
    %v8134 = vld [vmem:[%s0 + $0xec] sm:$0xf]
    %v8135 = vld [vmem:[%s0 + $0xf0] sm:$0xf]
    %v8136 = vld [vmem:[%s0 + $0xf4] sm:$0xf]
    %v8137 = vld [vmem:[%s0 + $0xf8] sm:$0xf]
    %v8138 = vld [vmem:[%s0 + $0xfc] sm:$0xf]
    %v8139 = vld [vmem:[%s0 + $0x100] sm:$0xf]
    %v8140 = vld [vmem:[%s0 + $0x104] sm:$0xf]
    %v8141 = vld [vmem:[%s0 + $0x108] sm:$0xf]
    %v8142 = vld [vmem:[%s0 + $0x10c] sm:$0xf]
    %v8143 = vld [vmem:[%s0 + $0x110] sm:$0xf]
    %v8144 = vld [vmem:[%s0 + $0x114] sm:$0xf]
    %v8145 = vld [vmem:[%s0 + $0x118] sm:$0xf]
    %v8146 = vld [vmem:[%s0 + $0x11c] sm:$0xf]
    %v8147 = vld [vmem:[%s0 + $0x120] sm:$0xf]
    %v8148 = vld [vmem:[%s0 + $0x124] sm:$0xf]
    %v8149 = vld [vmem:[%s0 + $0x128] sm:$0xf]
    %v8150 = vld [vmem:[%s0 + $0x12c] sm:$0xf]
    %v8151 = vld [vmem:[%s0 + $0x130] sm:$0xf]
    %v8152 = vld [vmem:[%s0 + $0x134] sm:$0xf]
    %v8153 = vld [vmem:[%s0 + $0x138] sm:$0xf]
    %v8154 = vld [vmem:[%s0 + $0x13c] sm:$0xf]
    %v8155 = vld [vmem:[%s0 + $0x140] sm:$0xf]
    %v8156 = vld [vmem:[%s0 + $0x144] sm:$0xf]
    %v8157 = vld [vmem:[%s0 + $0x148] sm:$0xf]
    %v8158 = vld [vmem:[%s0 + $0x14c] sm:$0xf]
    %v8159 = vld [vmem:[%s0 + $0x150] sm:$0xf]
    %v8160 = vld [vmem:[%s0 + $0x154] sm:$0xf]
    %v8161 = vld [vmem:[%s0 + $0x158] sm:$0x7]
    %v8162 = vld [vmem:[%s1 + $0x1c] sm:$0xf]
    %v8246 = vunpack.c.l.b16 %v8079
    %v8247 = vunpack.c.l.b16 %v8080
    %v8248 = vunpack.c.l.b16 %v8081
    %v8249 = vunpack.c.l.b16 %v8082
    %v8250 = vunpack.c.l.b16 %v8083
    %v8251 = vunpack.c.l.b16 %v8084
    %v8252 = vunpack.c.l.b16 %v8085
    %v8253 = vunpack.c.l.b16 %v8086
    %v8254 = vunpack.c.l.b16 %v8087
    %v8255 = vunpack.c.l.b16 %v8088
    %v8256 = vunpack.c.l.b16 %v8089
    %v8257 = vunpack.c.l.b16 %v8090
    %v8258 = vunpack.c.l.b16 %v8091
    %v8259 = vunpack.c.l.b16 %v8092
    %v8260 = vunpack.c.l.b16 %v8093
    %v8261 = vunpack.c.l.b16 %v8094
    %v8262 = vunpack.c.l.b16 %v8095
    %v8263 = vunpack.c.l.b16 %v8096
    %v8264 = vunpack.c.l.b16 %v8097
    %v8265 = vunpack.c.l.b16 %v8098
    %v8266 = vunpack.c.l.b16 %v8099
    %v8267 = vunpack.c.l.b16 %v8100
    %v8268 = vunpack.c.l.b16 %v8101
    %v8269 = vunpack.c.l.b16 %v8102
    %v8270 = vunpack.c.l.b16 %v8103
    %v8271 = vunpack.c.l.b16 %v8104
    %v8272 = vunpack.c.l.b16 %v8105
    %v8273 = vunpack.c.l.b16 %v8106
    %v8274 = vunpack.c.l.b16 %v8107
    %v8275 = vunpack.c.l.b16 %v8108
    %v8276 = vunpack.c.l.b16 %v8109
    %v8277 = vunpack.c.l.b16 %v8110
    %v8278 = vunpack.c.l.b16 %v8111
    %v8279 = vunpack.c.l.b16 %v8112
    %v8280 = vunpack.c.l.b16 %v8113
    %v8281 = vunpack.c.l.b16 %v8114
    %v8282 = vunpack.c.l.b16 %v8115
    %v8283 = vunpack.c.l.b16 %v8116
    %v8284 = vunpack.c.l.b16 %v8117
    %v8285 = vunpack.c.l.b16 %v8118
    %v8286 = vunpack.c.l.b16 %v8119
    %v8287 = vunpack.c.l.b16 %v8120
    %v8288 = vunpack.c.l.b16 %v8121
    %v8289 = vunpack.c.l.b16 %v8122
    %v8290 = vunpack.c.l.b16 %v8123
    %v8291 = vunpack.c.l.b16 %v8124
    %v8292 = vunpack.c.l.b16 %v8125
    %v8293 = vunpack.c.l.b16 %v8126
    %v8294 = vunpack.c.l.b16 %v8127
    %v8295 = vunpack.c.l.b16 %v8128
    %v8296 = vunpack.c.l.b16 %v8129
    %v8297 = vunpack.c.l.b16 %v8130
    %v8298 = vunpack.c.l.b16 %v8131
    %v8299 = vunpack.c.l.b16 %v8132
    %v8300 = vunpack.c.l.b16 %v8133
    %v8301 = vunpack.c.l.b16 %v8134
    %v8302 = vunpack.c.l.b16 %v8135
    %v8303 = vunpack.c.l.b16 %v8136
    %v8304 = vunpack.c.l.b16 %v8137
    %v8305 = vunpack.c.l.b16 %v8138
    %v8306 = vunpack.c.l.b16 %v8139
    %v8307 = vunpack.c.l.b16 %v8140
    %v8308 = vunpack.c.l.b16 %v8141
    %v8309 = vunpack.c.l.b16 %v8142
    %v8310 = vunpack.c.l.b16 %v8143
    %v8311 = vunpack.c.l.b16 %v8144
    %v8312 = vunpack.c.l.b16 %v8145
    %v8313 = vunpack.c.l.b16 %v8146
    %v8314 = vunpack.c.l.b16 %v8147
    %v8315 = vunpack.c.l.b16 %v8148
    %v8316 = vunpack.c.l.b16 %v8149
    %v8317 = vunpack.c.l.b16 %v8150
    %v8318 = vunpack.c.l.b16 %v8151
    %v8319 = vunpack.c.l.b16 %v8152
    %v8320 = vunpack.c.l.b16 %v8153
    %v8321 = vunpack.c.l.b16 %v8154
    %v8322 = vunpack.c.l.b16 %v8155
    %v8323 = vunpack.c.l.b16 %v8156
    %v8324 = vunpack.c.l.b16 %v8157
    %v8325 = vunpack.c.l.b16 %v8158
    %v8326 = vunpack.c.l.b16 %v8159
    %v8327 = vunpack.c.l.b16 %v8160
    %v8328 = vunpack.c.l.b16 %v8161
    %v8329 = vpack.c.b16 %v8247, %v8246
    %v8330 = vpack.c.b16 %v8249, %v8248
    %v8331 = vpack.c.b16 %v8251, %v8250
    %v8332 = vpack.c.b16 %v8253, %v8252
    %v8333 = vpack.c.b16 %v8255, %v8254
    %v8334 = vpack.c.b16 %v8257, %v8256
    %v8335 = vpack.c.b16 %v8259, %v8258
    %v8336 = vpack.c.b16 %v8261, %v8260
    %v8337 = vpack.c.b16 %v8263, %v8262
    %v8338 = vpack.c.b16 %v8265, %v8264
    %v8339 = vpack.c.b16 %v8267, %v8266
    %v8340 = vpack.c.b16 %v8269, %v8268
    %v8341 = vpack.c.b16 %v8271, %v8270
    %v8342 = vpack.c.b16 %v8273, %v8272
    %v8343 = vpack.c.b16 %v8275, %v8274
    %v8344 = vpack.c.b16 %v8277, %v8276
    %v8345 = vpack.c.b16 %v8279, %v8278
    %v8346 = vpack.c.b16 %v8281, %v8280
    %v8347 = vpack.c.b16 %v8283, %v8282
    %v8348 = vpack.c.b16 %v8285, %v8284
    %v8349 = vpack.c.b16 %v8287, %v8286
    %v8350 = vpack.c.b16 %v8289, %v8288
    %v8351 = vpack.c.b16 %v8291, %v8290
    %v8352 = vpack.c.b16 %v8293, %v8292
    %v8353 = vpack.c.b16 %v8295, %v8294
    %v8354 = vpack.c.b16 %v8297, %v8296
    %v8355 = vpack.c.b16 %v8299, %v8298
    %v8356 = vpack.c.b16 %v8301, %v8300
    %v8357 = vpack.c.b16 %v8303, %v8302
    %v8358 = vpack.c.b16 %v8305, %v8304
    %v8359 = vpack.c.b16 %v8307, %v8306
    %v8360 = vpack.c.b16 %v8309, %v8308
    %v8361 = vpack.c.b16 %v8311, %v8310
    %v8362 = vpack.c.b16 %v8313, %v8312
    %v8363 = vpack.c.b16 %v8315, %v8314
    %v8364 = vpack.c.b16 %v8317, %v8316
    %v8365 = vpack.c.b16 %v8319, %v8318
    %v8366 = vpack.c.b16 %v8321, %v8320
    %v8367 = vpack.c.b16 %v8323, %v8322
    %v8368 = vpack.c.b16 %v8325, %v8324
    %v8369 = vpack.c.b16 %v8327, %v8326
    %v8370 = vpack.c.b16 %v8328, %v8328
    %vm8371 = vsmask.f32 5376
    %v8373 = vshrl.u32 %v8329, 16
    %v8375 = vrot.slane %v8373, 2
    %v8376 = vshll.u32 %v8329, 16
    %v8378 = vrot.slane %v8376, 3
    %v8379 = vor.u32 %v8375, %v8378
    %v8381 = vshrl.u32 %v8330, 16
    %v8383 = vrot.slane %v8381, 2
    %v8384 = vshll.u32 %v8330, 16
    %v8386 = vrot.slane %v8384, 3
    %v8387 = vor.u32 %v8383, %v8386
    %v8388 = vsel %vm8371, %v8379, %v8387
    %v8390 = vshrl.u32 %v8331, 16
    %v8392 = vrot.slane %v8390, 2
    %v8393 = vshll.u32 %v8331, 16
    %v8395 = vrot.slane %v8393, 3
    %v8396 = vor.u32 %v8392, %v8395
    %v8397 = vsel %vm8371, %v8387, %v8396
    %v8399 = vshrl.u32 %v8332, 16
    %v8401 = vrot.slane %v8399, 2
    %v8402 = vshll.u32 %v8332, 16
    %v8404 = vrot.slane %v8402, 3
    %v8405 = vor.u32 %v8401, %v8404
    %v8406 = vsel %vm8371, %v8396, %v8405
    %v8408 = vshrl.u32 %v8333, 16
    %v8410 = vrot.slane %v8408, 2
    %v8411 = vshll.u32 %v8333, 16
    %v8413 = vrot.slane %v8411, 3
    %v8414 = vor.u32 %v8410, %v8413
    %v8415 = vsel %vm8371, %v8405, %v8414
    %v8417 = vshrl.u32 %v8334, 16
    %v8419 = vrot.slane %v8417, 2
    %v8420 = vshll.u32 %v8334, 16
    %v8422 = vrot.slane %v8420, 3
    %v8423 = vor.u32 %v8419, %v8422
    %v8424 = vsel %vm8371, %v8414, %v8423
    %v8426 = vshrl.u32 %v8335, 16
    %v8428 = vrot.slane %v8426, 2
    %v8429 = vshll.u32 %v8335, 16
    %v8431 = vrot.slane %v8429, 3
    %v8432 = vor.u32 %v8428, %v8431
    %v8433 = vsel %vm8371, %v8423, %v8432
    %v8435 = vshrl.u32 %v8336, 16
    %v8437 = vrot.slane %v8435, 2
    %v8438 = vshll.u32 %v8336, 16
    %v8440 = vrot.slane %v8438, 3
    %v8441 = vor.u32 %v8437, %v8440
    %v8442 = vsel %vm8371, %v8432, %v8441
    %v8444 = vshrl.u32 %v8337, 16
    %v8446 = vrot.slane %v8444, 2
    %v8447 = vshll.u32 %v8337, 16
    %v8449 = vrot.slane %v8447, 3
    %v8450 = vor.u32 %v8446, %v8449
    %v8451 = vsel %vm8371, %v8441, %v8450
    %v8453 = vshrl.u32 %v8338, 16
    %v8455 = vrot.slane %v8453, 2
    %v8456 = vshll.u32 %v8338, 16
    %v8458 = vrot.slane %v8456, 3
    %v8459 = vor.u32 %v8455, %v8458
    %v8460 = vsel %vm8371, %v8450, %v8459
    %v8462 = vshrl.u32 %v8339, 16
    %v8464 = vrot.slane %v8462, 2
    %v8465 = vshll.u32 %v8339, 16
    %v8467 = vrot.slane %v8465, 3
    %v8468 = vor.u32 %v8464, %v8467
    %v8469 = vsel %vm8371, %v8459, %v8468
    %v8471 = vshrl.u32 %v8340, 16
    %v8473 = vrot.slane %v8471, 2
    %v8474 = vshll.u32 %v8340, 16
    %v8476 = vrot.slane %v8474, 3
    %v8477 = vor.u32 %v8473, %v8476
    %v8478 = vsel %vm8371, %v8468, %v8477
    %v8480 = vshrl.u32 %v8341, 16
    %v8482 = vrot.slane %v8480, 2
    %v8483 = vshll.u32 %v8341, 16
    %v8485 = vrot.slane %v8483, 3
    %v8486 = vor.u32 %v8482, %v8485
    %v8487 = vsel %vm8371, %v8477, %v8486
    %v8489 = vshrl.u32 %v8342, 16
    %v8491 = vrot.slane %v8489, 2
    %v8492 = vshll.u32 %v8342, 16
    %v8494 = vrot.slane %v8492, 3
    %v8495 = vor.u32 %v8491, %v8494
    %v8496 = vsel %vm8371, %v8486, %v8495
    %v8498 = vshrl.u32 %v8343, 16
    %v8500 = vrot.slane %v8498, 2
    %v8501 = vshll.u32 %v8343, 16
    %v8503 = vrot.slane %v8501, 3
    %v8504 = vor.u32 %v8500, %v8503
    %v8505 = vsel %vm8371, %v8495, %v8504
    %v8507 = vshrl.u32 %v8344, 16
    %v8509 = vrot.slane %v8507, 2
    %v8510 = vshll.u32 %v8344, 16
    %v8512 = vrot.slane %v8510, 3
    %v8513 = vor.u32 %v8509, %v8512
    %v8514 = vsel %vm8371, %v8504, %v8513
    %v8516 = vshrl.u32 %v8345, 16
    %v8518 = vrot.slane %v8516, 2
    %v8519 = vshll.u32 %v8345, 16
    %v8521 = vrot.slane %v8519, 3
    %v8522 = vor.u32 %v8518, %v8521
    %v8523 = vsel %vm8371, %v8513, %v8522
    %v8525 = vshrl.u32 %v8346, 16
    %v8527 = vrot.slane %v8525, 2
    %v8528 = vshll.u32 %v8346, 16
    %v8530 = vrot.slane %v8528, 3
    %v8531 = vor.u32 %v8527, %v8530
    %v8532 = vsel %vm8371, %v8522, %v8531
    %v8534 = vshrl.u32 %v8347, 16
    %v8536 = vrot.slane %v8534, 2
    %v8537 = vshll.u32 %v8347, 16
    %v8539 = vrot.slane %v8537, 3
    %v8540 = vor.u32 %v8536, %v8539
    %v8541 = vsel %vm8371, %v8531, %v8540
    %v8543 = vshrl.u32 %v8348, 16
    %v8545 = vrot.slane %v8543, 2
    %v8546 = vshll.u32 %v8348, 16
    %v8548 = vrot.slane %v8546, 3
    %v8549 = vor.u32 %v8545, %v8548
    %v8550 = vsel %vm8371, %v8540, %v8549
    %v8552 = vshrl.u32 %v8349, 16
    %v8554 = vrot.slane %v8552, 2
    %v8555 = vshll.u32 %v8349, 16
    %v8557 = vrot.slane %v8555, 3
    %v8558 = vor.u32 %v8554, %v8557
    %v8559 = vsel %vm8371, %v8549, %v8558
    %v8561 = vshrl.u32 %v8350, 16
    %v8563 = vrot.slane %v8561, 2
    %v8564 = vshll.u32 %v8350, 16
    %v8566 = vrot.slane %v8564, 3
    %v8567 = vor.u32 %v8563, %v8566
    %v8568 = vsel %vm8371, %v8558, %v8567
    %v8570 = vshrl.u32 %v8351, 16
    %v8572 = vrot.slane %v8570, 2
    %v8573 = vshll.u32 %v8351, 16
    %v8575 = vrot.slane %v8573, 3
    %v8576 = vor.u32 %v8572, %v8575
    %v8577 = vsel %vm8371, %v8567, %v8576
    %v8579 = vshrl.u32 %v8352, 16
    %v8581 = vrot.slane %v8579, 2
    %v8582 = vshll.u32 %v8352, 16
    %v8584 = vrot.slane %v8582, 3
    %v8585 = vor.u32 %v8581, %v8584
    %v8586 = vsel %vm8371, %v8576, %v8585
    %v8588 = vshrl.u32 %v8353, 16
    %v8590 = vrot.slane %v8588, 2
    %v8591 = vshll.u32 %v8353, 16
    %v8593 = vrot.slane %v8591, 3
    %v8594 = vor.u32 %v8590, %v8593
    %v8595 = vsel %vm8371, %v8585, %v8594
    %v8597 = vshrl.u32 %v8354, 16
    %v8599 = vrot.slane %v8597, 2
    %v8600 = vshll.u32 %v8354, 16
    %v8602 = vrot.slane %v8600, 3
    %v8603 = vor.u32 %v8599, %v8602
    %v8604 = vsel %vm8371, %v8594, %v8603
    %v8606 = vshrl.u32 %v8355, 16
    %v8608 = vrot.slane %v8606, 2
    %v8609 = vshll.u32 %v8355, 16
    %v8611 = vrot.slane %v8609, 3
    %v8612 = vor.u32 %v8608, %v8611
    %v8613 = vsel %vm8371, %v8603, %v8612
    %v8615 = vshrl.u32 %v8356, 16
    %v8617 = vrot.slane %v8615, 2
    %v8618 = vshll.u32 %v8356, 16
    %v8620 = vrot.slane %v8618, 3
    %v8621 = vor.u32 %v8617, %v8620
    %v8622 = vsel %vm8371, %v8612, %v8621
    %v8624 = vshrl.u32 %v8357, 16
    %v8626 = vrot.slane %v8624, 2
    %v8627 = vshll.u32 %v8357, 16
    %v8629 = vrot.slane %v8627, 3
    %v8630 = vor.u32 %v8626, %v8629
    %v8631 = vsel %vm8371, %v8621, %v8630
    %v8633 = vshrl.u32 %v8358, 16
    %v8635 = vrot.slane %v8633, 2
    %v8636 = vshll.u32 %v8358, 16
    %v8638 = vrot.slane %v8636, 3
    %v8639 = vor.u32 %v8635, %v8638
    %v8640 = vsel %vm8371, %v8630, %v8639
    %v8642 = vshrl.u32 %v8359, 16
    %v8644 = vrot.slane %v8642, 2
    %v8645 = vshll.u32 %v8359, 16
    %v8647 = vrot.slane %v8645, 3
    %v8648 = vor.u32 %v8644, %v8647
    %v8649 = vsel %vm8371, %v8639, %v8648
    %v8651 = vshrl.u32 %v8360, 16
    %v8653 = vrot.slane %v8651, 2
    %v8654 = vshll.u32 %v8360, 16
    %v8656 = vrot.slane %v8654, 3
    %v8657 = vor.u32 %v8653, %v8656
    %v8658 = vsel %vm8371, %v8648, %v8657
    %v8660 = vshrl.u32 %v8361, 16
    %v8662 = vrot.slane %v8660, 2
    %v8663 = vshll.u32 %v8361, 16
    %v8665 = vrot.slane %v8663, 3
    %v8666 = vor.u32 %v8662, %v8665
    %v8667 = vsel %vm8371, %v8657, %v8666
    %v8669 = vshrl.u32 %v8362, 16
    %v8671 = vrot.slane %v8669, 2
    %v8672 = vshll.u32 %v8362, 16
    %v8674 = vrot.slane %v8672, 3
    %v8675 = vor.u32 %v8671, %v8674
    %v8676 = vsel %vm8371, %v8666, %v8675
    %v8678 = vshrl.u32 %v8363, 16
    %v8680 = vrot.slane %v8678, 2
    %v8681 = vshll.u32 %v8363, 16
    %v8683 = vrot.slane %v8681, 3
    %v8684 = vor.u32 %v8680, %v8683
    %v8685 = vsel %vm8371, %v8675, %v8684
    %v8687 = vshrl.u32 %v8364, 16
    %v8689 = vrot.slane %v8687, 2
    %v8690 = vshll.u32 %v8364, 16
    %v8692 = vrot.slane %v8690, 3
    %v8693 = vor.u32 %v8689, %v8692
    %v8694 = vsel %vm8371, %v8684, %v8693
    %v8696 = vshrl.u32 %v8365, 16
    %v8698 = vrot.slane %v8696, 2
    %v8699 = vshll.u32 %v8365, 16
    %v8701 = vrot.slane %v8699, 3
    %v8702 = vor.u32 %v8698, %v8701
    %v8703 = vsel %vm8371, %v8693, %v8702
    %v8705 = vshrl.u32 %v8366, 16
    %v8707 = vrot.slane %v8705, 2
    %v8708 = vshll.u32 %v8366, 16
    %v8710 = vrot.slane %v8708, 3
    %v8711 = vor.u32 %v8707, %v8710
    %v8712 = vsel %vm8371, %v8702, %v8711
    %v8714 = vshrl.u32 %v8367, 16
    %v8716 = vrot.slane %v8714, 2
    %v8717 = vshll.u32 %v8367, 16
    %v8719 = vrot.slane %v8717, 3
    %v8720 = vor.u32 %v8716, %v8719
    %v8721 = vsel %vm8371, %v8711, %v8720
    %v8723 = vshrl.u32 %v8368, 16
    %v8725 = vrot.slane %v8723, 2
    %v8726 = vshll.u32 %v8368, 16
    %v8728 = vrot.slane %v8726, 3
    %v8729 = vor.u32 %v8725, %v8728
    %v8730 = vsel %vm8371, %v8720, %v8729
    %v8732 = vshrl.u32 %v8369, 16
    %v8734 = vrot.slane %v8732, 2
    %v8735 = vshll.u32 %v8369, 16
    %v8737 = vrot.slane %v8735, 3
    %v8738 = vor.u32 %v8734, %v8737
    %v8739 = vsel %vm8371, %v8729, %v8738
    %v8741 = vshrl.u32 %v8370, 16
    %v8743 = vrot.slane %v8741, 2
    %v8744 = vshll.u32 %v8370, 16
    %v8746 = vrot.slane %v8744, 3
    %v8747 = vor.u32 %v8743, %v8746
    %v8748 = vsel %vm8371, %v8738, %v8747
    %v8750 = vsel %vm313, %v8388, 0
    %v8753 = vsel %vm313, %v8397, 0
    %v8756 = vsel %vm313, %v8406, 0
    %v8759 = vsel %vm313, %v8415, 0
    %v8762 = vsel %vm313, %v8424, 0
    %v8765 = vsel %vm313, %v8433, 0
    %v8768 = vsel %vm313, %v8442, 0
    %v8771 = vsel %vm313, %v8451, 0
    %v8774 = vsel %vm313, %v8460, 0
    %v8777 = vsel %vm313, %v8469, 0
    %v8780 = vsel %vm313, %v8478, 0
    %v8783 = vsel %vm313, %v8487, 0
    %v8786 = vsel %vm313, %v8496, 0
    %v8789 = vsel %vm313, %v8505, 0
    %v8792 = vsel %vm313, %v8514, 0
    %v8795 = vsel %vm313, %v8523, 0
    %v8798 = vsel %vm313, %v8532, 0
    %v8801 = vsel %vm313, %v8541, 0
    %v8804 = vsel %vm313, %v8550, 0
    %v8807 = vsel %vm313, %v8559, 0
    %v8810 = vsel %vm313, %v8568, 0
    %v8813 = vsel %vm313, %v8577, 0
    %v8816 = vsel %vm313, %v8586, 0
    %v8819 = vsel %vm313, %v8595, 0
    %v8822 = vsel %vm313, %v8604, 0
    %v8825 = vsel %vm313, %v8613, 0
    %v8828 = vsel %vm313, %v8622, 0
    %v8831 = vsel %vm313, %v8631, 0
    %v8834 = vsel %vm313, %v8640, 0
    %v8837 = vsel %vm313, %v8649, 0
    %v8840 = vsel %vm313, %v8658, 0
    %v8843 = vsel %vm313, %v8667, 0
    %v8846 = vsel %vm313, %v8676, 0
    %v8849 = vsel %vm313, %v8685, 0
    %v8852 = vsel %vm313, %v8694, 0
    %v8855 = vsel %vm313, %v8703, 0
    %v8858 = vsel %vm313, %v8712, 0
    %v8861 = vsel %vm313, %v8721, 0
    %v8864 = vsel %vm313, %v8730, 0
    %v8867 = vsel %vm313, %v8739, 0
    %v8870 = vsel %vm313, %v8748, 0
    %v8873 = vsel %vm437, %v8162, 0
    %8875 = vmatprep.subr.bf16.mxu0 0
    %8876 = vmatpush1.bf16.msra.mxu0 %v8873
    %8877 = vmatprep.subr.bf16.mxu0 0
    %8878 = vmatpush1.bf16.msra.mxu0 0
    %8879 = vmatprep.subr.bf16.mxu0 0
    %8880 = vmatpush1.bf16.msra.mxu0 0
    %8881 = vmatprep.subr.bf16.mxu0 0
    %8882 = vmatpush1.bf16.msra.mxu0 0
    %8883 = vmatprep.subr.bf16.mxu0 0
    %8884 = vmatpush1.bf16.msra.mxu0 0
    %8885 = vmatprep.subr.bf16.mxu0 0
    %8886 = vmatpush1.bf16.msra.mxu0 0
    %8887 = vmatprep.subr.bf16.mxu0 0
    %8888 = vmatpush1.bf16.msra.mxu0 0
    %8889 = vmatprep.subr.bf16.mxu0 0
    %8890 = vmatpush1.bf16.msra.mxu0 0
    %8891 = vmatprep.subr.bf16.mxu0 0
    %8892 = vmatpush1.bf16.msra.mxu0 0
    %8893 = vmatprep.subr.bf16.mxu0 0
    %8894 = vmatpush1.bf16.msra.mxu0 0
    %8895 = vmatprep.subr.bf16.mxu0 0
    %8896 = vmatpush1.bf16.msra.mxu0 0
    %8897 = vmatprep.subr.bf16.mxu0 0
    %8898 = vmatpush1.bf16.msra.mxu0 0
    %8899 = vmatprep.subr.bf16.mxu0 0
    %8900 = vmatpush1.bf16.msra.mxu0 0
    %8901 = vmatprep.subr.bf16.mxu0 0
    %8902 = vmatpush1.bf16.msra.mxu0 0
    %8903 = vmatprep.subr.bf16.mxu0 0
    %8904 = vmatpush1.bf16.msra.mxu0 0
    %8905 = vmatprep.subr.bf16.mxu0 0
    %8906 = vmatpush1.bf16.msra.mxu0 0
    %8907 = vmatprep.mubr.bf16.mxu0 0
    %8908 = vmatmul.mubr.bf16.gmra.mrb[0].mxu0 %v8750
    %v8909 = vpop.f32.mrb[0].mxu0
    %v8910 = vadd.f32 0.0, %v8909
    %v8911 = vpop.f32.mrb[0].mxu0
    %v8912 = vpop.f32.mrb[0].mxu0
    %v8913 = vadd.f32 0.0, %v8912
    %v8914 = vpop.f32.mrb[0].mxu0
    %8915 = vmatprep.mubr.bf16.mxu0 0
    %8916 = vmatmul.mubr.bf16.gmra.mrb[0].mxu0 %v8753
    %v8917 = vpop.f32.mrb[0].mxu0
    %v8918 = vadd.f32 0.0, %v8917
    %v8919 = vpop.f32.mrb[0].mxu0
    %v8920 = vpop.f32.mrb[0].mxu0
    %v8921 = vadd.f32 0.0, %v8920
    %v8922 = vpop.f32.mrb[0].mxu0
    %8923 = vmatprep.mubr.bf16.mxu0 0
    %8924 = vmatmul.mubr.bf16.gmra.mrb[0].mxu0 %v8756
    %v8925 = vpop.f32.mrb[0].mxu0
    %v8926 = vadd.f32 0.0, %v8925
    %v8927 = vpop.f32.mrb[0].mxu0
    %v8928 = vpop.f32.mrb[0].mxu0
    %v8929 = vadd.f32 0.0, %v8928
    %v8930 = vpop.f32.mrb[0].mxu0
    %8931 = vmatprep.mubr.bf16.mxu0 0
    %8932 = vmatmul.mubr.bf16.gmra.mrb[0].mxu0 %v8759
    %v8933 = vpop.f32.mrb[0].mxu0
    %v8934 = vadd.f32 0.0, %v8933
    %v8935 = vpop.f32.mrb[0].mxu0
    %v8936 = vpop.f32.mrb[0].mxu0
    %v8937 = vadd.f32 0.0, %v8936
    %v8938 = vpop.f32.mrb[0].mxu0
    %8939 = vmatprep.mubr.bf16.mxu0 0
    %8940 = vmatmul.mubr.bf16.gmra.mrb[0].mxu0 %v8762
    %v8941 = vpop.f32.mrb[0].mxu0
    %v8942 = vadd.f32 0.0, %v8941
    %v8943 = vpop.f32.mrb[0].mxu0
    %v8944 = vpop.f32.mrb[0].mxu0
    %v8945 = vadd.f32 0.0, %v8944
    %v8946 = vpop.f32.mrb[0].mxu0
    %8947 = vmatprep.mubr.bf16.mxu0 0
    %8948 = vmatmul.mubr.bf16.gmra.mrb[0].mxu0 %v8765
    %v8949 = vpop.f32.mrb[0].mxu0
    %v8950 = vadd.f32 0.0, %v8949
    %v8951 = vpop.f32.mrb[0].mxu0
    %v8952 = vpop.f32.mrb[0].mxu0
    %v8953 = vadd.f32 0.0, %v8952
    %v8954 = vpop.f32.mrb[0].mxu0
    %8955 = vmatprep.mubr.bf16.mxu0 0
    %8956 = vmatmul.mubr.bf16.gmra.mrb[0].mxu0 %v8768
    %v8957 = vpop.f32.mrb[0].mxu0
    %v8958 = vadd.f32 0.0, %v8957
    %v8959 = vpop.f32.mrb[0].mxu0
    %v8960 = vpop.f32.mrb[0].mxu0
    %v8961 = vadd.f32 0.0, %v8960
    %v8962 = vpop.f32.mrb[0].mxu0
    %8963 = vmatprep.mubr.bf16.mxu0 0
    %8964 = vmatmul.mubr.bf16.gmra.mrb[0].mxu0 %v8771
    %v8965 = vpop.f32.mrb[0].mxu0
    %v8966 = vadd.f32 0.0, %v8965
    %v8967 = vpop.f32.mrb[0].mxu0
    %v8968 = vpop.f32.mrb[0].mxu0
    %v8969 = vadd.f32 0.0, %v8968
    %v8970 = vpop.f32.mrb[0].mxu0
    %8971 = vmatprep.mubr.bf16.mxu0 0
    %8972 = vmatmul.mubr.bf16.gmra.mrb[0].mxu0 %v8774
    %v8973 = vpop.f32.mrb[0].mxu0
    %v8974 = vadd.f32 0.0, %v8973
    %v8975 = vpop.f32.mrb[0].mxu0
    %v8976 = vpop.f32.mrb[0].mxu0
    %v8977 = vadd.f32 0.0, %v8976
    %v8978 = vpop.f32.mrb[0].mxu0
    %8979 = vmatprep.mubr.bf16.mxu0 0
    %8980 = vmatmul.mubr.bf16.gmra.mrb[0].mxu0 %v8777
    %v8981 = vpop.f32.mrb[0].mxu0
    %v8982 = vadd.f32 0.0, %v8981
    %v8983 = vpop.f32.mrb[0].mxu0
    %v8984 = vpop.f32.mrb[0].mxu0
    %v8985 = vadd.f32 0.0, %v8984
    %v8986 = vpop.f32.mrb[0].mxu0
    %8987 = vmatprep.mubr.bf16.mxu0 0
    %8988 = vmatmul.mubr.bf16.gmra.mrb[0].mxu0 %v8780
    %v8989 = vpop.f32.mrb[0].mxu0
    %v8990 = vadd.f32 0.0, %v8989
    %v8991 = vpop.f32.mrb[0].mxu0
    %v8992 = vpop.f32.mrb[0].mxu0
    %v8993 = vadd.f32 0.0, %v8992
    %v8994 = vpop.f32.mrb[0].mxu0
    %8995 = vmatprep.mubr.bf16.mxu0 0
    %8996 = vmatmul.mubr.bf16.gmra.mrb[0].mxu0 %v8783
    %v8997 = vpop.f32.mrb[0].mxu0
    %v8998 = vadd.f32 0.0, %v8997
    %v8999 = vpop.f32.mrb[0].mxu0
    %v9000 = vpop.f32.mrb[0].mxu0
    %v9001 = vadd.f32 0.0, %v9000
    %v9002 = vpop.f32.mrb[0].mxu0
    %9003 = vmatprep.mubr.bf16.mxu0 0
    %9004 = vmatmul.mubr.bf16.gmra.mrb[0].mxu0 %v8786
    %v9005 = vpop.f32.mrb[0].mxu0
    %v9006 = vadd.f32 0.0, %v9005
    %v9007 = vpop.f32.mrb[0].mxu0
    %v9008 = vpop.f32.mrb[0].mxu0
    %v9009 = vadd.f32 0.0, %v9008
    %v9010 = vpop.f32.mrb[0].mxu0
    %9011 = vmatprep.mubr.bf16.mxu0 0
    %9012 = vmatmul.mubr.bf16.gmra.mrb[0].mxu0 %v8789
    %v9013 = vpop.f32.mrb[0].mxu0
    %v9014 = vadd.f32 0.0, %v9013
    %v9015 = vpop.f32.mrb[0].mxu0
    %v9016 = vpop.f32.mrb[0].mxu0
    %v9017 = vadd.f32 0.0, %v9016
    %v9018 = vpop.f32.mrb[0].mxu0
    %9019 = vmatprep.mubr.bf16.mxu0 0
    %9020 = vmatmul.mubr.bf16.gmra.mrb[0].mxu0 %v8792
    %v9021 = vpop.f32.mrb[0].mxu0
    %v9022 = vadd.f32 0.0, %v9021
    %v9023 = vpop.f32.mrb[0].mxu0
    %v9024 = vpop.f32.mrb[0].mxu0
    %v9025 = vadd.f32 0.0, %v9024
    %v9026 = vpop.f32.mrb[0].mxu0
    %9027 = vmatprep.mubr.bf16.mxu0 0
    %9028 = vmatmul.mubr.bf16.gmra.mrb[0].mxu0 %v8795
    %v9029 = vpop.f32.mrb[0].mxu0
    %v9030 = vadd.f32 0.0, %v9029
    %v9031 = vpop.f32.mrb[0].mxu0
    %v9032 = vpop.f32.mrb[0].mxu0
    %v9033 = vadd.f32 0.0, %v9032
    %v9034 = vpop.f32.mrb[0].mxu0
    %9035 = vmatprep.mubr.bf16.mxu0 0
    %9036 = vmatmul.mubr.bf16.gmra.mrb[0].mxu0 %v8798
    %v9037 = vpop.f32.mrb[0].mxu0
    %v9038 = vadd.f32 0.0, %v9037
    %v9039 = vpop.f32.mrb[0].mxu0
    %v9040 = vpop.f32.mrb[0].mxu0
    %v9041 = vadd.f32 0.0, %v9040
    %v9042 = vpop.f32.mrb[0].mxu0
    %9043 = vmatprep.mubr.bf16.mxu0 0
    %9044 = vmatmul.mubr.bf16.gmra.mrb[0].mxu0 %v8801
    %v9045 = vpop.f32.mrb[0].mxu0
    %v9046 = vadd.f32 0.0, %v9045
    %v9047 = vpop.f32.mrb[0].mxu0
    %v9048 = vpop.f32.mrb[0].mxu0
    %v9049 = vadd.f32 0.0, %v9048
    %v9050 = vpop.f32.mrb[0].mxu0
    %9051 = vmatprep.mubr.bf16.mxu0 0
    %9052 = vmatmul.mubr.bf16.gmra.mrb[0].mxu0 %v8804
    %v9053 = vpop.f32.mrb[0].mxu0
    %v9054 = vadd.f32 0.0, %v9053
    %v9055 = vpop.f32.mrb[0].mxu0
    %v9056 = vpop.f32.mrb[0].mxu0
    %v9057 = vadd.f32 0.0, %v9056
    %v9058 = vpop.f32.mrb[0].mxu0
    %9059 = vmatprep.mubr.bf16.mxu0 0
    %9060 = vmatmul.mubr.bf16.gmra.mrb[0].mxu0 %v8807
    %v9061 = vpop.f32.mrb[0].mxu0
    %v9062 = vadd.f32 0.0, %v9061
    %v9063 = vpop.f32.mrb[0].mxu0
    %v9064 = vpop.f32.mrb[0].mxu0
    %v9065 = vadd.f32 0.0, %v9064
    %v9066 = vpop.f32.mrb[0].mxu0
    %9067 = vmatprep.mubr.bf16.mxu0 0
    %9068 = vmatmul.mubr.bf16.gmra.mrb[0].mxu0 %v8810
    %v9069 = vpop.f32.mrb[0].mxu0
    %v9070 = vadd.f32 0.0, %v9069
    %v9071 = vpop.f32.mrb[0].mxu0
    %v9072 = vpop.f32.mrb[0].mxu0
    %v9073 = vadd.f32 0.0, %v9072
    %v9074 = vpop.f32.mrb[0].mxu0
    %9075 = vmatprep.mubr.bf16.mxu0 0
    %9076 = vmatmul.mubr.bf16.gmra.mrb[0].mxu0 %v8813
    %v9077 = vpop.f32.mrb[0].mxu0
    %v9078 = vadd.f32 0.0, %v9077
    %v9079 = vpop.f32.mrb[0].mxu0
    %v9080 = vpop.f32.mrb[0].mxu0
    %v9081 = vadd.f32 0.0, %v9080
    %v9082 = vpop.f32.mrb[0].mxu0
    %9083 = vmatprep.mubr.bf16.mxu0 0
    %9084 = vmatmul.mubr.bf16.gmra.mrb[0].mxu0 %v8816
    %v9085 = vpop.f32.mrb[0].mxu0
    %v9086 = vadd.f32 0.0, %v9085
    %v9087 = vpop.f32.mrb[0].mxu0
    %v9088 = vpop.f32.mrb[0].mxu0
    %v9089 = vadd.f32 0.0, %v9088
    %v9090 = vpop.f32.mrb[0].mxu0
    %9091 = vmatprep.mubr.bf16.mxu0 0
    %9092 = vmatmul.mubr.bf16.gmra.mrb[0].mxu0 %v8819
    %v9093 = vpop.f32.mrb[0].mxu0
    %v9094 = vadd.f32 0.0, %v9093
    %v9095 = vpop.f32.mrb[0].mxu0
    %v9096 = vpop.f32.mrb[0].mxu0
    %v9097 = vadd.f32 0.0, %v9096
    %v9098 = vpop.f32.mrb[0].mxu0
    %9099 = vmatprep.mubr.bf16.mxu0 0
    %9100 = vmatmul.mubr.bf16.gmra.mrb[0].mxu0 %v8822
    %v9101 = vpop.f32.mrb[0].mxu0
    %v9102 = vadd.f32 0.0, %v9101
    %v9103 = vpop.f32.mrb[0].mxu0
    %v9104 = vpop.f32.mrb[0].mxu0
    %v9105 = vadd.f32 0.0, %v9104
    %v9106 = vpop.f32.mrb[0].mxu0
    %9107 = vmatprep.mubr.bf16.mxu0 0
    %9108 = vmatmul.mubr.bf16.gmra.mrb[0].mxu0 %v8825
    %v9109 = vpop.f32.mrb[0].mxu0
    %v9110 = vadd.f32 0.0, %v9109
    %v9111 = vpop.f32.mrb[0].mxu0
    %v9112 = vpop.f32.mrb[0].mxu0
    %v9113 = vadd.f32 0.0, %v9112
    %v9114 = vpop.f32.mrb[0].mxu0
    %9115 = vmatprep.mubr.bf16.mxu0 0
    %9116 = vmatmul.mubr.bf16.gmra.mrb[0].mxu0 %v8828
    %v9117 = vpop.f32.mrb[0].mxu0
    %v9118 = vadd.f32 0.0, %v9117
    %v9119 = vpop.f32.mrb[0].mxu0
    %v9120 = vpop.f32.mrb[0].mxu0
    %v9121 = vadd.f32 0.0, %v9120
    %v9122 = vpop.f32.mrb[0].mxu0
    %9123 = vmatprep.mubr.bf16.mxu0 0
    %9124 = vmatmul.mubr.bf16.gmra.mrb[0].mxu0 %v8831
    %v9125 = vpop.f32.mrb[0].mxu0
    %v9126 = vadd.f32 0.0, %v9125
    %v9127 = vpop.f32.mrb[0].mxu0
    %v9128 = vpop.f32.mrb[0].mxu0
    %v9129 = vadd.f32 0.0, %v9128
    %v9130 = vpop.f32.mrb[0].mxu0
    %9131 = vmatprep.mubr.bf16.mxu0 0
    %9132 = vmatmul.mubr.bf16.gmra.mrb[0].mxu0 %v8834
    %v9133 = vpop.f32.mrb[0].mxu0
    %v9134 = vadd.f32 0.0, %v9133
    %v9135 = vpop.f32.mrb[0].mxu0
    %v9136 = vpop.f32.mrb[0].mxu0
    %v9137 = vadd.f32 0.0, %v9136
    %v9138 = vpop.f32.mrb[0].mxu0
    %9139 = vmatprep.mubr.bf16.mxu0 0
    %9140 = vmatmul.mubr.bf16.gmra.mrb[0].mxu0 %v8837
    %v9141 = vpop.f32.mrb[0].mxu0
    %v9142 = vadd.f32 0.0, %v9141
    %v9143 = vpop.f32.mrb[0].mxu0
    %v9144 = vpop.f32.mrb[0].mxu0
    %v9145 = vadd.f32 0.0, %v9144
    %v9146 = vpop.f32.mrb[0].mxu0
    %9147 = vmatprep.mubr.bf16.mxu0 0
    %9148 = vmatmul.mubr.bf16.gmra.mrb[0].mxu0 %v8840
    %v9149 = vpop.f32.mrb[0].mxu0
    %v9150 = vadd.f32 0.0, %v9149
    %v9151 = vpop.f32.mrb[0].mxu0
    %v9152 = vpop.f32.mrb[0].mxu0
    %v9153 = vadd.f32 0.0, %v9152
    %v9154 = vpop.f32.mrb[0].mxu0
    %9155 = vmatprep.mubr.bf16.mxu0 0
    %9156 = vmatmul.mubr.bf16.gmra.mrb[0].mxu0 %v8843
    %v9157 = vpop.f32.mrb[0].mxu0
    %v9158 = vadd.f32 0.0, %v9157
    %v9159 = vpop.f32.mrb[0].mxu0
    %v9160 = vpop.f32.mrb[0].mxu0
    %v9161 = vadd.f32 0.0, %v9160
    %v9162 = vpop.f32.mrb[0].mxu0
    %9163 = vmatprep.mubr.bf16.mxu0 0
    %9164 = vmatmul.mubr.bf16.gmra.mrb[0].mxu0 %v8846
    %v9165 = vpop.f32.mrb[0].mxu0
    %v9166 = vadd.f32 0.0, %v9165
    %v9167 = vpop.f32.mrb[0].mxu0
    %v9168 = vpop.f32.mrb[0].mxu0
    %v9169 = vadd.f32 0.0, %v9168
    %v9170 = vpop.f32.mrb[0].mxu0
    %9171 = vmatprep.mubr.bf16.mxu0 0
    %9172 = vmatmul.mubr.bf16.gmra.mrb[0].mxu0 %v8849
    %v9173 = vpop.f32.mrb[0].mxu0
    %v9174 = vadd.f32 0.0, %v9173
    %v9175 = vpop.f32.mrb[0].mxu0
    %v9176 = vpop.f32.mrb[0].mxu0
    %v9177 = vadd.f32 0.0, %v9176
    %v9178 = vpop.f32.mrb[0].mxu0
    %9179 = vmatprep.mubr.bf16.mxu0 0
    %9180 = vmatmul.mubr.bf16.gmra.mrb[0].mxu0 %v8852
    %v9181 = vpop.f32.mrb[0].mxu0
    %v9182 = vadd.f32 0.0, %v9181
    %v9183 = vpop.f32.mrb[0].mxu0
    %v9184 = vpop.f32.mrb[0].mxu0
    %v9185 = vadd.f32 0.0, %v9184
    %v9186 = vpop.f32.mrb[0].mxu0
    %9187 = vmatprep.mubr.bf16.mxu0 0
    %9188 = vmatmul.mubr.bf16.gmra.mrb[0].mxu0 %v8855
    %v9189 = vpop.f32.mrb[0].mxu0
    %v9190 = vadd.f32 0.0, %v9189
    %v9191 = vpop.f32.mrb[0].mxu0
    %v9192 = vpop.f32.mrb[0].mxu0
    %v9193 = vadd.f32 0.0, %v9192
    %v9194 = vpop.f32.mrb[0].mxu0
    %9195 = vmatprep.mubr.bf16.mxu0 0
    %9196 = vmatmul.mubr.bf16.gmra.mrb[0].mxu0 %v8858
    %v9197 = vpop.f32.mrb[0].mxu0
    %v9198 = vadd.f32 0.0, %v9197
    %v9199 = vpop.f32.mrb[0].mxu0
    %v9200 = vpop.f32.mrb[0].mxu0
    %v9201 = vadd.f32 0.0, %v9200
    %v9202 = vpop.f32.mrb[0].mxu0
    %9203 = vmatprep.mubr.bf16.mxu0 0
    %9204 = vmatmul.mubr.bf16.gmra.mrb[0].mxu0 %v8861
    %v9205 = vpop.f32.mrb[0].mxu0
    %v9206 = vadd.f32 0.0, %v9205
    %v9207 = vpop.f32.mrb[0].mxu0
    %v9208 = vpop.f32.mrb[0].mxu0
    %v9209 = vadd.f32 0.0, %v9208
    %v9210 = vpop.f32.mrb[0].mxu0
    %9211 = vmatprep.mubr.bf16.mxu0 0
    %9212 = vmatmul.mubr.bf16.gmra.mrb[0].mxu0 %v8864
    %v9213 = vpop.f32.mrb[0].mxu0
    %v9214 = vadd.f32 0.0, %v9213
    %v9215 = vpop.f32.mrb[0].mxu0
    %v9216 = vpop.f32.mrb[0].mxu0
    %v9217 = vadd.f32 0.0, %v9216
    %v9218 = vpop.f32.mrb[0].mxu0
    %9219 = vmatprep.mubr.bf16.mxu0 0
    %9220 = vmatmul.mubr.bf16.gmra.mrb[0].mxu0 %v8867
    %v9221 = vpop.f32.mrb[0].mxu0
    %v9222 = vadd.f32 0.0, %v9221
    %v9223 = vpop.f32.mrb[0].mxu0
    %v9224 = vpop.f32.mrb[0].mxu0
    %v9225 = vadd.f32 0.0, %v9224
    %v9226 = vpop.f32.mrb[0].mxu0
    %9227 = vmatprep.mubr.bf16.mxu0 0
    %9228 = vmatmul.mubr.bf16.gmra.mrb[0].mxu0 %v8870
    %v9229 = vpop.f32.mrb[0].mxu0
    %v9230 = vadd.f32 0.0, %v9229
    %v9231 = vpop.f32.mrb[0].mxu0
    %v9232 = vpop.f32.mrb[0].mxu0
    %v9233 = vadd.f32 0.0, %v9232
    %v9234 = vpop.f32.mrb[0].mxu0
    %9235 = vdwg.mxu0
    %v9236 = vld [vmem:[#allocation2] sm:$0xff]
    %v9237 = vld [vmem:[#allocation2 + $0x8] sm:$0xff]
    %v9238 = vld [vmem:[#allocation2 + $0x10] sm:$0xff]
    %v9239 = vld [vmem:[#allocation2 + $0x18] sm:$0xff]
    %v9240 = vld [vmem:[#allocation2 + $0x20] sm:$0xff]
    %v9241 = vld [vmem:[#allocation2 + $0x28] sm:$0xff]
    %v9242 = vld [vmem:[#allocation2 + $0x30] sm:$0xff]
    %v9243 = vld [vmem:[#allocation2 + $0x38] sm:$0xff]
    %v9244 = vld [vmem:[#allocation2 + $0x40] sm:$0xff]
    %v9245 = vld [vmem:[#allocation2 + $0x48] sm:$0xff]
    %v9246 = vld [vmem:[#allocation2 + $0x50] sm:$0xff]
    %v9247 = vld [vmem:[#allocation2 + $0x58] sm:$0xff]
    %v9248 = vld [vmem:[#allocation2 + $0x60] sm:$0xff]
    %v9249 = vld [vmem:[#allocation2 + $0x68] sm:$0xff]
    %v9250 = vld [vmem:[#allocation2 + $0x70] sm:$0xff]
    %v9251 = vld [vmem:[#allocation2 + $0x78] sm:$0xff]
    %v9252 = vld [vmem:[#allocation2 + $0x80] sm:$0xff]
    %v9253 = vld [vmem:[#allocation2 + $0x88] sm:$0xff]
    %v9254 = vld [vmem:[#allocation2 + $0x90] sm:$0xff]
    %v9255 = vld [vmem:[#allocation2 + $0x98] sm:$0xff]
    %v9256 = vld [vmem:[#allocation2 + $0xa0] sm:$0xff]
    %v9257 = vld [vmem:[#allocation2 + $0xa8] sm:$0xff]
    %v9258 = vld [vmem:[#allocation2 + $0xb0] sm:$0xff]
    %v9259 = vld [vmem:[#allocation2 + $0xb8] sm:$0xff]
    %v9260 = vld [vmem:[#allocation2 + $0xc0] sm:$0xff]
    %v9261 = vld [vmem:[#allocation2 + $0xc8] sm:$0xff]
    %v9262 = vld [vmem:[#allocation2 + $0xd0] sm:$0xff]
    %v9263 = vld [vmem:[#allocation2 + $0xd8] sm:$0xff]
    %v9264 = vld [vmem:[#allocation2 + $0xe0] sm:$0xff]
    %v9265 = vld [vmem:[#allocation2 + $0xe8] sm:$0xff]
    %v9266 = vld [vmem:[#allocation2 + $0xf0] sm:$0xff]
    %v9267 = vld [vmem:[#allocation2 + $0xf8] sm:$0xff]
    %v9268 = vld [vmem:[#allocation2 + $0x100] sm:$0xff]
    %v9269 = vld [vmem:[#allocation2 + $0x108] sm:$0xff]
    %v9270 = vld [vmem:[#allocation2 + $0x110] sm:$0xff]
    %v9271 = vld [vmem:[#allocation2 + $0x118] sm:$0xff]
    %v9272 = vld [vmem:[#allocation2 + $0x120] sm:$0xff]
    %v9273 = vld [vmem:[#allocation2 + $0x128] sm:$0xff]
    %v9274 = vld [vmem:[#allocation2 + $0x130] sm:$0xff]
    %v9275 = vld [vmem:[#allocation2 + $0x138] sm:$0xff]
    %v9276 = vld [vmem:[#allocation2 + $0x140] sm:$0xff]
    %v9277 = vld [vmem:[#allocation2 + $0x148] sm:$0xff]
    %v9278 = vld [vmem:[#allocation2 + $0x150] sm:$0xff]
    %v9279 = vld [vmem:[#allocation2 + $0x158] sm:$0xff]
    %v9280 = vld [vmem:[#allocation2 + $0x160] sm:$0xff]
    %v9281 = vld [vmem:[#allocation2 + $0x168] sm:$0xff]
    %v9282 = vld [vmem:[#allocation2 + $0x170] sm:$0xff]
    %v9283 = vld [vmem:[#allocation2 + $0x178] sm:$0xff]
    %v9284 = vld [vmem:[#allocation2 + $0x180] sm:$0xff]
    %v9285 = vld [vmem:[#allocation2 + $0x188] sm:$0xff]
    %v9286 = vld [vmem:[#allocation2 + $0x190] sm:$0xff]
    %v9287 = vld [vmem:[#allocation2 + $0x198] sm:$0xff]
    %v9288 = vld [vmem:[#allocation2 + $0x1a0] sm:$0xff]
    %v9289 = vld [vmem:[#allocation2 + $0x1a8] sm:$0xff]
    %v9290 = vld [vmem:[#allocation2 + $0x1b0] sm:$0xff]
    %v9291 = vld [vmem:[#allocation2 + $0x1b8] sm:$0xff]
    %v9292 = vld [vmem:[#allocation2 + $0x1c0] sm:$0xff]
    %v9293 = vld [vmem:[#allocation2 + $0x1c8] sm:$0xff]
    %v9294 = vld [vmem:[#allocation2 + $0x1d0] sm:$0xff]
    %v9295 = vld [vmem:[#allocation2 + $0x1d8] sm:$0xff]
    %v9296 = vld [vmem:[#allocation2 + $0x1e0] sm:$0xff]
    %v9297 = vld [vmem:[#allocation2 + $0x1e8] sm:$0xff]
    %v9298 = vld [vmem:[#allocation2 + $0x1f0] sm:$0xff]
    %v9299 = vld [vmem:[#allocation2 + $0x1f8] sm:$0xff]
    %v9300 = vld [vmem:[#allocation2 + $0x200] sm:$0xff]
    %v9301 = vld [vmem:[#allocation2 + $0x208] sm:$0xff]
    %v9302 = vld [vmem:[#allocation2 + $0x210] sm:$0xff]
    %v9303 = vld [vmem:[#allocation2 + $0x218] sm:$0xff]
    %v9304 = vld [vmem:[#allocation2 + $0x220] sm:$0xff]
    %v9305 = vld [vmem:[#allocation2 + $0x228] sm:$0xff]
    %v9306 = vld [vmem:[#allocation2 + $0x230] sm:$0xff]
    %v9307 = vld [vmem:[#allocation2 + $0x238] sm:$0xff]
    %v9308 = vld [vmem:[#allocation2 + $0x240] sm:$0xff]
    %v9309 = vld [vmem:[#allocation2 + $0x248] sm:$0xff]
    %v9310 = vld [vmem:[#allocation2 + $0x250] sm:$0xff]
    %v9311 = vld [vmem:[#allocation2 + $0x258] sm:$0xff]
    %v9312 = vld [vmem:[#allocation2 + $0x260] sm:$0xff]
    %v9313 = vld [vmem:[#allocation2 + $0x268] sm:$0xff]
    %v9314 = vld [vmem:[#allocation2 + $0x270] sm:$0xff]
    %v9315 = vld [vmem:[#allocation2 + $0x278] sm:$0xff]
    %v9316 = vld [vmem:[#allocation2 + $0x280] sm:$0xff]
    %v9317 = vld [vmem:[#allocation2 + $0x288] sm:$0xff]
    %v9318 = vadd.f32 %v9236, %v8910
    %v9319 = vadd.f32 %v9237, %v8913
    %v9320 = vadd.f32 %v9238, %v8918
    %v9321 = vadd.f32 %v9239, %v8921
    %v9322 = vadd.f32 %v9240, %v8926
    %v9323 = vadd.f32 %v9241, %v8929
    %v9324 = vadd.f32 %v9242, %v8934
    %v9325 = vadd.f32 %v9243, %v8937
    %v9326 = vadd.f32 %v9244, %v8942
    %v9327 = vadd.f32 %v9245, %v8945
    %v9328 = vadd.f32 %v9246, %v8950
    %v9329 = vadd.f32 %v9247, %v8953
    %v9330 = vadd.f32 %v9248, %v8958
    %v9331 = vadd.f32 %v9249, %v8961
    %v9332 = vadd.f32 %v9250, %v8966
    %v9333 = vadd.f32 %v9251, %v8969
    %v9334 = vadd.f32 %v9252, %v8974
    %v9335 = vadd.f32 %v9253, %v8977
    %v9336 = vadd.f32 %v9254, %v8982
    %v9337 = vadd.f32 %v9255, %v8985
    %v9338 = vadd.f32 %v9256, %v8990
    %v9339 = vadd.f32 %v9257, %v8993
    %v9340 = vadd.f32 %v9258, %v8998
    %v9341 = vadd.f32 %v9259, %v9001
    %v9342 = vadd.f32 %v9260, %v9006
    %v9343 = vadd.f32 %v9261, %v9009
    %v9344 = vadd.f32 %v9262, %v9014
    %v9345 = vadd.f32 %v9263, %v9017
    %v9346 = vadd.f32 %v9264, %v9022
    %v9347 = vadd.f32 %v9265, %v9025
    %v9348 = vadd.f32 %v9266, %v9030
    %v9349 = vadd.f32 %v9267, %v9033
    %v9350 = vadd.f32 %v9268, %v9038
    %v9351 = vadd.f32 %v9269, %v9041
    %v9352 = vadd.f32 %v9270, %v9046
    %v9353 = vadd.f32 %v9271, %v9049
    %v9354 = vadd.f32 %v9272, %v9054
    %v9355 = vadd.f32 %v9273, %v9057
    %v9356 = vadd.f32 %v9274, %v9062
    %v9357 = vadd.f32 %v9275, %v9065
    %v9358 = vadd.f32 %v9276, %v9070
    %v9359 = vadd.f32 %v9277, %v9073
    %v9360 = vadd.f32 %v9278, %v9078
    %v9361 = vadd.f32 %v9279, %v9081
    %v9362 = vadd.f32 %v9280, %v9086
    %v9363 = vadd.f32 %v9281, %v9089
    %v9364 = vadd.f32 %v9282, %v9094
    %v9365 = vadd.f32 %v9283, %v9097
    %v9366 = vadd.f32 %v9284, %v9102
    %v9367 = vadd.f32 %v9285, %v9105
    %v9368 = vadd.f32 %v9286, %v9110
    %v9369 = vadd.f32 %v9287, %v9113
    %v9370 = vadd.f32 %v9288, %v9118
    %v9371 = vadd.f32 %v9289, %v9121
    %v9372 = vadd.f32 %v9290, %v9126
    %v9373 = vadd.f32 %v9291, %v9129
    %v9374 = vadd.f32 %v9292, %v9134
    %v9375 = vadd.f32 %v9293, %v9137
    %v9376 = vadd.f32 %v9294, %v9142
    %v9377 = vadd.f32 %v9295, %v9145
    %v9378 = vadd.f32 %v9296, %v9150
    %v9379 = vadd.f32 %v9297, %v9153
    %v9380 = vadd.f32 %v9298, %v9158
    %v9381 = vadd.f32 %v9299, %v9161
    %v9382 = vadd.f32 %v9300, %v9166
    %v9383 = vadd.f32 %v9301, %v9169
    %v9384 = vadd.f32 %v9302, %v9174
    %v9385 = vadd.f32 %v9303, %v9177
    %v9386 = vadd.f32 %v9304, %v9182
    %v9387 = vadd.f32 %v9305, %v9185
    %v9388 = vadd.f32 %v9306, %v9190
    %v9389 = vadd.f32 %v9307, %v9193
    %v9390 = vadd.f32 %v9308, %v9198
    %v9391 = vadd.f32 %v9309, %v9201
    %v9392 = vadd.f32 %v9310, %v9206
    %v9393 = vadd.f32 %v9311, %v9209
    %v9394 = vadd.f32 %v9312, %v9214
    %v9395 = vadd.f32 %v9313, %v9217
    %v9396 = vadd.f32 %v9314, %v9222
    %v9397 = vadd.f32 %v9315, %v9225
    %v9398 = vadd.f32 %v9316, %v9230
    %v9399 = vadd.f32 %v9317, %v9233
    %9400 = vst [vmem:[#allocation2] sm:$0xff] %v9318
    %9401 = vst [vmem:[#allocation2 + $0x8] sm:$0xff] %v9319
    %9402 = vst [vmem:[#allocation2 + $0x10] sm:$0xff] %v9320
    %9403 = vst [vmem:[#allocation2 + $0x18] sm:$0xff] %v9321
    %9404 = vst [vmem:[#allocation2 + $0x20] sm:$0xff] %v9322
    %9405 = vst [vmem:[#allocation2 + $0x28] sm:$0xff] %v9323
    %9406 = vst [vmem:[#allocation2 + $0x30] sm:$0xff] %v9324
    %9407 = vst [vmem:[#allocation2 + $0x38] sm:$0xff] %v9325
    %9408 = vst [vmem:[#allocation2 + $0x40] sm:$0xff] %v9326
    %9409 = vst [vmem:[#allocation2 + $0x48] sm:$0xff] %v9327
    %9410 = vst [vmem:[#allocation2 + $0x50] sm:$0xff] %v9328
    %9411 = vst [vmem:[#allocation2 + $0x58] sm:$0xff] %v9329
    %9412 = vst [vmem:[#allocation2 + $0x60] sm:$0xff] %v9330
    %9413 = vst [vmem:[#allocation2 + $0x68] sm:$0xff] %v9331
    %9414 = vst [vmem:[#allocation2 + $0x70] sm:$0xff] %v9332
    %9415 = vst [vmem:[#allocation2 + $0x78] sm:$0xff] %v9333
    %9416 = vst [vmem:[#allocation2 + $0x80] sm:$0xff] %v9334
    %9417 = vst [vmem:[#allocation2 + $0x88] sm:$0xff] %v9335
    %9418 = vst [vmem:[#allocation2 + $0x90] sm:$0xff] %v9336
    %9419 = vst [vmem:[#allocation2 + $0x98] sm:$0xff] %v9337
    %9420 = vst [vmem:[#allocation2 + $0xa0] sm:$0xff] %v9338
    %9421 = vst [vmem:[#allocation2 + $0xa8] sm:$0xff] %v9339
    %9422 = vst [vmem:[#allocation2 + $0xb0] sm:$0xff] %v9340
    %9423 = vst [vmem:[#allocation2 + $0xb8] sm:$0xff] %v9341
    %9424 = vst [vmem:[#allocation2 + $0xc0] sm:$0xff] %v9342
    %9425 = vst [vmem:[#allocation2 + $0xc8] sm:$0xff] %v9343
    %9426 = vst [vmem:[#allocation2 + $0xd0] sm:$0xff] %v9344
    %9427 = vst [vmem:[#allocation2 + $0xd8] sm:$0xff] %v9345
    %9428 = vst [vmem:[#allocation2 + $0xe0] sm:$0xff] %v9346
    %9429 = vst [vmem:[#allocation2 + $0xe8] sm:$0xff] %v9347
    %9430 = vst [vmem:[#allocation2 + $0xf0] sm:$0xff] %v9348
    %9431 = vst [vmem:[#allocation2 + $0xf8] sm:$0xff] %v9349
    %9432 = vst [vmem:[#allocation2 + $0x100] sm:$0xff] %v9350
    %9433 = vst [vmem:[#allocation2 + $0x108] sm:$0xff] %v9351
    %9434 = vst [vmem:[#allocation2 + $0x110] sm:$0xff] %v9352
    %9435 = vst [vmem:[#allocation2 + $0x118] sm:$0xff] %v9353
    %9436 = vst [vmem:[#allocation2 + $0x120] sm:$0xff] %v9354
    %9437 = vst [vmem:[#allocation2 + $0x128] sm:$0xff] %v9355
    %9438 = vst [vmem:[#allocation2 + $0x130] sm:$0xff] %v9356
    %9439 = vst [vmem:[#allocation2 + $0x138] sm:$0xff] %v9357
    %9440 = vst [vmem:[#allocation2 + $0x140] sm:$0xff] %v9358
    %9441 = vst [vmem:[#allocation2 + $0x148] sm:$0xff] %v9359
    %9442 = vst [vmem:[#allocation2 + $0x150] sm:$0xff] %v9360
    %9443 = vst [vmem:[#allocation2 + $0x158] sm:$0xff] %v9361
    %9444 = vst [vmem:[#allocation2 + $0x160] sm:$0xff] %v9362
    %9445 = vst [vmem:[#allocation2 + $0x168] sm:$0xff] %v9363
    %9446 = vst [vmem:[#allocation2 + $0x170] sm:$0xff] %v9364
    %9447 = vst [vmem:[#allocation2 + $0x178] sm:$0xff] %v9365
    %9448 = vst [vmem:[#allocation2 + $0x180] sm:$0xff] %v9366
    %9449 = vst [vmem:[#allocation2 + $0x188] sm:$0xff] %v9367
    %9450 = vst [vmem:[#allocation2 + $0x190] sm:$0xff] %v9368
    %9451 = vst [vmem:[#allocation2 + $0x198] sm:$0xff] %v9369
    %9452 = vst [vmem:[#allocation2 + $0x1a0] sm:$0xff] %v9370
    %9453 = vst [vmem:[#allocation2 + $0x1a8] sm:$0xff] %v9371
    %9454 = vst [vmem:[#allocation2 + $0x1b0] sm:$0xff] %v9372
    %9455 = vst [vmem:[#allocation2 + $0x1b8] sm:$0xff] %v9373
    %9456 = vst [vmem:[#allocation2 + $0x1c0] sm:$0xff] %v9374
    %9457 = vst [vmem:[#allocation2 + $0x1c8] sm:$0xff] %v9375
    %9458 = vst [vmem:[#allocation2 + $0x1d0] sm:$0xff] %v9376
    %9459 = vst [vmem:[#allocation2 + $0x1d8] sm:$0xff] %v9377
    %9460 = vst [vmem:[#allocation2 + $0x1e0] sm:$0xff] %v9378
    %9461 = vst [vmem:[#allocation2 + $0x1e8] sm:$0xff] %v9379
    %9462 = vst [vmem:[#allocation2 + $0x1f0] sm:$0xff] %v9380
    %9463 = vst [vmem:[#allocation2 + $0x1f8] sm:$0xff] %v9381
    %9464 = vst [vmem:[#allocation2 + $0x200] sm:$0xff] %v9382
    %9465 = vst [vmem:[#allocation2 + $0x208] sm:$0xff] %v9383
    %9466 = vst [vmem:[#allocation2 + $0x210] sm:$0xff] %v9384
    %9467 = vst [vmem:[#allocation2 + $0x218] sm:$0xff] %v9385
    %9468 = vst [vmem:[#allocation2 + $0x220] sm:$0xff] %v9386
    %9469 = vst [vmem:[#allocation2 + $0x228] sm:$0xff] %v9387
    %9470 = vst [vmem:[#allocation2 + $0x230] sm:$0xff] %v9388
    %9471 = vst [vmem:[#allocation2 + $0x238] sm:$0xff] %v9389
    %9472 = vst [vmem:[#allocation2 + $0x240] sm:$0xff] %v9390
    %9473 = vst [vmem:[#allocation2 + $0x248] sm:$0xff] %v9391
    %9474 = vst [vmem:[#allocation2 + $0x250] sm:$0xff] %v9392
    %9475 = vst [vmem:[#allocation2 + $0x258] sm:$0xff] %v9393
    %9476 = vst [vmem:[#allocation2 + $0x260] sm:$0xff] %v9394
    %9477 = vst [vmem:[#allocation2 + $0x268] sm:$0xff] %v9395
    %9478 = vst [vmem:[#allocation2 + $0x270] sm:$0xff] %v9396
    %9479 = vst [vmem:[#allocation2 + $0x278] sm:$0xff] %v9397
    %9480 = vst [vmem:[#allocation2 + $0x280] sm:$0xff] %v9398
    %9481 = vst [vmem:[#allocation2 + $0x288] sm:$0xff] %v9399
    %v9482 = vld [vmem:[%s0 + $0x10] sm:$0x8]
    %v9483 = vld [vmem:[%s0 + $0x14] sm:$0xf]
    %v9484 = vld [vmem:[%s0 + $0x18] sm:$0xf]
    %v9485 = vld [vmem:[%s0 + $0x1c] sm:$0xf]
    %v9486 = vld [vmem:[%s0 + $0x20] sm:$0xf]
    %v9487 = vld [vmem:[%s0 + $0x24] sm:$0xf]
    %v9488 = vld [vmem:[%s0 + $0x28] sm:$0xf]
    %v9489 = vld [vmem:[%s0 + $0x2c] sm:$0xf]
    %v9490 = vld [vmem:[%s0 + $0x30] sm:$0xf]
    %v9491 = vld [vmem:[%s0 + $0x34] sm:$0xf]
    %v9492 = vld [vmem:[%s0 + $0x38] sm:$0xf]
    %v9493 = vld [vmem:[%s0 + $0x3c] sm:$0xf]
    %v9494 = vld [vmem:[%s0 + $0x40] sm:$0xf]
    %v9495 = vld [vmem:[%s0 + $0x44] sm:$0xf]
    %v9496 = vld [vmem:[%s0 + $0x48] sm:$0xf]
    %v9497 = vld [vmem:[%s0 + $0x4c] sm:$0xf]
    %v9498 = vld [vmem:[%s0 + $0x50] sm:$0xf]
    %v9499 = vld [vmem:[%s0 + $0x54] sm:$0xf]
    %v9500 = vld [vmem:[%s0 + $0x58] sm:$0xf]
    %v9501 = vld [vmem:[%s0 + $0x5c] sm:$0xf]
    %v9502 = vld [vmem:[%s0 + $0x60] sm:$0xf]
    %v9503 = vld [vmem:[%s0 + $0x64] sm:$0xf]
    %v9504 = vld [vmem:[%s0 + $0x68] sm:$0xf]
    %v9505 = vld [vmem:[%s0 + $0x6c] sm:$0xf]
    %v9506 = vld [vmem:[%s0 + $0x70] sm:$0xf]
    %v9507 = vld [vmem:[%s0 + $0x74] sm:$0xf]
    %v9508 = vld [vmem:[%s0 + $0x78] sm:$0xf]
    %v9509 = vld [vmem:[%s0 + $0x7c] sm:$0xf]
    %v9510 = vld [vmem:[%s0 + $0x80] sm:$0xf]
    %v9511 = vld [vmem:[%s0 + $0x84] sm:$0xf]
    %v9512 = vld [vmem:[%s0 + $0x88] sm:$0xf]
    %v9513 = vld [vmem:[%s0 + $0x8c] sm:$0xf]
    %v9514 = vld [vmem:[%s0 + $0x90] sm:$0xf]
    %v9515 = vld [vmem:[%s0 + $0x94] sm:$0xf]
    %v9516 = vld [vmem:[%s0 + $0x98] sm:$0xf]
    %v9517 = vld [vmem:[%s0 + $0x9c] sm:$0xf]
    %v9518 = vld [vmem:[%s0 + $0xa0] sm:$0xf]
    %v9519 = vld [vmem:[%s0 + $0xa4] sm:$0xf]
    %v9520 = vld [vmem:[%s0 + $0xa8] sm:$0xf]
    %v9521 = vld [vmem:[%s0 + $0xac] sm:$0xf]
    %v9522 = vld [vmem:[%s0 + $0xb0] sm:$0xf]
    %v9523 = vld [vmem:[%s0 + $0xb4] sm:$0xf]
    %v9524 = vld [vmem:[%s0 + $0xb8] sm:$0xf]
    %v9525 = vld [vmem:[%s0 + $0xbc] sm:$0xf]
    %v9526 = vld [vmem:[%s0 + $0xc0] sm:$0xf]
    %v9527 = vld [vmem:[%s0 + $0xc4] sm:$0xf]
    %v9528 = vld [vmem:[%s0 + $0xc8] sm:$0xf]
    %v9529 = vld [vmem:[%s0 + $0xcc] sm:$0xf]
    %v9530 = vld [vmem:[%s0 + $0xd0] sm:$0xf]
    %v9531 = vld [vmem:[%s0 + $0xd4] sm:$0xf]
    %v9532 = vld [vmem:[%s0 + $0xd8] sm:$0xf]
    %v9533 = vld [vmem:[%s0 + $0xdc] sm:$0xf]
    %v9534 = vld [vmem:[%s0 + $0xe0] sm:$0xf]
    %v9535 = vld [vmem:[%s0 + $0xe4] sm:$0xf]
    %v9536 = vld [vmem:[%s0 + $0xe8] sm:$0xf]
    %v9537 = vld [vmem:[%s0 + $0xec] sm:$0xf]
    %v9538 = vld [vmem:[%s0 + $0xf0] sm:$0xf]
    %v9539 = vld [vmem:[%s0 + $0xf4] sm:$0xf]
    %v9540 = vld [vmem:[%s0 + $0xf8] sm:$0xf]
    %v9541 = vld [vmem:[%s0 + $0xfc] sm:$0xf]
    %v9542 = vld [vmem:[%s0 + $0x100] sm:$0xf]
    %v9543 = vld [vmem:[%s0 + $0x104] sm:$0xf]
    %v9544 = vld [vmem:[%s0 + $0x108] sm:$0xf]
    %v9545 = vld [vmem:[%s0 + $0x10c] sm:$0xf]
    %v9546 = vld [vmem:[%s0 + $0x110] sm:$0xf]
    %v9547 = vld [vmem:[%s0 + $0x114] sm:$0xf]
    %v9548 = vld [vmem:[%s0 + $0x118] sm:$0xf]
    %v9549 = vld [vmem:[%s0 + $0x11c] sm:$0xf]
    %v9550 = vld [vmem:[%s0 + $0x120] sm:$0xf]
    %v9551 = vld [vmem:[%s0 + $0x124] sm:$0xf]
    %v9552 = vld [vmem:[%s0 + $0x128] sm:$0xf]
    %v9553 = vld [vmem:[%s0 + $0x12c] sm:$0xf]
    %v9554 = vld [vmem:[%s0 + $0x130] sm:$0xf]
    %v9555 = vld [vmem:[%s0 + $0x134] sm:$0xf]
    %v9556 = vld [vmem:[%s0 + $0x138] sm:$0xf]
    %v9557 = vld [vmem:[%s0 + $0x13c] sm:$0xf]
    %v9558 = vld [vmem:[%s0 + $0x140] sm:$0xf]
    %v9559 = vld [vmem:[%s0 + $0x144] sm:$0xf]
    %v9560 = vld [vmem:[%s0 + $0x148] sm:$0xf]
    %v9561 = vld [vmem:[%s0 + $0x14c] sm:$0xf]
    %v9562 = vld [vmem:[%s0 + $0x150] sm:$0xf]
    %v9563 = vld [vmem:[%s0 + $0x154] sm:$0xf]
    %v9564 = vld [vmem:[%s0 + $0x158] sm:$0x7]
    %v9565 = vld [vmem:[%s1 + $0x20] sm:$0xf]
    %v9649 = vunpack.c.l.b16 %v9482
    %v9650 = vunpack.c.l.b16 %v9483
    %v9651 = vunpack.c.l.b16 %v9484
    %v9652 = vunpack.c.l.b16 %v9485
    %v9653 = vunpack.c.l.b16 %v9486
    %v9654 = vunpack.c.l.b16 %v9487
    %v9655 = vunpack.c.l.b16 %v9488
    %v9656 = vunpack.c.l.b16 %v9489
    %v9657 = vunpack.c.l.b16 %v9490
    %v9658 = vunpack.c.l.b16 %v9491
    %v9659 = vunpack.c.l.b16 %v9492
    %v9660 = vunpack.c.l.b16 %v9493
    %v9661 = vunpack.c.l.b16 %v9494
    %v9662 = vunpack.c.l.b16 %v9495
    %v9663 = vunpack.c.l.b16 %v9496
    %v9664 = vunpack.c.l.b16 %v9497
    %v9665 = vunpack.c.l.b16 %v9498
    %v9666 = vunpack.c.l.b16 %v9499
    %v9667 = vunpack.c.l.b16 %v9500
    %v9668 = vunpack.c.l.b16 %v9501
    %v9669 = vunpack.c.l.b16 %v9502
    %v9670 = vunpack.c.l.b16 %v9503
    %v9671 = vunpack.c.l.b16 %v9504
    %v9672 = vunpack.c.l.b16 %v9505
    %v9673 = vunpack.c.l.b16 %v9506
    %v9674 = vunpack.c.l.b16 %v9507
    %v9675 = vunpack.c.l.b16 %v9508
    %v9676 = vunpack.c.l.b16 %v9509
    %v9677 = vunpack.c.l.b16 %v9510
    %v9678 = vunpack.c.l.b16 %v9511
    %v9679 = vunpack.c.l.b16 %v9512
    %v9680 = vunpack.c.l.b16 %v9513
    %v9681 = vunpack.c.l.b16 %v9514
    %v9682 = vunpack.c.l.b16 %v9515
    %v9683 = vunpack.c.l.b16 %v9516
    %v9684 = vunpack.c.l.b16 %v9517
    %v9685 = vunpack.c.l.b16 %v9518
    %v9686 = vunpack.c.l.b16 %v9519
    %v9687 = vunpack.c.l.b16 %v9520
    %v9688 = vunpack.c.l.b16 %v9521
    %v9689 = vunpack.c.l.b16 %v9522
    %v9690 = vunpack.c.l.b16 %v9523
    %v9691 = vunpack.c.l.b16 %v9524
    %v9692 = vunpack.c.l.b16 %v9525
    %v9693 = vunpack.c.l.b16 %v9526
    %v9694 = vunpack.c.l.b16 %v9527
    %v9695 = vunpack.c.l.b16 %v9528
    %v9696 = vunpack.c.l.b16 %v9529
    %v9697 = vunpack.c.l.b16 %v9530
    %v9698 = vunpack.c.l.b16 %v9531
    %v9699 = vunpack.c.l.b16 %v9532
    %v9700 = vunpack.c.l.b16 %v9533
    %v9701 = vunpack.c.l.b16 %v9534
    %v9702 = vunpack.c.l.b16 %v9535
    %v9703 = vunpack.c.l.b16 %v9536
    %v9704 = vunpack.c.l.b16 %v9537
    %v9705 = vunpack.c.l.b16 %v9538
    %v9706 = vunpack.c.l.b16 %v9539
    %v9707 = vunpack.c.l.b16 %v9540
    %v9708 = vunpack.c.l.b16 %v9541
    %v9709 = vunpack.c.l.b16 %v9542
    %v9710 = vunpack.c.l.b16 %v9543
    %v9711 = vunpack.c.l.b16 %v9544
    %v9712 = vunpack.c.l.b16 %v9545
    %v9713 = vunpack.c.l.b16 %v9546
    %v9714 = vunpack.c.l.b16 %v9547
    %v9715 = vunpack.c.l.b16 %v9548
    %v9716 = vunpack.c.l.b16 %v9549
    %v9717 = vunpack.c.l.b16 %v9550
    %v9718 = vunpack.c.l.b16 %v9551
    %v9719 = vunpack.c.l.b16 %v9552
    %v9720 = vunpack.c.l.b16 %v9553
    %v9721 = vunpack.c.l.b16 %v9554
    %v9722 = vunpack.c.l.b16 %v9555
    %v9723 = vunpack.c.l.b16 %v9556
    %v9724 = vunpack.c.l.b16 %v9557
    %v9725 = vunpack.c.l.b16 %v9558
    %v9726 = vunpack.c.l.b16 %v9559
    %v9727 = vunpack.c.l.b16 %v9560
    %v9728 = vunpack.c.l.b16 %v9561
    %v9729 = vunpack.c.l.b16 %v9562
    %v9730 = vunpack.c.l.b16 %v9563
    %v9731 = vunpack.c.l.b16 %v9564
    %v9732 = vpack.c.b16 %v9650, %v9649
    %v9733 = vpack.c.b16 %v9652, %v9651
    %v9734 = vpack.c.b16 %v9654, %v9653
    %v9735 = vpack.c.b16 %v9656, %v9655
    %v9736 = vpack.c.b16 %v9658, %v9657
    %v9737 = vpack.c.b16 %v9660, %v9659
    %v9738 = vpack.c.b16 %v9662, %v9661
    %v9739 = vpack.c.b16 %v9664, %v9663
    %v9740 = vpack.c.b16 %v9666, %v9665
    %v9741 = vpack.c.b16 %v9668, %v9667
    %v9742 = vpack.c.b16 %v9670, %v9669
    %v9743 = vpack.c.b16 %v9672, %v9671
    %v9744 = vpack.c.b16 %v9674, %v9673
    %v9745 = vpack.c.b16 %v9676, %v9675
    %v9746 = vpack.c.b16 %v9678, %v9677
    %v9747 = vpack.c.b16 %v9680, %v9679
    %v9748 = vpack.c.b16 %v9682, %v9681
    %v9749 = vpack.c.b16 %v9684, %v9683
    %v9750 = vpack.c.b16 %v9686, %v9685
    %v9751 = vpack.c.b16 %v9688, %v9687
    %v9752 = vpack.c.b16 %v9690, %v9689
    %v9753 = vpack.c.b16 %v9692, %v9691
    %v9754 = vpack.c.b16 %v9694, %v9693
    %v9755 = vpack.c.b16 %v9696, %v9695
    %v9756 = vpack.c.b16 %v9698, %v9697
    %v9757 = vpack.c.b16 %v9700, %v9699
    %v9758 = vpack.c.b16 %v9702, %v9701
    %v9759 = vpack.c.b16 %v9704, %v9703
    %v9760 = vpack.c.b16 %v9706, %v9705
    %v9761 = vpack.c.b16 %v9708, %v9707
    %v9762 = vpack.c.b16 %v9710, %v9709
    %v9763 = vpack.c.b16 %v9712, %v9711
    %v9764 = vpack.c.b16 %v9714, %v9713
    %v9765 = vpack.c.b16 %v9716, %v9715
    %v9766 = vpack.c.b16 %v9718, %v9717
    %v9767 = vpack.c.b16 %v9720, %v9719
    %v9768 = vpack.c.b16 %v9722, %v9721
    %v9769 = vpack.c.b16 %v9724, %v9723
    %v9770 = vpack.c.b16 %v9726, %v9725
    %v9771 = vpack.c.b16 %v9728, %v9727
    %v9772 = vpack.c.b16 %v9730, %v9729
    %v9773 = vpack.c.b16 %v9731, %v9731
    %vm9774 = vcmask 1044480
    %v9775 = vrot.slane %v9732, 3
    %v9776 = vrot.slane %v9733, 3
    %v9777 = vsel %vm9774, %v9775, %v9776
    %v9778 = vrot.slane %v9734, 3
    %v9779 = vsel %vm9774, %v9776, %v9778
    %v9780 = vrot.slane %v9735, 3
    %v9781 = vsel %vm9774, %v9778, %v9780
    %v9782 = vrot.slane %v9736, 3
    %v9783 = vsel %vm9774, %v9780, %v9782
    %v9784 = vrot.slane %v9737, 3
    %v9785 = vsel %vm9774, %v9782, %v9784
    %v9786 = vrot.slane %v9738, 3
    %v9787 = vsel %vm9774, %v9784, %v9786
    %v9788 = vrot.slane %v9739, 3
    %v9789 = vsel %vm9774, %v9786, %v9788
    %v9790 = vrot.slane %v9740, 3
    %v9791 = vsel %vm9774, %v9788, %v9790
    %v9792 = vrot.slane %v9741, 3
    %v9793 = vsel %vm9774, %v9790, %v9792
    %v9794 = vrot.slane %v9742, 3
    %v9795 = vsel %vm9774, %v9792, %v9794
    %v9796 = vrot.slane %v9743, 3
    %v9797 = vsel %vm9774, %v9794, %v9796
    %v9798 = vrot.slane %v9744, 3
    %v9799 = vsel %vm9774, %v9796, %v9798
    %v9800 = vrot.slane %v9745, 3
    %v9801 = vsel %vm9774, %v9798, %v9800
    %v9802 = vrot.slane %v9746, 3
    %v9803 = vsel %vm9774, %v9800, %v9802
    %v9804 = vrot.slane %v9747, 3
    %v9805 = vsel %vm9774, %v9802, %v9804
    %v9806 = vrot.slane %v9748, 3
    %v9807 = vsel %vm9774, %v9804, %v9806
    %v9808 = vrot.slane %v9749, 3
    %v9809 = vsel %vm9774, %v9806, %v9808
    %v9810 = vrot.slane %v9750, 3
    %v9811 = vsel %vm9774, %v9808, %v9810
    %v9812 = vrot.slane %v9751, 3
    %v9813 = vsel %vm9774, %v9810, %v9812
    %v9814 = vrot.slane %v9752, 3
    %v9815 = vsel %vm9774, %v9812, %v9814
    %v9816 = vrot.slane %v9753, 3
    %v9817 = vsel %vm9774, %v9814, %v9816
    %v9818 = vrot.slane %v9754, 3
    %v9819 = vsel %vm9774, %v9816, %v9818
    %v9820 = vrot.slane %v9755, 3
    %v9821 = vsel %vm9774, %v9818, %v9820
    %v9822 = vrot.slane %v9756, 3
    %v9823 = vsel %vm9774, %v9820, %v9822
    %v9824 = vrot.slane %v9757, 3
    %v9825 = vsel %vm9774, %v9822, %v9824
    %v9826 = vrot.slane %v9758, 3
    %v9827 = vsel %vm9774, %v9824, %v9826
    %v9828 = vrot.slane %v9759, 3
    %v9829 = vsel %vm9774, %v9826, %v9828
    %v9830 = vrot.slane %v9760, 3
    %v9831 = vsel %vm9774, %v9828, %v9830
    %v9832 = vrot.slane %v9761, 3
    %v9833 = vsel %vm9774, %v9830, %v9832
    %v9834 = vrot.slane %v9762, 3
    %v9835 = vsel %vm9774, %v9832, %v9834
    %v9836 = vrot.slane %v9763, 3
    %v9837 = vsel %vm9774, %v9834, %v9836
    %v9838 = vrot.slane %v9764, 3
    %v9839 = vsel %vm9774, %v9836, %v9838
    %v9840 = vrot.slane %v9765, 3
    %v9841 = vsel %vm9774, %v9838, %v9840
    %v9842 = vrot.slane %v9766, 3
    %v9843 = vsel %vm9774, %v9840, %v9842
    %v9844 = vrot.slane %v9767, 3
    %v9845 = vsel %vm9774, %v9842, %v9844
    %v9846 = vrot.slane %v9768, 3
    %v9847 = vsel %vm9774, %v9844, %v9846
    %v9848 = vrot.slane %v9769, 3
    %v9849 = vsel %vm9774, %v9846, %v9848
    %v9850 = vrot.slane %v9770, 3
    %v9851 = vsel %vm9774, %v9848, %v9850
    %v9852 = vrot.slane %v9771, 3
    %v9853 = vsel %vm9774, %v9850, %v9852
    %v9854 = vrot.slane %v9772, 3
    %v9855 = vsel %vm9774, %v9852, %v9854
    %v9856 = vrot.slane %v9773, 3
    %v9857 = vsel %vm9774, %v9854, %v9856
    %v9859 = vsel %vm313, %v9777, 0
    %v9862 = vsel %vm313, %v9779, 0
    %v9865 = vsel %vm313, %v9781, 0
    %v9868 = vsel %vm313, %v9783, 0
    %v9871 = vsel %vm313, %v9785, 0
    %v9874 = vsel %vm313, %v9787, 0
    %v9877 = vsel %vm313, %v9789, 0
    %v9880 = vsel %vm313, %v9791, 0
    %v9883 = vsel %vm313, %v9793, 0
    %v9886 = vsel %vm313, %v9795, 0
    %v9889 = vsel %vm313, %v9797, 0
    %v9892 = vsel %vm313, %v9799, 0
    %v9895 = vsel %vm313, %v9801, 0
    %v9898 = vsel %vm313, %v9803, 0
    %v9901 = vsel %vm313, %v9805, 0
    %v9904 = vsel %vm313, %v9807, 0
    %v9907 = vsel %vm313, %v9809, 0
    %v9910 = vsel %vm313, %v9811, 0
    %v9913 = vsel %vm313, %v9813, 0
    %v9916 = vsel %vm313, %v9815, 0
    %v9919 = vsel %vm313, %v9817, 0
    %v9922 = vsel %vm313, %v9819, 0
    %v9925 = vsel %vm313, %v9821, 0
    %v9928 = vsel %vm313, %v9823, 0
    %v9931 = vsel %vm313, %v9825, 0
    %v9934 = vsel %vm313, %v9827, 0
    %v9937 = vsel %vm313, %v9829, 0
    %v9940 = vsel %vm313, %v9831, 0
    %v9943 = vsel %vm313, %v9833, 0
    %v9946 = vsel %vm313, %v9835, 0
    %v9949 = vsel %vm313, %v9837, 0
    %v9952 = vsel %vm313, %v9839, 0
    %v9955 = vsel %vm313, %v9841, 0
    %v9958 = vsel %vm313, %v9843, 0
    %v9961 = vsel %vm313, %v9845, 0
    %v9964 = vsel %vm313, %v9847, 0
    %v9967 = vsel %vm313, %v9849, 0
    %v9970 = vsel %vm313, %v9851, 0
    %v9973 = vsel %vm313, %v9853, 0
    %v9976 = vsel %vm313, %v9855, 0
    %v9979 = vsel %vm313, %v9857, 0
    %v9982 = vsel %vm437, %v9565, 0
    %9984 = vmatprep.subr.bf16.mxu0 0
    %9985 = vmatpush1.bf16.msra.mxu0 %v9982
    %9986 = vmatprep.subr.bf16.mxu0 0
    %9987 = vmatpush1.bf16.msra.mxu0 0
    %9988 = vmatprep.subr.bf16.mxu0 0
    %9989 = vmatpush1.bf16.msra.mxu0 0
    %9990 = vmatprep.subr.bf16.mxu0 0
    %9991 = vmatpush1.bf16.msra.mxu0 0
    %9992 = vmatprep.subr.bf16.mxu0 0
    %9993 = vmatpush1.bf16.msra.mxu0 0
    %9994 = vmatprep.subr.bf16.mxu0 0
    %9995 = vmatpush1.bf16.msra.mxu0 0
    %9996 = vmatprep.subr.bf16.mxu0 0
    %9997 = vmatpush1.bf16.msra.mxu0 0
    %9998 = vmatprep.subr.bf16.mxu0 0
    %9999 = vmatpush1.bf16.msra.mxu0 0
    %10000 = vmatprep.subr.bf16.mxu0 0
    %10001 = vmatpush1.bf16.msra.mxu0 0
    %10002 = vmatprep.subr.bf16.mxu0 0
    %10003 = vmatpush1.bf16.msra.mxu0 0
    %10004 = vmatprep.subr.bf16.mxu0 0
    %10005 = vmatpush1.bf16.msra.mxu0 0
    %10006 = vmatprep.subr.bf16.mxu0 0
    %10007 = vmatpush1.bf16.msra.mxu0 0
    %10008 = vmatprep.subr.bf16.mxu0 0
    %10009 = vmatpush1.bf16.msra.mxu0 0
    %10010 = vmatprep.subr.bf16.mxu0 0
    %10011 = vmatpush1.bf16.msra.mxu0 0
    %10012 = vmatprep.subr.bf16.mxu0 0
    %10013 = vmatpush1.bf16.msra.mxu0 0
    %10014 = vmatprep.subr.bf16.mxu0 0
    %10015 = vmatpush1.bf16.msra.mxu0 0
    %10016 = vmatprep.mubr.bf16.mxu0 0
    %10017 = vmatmul.mubr.bf16.gmra.mrb[0].mxu0 %v9859
    %v10018 = vpop.f32.mrb[0].mxu0
    %v10019 = vadd.f32 0.0, %v10018
    %v10020 = vpop.f32.mrb[0].mxu0
    %v10021 = vpop.f32.mrb[0].mxu0
    %v10022 = vadd.f32 0.0, %v10021
    %v10023 = vpop.f32.mrb[0].mxu0
    %10024 = vmatprep.mubr.bf16.mxu0 0
    %10025 = vmatmul.mubr.bf16.gmra.mrb[0].mxu0 %v9862
    %v10026 = vpop.f32.mrb[0].mxu0
    %v10027 = vadd.f32 0.0, %v10026
    %v10028 = vpop.f32.mrb[0].mxu0
    %v10029 = vpop.f32.mrb[0].mxu0
    %v10030 = vadd.f32 0.0, %v10029
    %v10031 = vpop.f32.mrb[0].mxu0
    %10032 = vmatprep.mubr.bf16.mxu0 0
    %10033 = vmatmul.mubr.bf16.gmra.mrb[0].mxu0 %v9865
    %v10034 = vpop.f32.mrb[0].mxu0
    %v10035 = vadd.f32 0.0, %v10034
    %v10036 = vpop.f32.mrb[0].mxu0
    %v10037 = vpop.f32.mrb[0].mxu0
    %v10038 = vadd.f32 0.0, %v10037
    %v10039 = vpop.f32.mrb[0].mxu0
    %10040 = vmatprep.mubr.bf16.mxu0 0
    %10041 = vmatmul.mubr.bf16.gmra.mrb[0].mxu0 %v9868
    %v10042 = vpop.f32.mrb[0].mxu0
    %v10043 = vadd.f32 0.0, %v10042
    %v10044 = vpop.f32.mrb[0].mxu0
    %v10045 = vpop.f32.mrb[0].mxu0
    %v10046 = vadd.f32 0.0, %v10045
    %v10047 = vpop.f32.mrb[0].mxu0
    %10048 = vmatprep.mubr.bf16.mxu0 0
    %10049 = vmatmul.mubr.bf16.gmra.mrb[0].mxu0 %v9871
    %v10050 = vpop.f32.mrb[0].mxu0
    %v10051 = vadd.f32 0.0, %v10050
    %v10052 = vpop.f32.mrb[0].mxu0
    %v10053 = vpop.f32.mrb[0].mxu0
    %v10054 = vadd.f32 0.0, %v10053
    %v10055 = vpop.f32.mrb[0].mxu0
    %10056 = vmatprep.mubr.bf16.mxu0 0
    %10057 = vmatmul.mubr.bf16.gmra.mrb[0].mxu0 %v9874
    %v10058 = vpop.f32.mrb[0].mxu0
    %v10059 = vadd.f32 0.0, %v10058
    %v10060 = vpop.f32.mrb[0].mxu0
    %v10061 = vpop.f32.mrb[0].mxu0
    %v10062 = vadd.f32 0.0, %v10061
    %v10063 = vpop.f32.mrb[0].mxu0
    %10064 = vmatprep.mubr.bf16.mxu0 0
    %10065 = vmatmul.mubr.bf16.gmra.mrb[0].mxu0 %v9877
    %v10066 = vpop.f32.mrb[0].mxu0
    %v10067 = vadd.f32 0.0, %v10066
    %v10068 = vpop.f32.mrb[0].mxu0
    %v10069 = vpop.f32.mrb[0].mxu0
    %v10070 = vadd.f32 0.0, %v10069
    %v10071 = vpop.f32.mrb[0].mxu0
    %10072 = vmatprep.mubr.bf16.mxu0 0
    %10073 = vmatmul.mubr.bf16.gmra.mrb[0].mxu0 %v9880
    %v10074 = vpop.f32.mrb[0].mxu0
    %v10075 = vadd.f32 0.0, %v10074
    %v10076 = vpop.f32.mrb[0].mxu0
    %v10077 = vpop.f32.mrb[0].mxu0
    %v10078 = vadd.f32 0.0, %v10077
    %v10079 = vpop.f32.mrb[0].mxu0
    %10080 = vmatprep.mubr.bf16.mxu0 0
    %10081 = vmatmul.mubr.bf16.gmra.mrb[0].mxu0 %v9883
    %v10082 = vpop.f32.mrb[0].mxu0
    %v10083 = vadd.f32 0.0, %v10082
    %v10084 = vpop.f32.mrb[0].mxu0
    %v10085 = vpop.f32.mrb[0].mxu0
    %v10086 = vadd.f32 0.0, %v10085
    %v10087 = vpop.f32.mrb[0].mxu0
    %10088 = vmatprep.mubr.bf16.mxu0 0
    %10089 = vmatmul.mubr.bf16.gmra.mrb[0].mxu0 %v9886
    %v10090 = vpop.f32.mrb[0].mxu0
    %v10091 = vadd.f32 0.0, %v10090
    %v10092 = vpop.f32.mrb[0].mxu0
    %v10093 = vpop.f32.mrb[0].mxu0
    %v10094 = vadd.f32 0.0, %v10093
    %v10095 = vpop.f32.mrb[0].mxu0
    %10096 = vmatprep.mubr.bf16.mxu0 0
    %10097 = vmatmul.mubr.bf16.gmra.mrb[0].mxu0 %v9889
    %v10098 = vpop.f32.mrb[0].mxu0
    %v10099 = vadd.f32 0.0, %v10098
    %v10100 = vpop.f32.mrb[0].mxu0
    %v10101 = vpop.f32.mrb[0].mxu0
    %v10102 = vadd.f32 0.0, %v10101
    %v10103 = vpop.f32.mrb[0].mxu0
    %10104 = vmatprep.mubr.bf16.mxu0 0
    %10105 = vmatmul.mubr.bf16.gmra.mrb[0].mxu0 %v9892
    %v10106 = vpop.f32.mrb[0].mxu0
    %v10107 = vadd.f32 0.0, %v10106
    %v10108 = vpop.f32.mrb[0].mxu0
    %v10109 = vpop.f32.mrb[0].mxu0
    %v10110 = vadd.f32 0.0, %v10109
    %v10111 = vpop.f32.mrb[0].mxu0
    %10112 = vmatprep.mubr.bf16.mxu0 0
    %10113 = vmatmul.mubr.bf16.gmra.mrb[0].mxu0 %v9895
    %v10114 = vpop.f32.mrb[0].mxu0
    %v10115 = vadd.f32 0.0, %v10114
    %v10116 = vpop.f32.mrb[0].mxu0
    %v10117 = vpop.f32.mrb[0].mxu0
    %v10118 = vadd.f32 0.0, %v10117
    %v10119 = vpop.f32.mrb[0].mxu0
    %10120 = vmatprep.mubr.bf16.mxu0 0
    %10121 = vmatmul.mubr.bf16.gmra.mrb[0].mxu0 %v9898
    %v10122 = vpop.f32.mrb[0].mxu0
    %v10123 = vadd.f32 0.0, %v10122
    %v10124 = vpop.f32.mrb[0].mxu0
    %v10125 = vpop.f32.mrb[0].mxu0
    %v10126 = vadd.f32 0.0, %v10125
    %v10127 = vpop.f32.mrb[0].mxu0
    %10128 = vmatprep.mubr.bf16.mxu0 0
    %10129 = vmatmul.mubr.bf16.gmra.mrb[0].mxu0 %v9901
    %v10130 = vpop.f32.mrb[0].mxu0
    %v10131 = vadd.f32 0.0, %v10130
    %v10132 = vpop.f32.mrb[0].mxu0
    %v10133 = vpop.f32.mrb[0].mxu0
    %v10134 = vadd.f32 0.0, %v10133
    %v10135 = vpop.f32.mrb[0].mxu0
    %10136 = vmatprep.mubr.bf16.mxu0 0
    %10137 = vmatmul.mubr.bf16.gmra.mrb[0].mxu0 %v9904
    %v10138 = vpop.f32.mrb[0].mxu0
    %v10139 = vadd.f32 0.0, %v10138
    %v10140 = vpop.f32.mrb[0].mxu0
    %v10141 = vpop.f32.mrb[0].mxu0
    %v10142 = vadd.f32 0.0, %v10141
    %v10143 = vpop.f32.mrb[0].mxu0
    %10144 = vmatprep.mubr.bf16.mxu0 0
    %10145 = vmatmul.mubr.bf16.gmra.mrb[0].mxu0 %v9907
    %v10146 = vpop.f32.mrb[0].mxu0
    %v10147 = vadd.f32 0.0, %v10146
    %v10148 = vpop.f32.mrb[0].mxu0
    %v10149 = vpop.f32.mrb[0].mxu0
    %v10150 = vadd.f32 0.0, %v10149
    %v10151 = vpop.f32.mrb[0].mxu0
    %10152 = vmatprep.mubr.bf16.mxu0 0
    %10153 = vmatmul.mubr.bf16.gmra.mrb[0].mxu0 %v9910
    %v10154 = vpop.f32.mrb[0].mxu0
    %v10155 = vadd.f32 0.0, %v10154
    %v10156 = vpop.f32.mrb[0].mxu0
    %v10157 = vpop.f32.mrb[0].mxu0
    %v10158 = vadd.f32 0.0, %v10157
    %v10159 = vpop.f32.mrb[0].mxu0
    %10160 = vmatprep.mubr.bf16.mxu0 0
    %10161 = vmatmul.mubr.bf16.gmra.mrb[0].mxu0 %v9913
    %v10162 = vpop.f32.mrb[0].mxu0
    %v10163 = vadd.f32 0.0, %v10162
    %v10164 = vpop.f32.mrb[0].mxu0
    %v10165 = vpop.f32.mrb[0].mxu0
    %v10166 = vadd.f32 0.0, %v10165
    %v10167 = vpop.f32.mrb[0].mxu0
    %10168 = vmatprep.mubr.bf16.mxu0 0
    %10169 = vmatmul.mubr.bf16.gmra.mrb[0].mxu0 %v9916
    %v10170 = vpop.f32.mrb[0].mxu0
    %v10171 = vadd.f32 0.0, %v10170
    %v10172 = vpop.f32.mrb[0].mxu0
    %v10173 = vpop.f32.mrb[0].mxu0
    %v10174 = vadd.f32 0.0, %v10173
    %v10175 = vpop.f32.mrb[0].mxu0
    %10176 = vmatprep.mubr.bf16.mxu0 0
    %10177 = vmatmul.mubr.bf16.gmra.mrb[0].mxu0 %v9919
    %v10178 = vpop.f32.mrb[0].mxu0
    %v10179 = vadd.f32 0.0, %v10178
    %v10180 = vpop.f32.mrb[0].mxu0
    %v10181 = vpop.f32.mrb[0].mxu0
    %v10182 = vadd.f32 0.0, %v10181
    %v10183 = vpop.f32.mrb[0].mxu0
    %10184 = vmatprep.mubr.bf16.mxu0 0
    %10185 = vmatmul.mubr.bf16.gmra.mrb[0].mxu0 %v9922
    %v10186 = vpop.f32.mrb[0].mxu0
    %v10187 = vadd.f32 0.0, %v10186
    %v10188 = vpop.f32.mrb[0].mxu0
    %v10189 = vpop.f32.mrb[0].mxu0
    %v10190 = vadd.f32 0.0, %v10189
    %v10191 = vpop.f32.mrb[0].mxu0
    %10192 = vmatprep.mubr.bf16.mxu0 0
    %10193 = vmatmul.mubr.bf16.gmra.mrb[0].mxu0 %v9925
    %v10194 = vpop.f32.mrb[0].mxu0
    %v10195 = vadd.f32 0.0, %v10194
    %v10196 = vpop.f32.mrb[0].mxu0
    %v10197 = vpop.f32.mrb[0].mxu0
    %v10198 = vadd.f32 0.0, %v10197
    %v10199 = vpop.f32.mrb[0].mxu0
    %10200 = vmatprep.mubr.bf16.mxu0 0
    %10201 = vmatmul.mubr.bf16.gmra.mrb[0].mxu0 %v9928
    %v10202 = vpop.f32.mrb[0].mxu0
    %v10203 = vadd.f32 0.0, %v10202
    %v10204 = vpop.f32.mrb[0].mxu0
    %v10205 = vpop.f32.mrb[0].mxu0
    %v10206 = vadd.f32 0.0, %v10205
    %v10207 = vpop.f32.mrb[0].mxu0
    %10208 = vmatprep.mubr.bf16.mxu0 0
    %10209 = vmatmul.mubr.bf16.gmra.mrb[0].mxu0 %v9931
    %v10210 = vpop.f32.mrb[0].mxu0
    %v10211 = vadd.f32 0.0, %v10210
    %v10212 = vpop.f32.mrb[0].mxu0
    %v10213 = vpop.f32.mrb[0].mxu0
    %v10214 = vadd.f32 0.0, %v10213
    %v10215 = vpop.f32.mrb[0].mxu0
    %10216 = vmatprep.mubr.bf16.mxu0 0
    %10217 = vmatmul.mubr.bf16.gmra.mrb[0].mxu0 %v9934
    %v10218 = vpop.f32.mrb[0].mxu0
    %v10219 = vadd.f32 0.0, %v10218
    %v10220 = vpop.f32.mrb[0].mxu0
    %v10221 = vpop.f32.mrb[0].mxu0
    %v10222 = vadd.f32 0.0, %v10221
    %v10223 = vpop.f32.mrb[0].mxu0
    %10224 = vmatprep.mubr.bf16.mxu0 0
    %10225 = vmatmul.mubr.bf16.gmra.mrb[0].mxu0 %v9937
    %v10226 = vpop.f32.mrb[0].mxu0
    %v10227 = vadd.f32 0.0, %v10226
    %v10228 = vpop.f32.mrb[0].mxu0
    %v10229 = vpop.f32.mrb[0].mxu0
    %v10230 = vadd.f32 0.0, %v10229
    %v10231 = vpop.f32.mrb[0].mxu0
    %10232 = vmatprep.mubr.bf16.mxu0 0
    %10233 = vmatmul.mubr.bf16.gmra.mrb[0].mxu0 %v9940
    %v10234 = vpop.f32.mrb[0].mxu0
    %v10235 = vadd.f32 0.0, %v10234
    %v10236 = vpop.f32.mrb[0].mxu0
    %v10237 = vpop.f32.mrb[0].mxu0
    %v10238 = vadd.f32 0.0, %v10237
    %v10239 = vpop.f32.mrb[0].mxu0
    %10240 = vmatprep.mubr.bf16.mxu0 0
    %10241 = vmatmul.mubr.bf16.gmra.mrb[0].mxu0 %v9943
    %v10242 = vpop.f32.mrb[0].mxu0
    %v10243 = vadd.f32 0.0, %v10242
    %v10244 = vpop.f32.mrb[0].mxu0
    %v10245 = vpop.f32.mrb[0].mxu0
    %v10246 = vadd.f32 0.0, %v10245
    %v10247 = vpop.f32.mrb[0].mxu0
    %10248 = vmatprep.mubr.bf16.mxu0 0
    %10249 = vmatmul.mubr.bf16.gmra.mrb[0].mxu0 %v9946
    %v10250 = vpop.f32.mrb[0].mxu0
    %v10251 = vadd.f32 0.0, %v10250
    %v10252 = vpop.f32.mrb[0].mxu0
    %v10253 = vpop.f32.mrb[0].mxu0
    %v10254 = vadd.f32 0.0, %v10253
    %v10255 = vpop.f32.mrb[0].mxu0
    %10256 = vmatprep.mubr.bf16.mxu0 0
    %10257 = vmatmul.mubr.bf16.gmra.mrb[0].mxu0 %v9949
    %v10258 = vpop.f32.mrb[0].mxu0
    %v10259 = vadd.f32 0.0, %v10258
    %v10260 = vpop.f32.mrb[0].mxu0
    %v10261 = vpop.f32.mrb[0].mxu0
    %v10262 = vadd.f32 0.0, %v10261
    %v10263 = vpop.f32.mrb[0].mxu0
    %10264 = vmatprep.mubr.bf16.mxu0 0
    %10265 = vmatmul.mubr.bf16.gmra.mrb[0].mxu0 %v9952
    %v10266 = vpop.f32.mrb[0].mxu0
    %v10267 = vadd.f32 0.0, %v10266
    %v10268 = vpop.f32.mrb[0].mxu0
    %v10269 = vpop.f32.mrb[0].mxu0
    %v10270 = vadd.f32 0.0, %v10269
    %v10271 = vpop.f32.mrb[0].mxu0
    %10272 = vmatprep.mubr.bf16.mxu0 0
    %10273 = vmatmul.mubr.bf16.gmra.mrb[0].mxu0 %v9955
    %v10274 = vpop.f32.mrb[0].mxu0
    %v10275 = vadd.f32 0.0, %v10274
    %v10276 = vpop.f32.mrb[0].mxu0
    %v10277 = vpop.f32.mrb[0].mxu0
    %v10278 = vadd.f32 0.0, %v10277
    %v10279 = vpop.f32.mrb[0].mxu0
    %10280 = vmatprep.mubr.bf16.mxu0 0
    %10281 = vmatmul.mubr.bf16.gmra.mrb[0].mxu0 %v9958
    %v10282 = vpop.f32.mrb[0].mxu0
    %v10283 = vadd.f32 0.0, %v10282
    %v10284 = vpop.f32.mrb[0].mxu0
    %v10285 = vpop.f32.mrb[0].mxu0
    %v10286 = vadd.f32 0.0, %v10285
    %v10287 = vpop.f32.mrb[0].mxu0
    %10288 = vmatprep.mubr.bf16.mxu0 0
    %10289 = vmatmul.mubr.bf16.gmra.mrb[0].mxu0 %v9961
    %v10290 = vpop.f32.mrb[0].mxu0
    %v10291 = vadd.f32 0.0, %v10290
    %v10292 = vpop.f32.mrb[0].mxu0
    %v10293 = vpop.f32.mrb[0].mxu0
    %v10294 = vadd.f32 0.0, %v10293
    %v10295 = vpop.f32.mrb[0].mxu0
    %10296 = vmatprep.mubr.bf16.mxu0 0
    %10297 = vmatmul.mubr.bf16.gmra.mrb[0].mxu0 %v9964
    %v10298 = vpop.f32.mrb[0].mxu0
    %v10299 = vadd.f32 0.0, %v10298
    %v10300 = vpop.f32.mrb[0].mxu0
    %v10301 = vpop.f32.mrb[0].mxu0
    %v10302 = vadd.f32 0.0, %v10301
    %v10303 = vpop.f32.mrb[0].mxu0
    %10304 = vmatprep.mubr.bf16.mxu0 0
    %10305 = vmatmul.mubr.bf16.gmra.mrb[0].mxu0 %v9967
    %v10306 = vpop.f32.mrb[0].mxu0
    %v10307 = vadd.f32 0.0, %v10306
    %v10308 = vpop.f32.mrb[0].mxu0
    %v10309 = vpop.f32.mrb[0].mxu0
    %v10310 = vadd.f32 0.0, %v10309
    %v10311 = vpop.f32.mrb[0].mxu0
    %10312 = vmatprep.mubr.bf16.mxu0 0
    %10313 = vmatmul.mubr.bf16.gmra.mrb[0].mxu0 %v9970
    %v10314 = vpop.f32.mrb[0].mxu0
    %v10315 = vadd.f32 0.0, %v10314
    %v10316 = vpop.f32.mrb[0].mxu0
    %v10317 = vpop.f32.mrb[0].mxu0
    %v10318 = vadd.f32 0.0, %v10317
    %v10319 = vpop.f32.mrb[0].mxu0
    %10320 = vmatprep.mubr.bf16.mxu0 0
    %10321 = vmatmul.mubr.bf16.gmra.mrb[0].mxu0 %v9973
    %v10322 = vpop.f32.mrb[0].mxu0
    %v10323 = vadd.f32 0.0, %v10322
    %v10324 = vpop.f32.mrb[0].mxu0
    %v10325 = vpop.f32.mrb[0].mxu0
    %v10326 = vadd.f32 0.0, %v10325
    %v10327 = vpop.f32.mrb[0].mxu0
    %10328 = vmatprep.mubr.bf16.mxu0 0
    %10329 = vmatmul.mubr.bf16.gmra.mrb[0].mxu0 %v9976
    %v10330 = vpop.f32.mrb[0].mxu0
    %v10331 = vadd.f32 0.0, %v10330
    %v10332 = vpop.f32.mrb[0].mxu0
    %v10333 = vpop.f32.mrb[0].mxu0
    %v10334 = vadd.f32 0.0, %v10333
    %v10335 = vpop.f32.mrb[0].mxu0
    %10336 = vmatprep.mubr.bf16.mxu0 0
    %10337 = vmatmul.mubr.bf16.gmra.mrb[0].mxu0 %v9979
    %v10338 = vpop.f32.mrb[0].mxu0
    %v10339 = vadd.f32 0.0, %v10338
    %v10340 = vpop.f32.mrb[0].mxu0
    %v10341 = vpop.f32.mrb[0].mxu0
    %v10342 = vadd.f32 0.0, %v10341
    %v10343 = vpop.f32.mrb[0].mxu0
    %10344 = vdwg.mxu0
    %v10345 = vld [vmem:[#allocation2] sm:$0xff]
    %v10346 = vld [vmem:[#allocation2 + $0x8] sm:$0xff]
    %v10347 = vld [vmem:[#allocation2 + $0x10] sm:$0xff]
    %v10348 = vld [vmem:[#allocation2 + $0x18] sm:$0xff]
    %v10349 = vld [vmem:[#allocation2 + $0x20] sm:$0xff]
    %v10350 = vld [vmem:[#allocation2 + $0x28] sm:$0xff]
    %v10351 = vld [vmem:[#allocation2 + $0x30] sm:$0xff]
    %v10352 = vld [vmem:[#allocation2 + $0x38] sm:$0xff]
    %v10353 = vld [vmem:[#allocation2 + $0x40] sm:$0xff]
    %v10354 = vld [vmem:[#allocation2 + $0x48] sm:$0xff]
    %v10355 = vld [vmem:[#allocation2 + $0x50] sm:$0xff]
    %v10356 = vld [vmem:[#allocation2 + $0x58] sm:$0xff]
    %v10357 = vld [vmem:[#allocation2 + $0x60] sm:$0xff]
    %v10358 = vld [vmem:[#allocation2 + $0x68] sm:$0xff]
    %v10359 = vld [vmem:[#allocation2 + $0x70] sm:$0xff]
    %v10360 = vld [vmem:[#allocation2 + $0x78] sm:$0xff]
    %v10361 = vld [vmem:[#allocation2 + $0x80] sm:$0xff]
    %v10362 = vld [vmem:[#allocation2 + $0x88] sm:$0xff]
    %v10363 = vld [vmem:[#allocation2 + $0x90] sm:$0xff]
    %v10364 = vld [vmem:[#allocation2 + $0x98] sm:$0xff]
    %v10365 = vld [vmem:[#allocation2 + $0xa0] sm:$0xff]
    %v10366 = vld [vmem:[#allocation2 + $0xa8] sm:$0xff]
    %v10367 = vld [vmem:[#allocation2 + $0xb0] sm:$0xff]
    %v10368 = vld [vmem:[#allocation2 + $0xb8] sm:$0xff]
    %v10369 = vld [vmem:[#allocation2 + $0xc0] sm:$0xff]
    %v10370 = vld [vmem:[#allocation2 + $0xc8] sm:$0xff]
    %v10371 = vld [vmem:[#allocation2 + $0xd0] sm:$0xff]
    %v10372 = vld [vmem:[#allocation2 + $0xd8] sm:$0xff]
    %v10373 = vld [vmem:[#allocation2 + $0xe0] sm:$0xff]
    %v10374 = vld [vmem:[#allocation2 + $0xe8] sm:$0xff]
    %v10375 = vld [vmem:[#allocation2 + $0xf0] sm:$0xff]
    %v10376 = vld [vmem:[#allocation2 + $0xf8] sm:$0xff]
    %v10377 = vld [vmem:[#allocation2 + $0x100] sm:$0xff]
    %v10378 = vld [vmem:[#allocation2 + $0x108] sm:$0xff]
    %v10379 = vld [vmem:[#allocation2 + $0x110] sm:$0xff]
    %v10380 = vld [vmem:[#allocation2 + $0x118] sm:$0xff]
    %v10381 = vld [vmem:[#allocation2 + $0x120] sm:$0xff]
    %v10382 = vld [vmem:[#allocation2 + $0x128] sm:$0xff]
    %v10383 = vld [vmem:[#allocation2 + $0x130] sm:$0xff]
    %v10384 = vld [vmem:[#allocation2 + $0x138] sm:$0xff]
    %v10385 = vld [vmem:[#allocation2 + $0x140] sm:$0xff]
    %v10386 = vld [vmem:[#allocation2 + $0x148] sm:$0xff]
    %v10387 = vld [vmem:[#allocation2 + $0x150] sm:$0xff]
    %v10388 = vld [vmem:[#allocation2 + $0x158] sm:$0xff]
    %v10389 = vld [vmem:[#allocation2 + $0x160] sm:$0xff]
    %v10390 = vld [vmem:[#allocation2 + $0x168] sm:$0xff]
    %v10391 = vld [vmem:[#allocation2 + $0x170] sm:$0xff]
    %v10392 = vld [vmem:[#allocation2 + $0x178] sm:$0xff]
    %v10393 = vld [vmem:[#allocation2 + $0x180] sm:$0xff]
    %v10394 = vld [vmem:[#allocation2 + $0x188] sm:$0xff]
    %v10395 = vld [vmem:[#allocation2 + $0x190] sm:$0xff]
    %v10396 = vld [vmem:[#allocation2 + $0x198] sm:$0xff]
    %v10397 = vld [vmem:[#allocation2 + $0x1a0] sm:$0xff]
    %v10398 = vld [vmem:[#allocation2 + $0x1a8] sm:$0xff]
    %v10399 = vld [vmem:[#allocation2 + $0x1b0] sm:$0xff]
    %v10400 = vld [vmem:[#allocation2 + $0x1b8] sm:$0xff]
    %v10401 = vld [vmem:[#allocation2 + $0x1c0] sm:$0xff]
    %v10402 = vld [vmem:[#allocation2 + $0x1c8] sm:$0xff]
    %v10403 = vld [vmem:[#allocation2 + $0x1d0] sm:$0xff]
    %v10404 = vld [vmem:[#allocation2 + $0x1d8] sm:$0xff]
    %v10405 = vld [vmem:[#allocation2 + $0x1e0] sm:$0xff]
    %v10406 = vld [vmem:[#allocation2 + $0x1e8] sm:$0xff]
    %v10407 = vld [vmem:[#allocation2 + $0x1f0] sm:$0xff]
    %v10408 = vld [vmem:[#allocation2 + $0x1f8] sm:$0xff]
    %v10409 = vld [vmem:[#allocation2 + $0x200] sm:$0xff]
    %v10410 = vld [vmem:[#allocation2 + $0x208] sm:$0xff]
    %v10411 = vld [vmem:[#allocation2 + $0x210] sm:$0xff]
    %v10412 = vld [vmem:[#allocation2 + $0x218] sm:$0xff]
    %v10413 = vld [vmem:[#allocation2 + $0x220] sm:$0xff]
    %v10414 = vld [vmem:[#allocation2 + $0x228] sm:$0xff]
    %v10415 = vld [vmem:[#allocation2 + $0x230] sm:$0xff]
    %v10416 = vld [vmem:[#allocation2 + $0x238] sm:$0xff]
    %v10417 = vld [vmem:[#allocation2 + $0x240] sm:$0xff]
    %v10418 = vld [vmem:[#allocation2 + $0x248] sm:$0xff]
    %v10419 = vld [vmem:[#allocation2 + $0x250] sm:$0xff]
    %v10420 = vld [vmem:[#allocation2 + $0x258] sm:$0xff]
    %v10421 = vld [vmem:[#allocation2 + $0x260] sm:$0xff]
    %v10422 = vld [vmem:[#allocation2 + $0x268] sm:$0xff]
    %v10423 = vld [vmem:[#allocation2 + $0x270] sm:$0xff]
    %v10424 = vld [vmem:[#allocation2 + $0x278] sm:$0xff]
    %v10425 = vld [vmem:[#allocation2 + $0x280] sm:$0xff]
    %v10426 = vld [vmem:[#allocation2 + $0x288] sm:$0xff]
    %v10427 = vadd.f32 %v10345, %v10019
    %v10428 = vadd.f32 %v10346, %v10022
    %v10429 = vadd.f32 %v10347, %v10027
    %v10430 = vadd.f32 %v10348, %v10030
    %v10431 = vadd.f32 %v10349, %v10035
    %v10432 = vadd.f32 %v10350, %v10038
    %v10433 = vadd.f32 %v10351, %v10043
    %v10434 = vadd.f32 %v10352, %v10046
    %v10435 = vadd.f32 %v10353, %v10051
    %v10436 = vadd.f32 %v10354, %v10054
    %v10437 = vadd.f32 %v10355, %v10059
    %v10438 = vadd.f32 %v10356, %v10062
    %v10439 = vadd.f32 %v10357, %v10067
    %v10440 = vadd.f32 %v10358, %v10070
    %v10441 = vadd.f32 %v10359, %v10075
    %v10442 = vadd.f32 %v10360, %v10078
    %v10443 = vadd.f32 %v10361, %v10083
    %v10444 = vadd.f32 %v10362, %v10086
    %v10445 = vadd.f32 %v10363, %v10091
    %v10446 = vadd.f32 %v10364, %v10094
    %v10447 = vadd.f32 %v10365, %v10099
    %v10448 = vadd.f32 %v10366, %v10102
    %v10449 = vadd.f32 %v10367, %v10107
    %v10450 = vadd.f32 %v10368, %v10110
    %v10451 = vadd.f32 %v10369, %v10115
    %v10452 = vadd.f32 %v10370, %v10118
    %v10453 = vadd.f32 %v10371, %v10123
    %v10454 = vadd.f32 %v10372, %v10126
    %v10455 = vadd.f32 %v10373, %v10131
    %v10456 = vadd.f32 %v10374, %v10134
    %v10457 = vadd.f32 %v10375, %v10139
    %v10458 = vadd.f32 %v10376, %v10142
    %v10459 = vadd.f32 %v10377, %v10147
    %v10460 = vadd.f32 %v10378, %v10150
    %v10461 = vadd.f32 %v10379, %v10155
    %v10462 = vadd.f32 %v10380, %v10158
    %v10463 = vadd.f32 %v10381, %v10163
    %v10464 = vadd.f32 %v10382, %v10166
    %v10465 = vadd.f32 %v10383, %v10171
    %v10466 = vadd.f32 %v10384, %v10174
    %v10467 = vadd.f32 %v10385, %v10179
    %v10468 = vadd.f32 %v10386, %v10182
    %v10469 = vadd.f32 %v10387, %v10187
    %v10470 = vadd.f32 %v10388, %v10190
    %v10471 = vadd.f32 %v10389, %v10195
    %v10472 = vadd.f32 %v10390, %v10198
    %v10473 = vadd.f32 %v10391, %v10203
    %v10474 = vadd.f32 %v10392, %v10206
    %v10475 = vadd.f32 %v10393, %v10211
    %v10476 = vadd.f32 %v10394, %v10214
    %v10477 = vadd.f32 %v10395, %v10219
    %v10478 = vadd.f32 %v10396, %v10222
    %v10479 = vadd.f32 %v10397, %v10227
    %v10480 = vadd.f32 %v10398, %v10230
    %v10481 = vadd.f32 %v10399, %v10235
    %v10482 = vadd.f32 %v10400, %v10238
    %v10483 = vadd.f32 %v10401, %v10243
    %v10484 = vadd.f32 %v10402, %v10246
    %v10485 = vadd.f32 %v10403, %v10251
    %v10486 = vadd.f32 %v10404, %v10254
    %v10487 = vadd.f32 %v10405, %v10259
    %v10488 = vadd.f32 %v10406, %v10262
    %v10489 = vadd.f32 %v10407, %v10267
    %v10490 = vadd.f32 %v10408, %v10270
    %v10491 = vadd.f32 %v10409, %v10275
    %v10492 = vadd.f32 %v10410, %v10278
    %v10493 = vadd.f32 %v10411, %v10283
    %v10494 = vadd.f32 %v10412, %v10286
    %v10495 = vadd.f32 %v10413, %v10291
    %v10496 = vadd.f32 %v10414, %v10294
    %v10497 = vadd.f32 %v10415, %v10299
    %v10498 = vadd.f32 %v10416, %v10302
    %v10499 = vadd.f32 %v10417, %v10307
    %v10500 = vadd.f32 %v10418, %v10310
    %v10501 = vadd.f32 %v10419, %v10315
    %v10502 = vadd.f32 %v10420, %v10318
    %v10503 = vadd.f32 %v10421, %v10323
    %v10504 = vadd.f32 %v10422, %v10326
    %v10505 = vadd.f32 %v10423, %v10331
    %v10506 = vadd.f32 %v10424, %v10334
    %v10507 = vadd.f32 %v10425, %v10339
    %v10508 = vadd.f32 %v10426, %v10342
    %10509 = vst [vmem:[#allocation2] sm:$0xff] %v10427
    %10510 = vst [vmem:[#allocation2 + $0x8] sm:$0xff] %v10428
    %10511 = vst [vmem:[#allocation2 + $0x10] sm:$0xff] %v10429
    %10512 = vst [vmem:[#allocation2 + $0x18] sm:$0xff] %v10430
    %10513 = vst [vmem:[#allocation2 + $0x20] sm:$0xff] %v10431
    %10514 = vst [vmem:[#allocation2 + $0x28] sm:$0xff] %v10432
    %10515 = vst [vmem:[#allocation2 + $0x30] sm:$0xff] %v10433
    %10516 = vst [vmem:[#allocation2 + $0x38] sm:$0xff] %v10434
    %10517 = vst [vmem:[#allocation2 + $0x40] sm:$0xff] %v10435
    %10518 = vst [vmem:[#allocation2 + $0x48] sm:$0xff] %v10436
    %10519 = vst [vmem:[#allocation2 + $0x50] sm:$0xff] %v10437
    %10520 = vst [vmem:[#allocation2 + $0x58] sm:$0xff] %v10438
    %10521 = vst [vmem:[#allocation2 + $0x60] sm:$0xff] %v10439
    %10522 = vst [vmem:[#allocation2 + $0x68] sm:$0xff] %v10440
    %10523 = vst [vmem:[#allocation2 + $0x70] sm:$0xff] %v10441
    %10524 = vst [vmem:[#allocation2 + $0x78] sm:$0xff] %v10442
    %10525 = vst [vmem:[#allocation2 + $0x80] sm:$0xff] %v10443
    %10526 = vst [vmem:[#allocation2 + $0x88] sm:$0xff] %v10444
    %10527 = vst [vmem:[#allocation2 + $0x90] sm:$0xff] %v10445
    %10528 = vst [vmem:[#allocation2 + $0x98] sm:$0xff] %v10446
    %10529 = vst [vmem:[#allocation2 + $0xa0] sm:$0xff] %v10447
    %10530 = vst [vmem:[#allocation2 + $0xa8] sm:$0xff] %v10448
    %10531 = vst [vmem:[#allocation2 + $0xb0] sm:$0xff] %v10449
    %10532 = vst [vmem:[#allocation2 + $0xb8] sm:$0xff] %v10450
    %10533 = vst [vmem:[#allocation2 + $0xc0] sm:$0xff] %v10451
    %10534 = vst [vmem:[#allocation2 + $0xc8] sm:$0xff] %v10452
    %10535 = vst [vmem:[#allocation2 + $0xd0] sm:$0xff] %v10453
    %10536 = vst [vmem:[#allocation2 + $0xd8] sm:$0xff] %v10454
    %10537 = vst [vmem:[#allocation2 + $0xe0] sm:$0xff] %v10455
    %10538 = vst [vmem:[#allocation2 + $0xe8] sm:$0xff] %v10456
    %10539 = vst [vmem:[#allocation2 + $0xf0] sm:$0xff] %v10457
    %10540 = vst [vmem:[#allocation2 + $0xf8] sm:$0xff] %v10458
    %10541 = vst [vmem:[#allocation2 + $0x100] sm:$0xff] %v10459
    %10542 = vst [vmem:[#allocation2 + $0x108] sm:$0xff] %v10460
    %10543 = vst [vmem:[#allocation2 + $0x110] sm:$0xff] %v10461
    %10544 = vst [vmem:[#allocation2 + $0x118] sm:$0xff] %v10462
    %10545 = vst [vmem:[#allocation2 + $0x120] sm:$0xff] %v10463
    %10546 = vst [vmem:[#allocation2 + $0x128] sm:$0xff] %v10464
    %10547 = vst [vmem:[#allocation2 + $0x130] sm:$0xff] %v10465
    %10548 = vst [vmem:[#allocation2 + $0x138] sm:$0xff] %v10466
    %10549 = vst [vmem:[#allocation2 + $0x140] sm:$0xff] %v10467
    %10550 = vst [vmem:[#allocation2 + $0x148] sm:$0xff] %v10468
    %10551 = vst [vmem:[#allocation2 + $0x150] sm:$0xff] %v10469
    %10552 = vst [vmem:[#allocation2 + $0x158] sm:$0xff] %v10470
    %10553 = vst [vmem:[#allocation2 + $0x160] sm:$0xff] %v10471
    %10554 = vst [vmem:[#allocation2 + $0x168] sm:$0xff] %v10472
    %10555 = vst [vmem:[#allocation2 + $0x170] sm:$0xff] %v10473
    %10556 = vst [vmem:[#allocation2 + $0x178] sm:$0xff] %v10474
    %10557 = vst [vmem:[#allocation2 + $0x180] sm:$0xff] %v10475
    %10558 = vst [vmem:[#allocation2 + $0x188] sm:$0xff] %v10476
    %10559 = vst [vmem:[#allocation2 + $0x190] sm:$0xff] %v10477
    %10560 = vst [vmem:[#allocation2 + $0x198] sm:$0xff] %v10478
    %10561 = vst [vmem:[#allocation2 + $0x1a0] sm:$0xff] %v10479
    %10562 = vst [vmem:[#allocation2 + $0x1a8] sm:$0xff] %v10480
    %10563 = vst [vmem:[#allocation2 + $0x1b0] sm:$0xff] %v10481
    %10564 = vst [vmem:[#allocation2 + $0x1b8] sm:$0xff] %v10482
    %10565 = vst [vmem:[#allocation2 + $0x1c0] sm:$0xff] %v10483
    %10566 = vst [vmem:[#allocation2 + $0x1c8] sm:$0xff] %v10484
    %10567 = vst [vmem:[#allocation2 + $0x1d0] sm:$0xff] %v10485
    %10568 = vst [vmem:[#allocation2 + $0x1d8] sm:$0xff] %v10486
    %10569 = vst [vmem:[#allocation2 + $0x1e0] sm:$0xff] %v10487
    %10570 = vst [vmem:[#allocation2 + $0x1e8] sm:$0xff] %v10488
    %10571 = vst [vmem:[#allocation2 + $0x1f0] sm:$0xff] %v10489
    %10572 = vst [vmem:[#allocation2 + $0x1f8] sm:$0xff] %v10490
    %10573 = vst [vmem:[#allocation2 + $0x200] sm:$0xff] %v10491
    %10574 = vst [vmem:[#allocation2 + $0x208] sm:$0xff] %v10492
    %10575 = vst [vmem:[#allocation2 + $0x210] sm:$0xff] %v10493
    %10576 = vst [vmem:[#allocation2 + $0x218] sm:$0xff] %v10494
    %10577 = vst [vmem:[#allocation2 + $0x220] sm:$0xff] %v10495
    %10578 = vst [vmem:[#allocation2 + $0x228] sm:$0xff] %v10496
    %10579 = vst [vmem:[#allocation2 + $0x230] sm:$0xff] %v10497
    %10580 = vst [vmem:[#allocation2 + $0x238] sm:$0xff] %v10498
    %10581 = vst [vmem:[#allocation2 + $0x240] sm:$0xff] %v10499
    %10582 = vst [vmem:[#allocation2 + $0x248] sm:$0xff] %v10500
    %10583 = vst [vmem:[#allocation2 + $0x250] sm:$0xff] %v10501
    %10584 = vst [vmem:[#allocation2 + $0x258] sm:$0xff] %v10502
    %10585 = vst [vmem:[#allocation2 + $0x260] sm:$0xff] %v10503
    %10586 = vst [vmem:[#allocation2 + $0x268] sm:$0xff] %v10504
    %10587 = vst [vmem:[#allocation2 + $0x270] sm:$0xff] %v10505
    %10588 = vst [vmem:[#allocation2 + $0x278] sm:$0xff] %v10506
    %10589 = vst [vmem:[#allocation2 + $0x280] sm:$0xff] %v10507
    %10590 = vst [vmem:[#allocation2 + $0x288] sm:$0xff] %v10508
    %v10591 = vld [vmem:[#allocation2] sm:$0xff]
    %v10592 = vld [vmem:[#allocation2 + $0x8] sm:$0xff]
    %v10593 = vld [vmem:[#allocation2 + $0x10] sm:$0xff]
    %v10594 = vld [vmem:[#allocation2 + $0x18] sm:$0xff]
    %v10595 = vld [vmem:[#allocation2 + $0x20] sm:$0xff]
    %v10596 = vld [vmem:[#allocation2 + $0x28] sm:$0xff]
    %v10597 = vld [vmem:[#allocation2 + $0x30] sm:$0xff]
    %v10598 = vld [vmem:[#allocation2 + $0x38] sm:$0xff]
    %v10599 = vld [vmem:[#allocation2 + $0x40] sm:$0xff]
    %v10600 = vld [vmem:[#allocation2 + $0x48] sm:$0xff]
    %v10601 = vld [vmem:[#allocation2 + $0x50] sm:$0xff]
    %v10602 = vld [vmem:[#allocation2 + $0x58] sm:$0xff]
    %v10603 = vld [vmem:[#allocation2 + $0x60] sm:$0xff]
    %v10604 = vld [vmem:[#allocation2 + $0x68] sm:$0xff]
    %v10605 = vld [vmem:[#allocation2 + $0x70] sm:$0xff]
    %v10606 = vld [vmem:[#allocation2 + $0x78] sm:$0xff]
    %v10607 = vld [vmem:[#allocation2 + $0x80] sm:$0xff]
    %v10608 = vld [vmem:[#allocation2 + $0x88] sm:$0xff]
    %v10609 = vld [vmem:[#allocation2 + $0x90] sm:$0xff]
    %v10610 = vld [vmem:[#allocation2 + $0x98] sm:$0xff]
    %v10611 = vld [vmem:[#allocation2 + $0xa0] sm:$0xff]
    %v10612 = vld [vmem:[#allocation2 + $0xa8] sm:$0xff]
    %v10613 = vld [vmem:[#allocation2 + $0xb0] sm:$0xff]
    %v10614 = vld [vmem:[#allocation2 + $0xb8] sm:$0xff]
    %v10615 = vld [vmem:[#allocation2 + $0xc0] sm:$0xff]
    %v10616 = vld [vmem:[#allocation2 + $0xc8] sm:$0xff]
    %v10617 = vld [vmem:[#allocation2 + $0xd0] sm:$0xff]
    %v10618 = vld [vmem:[#allocation2 + $0xd8] sm:$0xff]
    %v10619 = vld [vmem:[#allocation2 + $0xe0] sm:$0xff]
    %v10620 = vld [vmem:[#allocation2 + $0xe8] sm:$0xff]
    %v10621 = vld [vmem:[#allocation2 + $0xf0] sm:$0xff]
    %v10622 = vld [vmem:[#allocation2 + $0xf8] sm:$0xff]
    %v10623 = vld [vmem:[#allocation2 + $0x100] sm:$0xff]
    %v10624 = vld [vmem:[#allocation2 + $0x108] sm:$0xff]
    %v10625 = vld [vmem:[#allocation2 + $0x110] sm:$0xff]
    %v10626 = vld [vmem:[#allocation2 + $0x118] sm:$0xff]
    %v10627 = vld [vmem:[#allocation2 + $0x120] sm:$0xff]
    %v10628 = vld [vmem:[#allocation2 + $0x128] sm:$0xff]
    %v10629 = vld [vmem:[#allocation2 + $0x130] sm:$0xff]
    %v10630 = vld [vmem:[#allocation2 + $0x138] sm:$0xff]
    %v10631 = vld [vmem:[#allocation2 + $0x140] sm:$0xff]
    %v10632 = vld [vmem:[#allocation2 + $0x148] sm:$0xff]
    %v10633 = vld [vmem:[#allocation2 + $0x150] sm:$0xff]
    %v10634 = vld [vmem:[#allocation2 + $0x158] sm:$0xff]
    %v10635 = vld [vmem:[#allocation2 + $0x160] sm:$0xff]
    %v10636 = vld [vmem:[#allocation2 + $0x168] sm:$0xff]
    %v10637 = vld [vmem:[#allocation2 + $0x170] sm:$0xff]
    %v10638 = vld [vmem:[#allocation2 + $0x178] sm:$0xff]
    %v10639 = vld [vmem:[#allocation2 + $0x180] sm:$0xff]
    %v10640 = vld [vmem:[#allocation2 + $0x188] sm:$0xff]
    %v10641 = vld [vmem:[#allocation2 + $0x190] sm:$0xff]
    %v10642 = vld [vmem:[#allocation2 + $0x198] sm:$0xff]
    %v10643 = vld [vmem:[#allocation2 + $0x1a0] sm:$0xff]
    %v10644 = vld [vmem:[#allocation2 + $0x1a8] sm:$0xff]
    %v10645 = vld [vmem:[#allocation2 + $0x1b0] sm:$0xff]
    %v10646 = vld [vmem:[#allocation2 + $0x1b8] sm:$0xff]
    %v10647 = vld [vmem:[#allocation2 + $0x1c0] sm:$0xff]
    %v10648 = vld [vmem:[#allocation2 + $0x1c8] sm:$0xff]
    %v10649 = vld [vmem:[#allocation2 + $0x1d0] sm:$0xff]
    %v10650 = vld [vmem:[#allocation2 + $0x1d8] sm:$0xff]
    %v10651 = vld [vmem:[#allocation2 + $0x1e0] sm:$0xff]
    %v10652 = vld [vmem:[#allocation2 + $0x1e8] sm:$0xff]
    %v10653 = vld [vmem:[#allocation2 + $0x1f0] sm:$0xff]
    %v10654 = vld [vmem:[#allocation2 + $0x1f8] sm:$0xff]
    %v10655 = vld [vmem:[#allocation2 + $0x200] sm:$0xff]
    %v10656 = vld [vmem:[#allocation2 + $0x208] sm:$0xff]
    %v10657 = vld [vmem:[#allocation2 + $0x210] sm:$0xff]
    %v10658 = vld [vmem:[#allocation2 + $0x218] sm:$0xff]
    %v10659 = vld [vmem:[#allocation2 + $0x220] sm:$0xff]
    %v10660 = vld [vmem:[#allocation2 + $0x228] sm:$0xff]
    %v10661 = vld [vmem:[#allocation2 + $0x230] sm:$0xff]
    %v10662 = vld [vmem:[#allocation2 + $0x238] sm:$0xff]
    %v10663 = vld [vmem:[#allocation2 + $0x240] sm:$0xff]
    %v10664 = vld [vmem:[#allocation2 + $0x248] sm:$0xff]
    %v10665 = vld [vmem:[#allocation2 + $0x250] sm:$0xff]
    %v10666 = vld [vmem:[#allocation2 + $0x258] sm:$0xff]
    %v10667 = vld [vmem:[#allocation2 + $0x260] sm:$0xff]
    %v10668 = vld [vmem:[#allocation2 + $0x268] sm:$0xff]
    %v10669 = vld [vmem:[#allocation2 + $0x270] sm:$0xff]
    %v10670 = vld [vmem:[#allocation2 + $0x278] sm:$0xff]
    %v10671 = vld [vmem:[#allocation2 + $0x280] sm:$0xff]
    %v10672 = vld [vmem:[#allocation2 + $0x288] sm:$0xff]
    %v10673 = vld [vmem:[%s2] sm:$0x1]
    %v10675 = vlaneseq
    %v10676 = vshrl.u32 %v10675, 7
    %v10677 = vsub.s32 0, %v10676
    %v10678 = vrot.slane %v10673, %v10677
    %v10680 = vadd.f32 %v10591, %v10678
    %v10681 = vadd.f32 %v10592, %v10678
    %v10682 = vadd.f32 %v10593, %v10678
    %v10683 = vadd.f32 %v10594, %v10678
    %v10684 = vadd.f32 %v10595, %v10678
    %v10685 = vadd.f32 %v10596, %v10678
    %v10686 = vadd.f32 %v10597, %v10678
    %v10687 = vadd.f32 %v10598, %v10678
    %v10688 = vadd.f32 %v10599, %v10678
    %v10689 = vadd.f32 %v10600, %v10678
    %v10690 = vadd.f32 %v10601, %v10678
    %v10691 = vadd.f32 %v10602, %v10678
    %v10692 = vadd.f32 %v10603, %v10678
    %v10693 = vadd.f32 %v10604, %v10678
    %v10694 = vadd.f32 %v10605, %v10678
    %v10695 = vadd.f32 %v10606, %v10678
    %v10696 = vadd.f32 %v10607, %v10678
    %v10697 = vadd.f32 %v10608, %v10678
    %v10698 = vadd.f32 %v10609, %v10678
    %v10699 = vadd.f32 %v10610, %v10678
    %v10700 = vadd.f32 %v10611, %v10678
    %v10701 = vadd.f32 %v10612, %v10678
    %v10702 = vadd.f32 %v10613, %v10678
    %v10703 = vadd.f32 %v10614, %v10678
    %v10704 = vadd.f32 %v10615, %v10678
    %v10705 = vadd.f32 %v10616, %v10678
    %v10706 = vadd.f32 %v10617, %v10678
    %v10707 = vadd.f32 %v10618, %v10678
    %v10708 = vadd.f32 %v10619, %v10678
    %v10709 = vadd.f32 %v10620, %v10678
    %v10710 = vadd.f32 %v10621, %v10678
    %v10711 = vadd.f32 %v10622, %v10678
    %v10712 = vadd.f32 %v10623, %v10678
    %v10713 = vadd.f32 %v10624, %v10678
    %v10714 = vadd.f32 %v10625, %v10678
    %v10715 = vadd.f32 %v10626, %v10678
    %v10716 = vadd.f32 %v10627, %v10678
    %v10717 = vadd.f32 %v10628, %v10678
    %v10718 = vadd.f32 %v10629, %v10678
    %v10719 = vadd.f32 %v10630, %v10678
    %v10720 = vadd.f32 %v10631, %v10678
    %v10721 = vadd.f32 %v10632, %v10678
    %v10722 = vadd.f32 %v10633, %v10678
    %v10723 = vadd.f32 %v10634, %v10678
    %v10724 = vadd.f32 %v10635, %v10678
    %v10725 = vadd.f32 %v10636, %v10678
    %v10726 = vadd.f32 %v10637, %v10678
    %v10727 = vadd.f32 %v10638, %v10678
    %v10728 = vadd.f32 %v10639, %v10678
    %v10729 = vadd.f32 %v10640, %v10678
    %v10730 = vadd.f32 %v10641, %v10678
    %v10731 = vadd.f32 %v10642, %v10678
    %v10732 = vadd.f32 %v10643, %v10678
    %v10733 = vadd.f32 %v10644, %v10678
    %v10734 = vadd.f32 %v10645, %v10678
    %v10735 = vadd.f32 %v10646, %v10678
    %v10736 = vadd.f32 %v10647, %v10678
    %v10737 = vadd.f32 %v10648, %v10678
    %v10738 = vadd.f32 %v10649, %v10678
    %v10739 = vadd.f32 %v10650, %v10678
    %v10740 = vadd.f32 %v10651, %v10678
    %v10741 = vadd.f32 %v10652, %v10678
    %v10742 = vadd.f32 %v10653, %v10678
    %v10743 = vadd.f32 %v10654, %v10678
    %v10744 = vadd.f32 %v10655, %v10678
    %v10745 = vadd.f32 %v10656, %v10678
    %v10746 = vadd.f32 %v10657, %v10678
    %v10747 = vadd.f32 %v10658, %v10678
    %v10748 = vadd.f32 %v10659, %v10678
    %v10749 = vadd.f32 %v10660, %v10678
    %v10750 = vadd.f32 %v10661, %v10678
    %v10751 = vadd.f32 %v10662, %v10678
    %v10752 = vadd.f32 %v10663, %v10678
    %v10753 = vadd.f32 %v10664, %v10678
    %v10754 = vadd.f32 %v10665, %v10678
    %v10755 = vadd.f32 %v10666, %v10678
    %v10756 = vadd.f32 %v10667, %v10678
    %v10757 = vadd.f32 %v10668, %v10678
    %v10758 = vadd.f32 %v10669, %v10678
    %v10759 = vadd.f32 %v10670, %v10678
    %v10760 = vadd.f32 %v10671, %v10678
    %v10761 = vadd.f32 %v10672, %v10678
    %v10762 = vmax.f32 %v10680, 0.0
    %v10763 = vmax.f32 %v10681, 0.0
    %v10764 = vmax.f32 %v10682, 0.0
    %v10765 = vmax.f32 %v10683, 0.0
    %v10766 = vmax.f32 %v10684, 0.0
    %v10767 = vmax.f32 %v10685, 0.0
    %v10768 = vmax.f32 %v10686, 0.0
    %v10769 = vmax.f32 %v10687, 0.0
    %v10770 = vmax.f32 %v10688, 0.0
    %v10771 = vmax.f32 %v10689, 0.0
    %v10772 = vmax.f32 %v10690, 0.0
    %v10773 = vmax.f32 %v10691, 0.0
    %v10774 = vmax.f32 %v10692, 0.0
    %v10775 = vmax.f32 %v10693, 0.0
    %v10776 = vmax.f32 %v10694, 0.0
    %v10777 = vmax.f32 %v10695, 0.0
    %v10778 = vmax.f32 %v10696, 0.0
    %v10779 = vmax.f32 %v10697, 0.0
    %v10780 = vmax.f32 %v10698, 0.0
    %v10781 = vmax.f32 %v10699, 0.0
    %v10782 = vmax.f32 %v10700, 0.0
    %v10783 = vmax.f32 %v10701, 0.0
    %v10784 = vmax.f32 %v10702, 0.0
    %v10785 = vmax.f32 %v10703, 0.0
    %v10786 = vmax.f32 %v10704, 0.0
    %v10787 = vmax.f32 %v10705, 0.0
    %v10788 = vmax.f32 %v10706, 0.0
    %v10789 = vmax.f32 %v10707, 0.0
    %v10790 = vmax.f32 %v10708, 0.0
    %v10791 = vmax.f32 %v10709, 0.0
    %v10792 = vmax.f32 %v10710, 0.0
    %v10793 = vmax.f32 %v10711, 0.0
    %v10794 = vmax.f32 %v10712, 0.0
    %v10795 = vmax.f32 %v10713, 0.0
    %v10796 = vmax.f32 %v10714, 0.0
    %v10797 = vmax.f32 %v10715, 0.0
    %v10798 = vmax.f32 %v10716, 0.0
    %v10799 = vmax.f32 %v10717, 0.0
    %v10800 = vmax.f32 %v10718, 0.0
    %v10801 = vmax.f32 %v10719, 0.0
    %v10802 = vmax.f32 %v10720, 0.0
    %v10803 = vmax.f32 %v10721, 0.0
    %v10804 = vmax.f32 %v10722, 0.0
    %v10805 = vmax.f32 %v10723, 0.0
    %v10806 = vmax.f32 %v10724, 0.0
    %v10807 = vmax.f32 %v10725, 0.0
    %v10808 = vmax.f32 %v10726, 0.0
    %v10809 = vmax.f32 %v10727, 0.0
    %v10810 = vmax.f32 %v10728, 0.0
    %v10811 = vmax.f32 %v10729, 0.0
    %v10812 = vmax.f32 %v10730, 0.0
    %v10813 = vmax.f32 %v10731, 0.0
    %v10814 = vmax.f32 %v10732, 0.0
    %v10815 = vmax.f32 %v10733, 0.0
    %v10816 = vmax.f32 %v10734, 0.0
    %v10817 = vmax.f32 %v10735, 0.0
    %v10818 = vmax.f32 %v10736, 0.0
    %v10819 = vmax.f32 %v10737, 0.0
    %v10820 = vmax.f32 %v10738, 0.0
    %v10821 = vmax.f32 %v10739, 0.0
    %v10822 = vmax.f32 %v10740, 0.0
    %v10823 = vmax.f32 %v10741, 0.0
    %v10824 = vmax.f32 %v10742, 0.0
    %v10825 = vmax.f32 %v10743, 0.0
    %v10826 = vmax.f32 %v10744, 0.0
    %v10827 = vmax.f32 %v10745, 0.0
    %v10828 = vmax.f32 %v10746, 0.0
    %v10829 = vmax.f32 %v10747, 0.0
    %v10830 = vmax.f32 %v10748, 0.0
    %v10831 = vmax.f32 %v10749, 0.0
    %v10832 = vmax.f32 %v10750, 0.0
    %v10833 = vmax.f32 %v10751, 0.0
    %v10834 = vmax.f32 %v10752, 0.0
    %v10835 = vmax.f32 %v10753, 0.0
    %v10836 = vmax.f32 %v10754, 0.0
    %v10837 = vmax.f32 %v10755, 0.0
    %v10838 = vmax.f32 %v10756, 0.0
    %v10839 = vmax.f32 %v10757, 0.0
    %v10840 = vmax.f32 %v10758, 0.0
    %v10841 = vmax.f32 %v10759, 0.0
    %v10842 = vmax.f32 %v10760, 0.0
    %v10843 = vmax.f32 %v10761, 0.0
    %10844 = vst [vmem:[#allocation2] sm:$0xff] %v10762
    %10845 = vst [vmem:[#allocation2 + $0x8] sm:$0xff] %v10763
    %10846 = vst [vmem:[#allocation2 + $0x10] sm:$0xff] %v10764
    %10847 = vst [vmem:[#allocation2 + $0x18] sm:$0xff] %v10765
    %10848 = vst [vmem:[#allocation2 + $0x20] sm:$0xff] %v10766
    %10849 = vst [vmem:[#allocation2 + $0x28] sm:$0xff] %v10767
    %10850 = vst [vmem:[#allocation2 + $0x30] sm:$0xff] %v10768
    %10851 = vst [vmem:[#allocation2 + $0x38] sm:$0xff] %v10769
    %10852 = vst [vmem:[#allocation2 + $0x40] sm:$0xff] %v10770
    %10853 = vst [vmem:[#allocation2 + $0x48] sm:$0xff] %v10771
    %10854 = vst [vmem:[#allocation2 + $0x50] sm:$0xff] %v10772
    %10855 = vst [vmem:[#allocation2 + $0x58] sm:$0xff] %v10773
    %10856 = vst [vmem:[#allocation2 + $0x60] sm:$0xff] %v10774
    %10857 = vst [vmem:[#allocation2 + $0x68] sm:$0xff] %v10775
    %10858 = vst [vmem:[#allocation2 + $0x70] sm:$0xff] %v10776
    %10859 = vst [vmem:[#allocation2 + $0x78] sm:$0xff] %v10777
    %10860 = vst [vmem:[#allocation2 + $0x80] sm:$0xff] %v10778
    %10861 = vst [vmem:[#allocation2 + $0x88] sm:$0xff] %v10779
    %10862 = vst [vmem:[#allocation2 + $0x90] sm:$0xff] %v10780
    %10863 = vst [vmem:[#allocation2 + $0x98] sm:$0xff] %v10781
    %10864 = vst [vmem:[#allocation2 + $0xa0] sm:$0xff] %v10782
    %10865 = vst [vmem:[#allocation2 + $0xa8] sm:$0xff] %v10783
    %10866 = vst [vmem:[#allocation2 + $0xb0] sm:$0xff] %v10784
    %10867 = vst [vmem:[#allocation2 + $0xb8] sm:$0xff] %v10785
    %10868 = vst [vmem:[#allocation2 + $0xc0] sm:$0xff] %v10786
    %10869 = vst [vmem:[#allocation2 + $0xc8] sm:$0xff] %v10787
    %10870 = vst [vmem:[#allocation2 + $0xd0] sm:$0xff] %v10788
    %10871 = vst [vmem:[#allocation2 + $0xd8] sm:$0xff] %v10789
    %10872 = vst [vmem:[#allocation2 + $0xe0] sm:$0xff] %v10790
    %10873 = vst [vmem:[#allocation2 + $0xe8] sm:$0xff] %v10791
    %10874 = vst [vmem:[#allocation2 + $0xf0] sm:$0xff] %v10792
    %10875 = vst [vmem:[#allocation2 + $0xf8] sm:$0xff] %v10793
    %10876 = vst [vmem:[#allocation2 + $0x100] sm:$0xff] %v10794
    %10877 = vst [vmem:[#allocation2 + $0x108] sm:$0xff] %v10795
    %10878 = vst [vmem:[#allocation2 + $0x110] sm:$0xff] %v10796
    %10879 = vst [vmem:[#allocation2 + $0x118] sm:$0xff] %v10797
    %10880 = vst [vmem:[#allocation2 + $0x120] sm:$0xff] %v10798
    %10881 = vst [vmem:[#allocation2 + $0x128] sm:$0xff] %v10799
    %10882 = vst [vmem:[#allocation2 + $0x130] sm:$0xff] %v10800
    %10883 = vst [vmem:[#allocation2 + $0x138] sm:$0xff] %v10801
    %10884 = vst [vmem:[#allocation2 + $0x140] sm:$0xff] %v10802
    %10885 = vst [vmem:[#allocation2 + $0x148] sm:$0xff] %v10803
    %10886 = vst [vmem:[#allocation2 + $0x150] sm:$0xff] %v10804
    %10887 = vst [vmem:[#allocation2 + $0x158] sm:$0xff] %v10805
    %10888 = vst [vmem:[#allocation2 + $0x160] sm:$0xff] %v10806
    %10889 = vst [vmem:[#allocation2 + $0x168] sm:$0xff] %v10807
    %10890 = vst [vmem:[#allocation2 + $0x170] sm:$0xff] %v10808
    %10891 = vst [vmem:[#allocation2 + $0x178] sm:$0xff] %v10809
    %10892 = vst [vmem:[#allocation2 + $0x180] sm:$0xff] %v10810
    %10893 = vst [vmem:[#allocation2 + $0x188] sm:$0xff] %v10811
    %10894 = vst [vmem:[#allocation2 + $0x190] sm:$0xff] %v10812
    %10895 = vst [vmem:[#allocation2 + $0x198] sm:$0xff] %v10813
    %10896 = vst [vmem:[#allocation2 + $0x1a0] sm:$0xff] %v10814
    %10897 = vst [vmem:[#allocation2 + $0x1a8] sm:$0xff] %v10815
    %10898 = vst [vmem:[#allocation2 + $0x1b0] sm:$0xff] %v10816
    %10899 = vst [vmem:[#allocation2 + $0x1b8] sm:$0xff] %v10817
    %10900 = vst [vmem:[#allocation2 + $0x1c0] sm:$0xff] %v10818
    %10901 = vst [vmem:[#allocation2 + $0x1c8] sm:$0xff] %v10819
    %10902 = vst [vmem:[#allocation2 + $0x1d0] sm:$0xff] %v10820
    %10903 = vst [vmem:[#allocation2 + $0x1d8] sm:$0xff] %v10821
    %10904 = vst [vmem:[#allocation2 + $0x1e0] sm:$0xff] %v10822
    %10905 = vst [vmem:[#allocation2 + $0x1e8] sm:$0xff] %v10823
    %10906 = vst [vmem:[#allocation2 + $0x1f0] sm:$0xff] %v10824
    %10907 = vst [vmem:[#allocation2 + $0x1f8] sm:$0xff] %v10825
    %10908 = vst [vmem:[#allocation2 + $0x200] sm:$0xff] %v10826
    %10909 = vst [vmem:[#allocation2 + $0x208] sm:$0xff] %v10827
    %10910 = vst [vmem:[#allocation2 + $0x210] sm:$0xff] %v10828
    %10911 = vst [vmem:[#allocation2 + $0x218] sm:$0xff] %v10829
    %10912 = vst [vmem:[#allocation2 + $0x220] sm:$0xff] %v10830
    %10913 = vst [vmem:[#allocation2 + $0x228] sm:$0xff] %v10831
    %10914 = vst [vmem:[#allocation2 + $0x230] sm:$0xff] %v10832
    %10915 = vst [vmem:[#allocation2 + $0x238] sm:$0xff] %v10833
    %10916 = vst [vmem:[#allocation2 + $0x240] sm:$0xff] %v10834
    %10917 = vst [vmem:[#allocation2 + $0x248] sm:$0xff] %v10835
    %10918 = vst [vmem:[#allocation2 + $0x250] sm:$0xff] %v10836
    %10919 = vst [vmem:[#allocation2 + $0x258] sm:$0xff] %v10837
    %10920 = vst [vmem:[#allocation2 + $0x260] sm:$0xff] %v10838
    %10921 = vst [vmem:[#allocation2 + $0x268] sm:$0xff] %v10839
    %10922 = vst [vmem:[#allocation2 + $0x270] sm:$0xff] %v10840
    %10923 = vst [vmem:[#allocation2 + $0x278] sm:$0xff] %v10841
    %10924 = vst [vmem:[#allocation2 + $0x280] sm:$0xff] %v10842
    %10925 = vst [vmem:[#allocation2 + $0x288] sm:$0xff] %v10843
    %v10926 = vld [vmem:[#allocation2] sm:$0xff]
    %v10927 = vld [vmem:[#allocation2 + $0x8] sm:$0xff]
    %v10928 = vld [vmem:[#allocation2 + $0x10] sm:$0xff]
    %v10929 = vld [vmem:[#allocation2 + $0x18] sm:$0xff]
    %v10930 = vld [vmem:[#allocation2 + $0x20] sm:$0xff]
    %v10931 = vld [vmem:[#allocation2 + $0x28] sm:$0xff]
    %v10932 = vld [vmem:[#allocation2 + $0x30] sm:$0xff]
    %v10933 = vld [vmem:[#allocation2 + $0x38] sm:$0xff]
    %v10934 = vld [vmem:[#allocation2 + $0x40] sm:$0xff]
    %v10935 = vld [vmem:[#allocation2 + $0x48] sm:$0xff]
    %v10936 = vld [vmem:[#allocation2 + $0x50] sm:$0xff]
    %v10937 = vld [vmem:[#allocation2 + $0x58] sm:$0xff]
    %v10938 = vld [vmem:[#allocation2 + $0x60] sm:$0xff]
    %v10939 = vld [vmem:[#allocation2 + $0x68] sm:$0xff]
    %v10940 = vld [vmem:[#allocation2 + $0x70] sm:$0xff]
    %v10941 = vld [vmem:[#allocation2 + $0x78] sm:$0xff]
    %v10942 = vld [vmem:[#allocation2 + $0x80] sm:$0xff]
    %v10943 = vld [vmem:[#allocation2 + $0x88] sm:$0xff]
    %v10944 = vld [vmem:[#allocation2 + $0x90] sm:$0xff]
    %v10945 = vld [vmem:[#allocation2 + $0x98] sm:$0xff]
    %v10946 = vld [vmem:[#allocation2 + $0xa0] sm:$0xff]
    %v10947 = vld [vmem:[#allocation2 + $0xa8] sm:$0xff]
    %v10948 = vld [vmem:[#allocation2 + $0xb0] sm:$0xff]
    %v10949 = vld [vmem:[#allocation2 + $0xb8] sm:$0xff]
    %v10950 = vld [vmem:[#allocation2 + $0xc0] sm:$0xff]
    %v10951 = vld [vmem:[#allocation2 + $0xc8] sm:$0xff]
    %v10952 = vld [vmem:[#allocation2 + $0xd0] sm:$0xff]
    %v10953 = vld [vmem:[#allocation2 + $0xd8] sm:$0xff]
    %v10954 = vld [vmem:[#allocation2 + $0xe0] sm:$0xff]
    %v10955 = vld [vmem:[#allocation2 + $0xe8] sm:$0xff]
    %v10956 = vld [vmem:[#allocation2 + $0xf0] sm:$0xff]
    %v10957 = vld [vmem:[#allocation2 + $0xf8] sm:$0xff]
    %v10958 = vld [vmem:[#allocation2 + $0x100] sm:$0xff]
    %v10959 = vld [vmem:[#allocation2 + $0x108] sm:$0xff]
    %v10960 = vld [vmem:[#allocation2 + $0x110] sm:$0xff]
    %v10961 = vld [vmem:[#allocation2 + $0x118] sm:$0xff]
    %v10962 = vld [vmem:[#allocation2 + $0x120] sm:$0xff]
    %v10963 = vld [vmem:[#allocation2 + $0x128] sm:$0xff]
    %v10964 = vld [vmem:[#allocation2 + $0x130] sm:$0xff]
    %v10965 = vld [vmem:[#allocation2 + $0x138] sm:$0xff]
    %v10966 = vld [vmem:[#allocation2 + $0x140] sm:$0xff]
    %v10967 = vld [vmem:[%s5] sm:$0xff]
    %v10968 = vld [vmem:[%s5 + $0x8] sm:$0xff]
    %v10969 = vld [vmem:[%s5 + $0x10] sm:$0xff]
    %v10970 = vld [vmem:[%s5 + $0x18] sm:$0xff]
    %v10971 = vld [vmem:[%s5 + $0x20] sm:$0xff]
    %v10972 = vld [vmem:[%s5 + $0x28] sm:$0xff]
    %v10973 = vld [vmem:[%s5 + $0x30] sm:$0xff]
    %v10974 = vld [vmem:[%s5 + $0x38] sm:$0xff]
    %v10975 = vld [vmem:[%s5 + $0x40] sm:$0xff]
    %v10976 = vld [vmem:[%s5 + $0x48] sm:$0xff]
    %v10977 = vld [vmem:[%s5 + $0x50] sm:$0xff]
    %v10978 = vld [vmem:[%s5 + $0x58] sm:$0xff]
    %v10979 = vld [vmem:[%s5 + $0x60] sm:$0xff]
    %v10980 = vld [vmem:[%s5 + $0x68] sm:$0xff]
    %v10981 = vld [vmem:[%s5 + $0x70] sm:$0xff]
    %v10982 = vld [vmem:[%s5 + $0x78] sm:$0xff]
    %v10983 = vld [vmem:[%s5 + $0x80] sm:$0xff]
    %v10984 = vld [vmem:[%s5 + $0x88] sm:$0xff]
    %v10985 = vld [vmem:[%s5 + $0x90] sm:$0xff]
    %v10986 = vld [vmem:[%s5 + $0x98] sm:$0xff]
    %v10987 = vld [vmem:[%s5 + $0xa0] sm:$0xff]
    %v10988 = vld [vmem:[%s5 + $0xa8] sm:$0xff]
    %v10989 = vld [vmem:[%s5 + $0xb0] sm:$0xff]
    %v10990 = vld [vmem:[%s5 + $0xb8] sm:$0xff]
    %v10991 = vld [vmem:[%s5 + $0xc0] sm:$0xff]
    %v10992 = vld [vmem:[%s5 + $0xc8] sm:$0xff]
    %v10993 = vld [vmem:[%s5 + $0xd0] sm:$0xff]
    %v10994 = vld [vmem:[%s5 + $0xd8] sm:$0xff]
    %v10995 = vld [vmem:[%s5 + $0xe0] sm:$0xff]
    %v10996 = vld [vmem:[%s5 + $0xe8] sm:$0xff]
    %v10997 = vld [vmem:[%s5 + $0xf0] sm:$0xff]
    %v10998 = vld [vmem:[%s5 + $0xf8] sm:$0xff]
    %v10999 = vld [vmem:[%s5 + $0x100] sm:$0xff]
    %v11000 = vld [vmem:[%s5 + $0x108] sm:$0xff]
    %v11001 = vld [vmem:[%s5 + $0x110] sm:$0xff]
    %v11002 = vld [vmem:[%s5 + $0x118] sm:$0xff]
    %v11003 = vld [vmem:[%s5 + $0x120] sm:$0xff]
    %v11004 = vld [vmem:[%s5 + $0x128] sm:$0xff]
    %v11005 = vld [vmem:[%s5 + $0x130] sm:$0xff]
    %v11006 = vld [vmem:[%s5 + $0x138] sm:$0xff]
    %v11007 = vld [vmem:[%s5 + $0x140] sm:$0xff]
    %11009 = vset.pattern.permute.xlu0 0
    %11010 = vperm.xlu0 %11009, %v10967
    %v11011 = vpop.permute.xlu0 %11010
    %11014 = vset.pattern.permute.xlu0 0
    %11015 = vperm.xlu0 %11014, %v10968
    %v11016 = vpop.permute.xlu0 %11015
    %11019 = vset.pattern.permute.xlu0 0
    %11020 = vperm.xlu0 %11019, %v10969
    %v11021 = vpop.permute.xlu0 %11020
    %11024 = vset.pattern.permute.xlu0 0
    %11025 = vperm.xlu0 %11024, %v10970
    %v11026 = vpop.permute.xlu0 %11025
    %11029 = vset.pattern.permute.xlu0 0
    %11030 = vperm.xlu0 %11029, %v10971
    %v11031 = vpop.permute.xlu0 %11030
    %11034 = vset.pattern.permute.xlu0 0
    %11035 = vperm.xlu0 %11034, %v10972
    %v11036 = vpop.permute.xlu0 %11035
    %11039 = vset.pattern.permute.xlu0 0
    %11040 = vperm.xlu0 %11039, %v10973
    %v11041 = vpop.permute.xlu0 %11040
    %11044 = vset.pattern.permute.xlu0 0
    %11045 = vperm.xlu0 %11044, %v10974
    %v11046 = vpop.permute.xlu0 %11045
    %11049 = vset.pattern.permute.xlu0 0
    %11050 = vperm.xlu0 %11049, %v10975
    %v11051 = vpop.permute.xlu0 %11050
    %11054 = vset.pattern.permute.xlu0 0
    %11055 = vperm.xlu0 %11054, %v10976
    %v11056 = vpop.permute.xlu0 %11055
    %11059 = vset.pattern.permute.xlu0 0
    %11060 = vperm.xlu0 %11059, %v10977
    %v11061 = vpop.permute.xlu0 %11060
    %11064 = vset.pattern.permute.xlu0 0
    %11065 = vperm.xlu0 %11064, %v10978
    %v11066 = vpop.permute.xlu0 %11065
    %11069 = vset.pattern.permute.xlu0 0
    %11070 = vperm.xlu0 %11069, %v10979
    %v11071 = vpop.permute.xlu0 %11070
    %11074 = vset.pattern.permute.xlu0 0
    %11075 = vperm.xlu0 %11074, %v10980
    %v11076 = vpop.permute.xlu0 %11075
    %11079 = vset.pattern.permute.xlu0 0
    %11080 = vperm.xlu0 %11079, %v10981
    %v11081 = vpop.permute.xlu0 %11080
    %11084 = vset.pattern.permute.xlu0 0
    %11085 = vperm.xlu0 %11084, %v10982
    %v11086 = vpop.permute.xlu0 %11085
    %11089 = vset.pattern.permute.xlu0 0
    %11090 = vperm.xlu0 %11089, %v10983
    %v11091 = vpop.permute.xlu0 %11090
    %11094 = vset.pattern.permute.xlu0 0
    %11095 = vperm.xlu0 %11094, %v10984
    %v11096 = vpop.permute.xlu0 %11095
    %11099 = vset.pattern.permute.xlu0 0
    %11100 = vperm.xlu0 %11099, %v10985
    %v11101 = vpop.permute.xlu0 %11100
    %11104 = vset.pattern.permute.xlu0 0
    %11105 = vperm.xlu0 %11104, %v10986
    %v11106 = vpop.permute.xlu0 %11105
    %11109 = vset.pattern.permute.xlu0 0
    %11110 = vperm.xlu0 %11109, %v10987
    %v11111 = vpop.permute.xlu0 %11110
    %11114 = vset.pattern.permute.xlu0 0
    %11115 = vperm.xlu0 %11114, %v10988
    %v11116 = vpop.permute.xlu0 %11115
    %11119 = vset.pattern.permute.xlu0 0
    %11120 = vperm.xlu0 %11119, %v10989
    %v11121 = vpop.permute.xlu0 %11120
    %11124 = vset.pattern.permute.xlu0 0
    %11125 = vperm.xlu0 %11124, %v10990
    %v11126 = vpop.permute.xlu0 %11125
    %11129 = vset.pattern.permute.xlu0 0
    %11130 = vperm.xlu0 %11129, %v10991
    %v11131 = vpop.permute.xlu0 %11130
    %11134 = vset.pattern.permute.xlu0 0
    %11135 = vperm.xlu0 %11134, %v10992
    %v11136 = vpop.permute.xlu0 %11135
    %11139 = vset.pattern.permute.xlu0 0
    %11140 = vperm.xlu0 %11139, %v10993
    %v11141 = vpop.permute.xlu0 %11140
    %11144 = vset.pattern.permute.xlu0 0
    %11145 = vperm.xlu0 %11144, %v10994
    %v11146 = vpop.permute.xlu0 %11145
    %11149 = vset.pattern.permute.xlu0 0
    %11150 = vperm.xlu0 %11149, %v10995
    %v11151 = vpop.permute.xlu0 %11150
    %11154 = vset.pattern.permute.xlu0 0
    %11155 = vperm.xlu0 %11154, %v10996
    %v11156 = vpop.permute.xlu0 %11155
    %11159 = vset.pattern.permute.xlu0 0
    %11160 = vperm.xlu0 %11159, %v10997
    %v11161 = vpop.permute.xlu0 %11160
    %11164 = vset.pattern.permute.xlu0 0
    %11165 = vperm.xlu0 %11164, %v10998
    %v11166 = vpop.permute.xlu0 %11165
    %11169 = vset.pattern.permute.xlu0 0
    %11170 = vperm.xlu0 %11169, %v10999
    %v11171 = vpop.permute.xlu0 %11170
    %11174 = vset.pattern.permute.xlu0 0
    %11175 = vperm.xlu0 %11174, %v11000
    %v11176 = vpop.permute.xlu0 %11175
    %11179 = vset.pattern.permute.xlu0 0
    %11180 = vperm.xlu0 %11179, %v11001
    %v11181 = vpop.permute.xlu0 %11180
    %11184 = vset.pattern.permute.xlu0 0
    %11185 = vperm.xlu0 %11184, %v11002
    %v11186 = vpop.permute.xlu0 %11185
    %11189 = vset.pattern.permute.xlu0 0
    %11190 = vperm.xlu0 %11189, %v11003
    %v11191 = vpop.permute.xlu0 %11190
    %11194 = vset.pattern.permute.xlu0 0
    %11195 = vperm.xlu0 %11194, %v11004
    %v11196 = vpop.permute.xlu0 %11195
    %11199 = vset.pattern.permute.xlu0 0
    %11200 = vperm.xlu0 %11199, %v11005
    %v11201 = vpop.permute.xlu0 %11200
    %11204 = vset.pattern.permute.xlu0 0
    %11205 = vperm.xlu0 %11204, %v11006
    %v11206 = vpop.permute.xlu0 %11205
    %11209 = vset.pattern.permute.xlu0 0
    %11210 = vperm.xlu0 %11209, %v11007
    %v11211 = vpop.permute.xlu0 %11210
    %v11213 = vmul.f32 %v10926, %v11011
    %v11214 = vmul.f32 %v10927, %v11016
    %v11215 = vmul.f32 %v10928, %v11021
    %v11216 = vmul.f32 %v10929, %v11026
    %v11217 = vmul.f32 %v10930, %v11031
    %v11218 = vmul.f32 %v10931, %v11036
    %v11219 = vmul.f32 %v10932, %v11041
    %v11220 = vmul.f32 %v10933, %v11046
    %v11221 = vmul.f32 %v10934, %v11051
    %v11222 = vmul.f32 %v10935, %v11056
    %v11223 = vmul.f32 %v10936, %v11061
    %v11224 = vmul.f32 %v10937, %v11066
    %v11225 = vmul.f32 %v10938, %v11071
    %v11226 = vmul.f32 %v10939, %v11076
    %v11227 = vmul.f32 %v10940, %v11081
    %v11228 = vmul.f32 %v10941, %v11086
    %v11229 = vmul.f32 %v10942, %v11091
    %v11230 = vmul.f32 %v10943, %v11096
    %v11231 = vmul.f32 %v10944, %v11101
    %v11232 = vmul.f32 %v10945, %v11106
    %v11233 = vmul.f32 %v10946, %v11111
    %v11234 = vmul.f32 %v10947, %v11116
    %v11235 = vmul.f32 %v10948, %v11121
    %v11236 = vmul.f32 %v10949, %v11126
    %v11237 = vmul.f32 %v10950, %v11131
    %v11238 = vmul.f32 %v10951, %v11136
    %v11239 = vmul.f32 %v10952, %v11141
    %v11240 = vmul.f32 %v10953, %v11146
    %v11241 = vmul.f32 %v10954, %v11151
    %v11242 = vmul.f32 %v10955, %v11156
    %v11243 = vmul.f32 %v10956, %v11161
    %v11244 = vmul.f32 %v10957, %v11166
    %v11245 = vmul.f32 %v10958, %v11171
    %v11246 = vmul.f32 %v10959, %v11176
    %v11247 = vmul.f32 %v10960, %v11181
    %v11248 = vmul.f32 %v10961, %v11186
    %v11249 = vmul.f32 %v10962, %v11191
    %v11250 = vmul.f32 %v10963, %v11196
    %v11251 = vmul.f32 %v10964, %v11201
    %v11252 = vmul.f32 %v10965, %v11206
    %v11253 = vmul.f32 %v10966, %v11211
    %v11254 = vadd.f32 %v11213, %v11214
    %v11255 = vadd.f32 %v11254, %v11215
    %v11256 = vadd.f32 %v11255, %v11216
    %v11257 = vadd.f32 %v11256, %v11217
    %v11258 = vadd.f32 %v11257, %v11218
    %v11259 = vadd.f32 %v11258, %v11219
    %v11260 = vadd.f32 %v11259, %v11220
    %v11261 = vadd.f32 %v11260, %v11221
    %v11262 = vadd.f32 %v11261, %v11222
    %v11263 = vadd.f32 %v11262, %v11223
    %v11264 = vadd.f32 %v11263, %v11224
    %v11265 = vadd.f32 %v11264, %v11225
    %v11266 = vadd.f32 %v11265, %v11226
    %v11267 = vadd.f32 %v11266, %v11227
    %v11268 = vadd.f32 %v11267, %v11228
    %v11269 = vadd.f32 %v11268, %v11229
    %v11270 = vadd.f32 %v11269, %v11230
    %v11271 = vadd.f32 %v11270, %v11231
    %v11272 = vadd.f32 %v11271, %v11232
    %v11273 = vadd.f32 %v11272, %v11233
    %v11274 = vadd.f32 %v11273, %v11234
    %v11275 = vadd.f32 %v11274, %v11235
    %v11276 = vadd.f32 %v11275, %v11236
    %v11277 = vadd.f32 %v11276, %v11237
    %v11278 = vadd.f32 %v11277, %v11238
    %v11279 = vadd.f32 %v11278, %v11239
    %v11280 = vadd.f32 %v11279, %v11240
    %v11281 = vadd.f32 %v11280, %v11241
    %v11282 = vadd.f32 %v11281, %v11242
    %v11283 = vadd.f32 %v11282, %v11243
    %v11284 = vadd.f32 %v11283, %v11244
    %v11285 = vadd.f32 %v11284, %v11245
    %v11286 = vadd.f32 %v11285, %v11246
    %v11287 = vadd.f32 %v11286, %v11247
    %v11288 = vadd.f32 %v11287, %v11248
    %v11289 = vadd.f32 %v11288, %v11249
    %v11290 = vadd.f32 %v11289, %v11250
    %v11291 = vadd.f32 %v11290, %v11251
    %v11292 = vadd.f32 %v11291, %v11252
    %v11293 = vadd.f32 %v11292, %v11253
    %v11294 = vrot.slane %v11293, 4
    %v11295 = vadd.f32 %v11293, %v11294
    %v11296 = vrot.slane %v11295, 2
    %v11297 = vadd.f32 %v11295, %v11296
    %v11298 = vrot.slane %v11297, 1
    %v11299 = vadd.f32 %v11297, %v11298
    %v11300 = vld [vmem:[#allocation2 + $0x148] sm:$0xff]
    %v11301 = vld [vmem:[#allocation2 + $0x150] sm:$0xff]
    %v11302 = vld [vmem:[#allocation2 + $0x158] sm:$0xff]
    %v11303 = vld [vmem:[#allocation2 + $0x160] sm:$0xff]
    %v11304 = vld [vmem:[#allocation2 + $0x168] sm:$0xff]
    %v11305 = vld [vmem:[#allocation2 + $0x170] sm:$0xff]
    %v11306 = vld [vmem:[#allocation2 + $0x178] sm:$0xff]
    %v11307 = vld [vmem:[#allocation2 + $0x180] sm:$0xff]
    %v11308 = vld [vmem:[#allocation2 + $0x188] sm:$0xff]
    %v11309 = vld [vmem:[#allocation2 + $0x190] sm:$0xff]
    %v11310 = vld [vmem:[#allocation2 + $0x198] sm:$0xff]
    %v11311 = vld [vmem:[#allocation2 + $0x1a0] sm:$0xff]
    %v11312 = vld [vmem:[#allocation2 + $0x1a8] sm:$0xff]
    %v11313 = vld [vmem:[#allocation2 + $0x1b0] sm:$0xff]
    %v11314 = vld [vmem:[#allocation2 + $0x1b8] sm:$0xff]
    %v11315 = vld [vmem:[#allocation2 + $0x1c0] sm:$0xff]
    %v11316 = vld [vmem:[#allocation2 + $0x1c8] sm:$0xff]
    %v11317 = vld [vmem:[#allocation2 + $0x1d0] sm:$0xff]
    %v11318 = vld [vmem:[#allocation2 + $0x1d8] sm:$0xff]
    %v11319 = vld [vmem:[#allocation2 + $0x1e0] sm:$0xff]
    %v11320 = vld [vmem:[#allocation2 + $0x1e8] sm:$0xff]
    %v11321 = vld [vmem:[#allocation2 + $0x1f0] sm:$0xff]
    %v11322 = vld [vmem:[#allocation2 + $0x1f8] sm:$0xff]
    %v11323 = vld [vmem:[#allocation2 + $0x200] sm:$0xff]
    %v11324 = vld [vmem:[#allocation2 + $0x208] sm:$0xff]
    %v11325 = vld [vmem:[#allocation2 + $0x210] sm:$0xff]
    %v11326 = vld [vmem:[#allocation2 + $0x218] sm:$0xff]
    %v11327 = vld [vmem:[#allocation2 + $0x220] sm:$0xff]
    %v11328 = vld [vmem:[#allocation2 + $0x228] sm:$0xff]
    %v11329 = vld [vmem:[#allocation2 + $0x230] sm:$0xff]
    %v11330 = vld [vmem:[#allocation2 + $0x238] sm:$0xff]
    %v11331 = vld [vmem:[#allocation2 + $0x240] sm:$0xff]
    %v11332 = vld [vmem:[#allocation2 + $0x248] sm:$0xff]
    %v11333 = vld [vmem:[#allocation2 + $0x250] sm:$0xff]
    %v11334 = vld [vmem:[#allocation2 + $0x258] sm:$0xff]
    %v11335 = vld [vmem:[#allocation2 + $0x260] sm:$0xff]
    %v11336 = vld [vmem:[#allocation2 + $0x268] sm:$0xff]
    %v11337 = vld [vmem:[#allocation2 + $0x270] sm:$0xff]
    %v11338 = vld [vmem:[#allocation2 + $0x278] sm:$0xff]
    %v11339 = vld [vmem:[#allocation2 + $0x280] sm:$0xff]
    %v11340 = vld [vmem:[#allocation2 + $0x288] sm:$0xff]
    %v11341 = vmul.f32 %v11300, %v11011
    %v11342 = vmul.f32 %v11301, %v11016
    %v11343 = vmul.f32 %v11302, %v11021
    %v11344 = vmul.f32 %v11303, %v11026
    %v11345 = vmul.f32 %v11304, %v11031
    %v11346 = vmul.f32 %v11305, %v11036
    %v11347 = vmul.f32 %v11306, %v11041
    %v11348 = vmul.f32 %v11307, %v11046
    %v11349 = vmul.f32 %v11308, %v11051
    %v11350 = vmul.f32 %v11309, %v11056
    %v11351 = vmul.f32 %v11310, %v11061
    %v11352 = vmul.f32 %v11311, %v11066
    %v11353 = vmul.f32 %v11312, %v11071
    %v11354 = vmul.f32 %v11313, %v11076
    %v11355 = vmul.f32 %v11314, %v11081
    %v11356 = vmul.f32 %v11315, %v11086
    %v11357 = vmul.f32 %v11316, %v11091
    %v11358 = vmul.f32 %v11317, %v11096
    %v11359 = vmul.f32 %v11318, %v11101
    %v11360 = vmul.f32 %v11319, %v11106
    %v11361 = vmul.f32 %v11320, %v11111
    %v11362 = vmul.f32 %v11321, %v11116
    %v11363 = vmul.f32 %v11322, %v11121
    %v11364 = vmul.f32 %v11323, %v11126
    %v11365 = vmul.f32 %v11324, %v11131
    %v11366 = vmul.f32 %v11325, %v11136
    %v11367 = vmul.f32 %v11326, %v11141
    %v11368 = vmul.f32 %v11327, %v11146
    %v11369 = vmul.f32 %v11328, %v11151
    %v11370 = vmul.f32 %v11329, %v11156
    %v11371 = vmul.f32 %v11330, %v11161
    %v11372 = vmul.f32 %v11331, %v11166
    %v11373 = vmul.f32 %v11332, %v11171
    %v11374 = vmul.f32 %v11333, %v11176
    %v11375 = vmul.f32 %v11334, %v11181
    %v11376 = vmul.f32 %v11335, %v11186
    %v11377 = vmul.f32 %v11336, %v11191
    %v11378 = vmul.f32 %v11337, %v11196
    %v11379 = vmul.f32 %v11338, %v11201
    %v11380 = vmul.f32 %v11339, %v11206
    %v11381 = vmul.f32 %v11340, %v11211
    %v11382 = vadd.f32 %v11341, %v11342
    %v11383 = vadd.f32 %v11382, %v11343
    %v11384 = vadd.f32 %v11383, %v11344
    %v11385 = vadd.f32 %v11384, %v11345
    %v11386 = vadd.f32 %v11385, %v11346
    %v11387 = vadd.f32 %v11386, %v11347
    %v11388 = vadd.f32 %v11387, %v11348
    %v11389 = vadd.f32 %v11388, %v11349
    %v11390 = vadd.f32 %v11389, %v11350
    %v11391 = vadd.f32 %v11390, %v11351
    %v11392 = vadd.f32 %v11391, %v11352
    %v11393 = vadd.f32 %v11392, %v11353
    %v11394 = vadd.f32 %v11393, %v11354
    %v11395 = vadd.f32 %v11394, %v11355
    %v11396 = vadd.f32 %v11395, %v11356
    %v11397 = vadd.f32 %v11396, %v11357
    %v11398 = vadd.f32 %v11397, %v11358
    %v11399 = vadd.f32 %v11398, %v11359
    %v11400 = vadd.f32 %v11399, %v11360
    %v11401 = vadd.f32 %v11400, %v11361
    %v11402 = vadd.f32 %v11401, %v11362
    %v11403 = vadd.f32 %v11402, %v11363
    %v11404 = vadd.f32 %v11403, %v11364
    %v11405 = vadd.f32 %v11404, %v11365
    %v11406 = vadd.f32 %v11405, %v11366
    %v11407 = vadd.f32 %v11406, %v11367
    %v11408 = vadd.f32 %v11407, %v11368
    %v11409 = vadd.f32 %v11408, %v11369
    %v11410 = vadd.f32 %v11409, %v11370
    %v11411 = vadd.f32 %v11410, %v11371
    %v11412 = vadd.f32 %v11411, %v11372
    %v11413 = vadd.f32 %v11412, %v11373
    %v11414 = vadd.f32 %v11413, %v11374
    %v11415 = vadd.f32 %v11414, %v11375
    %v11416 = vadd.f32 %v11415, %v11376
    %v11417 = vadd.f32 %v11416, %v11377
    %v11418 = vadd.f32 %v11417, %v11378
    %v11419 = vadd.f32 %v11418, %v11379
    %v11420 = vadd.f32 %v11419, %v11380
    %v11421 = vadd.f32 %v11420, %v11381
    %v11422 = vrot.slane %v11421, 4
    %v11423 = vadd.f32 %v11421, %v11422
    %v11424 = vrot.slane %v11423, 2
    %v11425 = vadd.f32 %v11423, %v11424
    %v11426 = vrot.slane %v11425, 1
    %v11427 = vadd.f32 %v11425, %v11426
    %vm11428 = vcmask 1040384
    %v11429 = vsel %vm11428, %v11299, %v11427
    %v11430 = vpack.c.bf16 %v11429, %v11429
    %v11431 = vld [vmem:[%s3] sm:$0xf]
    %v11432 = vld [vmem:[%s3 + $0x4] sm:$0xf]
    %v11433 = vld [vmem:[%s3 + $0x8] sm:$0xf]
    %v11434 = vld [vmem:[%s3 + $0xc] sm:$0xf]
    %v11435 = vld [vmem:[%s3 + $0x10] sm:$0xf]
    %v11436 = vld [vmem:[%s3 + $0x14] sm:$0xf]
    %v11437 = vld [vmem:[%s3 + $0x18] sm:$0xf]
    %v11438 = vld [vmem:[%s3 + $0x1c] sm:$0xf]
    %v11439 = vld [vmem:[%s3 + $0x20] sm:$0xf]
    %v11440 = vld [vmem:[%s3 + $0x24] sm:$0xf]
    %v11441 = vld [vmem:[%s3 + $0x28] sm:$0xf]
    %v11442 = vld [vmem:[%s3 + $0x2c] sm:$0xf]
    %v11443 = vld [vmem:[%s3 + $0x30] sm:$0xf]
    %v11444 = vld [vmem:[%s3 + $0x34] sm:$0xf]
    %v11445 = vld [vmem:[%s3 + $0x38] sm:$0xf]
    %v11446 = vld [vmem:[%s3 + $0x3c] sm:$0xf]
    %v11447 = vld [vmem:[%s4] sm:$0x1]
    %v11449 = vlaneseq
    %v11450 = vshrl.u32 %v11449, 7
    %v11451 = vsub.s32 0, %v11450
    %v11452 = vrot.slane %v11447, %v11451
    %v11470 = vunpack.c.l.b16 %v11431
    %v11471 = vunpack.c.l.b16 %v11432
    %v11472 = vunpack.c.l.b16 %v11433
    %v11473 = vunpack.c.l.b16 %v11434
    %v11474 = vunpack.c.l.b16 %v11435
    %v11475 = vunpack.c.l.b16 %v11436
    %v11476 = vunpack.c.l.b16 %v11437
    %v11477 = vunpack.c.l.b16 %v11438
    %v11478 = vunpack.c.l.b16 %v11439
    %v11479 = vunpack.c.l.b16 %v11440
    %v11480 = vunpack.c.l.b16 %v11441
    %v11481 = vunpack.c.l.b16 %v11442
    %v11482 = vunpack.c.l.b16 %v11443
    %v11483 = vunpack.c.l.b16 %v11444
    %v11484 = vunpack.c.l.b16 %v11445
    %v11485 = vunpack.c.l.b16 %v11446
    %v11486 = vpack.c.b16 %v11471, %v11470
    %v11487 = vpack.c.b16 %v11473, %v11472
    %v11488 = vpack.c.b16 %v11475, %v11474
    %v11489 = vpack.c.b16 %v11477, %v11476
    %v11490 = vpack.c.b16 %v11479, %v11478
    %v11491 = vpack.c.b16 %v11481, %v11480
    %v11492 = vpack.c.b16 %v11483, %v11482
    %v11493 = vpack.c.b16 %v11485, %v11484
    %11502 = vmatprep.subr.bf16.mxu0 0
    %11503 = vmatpush1.bf16.msra.mxu0 %v11486
    %11504 = vmatprep.subr.bf16.mxu0 0
    %11505 = vmatpush1.bf16.msra.mxu0 %v11487
    %11506 = vmatprep.subr.bf16.mxu0 0
    %11507 = vmatpush1.bf16.msra.mxu0 %v11488
    %11508 = vmatprep.subr.bf16.mxu0 0
    %11509 = vmatpush1.bf16.msra.mxu0 %v11489
    %11510 = vmatprep.subr.bf16.mxu0 0
    %11511 = vmatpush1.bf16.msra.mxu0 %v11490
    %11512 = vmatprep.subr.bf16.mxu0 0
    %11513 = vmatpush1.bf16.msra.mxu0 %v11491
    %11514 = vmatprep.subr.bf16.mxu0 0
    %11515 = vmatpush1.bf16.msra.mxu0 %v11492
    %11516 = vmatprep.subr.bf16.mxu0 0
    %11517 = vmatpush1.bf16.msra.mxu0 %v11493
    %11518 = vmatprep.subr.bf16.mxu0 0
    %11519 = vmatpush1.bf16.msra.mxu0 0
    %11520 = vmatprep.subr.bf16.mxu0 0
    %11521 = vmatpush1.bf16.msra.mxu0 0
    %11522 = vmatprep.subr.bf16.mxu0 0
    %11523 = vmatpush1.bf16.msra.mxu0 0
    %11524 = vmatprep.subr.bf16.mxu0 0
    %11525 = vmatpush1.bf16.msra.mxu0 0
    %11526 = vmatprep.subr.bf16.mxu0 0
    %11527 = vmatpush1.bf16.msra.mxu0 0
    %11528 = vmatprep.subr.bf16.mxu0 0
    %11529 = vmatpush1.bf16.msra.mxu0 0
    %11530 = vmatprep.subr.bf16.mxu0 0
    %11531 = vmatpush1.bf16.msra.mxu0 0
    %11532 = vmatprep.subr.bf16.mxu0 0
    %11533 = vmatpush1.bf16.msra.mxu0 0
    %11534 = vmatprep.mubr.bf16.mxu0 0
    %11535 = vmatmul.mubr.bf16.gmra.mrb[0].mxu0 %v11430
    %v11536 = vpop.f32.mrb[0].mxu0
    %v11537 = vadd.f32 %v11452, %v11536
    %v11538 = vpop.f32.mrb[0].mxu0
    %v11539 = vpop.f32.mrb[0].mxu0
    %v11540 = vpop.f32.mrb[0].mxu0
    %11541 = vdwg.mxu0
    %vm11542 = vcmask 1041408
    %v11543 = vsel %vm11542, %v11537, -inf
    %11544 = vmax.xlane.f32.xlu0 %v11543
    %v11545 = vpop.xlane.xlu0 %11544
    %v11546 = vsub.f32 %v11537, %v11545
    %v11547 = vmul.f32 %v11546, 1.442695
    %v11548 = vpow.pop %v11547
    %v11549 = vsel %vm11542, %v11548, 0.0
    %11550 = vadd.xlane.f32.xlu0 %v11549
    %v11551 = vpop.xlane.xlu0 %11550
    %v11552 = vrcp.pop %v11551
    %v11553 = vmul.f32 %v11548, %v11552
    %11554 = vst [vmem:[#allocation3] sm:$0x3] %v11553
    // Predicated region
    $region26: #{keras_wrapper_forward.1} parent=1 // pred_check
      _
    $region27: #{keras_wrapper_forward.1} parent=1 // pred_check_branch
      %11556 = sbr.rel (0) target = $region29
    $region28: #{keras_wrapper_forward.1} parent=1 // pred_region
      %s11558 = ssub.s32 32, 32
      %11559 = vsyncadd [#allocation4], %s11558
      %s11561 = sshll.u32 [#allocation3], 4
      %s11562 = int_to_ptr.vmem [resolvable:$true] %s11561
      %11564 = dma.vmem_to_hbm [thread:$0]  %s11562, 32, %s6, [#allocation4]
    $region29: #{keras_wrapper_forward.1} parent=1 // pred_fallthru
      _
    // Predicated region
    $region30: #{keras_wrapper_forward.1} parent=1 // pred_check
      _
    $region31: #{keras_wrapper_forward.1} parent=1 // pred_check_branch
      %11566 = sbr.rel (0) target = $region33
    $region32: #{keras_wrapper_forward.1} parent=1 // pred_region
      %11567 = dma.done [#allocation4], 32
    $region33: #{keras_wrapper_forward.1} parent=1 // pred_fallthru
      _
    %11568 = vsyncpa [#allocation4], 1

</llo_original>
